<compile_context>
chip_gen: v7x
topology: tpu7x:2x2x1
jax: 0.10.0
libtpu: 0.0.40
codegen_flags: <defaults>
</compile_context>

<pallas_src>
import functools

import jax
import jax.numpy as jnp
from jax.experimental import pallas as pl
from jax.experimental.pallas import tpu as pltpu

EPS = 1e-6
LANE = 128


def _round_up(x, m):
    return ((x + m - 1) // m) * m


# --------------------------------------------------------------------------
# Pallas kernels
# --------------------------------------------------------------------------

def _mm_bias_act_kernel(x_ref, w_ref, b_ref, o_ref, *, act):
    """Fused (im2col patches) @ weights + bias + activation.

    x block: (block_m, Kp) bf16, w: (Kp, Cp) bf16, bias: (1, Cp) f32.
    Accumulation in f32 on the MXU; bias/activation in f32 on the VPU/EUP.
    """
    acc = jnp.dot(x_ref[...], w_ref[...], preferred_element_type=jnp.float32)
    acc = acc + b_ref[...]
    if act == "relu":
        acc = jnp.maximum(acc, 0.0)
    elif act == "softplus":
        # Stable softplus: max(x,0) + log1p(exp(-|x|))  (exp/log -> EUP slot).
        acc = jnp.maximum(acc, 0.0) + jnp.log1p(jnp.exp(-jnp.abs(acc)))
    o_ref[...] = acc


def _maps_to_kp_kernel(maps_ref, yg_ref, xg_ref, muy_ref, mux_ref, sc_ref):
    """FeatureMapsToKeyPoints: spatial-softargmax style reduction.
    maps_ref: (M, H*W) non-negative feature maps (M = N*T*K)."""
    maps = maps_ref[...]
    total = jnp.sum(maps, axis=-1, keepdims=True)
    inv = pl.reciprocal(total + EPS, approx=True)
    muy_ref[...] = jnp.sum(maps * yg_ref[...], axis=-1, keepdims=True) * inv
    mux_ref[...] = jnp.sum(maps * xg_ref[...], axis=-1, keepdims=True) * inv
    sc_ref[...] = total * (1.0 / maps.shape[-1])


def _kp_to_maps_kernel(muy_ref, mux_ref, sc_ref, yg_ref, xg_ref, o_ref, *, inv_kp_width):
    """KeyPointsToFeatureMaps: render isotropic gaussian blobs.
    mu/scale refs: (M, 1); grids: (1, H*W); output: (M, H*W)."""
    d = (yg_ref[...] - muy_ref[...]) ** 2 + (xg_ref[...] - mux_ref[...]) ** 2
    o_ref[...] = jnp.exp(-d * inv_kp_width) * sc_ref[...]


# --------------------------------------------------------------------------
# Ops built on the kernels
# --------------------------------------------------------------------------

def matmul_bias_act(x, w, b, act):
    """x: (M, K) f32, w: (K, C) f32, b: (C,) -> (M, C) f32.

    K and C are zero-padded to multiples of 128 (lane-dense MXU tiles and
    stores); M is padded to the row-block size and tiled over a parallel grid
    axis (uses both TensorCores on v7x, harmless on v5e/v6e).  MXU operands
    are cast to bf16; bias + activation stay in f32.
    """
    M, K = x.shape
    _, C = w.shape
    Kp = _round_up(K, LANE)
    Cp = _round_up(C, LANE)
    block_m = 256 if M >= 256 else _round_up(M, 8)
    Mp = _round_up(M, block_m)

    xp = jnp.pad(x.astype(jnp.bfloat16), ((0, Mp - M), (0, Kp - K)))
    wp = jnp.pad(w.astype(jnp.bfloat16), ((0, Kp - K), (0, Cp - C)))
    bp = jnp.pad(b.astype(jnp.float32), (0, Cp - C)).reshape(1, Cp)

    kernel = functools.partial(_mm_bias_act_kernel, act=act)
    cost = pl.CostEstimate(
        flops=2 * Mp * Kp * Cp,
        transcendentals=(2 * Mp * Cp) if act == "softplus" else 0,
        bytes_accessed=2 * (Mp * Kp + Kp * Cp) + 4 * (Cp + Mp * Cp),
    )
    out = pl.pallas_call(
        kernel,
        out_shape=jax.ShapeDtypeStruct((Mp, Cp), jnp.float32),
        grid=(Mp // block_m,),
        in_specs=[
            pl.BlockSpec((block_m, Kp), lambda i: (i, 0)),
            pl.BlockSpec((Kp, Cp), lambda i: (0, 0)),
            pl.BlockSpec((1, Cp), lambda i: (0, 0)),
        ],
        out_specs=pl.BlockSpec((block_m, Cp), lambda i: (i, 0)),
        compiler_params=pltpu.CompilerParams(
            dimension_semantics=("parallel",)),
        cost_estimate=cost,
    )(xp, wp, bp)
    return out[:M, :C]


def conv2d(x, w, b, *, stride=1, padding=0, act="relu"):
    """NHWC conv via im2col + Pallas matmul.  x: (N,H,W,Cin), w: (kh,kw,Cin,Cout)."""
    N, H, W, Cin = x.shape
    kh, kw, _, Cout = w.shape
    if padding:
        x = jnp.pad(x, ((0, 0), (padding, padding), (padding, padding), (0, 0)))
    Ho = (H + 2 * padding - kh) // stride + 1
    Wo = (W + 2 * padding - kw) // stride + 1
    if kh == 1 and kw == 1 and stride == 1:
        patches = x.reshape(N * Ho * Wo, Cin)
    else:
        cols = []
        for i in range(kh):
            for j in range(kw):
                cols.append(x[:, i:i + stride * Ho:stride, j:j + stride * Wo:stride, :])
        patches = jnp.concatenate(cols, axis=-1).reshape(N * Ho * Wo, kh * kw * Cin)
    wmat = w.reshape(kh * kw * Cin, Cout)
    out = matmul_bias_act(patches, wmat, b, act)      # (N*Ho*Wo, Cout)
    return out.reshape(N, Ho, Wo, Cout)


def _flat_grids(h, w):
    """Pixel-center grids in [-1, 1] (y is flipped, video_structure convention),
    flattened in row-major (h, w) order."""
    ylin = jnp.linspace(1.0, -1.0, h)
    xlin = jnp.linspace(-1.0, 1.0, w)
    yg = jnp.repeat(ylin, w).reshape(1, h * w).astype(jnp.float32)
    xg = jnp.tile(xlin, h).reshape(1, h * w).astype(jnp.float32)
    return yg, xg


def maps_to_keypoints(feature_maps):
    """(M, H, W, K) non-negative maps -> (mu_y, mu_x, intensity), each (M, K)."""
    M, H, W, K = feature_maps.shape
    yg, xg = _flat_grids(H, W)
    flat = feature_maps.transpose(0, 3, 1, 2).reshape(M * K, H * W).astype(jnp.float32)
    out_sds = jax.ShapeDtypeStruct((M * K, 1), jnp.float32)
    out_spec = pl.BlockSpec((M * K, 1), lambda i: (0, 0))
    mu_y, mu_x, sc = pl.pallas_call(
        _maps_to_kp_kernel,
        out_shape=(out_sds, out_sds, out_sds),
        grid=(1,),
        in_specs=[
            pl.BlockSpec((M * K, H * W), lambda i: (0, 0)),
            pl.BlockSpec((1, H * W), lambda i: (0, 0)),
            pl.BlockSpec((1, H * W), lambda i: (0, 0)),
        ],
        out_specs=(out_spec, out_spec, out_spec),
    )(flat, yg, xg)
    return mu_y.reshape(M, K), mu_x.reshape(M, K), sc.reshape(M, K)


def keypoints_to_maps(mu_y, mu_x, scale, *, sigma, heatmap_width):
    """Flat (M,) mu_y / mu_x / intensity -> (M, hw*hw) gaussian maps (one call
    renders ALL frames & key-points)."""
    M = mu_y.shape[0]
    hw = heatmap_width
    yg, xg = _flat_grids(hw, hw)
    inv_kp_width = 1.0 / (2.0 * (sigma / hw) ** 2)
    kernel = functools.partial(_kp_to_maps_kernel, inv_kp_width=inv_kp_width)
    kp_spec = pl.BlockSpec((M, 1), lambda i: (0, 0))
    grid_spec = pl.BlockSpec((1, hw * hw), lambda i: (0, 0))
    return pl.pallas_call(
        kernel,
        out_shape=jax.ShapeDtypeStruct((M, hw * hw), jnp.float32),
        grid=(1,),
        in_specs=[kp_spec, kp_spec, kp_spec, grid_spec, grid_spec],
        out_specs=pl.BlockSpec((M, hw * hw), lambda i: (0, 0)),
    )(mu_y.reshape(M, 1).astype(jnp.float32),
      mu_x.reshape(M, 1).astype(jnp.float32),
      scale.reshape(M, 1).astype(jnp.float32),
      yg, xg)


def add_coord_channels(x):
    """Append one y- and one x-coordinate channel in [-1, 1] (NHWC)."""
    N, H, W, _ = x.shape
    y = jnp.broadcast_to(jnp.linspace(-1.0, 1.0, H)[None, :, None, None], (N, H, W, 1))
    xx = jnp.broadcast_to(jnp.linspace(-1.0, 1.0, W)[None, None, :, None], (N, H, W, 1))
    return jnp.concatenate([x, y.astype(x.dtype), xx.astype(x.dtype)], axis=-1)


def upsample2(x):
    return jnp.repeat(jnp.repeat(x, 2, axis=1), 2, axis=2)


# --------------------------------------------------------------------------
# ULOSD model (deterministic synthetic parameters, NHWC)
# --------------------------------------------------------------------------

def _conv_param(key, kh, kw, cin, cout):
    fan_in = cin * kh * kw
    w = jax.random.normal(key, (kh, kw, cin, cout), jnp.float32) / jnp.sqrt(float(fan_in))
    b = jnp.zeros((cout,), jnp.float32)
    return w, b


def init_params(key, *, image_channels=3, num_keypoints=4):
    ks = jax.random.split(key, 12)
    p = {}
    # Encoder: input image + 2 coord channels; halve spatial 16 -> 4, final softplus.
    p["enc1"] = _conv_param(ks[0], 3, 3, image_channels + 2, 16)
    p["enc2"] = _conv_param(ks[1], 3, 3, 16, 32)
    p["enc3"] = _conv_param(ks[2], 3, 3, 32, 64)
    p["enc4"] = _conv_param(ks[3], 1, 1, 64, num_keypoints)
    # Appearance net: same trunk, raw image input, no final soft-plus.
    p["app1"] = _conv_param(ks[4], 3, 3, image_channels, 16)
    p["app2"] = _conv_param(ks[5], 3, 3, 16, 32)
    p["app3"] = _conv_param(ks[6], 3, 3, 32, 64)
    p["app4"] = _conv_param(ks[7], 1, 1, 64, num_keypoints)
    # Decoder: [gauss(K) + first-frame gauss(K) + appearance(K)] + 2 coord channels.
    dec_in = 3 * num_keypoints + 2
    p["dec1"] = _conv_param(ks[8], 3, 3, dec_in, 64)
    p["dec2"] = _conv_param(ks[9], 3, 3, 64, 32)
    p["dec3"] = _conv_param(ks[10], 3, 3, 32, 16)
    p["dec4"] = _conv_param(ks[11], 1, 1, 16, image_channels)
    return p


def encoder_fn(p, image):
    x = add_coord_channels(image)                                       # (M, 16, 16, C+2)
    x = conv2d(x, *p["enc1"], stride=1, padding=1, act="relu")          # (M, 16, 16, 16)
    x = conv2d(x, *p["enc2"], stride=2, padding=1, act="relu")          # (M, 8, 8, 32)
    x = conv2d(x, *p["enc3"], stride=2, padding=1, act="relu")          # (M, 4, 4, 64)
    return conv2d(x, *p["enc4"], stride=1, padding=0, act="softplus")   # (M, 4, 4, K)


def appearance_fn(p, image):
    x = conv2d(image, *p["app1"], stride=1, padding=1, act="relu")
    x = conv2d(x, *p["app2"], stride=2, padding=1, act="relu")
    x = conv2d(x, *p["app3"], stride=2, padding=1, act="relu")
    return conv2d(x, *p["app4"], stride=1, padding=0, act="none")       # (M, 4, 4, K)


def decoder_fn(p, x):
    x = conv2d(x, *p["dec1"], stride=1, padding=1, act="relu")          # (M, 4, 4, 64)
    x = upsample2(x)                                                    # (M, 8, 8, 64)
    x = conv2d(x, *p["dec2"], stride=1, padding=1, act="relu")          # (M, 8, 8, 32)
    x = upsample2(x)                                                    # (M, 16, 16, 32)
    x = conv2d(x, *p["dec3"], stride=1, padding=1, act="relu")          # (M, 16, 16, 16)
    return conv2d(x, *p["dec4"], stride=1, padding=0, act="none")       # (M, 16, 16, 3)


def ulosd_forward(p, image_sequence, *, sigma, feature_map_width):
    """image_sequence: (N, T, C, H, W) -> reconstructed images (N, T, C, H, W)."""
    N, T, C, H, W = image_sequence.shape
    NT = N * T
    hw = feature_map_width

    # ----- NHWC, all frames batched over T -----
    frames = image_sequence.reshape(NT, C, H, W).transpose(0, 2, 3, 1)   # (NT, H, W, C)

    # ----- encode: feature maps -> key-points (single pass over all frames) -----
    fmaps = encoder_fn(p, frames)                                        # (NT, hw, hw, K)
    K = fmaps.shape[-1]
    mu_y, mu_x, scale = maps_to_keypoints(fmaps)                         # each (NT, K)
    mu_y = mu_y.reshape(N, T, K)
    mu_x = mu_x.reshape(N, T, K)
    scale = scale.reshape(N, T, K)
    # Normalize intensities across key-points (video_structure convention).
    scale = scale / (EPS + jnp.max(scale, axis=2, keepdims=True))

    # ----- render gaussian maps for all frames in one kernel call -----
    gmaps = keypoints_to_maps(mu_y.reshape(-1), mu_x.reshape(-1), scale.reshape(-1),
                              sigma=sigma, heatmap_width=hw)             # (N*T*K, hw*hw)
    gmaps = gmaps.reshape(N, T, K, hw, hw)
    gmaps_nhwc = gmaps.transpose(0, 1, 3, 4, 2).reshape(NT, hw, hw, K)
    first_gmaps = jnp.broadcast_to(
        gmaps[:, 0:1].transpose(0, 1, 3, 4, 2), (N, T, hw, hw, K)).reshape(NT, hw, hw, K)

    # ----- appearance net on the first frame, broadcast over T -----
    first_frame = frames.reshape(N, T, H, W, C)[:, 0]                    # (N, H, W, C)
    app = appearance_fn(p, first_frame)                                  # (N, hw, hw, K)
    app = jnp.broadcast_to(app[:, None], (N, T, hw, hw, K)).reshape(NT, hw, hw, K)

    # ----- decode all frames at once -----
    combi = jnp.concatenate([gmaps_nhwc, first_gmaps, app], axis=-1)     # (NT, hw, hw, 3K)
    combi = add_coord_channels(combi)
    rec = decoder_fn(p, combi)                                           # (NT, H, W, C)
    return rec.reshape(N, T, H, W, C).transpose(0, 1, 4, 2, 3)           # (N, T, C, H, W)

# TODO(synk): stochastic key-point re-sampling (re_sample_kpts=True branch) is not
# exercised by forward() (encode is called with defaults) and is therefore omitted.

# --------------------------------------------------------------------------
# Main
# --------------------------------------------------------------------------

if __name__ == "__main__":
    # Config (small, consistent with the module): 16x16 RGB images, 4x4 feature
    # maps, K=4 key-points, gaussian sigma 1.5.
    N, T, C, H, W = 2, 3, 3, 16, 16
    FEATURE_MAP_WIDTH = 4
    SIGMA = 1.5
    NUM_KEYPOINTS = 4

    key = jax.random.PRNGKey(0)
    k_params, k_data = jax.random.split(key)
    params = init_params(k_params, image_channels=C, num_keypoints=NUM_KEYPOINTS)
    image_sequence = jax.random.uniform(k_data, (N, T, C, H, W), jnp.float32)

    fwd = jax.jit(functools.partial(
        ulosd_forward, sigma=SIGMA, feature_map_width=FEATURE_MAP_WIDTH))
    out = fwd(params, image_sequence)
    out = jax.block_until_ready(out)

    assert out.shape == (N, T, C, H, W), out.shape
    assert bool(jnp.all(jnp.isfinite(out)))
    print("KERNEL_OK")
</pallas_src>

<mosaic_0001>
module attributes {stable_mosaic.version = 11 : i64} {
  func.func @_mm_bias_act_kernel(%arg0: i32, %arg1: memref<256x128xbf16, #tpu.memory_space<vmem>>, %arg2: memref<128x128xbf16, #tpu.memory_space<vmem>>, %arg3: memref<1x128xf32, #tpu.memory_space<vmem>>, %arg4: memref<256x128xf32, #tpu.memory_space<vmem>>) attributes {dimension_semantics = [#tpu.dimension_semantics<parallel>], iteration_bounds = array<i64: 6>, scalar_prefetch = 0 : i64, scratch_operands = 0 : i64, tpu.core_type = #tpu.core_type<tc>, window_params = [{transform_indices = @transform_0, window_bounds = array<i64: 256, 128>}, {pipeline_mode = #tpu.pipeline_mode<synchronous>, transform_indices = @transform_1, window_bounds = array<i64: 128, 128>}, {pipeline_mode = #tpu.pipeline_mode<synchronous>, transform_indices = @transform_2, window_bounds = array<i64: 1, 128>}, {transform_indices = @transform_3, window_bounds = array<i64: 256, 128>}]} {
    %c0 = arith.constant 0 : index
    %c0_0 = arith.constant 0 : index
    %0 = vector.load %arg1[%c0, %c0_0] : memref<256x128xbf16, #tpu.memory_space<vmem>>, vector<256x128xbf16>
    %c0_1 = arith.constant 0 : index
    %c0_2 = arith.constant 0 : index
    %1 = vector.load %arg2[%c0_1, %c0_2] : memref<128x128xbf16, #tpu.memory_space<vmem>>, vector<128x128xbf16>
    %cst = arith.constant dense<0.000000e+00> : vector<256x128xf32>
    %2 = tpu.matmul %0, %1, %cst {dimension_numbers = #tpu.dot_dimension_numbers<[1], [0], [0], [1], [0, 0, 1, 1], [], []>} : vector<256x128xbf16>, vector<128x128xbf16>, vector<256x128xf32> -> vector<256x128xf32>
    %c0_3 = arith.constant 0 : index
    %c0_4 = arith.constant 0 : index
    %3 = vector.load %arg3[%c0_3, %c0_4] : memref<1x128xf32, #tpu.memory_space<vmem>>, vector<1x128xf32>
    %4 = vector.broadcast %3 : vector<1x128xf32> to vector<256x128xf32>
    %5 = arith.addf %2, %4 : vector<256x128xf32>
    %cst_5 = arith.constant 0.000000e+00 : f32
    %6 = vector.broadcast %cst_5 : f32 to vector<256x128xf32>
    %7 = arith.maximumf %5, %6 : vector<256x128xf32>
    %c0_6 = arith.constant 0 : index
    %c0_7 = arith.constant 0 : index
    %8 = vector.load %arg4[%c0_6, %c0_7] : memref<256x128xf32, #tpu.memory_space<vmem>>, vector<256x128xf32>
    tpu.vector_store %arg4[%c0_6, %c0_7], %7 {strides = array<i32>} : memref<256x128xf32, #tpu.memory_space<vmem>>, vector<256x128xf32>,
    return
  }
  func.func @transform_0(%arg0: i32) -> (i32, i32) {
    %c0_i32 = arith.constant 0 : i32
    %c0_i32_0 = arith.constant 0 : i32
    return %arg0, %c0_i32 : i32, i32
  }
  func.func @transform_1(%arg0: i32) -> (i32, i32) {
    %c0_i32 = arith.constant 0 : i32
    %c0_i32_0 = arith.constant 0 : i32
    %c0_i32_1 = arith.constant 0 : i32
    return %c0_i32, %c0_i32_0 : i32, i32
  }
  func.func @transform_2(%arg0: i32) -> (i32, i32) {
    %c0_i32 = arith.constant 0 : i32
    %c0_i32_0 = arith.constant 0 : i32
    %c0_i32_1 = arith.constant 0 : i32
    return %c0_i32, %c0_i32_0 : i32, i32
  }
  func.func @transform_3(%arg0: i32) -> (i32, i32) {
    %c0_i32 = arith.constant 0 : i32
    %c0_i32_0 = arith.constant 0 : i32
    return %arg0, %c0_i32 : i32, i32
  }
}

module attributes {stable_mosaic.version = 11 : i64} {
  func.func @_mm_bias_act_kernel(%arg0: i32, %arg1: memref<256x256xbf16, #tpu.memory_space<vmem>>, %arg2: memref<256x128xbf16, #tpu.memory_space<vmem>>, %arg3: memref<1x128xf32, #tpu.memory_space<vmem>>, %arg4: memref<256x128xf32, #tpu.memory_space<vmem>>) attributes {dimension_semantics = [#tpu.dimension_semantics<parallel>], iteration_bounds = array<i64: 2>, scalar_prefetch = 0 : i64, scratch_operands = 0 : i64, tpu.core_type = #tpu.core_type<tc>, window_params = [{transform_indices = @transform_0, window_bounds = array<i64: 256, 256>}, {pipeline_mode = #tpu.pipeline_mode<synchronous>, transform_indices = @transform_1, window_bounds = array<i64: 256, 128>}, {pipeline_mode = #tpu.pipeline_mode<synchronous>, transform_indices = @transform_2, window_bounds = array<i64: 1, 128>}, {transform_indices = @transform_3, window_bounds = array<i64: 256, 128>}]} {
    %c0 = arith.constant 0 : index
    %c0_0 = arith.constant 0 : index
    %0 = vector.load %arg1[%c0, %c0_0] : memref<256x256xbf16, #tpu.memory_space<vmem>>, vector<256x256xbf16>
    %c0_1 = arith.constant 0 : index
    %c0_2 = arith.constant 0 : index
    %1 = vector.load %arg2[%c0_1, %c0_2] : memref<256x128xbf16, #tpu.memory_space<vmem>>, vector<256x128xbf16>
    %cst = arith.constant dense<0.000000e+00> : vector<256x128xf32>
    %2 = tpu.matmul %0, %1, %cst {dimension_numbers = #tpu.dot_dimension_numbers<[1], [0], [0], [1], [0, 0, 1, 1], [], []>} : vector<256x256xbf16>, vector<256x128xbf16>, vector<256x128xf32> -> vector<256x128xf32>
    %c0_3 = arith.constant 0 : index
    %c0_4 = arith.constant 0 : index
    %3 = vector.load %arg3[%c0_3, %c0_4] : memref<1x128xf32, #tpu.memory_space<vmem>>, vector<1x128xf32>
    %4 = vector.broadcast %3 : vector<1x128xf32> to vector<256x128xf32>
    %5 = arith.addf %2, %4 : vector<256x128xf32>
    %cst_5 = arith.constant 0.000000e+00 : f32
    %6 = vector.broadcast %cst_5 : f32 to vector<256x128xf32>
    %7 = arith.maximumf %5, %6 : vector<256x128xf32>
    %c0_6 = arith.constant 0 : index
    %c0_7 = arith.constant 0 : index
    %8 = vector.load %arg4[%c0_6, %c0_7] : memref<256x128xf32, #tpu.memory_space<vmem>>, vector<256x128xf32>
    tpu.vector_store %arg4[%c0_6, %c0_7], %7 {strides = array<i32>} : memref<256x128xf32, #tpu.memory_space<vmem>>, vector<256x128xf32>,
    return
  }
  func.func @transform_0(%arg0: i32) -> (i32, i32) {
    %c0_i32 = arith.constant 0 : i32
    %c0_i32_0 = arith.constant 0 : i32
    return %arg0, %c0_i32 : i32, i32
  }
  func.func @transform_1(%arg0: i32) -> (i32, i32) {
    %c0_i32 = arith.constant 0 : i32
    %c0_i32_0 = arith.constant 0 : i32
    %c0_i32_1 = arith.constant 0 : i32
    return %c0_i32, %c0_i32_0 : i32, i32
  }
  func.func @transform_2(%arg0: i32) -> (i32, i32) {
    %c0_i32 = arith.constant 0 : i32
    %c0_i32_0 = arith.constant 0 : i32
    %c0_i32_1 = arith.constant 0 : i32
    return %c0_i32, %c0_i32_0 : i32, i32
  }
  func.func @transform_3(%arg0: i32) -> (i32, i32) {
    %c0_i32 = arith.constant 0 : i32
    %c0_i32_0 = arith.constant 0 : i32
    return %arg0, %c0_i32 : i32, i32
  }
}

module attributes {stable_mosaic.version = 11 : i64} {
  func.func @_mm_bias_act_kernel(%arg0: i32, %arg1: memref<96x384xbf16, #tpu.memory_space<vmem>>, %arg2: memref<384x128xbf16, #tpu.memory_space<vmem>>, %arg3: memref<1x128xf32, #tpu.memory_space<vmem>>, %arg4: memref<96x128xf32, #tpu.memory_space<vmem>>) attributes {dimension_semantics = [#tpu.dimension_semantics<parallel>], iteration_bounds = array<i64: 1>, scalar_prefetch = 0 : i64, scratch_operands = 0 : i64, tpu.core_type = #tpu.core_type<tc>, window_params = [{transform_indices = @transform_0, window_bounds = array<i64: 96, 384>}, {pipeline_mode = #tpu.pipeline_mode<synchronous>, transform_indices = @transform_1, window_bounds = array<i64: 384, 128>}, {pipeline_mode = #tpu.pipeline_mode<synchronous>, transform_indices = @transform_2, window_bounds = array<i64: 1, 128>}, {transform_indices = @transform_3, window_bounds = array<i64: 96, 128>}]} {
    %c0 = arith.constant 0 : index
    %c0_0 = arith.constant 0 : index
    %0 = vector.load %arg1[%c0, %c0_0] : memref<96x384xbf16, #tpu.memory_space<vmem>>, vector<96x384xbf16>
    %c0_1 = arith.constant 0 : index
    %c0_2 = arith.constant 0 : index
    %1 = vector.load %arg2[%c0_1, %c0_2] : memref<384x128xbf16, #tpu.memory_space<vmem>>, vector<384x128xbf16>
    %cst = arith.constant dense<0.000000e+00> : vector<96x128xf32>
    %2 = tpu.matmul %0, %1, %cst {dimension_numbers = #tpu.dot_dimension_numbers<[1], [0], [0], [1], [0, 0, 1, 1], [], []>} : vector<96x384xbf16>, vector<384x128xbf16>, vector<96x128xf32> -> vector<96x128xf32>
    %c0_3 = arith.constant 0 : index
    %c0_4 = arith.constant 0 : index
    %3 = vector.load %arg3[%c0_3, %c0_4] : memref<1x128xf32, #tpu.memory_space<vmem>>, vector<1x128xf32>
    %4 = vector.broadcast %3 : vector<1x128xf32> to vector<96x128xf32>
    %5 = arith.addf %2, %4 : vector<96x128xf32>
    %cst_5 = arith.constant 0.000000e+00 : f32
    %6 = vector.broadcast %cst_5 : f32 to vector<96x128xf32>
    %7 = arith.maximumf %5, %6 : vector<96x128xf32>
    %c0_6 = arith.constant 0 : index
    %c0_7 = arith.constant 0 : index
    %8 = vector.load %arg4[%c0_6, %c0_7] : memref<96x128xf32, #tpu.memory_space<vmem>>, vector<96x128xf32>
    tpu.vector_store %arg4[%c0_6, %c0_7], %7 {strides = array<i32>} : memref<96x128xf32, #tpu.memory_space<vmem>>, vector<96x128xf32>,
    return
  }
  func.func @transform_0(%arg0: i32) -> (i32, i32) {
    %c0_i32 = arith.constant 0 : i32
    %c0_i32_0 = arith.constant 0 : i32
    return %arg0, %c0_i32 : i32, i32
  }
  func.func @transform_1(%arg0: i32) -> (i32, i32) {
    %c0_i32 = arith.constant 0 : i32
    %c0_i32_0 = arith.constant 0 : i32
    %c0_i32_1 = arith.constant 0 : i32
    return %c0_i32, %c0_i32_0 : i32, i32
  }
  func.func @transform_2(%arg0: i32) -> (i32, i32) {
    %c0_i32 = arith.constant 0 : i32
    %c0_i32_0 = arith.constant 0 : i32
    %c0_i32_1 = arith.constant 0 : i32
    return %c0_i32, %c0_i32_0 : i32, i32
  }
  func.func @transform_3(%arg0: i32) -> (i32, i32) {
    %c0_i32 = arith.constant 0 : i32
    %c0_i32_0 = arith.constant 0 : i32
    return %arg0, %c0_i32 : i32, i32
  }
}

module attributes {stable_mosaic.version = 11 : i64} {
  func.func @_mm_bias_act_kernel(%arg0: i32, %arg1: memref<96x128xbf16, #tpu.memory_space<vmem>>, %arg2: memref<128x128xbf16, #tpu.memory_space<vmem>>, %arg3: memref<1x128xf32, #tpu.memory_space<vmem>>, %arg4: memref<96x128xf32, #tpu.memory_space<vmem>>) attributes {dimension_semantics = [#tpu.dimension_semantics<parallel>], iteration_bounds = array<i64: 1>, scalar_prefetch = 0 : i64, scratch_operands = 0 : i64, tpu.core_type = #tpu.core_type<tc>, window_params = [{transform_indices = @transform_0, window_bounds = array<i64: 96, 128>}, {pipeline_mode = #tpu.pipeline_mode<synchronous>, transform_indices = @transform_1, window_bounds = array<i64: 128, 128>}, {pipeline_mode = #tpu.pipeline_mode<synchronous>, transform_indices = @transform_2, window_bounds = array<i64: 1, 128>}, {transform_indices = @transform_3, window_bounds = array<i64: 96, 128>}]} {
    %c0 = arith.constant 0 : index
    %c0_0 = arith.constant 0 : index
    %0 = vector.load %arg1[%c0, %c0_0] : memref<96x128xbf16, #tpu.memory_space<vmem>>, vector<96x128xbf16>
    %c0_1 = arith.constant 0 : index
    %c0_2 = arith.constant 0 : index
    %1 = vector.load %arg2[%c0_1, %c0_2] : memref<128x128xbf16, #tpu.memory_space<vmem>>, vector<128x128xbf16>
    %cst = arith.constant dense<0.000000e+00> : vector<96x128xf32>
    %2 = tpu.matmul %0, %1, %cst {dimension_numbers = #tpu.dot_dimension_numbers<[1], [0], [0], [1], [0, 0, 1, 1], [], []>} : vector<96x128xbf16>, vector<128x128xbf16>, vector<96x128xf32> -> vector<96x128xf32>
    %c0_3 = arith.constant 0 : index
    %c0_4 = arith.constant 0 : index
    %3 = vector.load %arg3[%c0_3, %c0_4] : memref<1x128xf32, #tpu.memory_space<vmem>>, vector<1x128xf32>
    %4 = vector.broadcast %3 : vector<1x128xf32> to vector<96x128xf32>
    %5 = arith.addf %2, %4 : vector<96x128xf32>
    %cst_5 = arith.constant 0.000000e+00 : f32
    %6 = vector.broadcast %cst_5 : f32 to vector<96x128xf32>
    %7 = arith.maximumf %5, %6 : vector<96x128xf32>
    %8 = math.absf %5 : vector<96x128xf32>
    %cst_6 = arith.constant 0.000000e+00 : f32
    %9 = vector.broadcast %cst_6 : f32 to vector<96x128xf32>
    %10 = arith.subf %9, %8 : vector<96x128xf32>
    %11 = math.exp %10 : vector<96x128xf32>
    %12 = math.log1p %11 : vector<96x128xf32>
    %13 = arith.addf %7, %12 : vector<96x128xf32>
    %c0_7 = arith.constant 0 : index
    %c0_8 = arith.constant 0 : index
    %14 = vector.load %arg4[%c0_7, %c0_8] : memref<96x128xf32, #tpu.memory_space<vmem>>, vector<96x128xf32>
    tpu.vector_store %arg4[%c0_7, %c0_8], %13 {strides = array<i32>} : memref<96x128xf32, #tpu.memory_space<vmem>>, vector<96x128xf32>,
    return
  }
  func.func @transform_0(%arg0: i32) -> (i32, i32) {
    %c0_i32 = arith.constant 0 : i32
    %c0_i32_0 = arith.constant 0 : i32
    return %arg0, %c0_i32 : i32, i32
  }
  func.func @transform_1(%arg0: i32) -> (i32, i32) {
    %c0_i32 = arith.constant 0 : i32
    %c0_i32_0 = arith.constant 0 : i32
    %c0_i32_1 = arith.constant 0 : i32
    return %c0_i32, %c0_i32_0 : i32, i32
  }
  func.func @transform_2(%arg0: i32) -> (i32, i32) {
    %c0_i32 = arith.constant 0 : i32
    %c0_i32_0 = arith.constant 0 : i32
    %c0_i32_1 = arith.constant 0 : i32
    return %c0_i32, %c0_i32_0 : i32, i32
  }
  func.func @transform_3(%arg0: i32) -> (i32, i32) {
    %c0_i32 = arith.constant 0 : i32
    %c0_i32_0 = arith.constant 0 : i32
    return %arg0, %c0_i32 : i32, i32
  }
}

module attributes {stable_mosaic.version = 11 : i64} {
  func.func @_maps_to_kp_kernel(%arg0: i32, %arg1: memref<24x16xf32, #tpu.memory_space<vmem>>, %arg2: memref<1x16xf32, #tpu.memory_space<vmem>>, %arg3: memref<1x16xf32, #tpu.memory_space<vmem>>, %arg4: memref<24x1xf32, #tpu.memory_space<vmem>>, %arg5: memref<24x1xf32, #tpu.memory_space<vmem>>, %arg6: memref<24x1xf32, #tpu.memory_space<vmem>>) attributes {dimension_semantics = [#tpu.dimension_semantics<arbitrary>], iteration_bounds = array<i64: 1>, scalar_prefetch = 0 : i64, scratch_operands = 0 : i64, tpu.core_type = #tpu.core_type<tc>, window_params = [{pipeline_mode = #tpu.pipeline_mode<synchronous>, transform_indices = @transform_0, window_bounds = array<i64: 24, 16>}, {pipeline_mode = #tpu.pipeline_mode<synchronous>, transform_indices = @transform_1, window_bounds = array<i64: 1, 16>}, {pipeline_mode = #tpu.pipeline_mode<synchronous>, transform_indices = @transform_2, window_bounds = array<i64: 1, 16>}, {pipeline_mode = #tpu.pipeline_mode<synchronous>, transform_indices = @transform_3, window_bounds = array<i64: 24, 1>}, {pipeline_mode = #tpu.pipeline_mode<synchronous>, transform_indices = @transform_4, window_bounds = array<i64: 24, 1>}, {pipeline_mode = #tpu.pipeline_mode<synchronous>, transform_indices = @transform_5, window_bounds = array<i64: 24, 1>}]} {
    %c0 = arith.constant 0 : index
    %c0_0 = arith.constant 0 : index
    %0 = vector.load %arg1[%c0, %c0_0] : memref<24x16xf32, #tpu.memory_space<vmem>>, vector<24x16xf32>
    %cst = arith.constant dense<0.000000e+00> : vector<24xf32>
    %1 = vector.multi_reduction <add>, %0, %cst [1] : vector<24x16xf32> to vector<24xf32>
    %2 = vector.shape_cast %1 : vector<24xf32> to vector<24x1xf32>
    %cst_1 = arith.constant 9.99999997E-7 : f32
    %3 = vector.broadcast %cst_1 : f32 to vector<24x1xf32>
    %4 = arith.addf %2, %3 : vector<24x1xf32>
    %5 = tpu.reciprocal %4 {approx = true} : vector<24x1xf32> -> vector<24x1xf32>
    %c0_2 = arith.constant 0 : index
    %c0_3 = arith.constant 0 : index
    %6 = vector.load %arg2[%c0_2, %c0_3] : memref<1x16xf32, #tpu.memory_space<vmem>>, vector<1x16xf32>
    %7 = vector.broadcast %6 : vector<1x16xf32> to vector<24x16xf32>
    %8 = arith.mulf %0, %7 : vector<24x16xf32>
    %cst_4 = arith.constant dense<0.000000e+00> : vector<24xf32>
    %9 = vector.multi_reduction <add>, %8, %cst_4 [1] : vector<24x16xf32> to vector<24xf32>
    %10 = vector.shape_cast %9 : vector<24xf32> to vector<24x1xf32>
    %11 = arith.mulf %10, %5 : vector<24x1xf32>
    %c0_5 = arith.constant 0 : index
    %c0_6 = arith.constant 0 : index
    %12 = vector.load %arg4[%c0_5, %c0_6] : memref<24x1xf32, #tpu.memory_space<vmem>>, vector<24x1xf32>
    tpu.vector_store %arg4[%c0_5, %c0_6], %11 {strides = array<i32>} : memref<24x1xf32, #tpu.memory_space<vmem>>, vector<24x1xf32>,
    %c0_7 = arith.constant 0 : index
    %c0_8 = arith.constant 0 : index
    %13 = vector.load %arg3[%c0_7, %c0_8] : memref<1x16xf32, #tpu.memory_space<vmem>>, vector<1x16xf32>
    %14 = vector.broadcast %13 : vector<1x16xf32> to vector<24x16xf32>
    %15 = arith.mulf %0, %14 : vector<24x16xf32>
    %cst_9 = arith.constant dense<0.000000e+00> : vector<24xf32>
    %16 = vector.multi_reduction <add>, %15, %cst_9 [1] : vector<24x16xf32> to vector<24xf32>
    %17 = vector.shape_cast %16 : vector<24xf32> to vector<24x1xf32>
    %18 = arith.mulf %17, %5 : vector<24x1xf32>
    %c0_10 = arith.constant 0 : index
    %c0_11 = arith.constant 0 : index
    %19 = vector.load %arg5[%c0_10, %c0_11] : memref<24x1xf32, #tpu.memory_space<vmem>>, vector<24x1xf32>
    tpu.vector_store %arg5[%c0_10, %c0_11], %18 {strides = array<i32>} : memref<24x1xf32, #tpu.memory_space<vmem>>, vector<24x1xf32>,
    %cst_12 = arith.constant 6.250000e-02 : f32
    %20 = vector.broadcast %cst_12 : f32 to vector<24x1xf32>
    %21 = arith.mulf %2, %20 : vector<24x1xf32>
    %c0_13 = arith.constant 0 : index
    %c0_14 = arith.constant 0 : index
    %22 = vector.load %arg6[%c0_13, %c0_14] : memref<24x1xf32, #tpu.memory_space<vmem>>, vector<24x1xf32>
    tpu.vector_store %arg6[%c0_13, %c0_14], %21 {strides = array<i32>} : memref<24x1xf32, #tpu.memory_space<vmem>>, vector<24x1xf32>,
    return
  }
  func.func @transform_0(%arg0: i32) -> (i32, i32) {
    %c0_i32 = arith.constant 0 : i32
    %c0_i32_0 = arith.constant 0 : i32
    %c0_i32_1 = arith.constant 0 : i32
    return %c0_i32, %c0_i32_0 : i32, i32
  }
  func.func @transform_1(%arg0: i32) -> (i32, i32) {
    %c0_i32 = arith.constant 0 : i32
    %c0_i32_0 = arith.constant 0 : i32
    %c0_i32_1 = arith.constant 0 : i32
    return %c0_i32, %c0_i32_0 : i32, i32
  }
  func.func @transform_2(%arg0: i32) -> (i32, i32) {
    %c0_i32 = arith.constant 0 : i32
    %c0_i32_0 = arith.constant 0 : i32
    %c0_i32_1 = arith.constant 0 : i32
    return %c0_i32, %c0_i32_0 : i32, i32
  }
  func.func @transform_3(%arg0: i32) -> (i32, i32) {
    %c0_i32 = arith.constant 0 : i32
    %c0_i32_0 = arith.constant 0 : i32
    %c0_i32_1 = arith.constant 0 : i32
    return %c0_i32, %c0_i32_0 : i32, i32
  }
  func.func @transform_4(%arg0: i32) -> (i32, i32) {
    %c0_i32 = arith.constant 0 : i32
    %c0_i32_0 = arith.constant 0 : i32
    %c0_i32_1 = arith.constant 0 : i32
    return %c0_i32, %c0_i32_0 : i32, i32
  }
  func.func @transform_5(%arg0: i32) -> (i32, i32) {
    %c0_i32 = arith.constant 0 : i32
    %c0_i32_0 = arith.constant 0 : i32
    %c0_i32_1 = arith.constant 0 : i32
    return %c0_i32, %c0_i32_0 : i32, i32
  }
}

module attributes {stable_mosaic.version = 11 : i64} {
  func.func @_kp_to_maps_kernel(%arg0: i32, %arg1: memref<24x1xf32, #tpu.memory_space<vmem>>, %arg2: memref<24x1xf32, #tpu.memory_space<vmem>>, %arg3: memref<24x1xf32, #tpu.memory_space<vmem>>, %arg4: memref<1x16xf32, #tpu.memory_space<vmem>>, %arg5: memref<1x16xf32, #tpu.memory_space<vmem>>, %arg6: memref<24x16xf32, #tpu.memory_space<vmem>>) attributes {dimension_semantics = [#tpu.dimension_semantics<arbitrary>], iteration_bounds = array<i64: 1>, scalar_prefetch = 0 : i64, scratch_operands = 0 : i64, tpu.core_type = #tpu.core_type<tc>, window_params = [{pipeline_mode = #tpu.pipeline_mode<synchronous>, transform_indices = @transform_0, window_bounds = array<i64: 24, 1>}, {pipeline_mode = #tpu.pipeline_mode<synchronous>, transform_indices = @transform_1, window_bounds = array<i64: 24, 1>}, {pipeline_mode = #tpu.pipeline_mode<synchronous>, transform_indices = @transform_2, window_bounds = array<i64: 24, 1>}, {pipeline_mode = #tpu.pipeline_mode<synchronous>, transform_indices = @transform_3, window_bounds = array<i64: 1, 16>}, {pipeline_mode = #tpu.pipeline_mode<synchronous>, transform_indices = @transform_4, window_bounds = array<i64: 1, 16>}, {pipeline_mode = #tpu.pipeline_mode<synchronous>, transform_indices = @transform_5, window_bounds = array<i64: 24, 16>}]} {
    %c0 = arith.constant 0 : index
    %c0_0 = arith.constant 0 : index
    %0 = vector.load %arg4[%c0, %c0_0] : memref<1x16xf32, #tpu.memory_space<vmem>>, vector<1x16xf32>
    %c0_1 = arith.constant 0 : index
    %c0_2 = arith.constant 0 : index
    %1 = vector.load %arg1[%c0_1, %c0_2] : memref<24x1xf32, #tpu.memory_space<vmem>>, vector<24x1xf32>
    %2 = vector.broadcast %0 : vector<1x16xf32> to vector<24x16xf32>
    %3 = vector.broadcast %1 : vector<24x1xf32> to vector<24x16xf32>
    %4 = arith.subf %2, %3 : vector<24x16xf32>
    %5 = arith.mulf %4, %4 : vector<24x16xf32>
    %c0_3 = arith.constant 0 : index
    %c0_4 = arith.constant 0 : index
    %6 = vector.load %arg5[%c0_3, %c0_4] : memref<1x16xf32, #tpu.memory_space<vmem>>, vector<1x16xf32>
    %c0_5 = arith.constant 0 : index
    %c0_6 = arith.constant 0 : index
    %7 = vector.load %arg2[%c0_5, %c0_6] : memref<24x1xf32, #tpu.memory_space<vmem>>, vector<24x1xf32>
    %8 = vector.broadcast %6 : vector<1x16xf32> to vector<24x16xf32>
    %9 = vector.broadcast %7 : vector<24x1xf32> to vector<24x16xf32>
    %10 = arith.subf %8, %9 : vector<24x16xf32>
    %11 = arith.mulf %10, %10 : vector<24x16xf32>
    %12 = arith.addf %5, %11 : vector<24x16xf32>
    %cst = arith.constant 0.000000e+00 : f32
    %13 = vector.broadcast %cst : f32 to vector<24x16xf32>
    %14 = arith.subf %13, %12 : vector<24x16xf32>
    %cst_7 = arith.constant 3.55555558 : f32
    %15 = vector.broadcast %cst_7 : f32 to vector<24x16xf32>
    %16 = arith.mulf %14, %15 : vector<24x16xf32>
    %17 = math.exp %16 : vector<24x16xf32>
    %c0_8 = arith.constant 0 : index
    %c0_9 = arith.constant 0 : index
    %18 = vector.load %arg3[%c0_8, %c0_9] : memref<24x1xf32, #tpu.memory_space<vmem>>, vector<24x1xf32>
    %19 = vector.broadcast %18 : vector<24x1xf32> to vector<24x16xf32>
    %20 = arith.mulf %17, %19 : vector<24x16xf32>
    %c0_10 = arith.constant 0 : index
    %c0_11 = arith.constant 0 : index
    %21 = vector.load %arg6[%c0_10, %c0_11] : memref<24x16xf32, #tpu.memory_space<vmem>>, vector<24x16xf32>
    tpu.vector_store %arg6[%c0_10, %c0_11], %20 {strides = array<i32>} : memref<24x16xf32, #tpu.memory_space<vmem>>, vector<24x16xf32>,
    return
  }
  func.func @transform_0(%arg0: i32) -> (i32, i32) {
    %c0_i32 = arith.constant 0 : i32
    %c0_i32_0 = arith.constant 0 : i32
    %c0_i32_1 = arith.constant 0 : i32
    return %c0_i32, %c0_i32_0 : i32, i32
  }
  func.func @transform_1(%arg0: i32) -> (i32, i32) {
    %c0_i32 = arith.constant 0 : i32
    %c0_i32_0 = arith.constant 0 : i32
    %c0_i32_1 = arith.constant 0 : i32
    return %c0_i32, %c0_i32_0 : i32, i32
  }
  func.func @transform_2(%arg0: i32) -> (i32, i32) {
    %c0_i32 = arith.constant 0 : i32
    %c0_i32_0 = arith.constant 0 : i32
    %c0_i32_1 = arith.constant 0 : i32
    return %c0_i32, %c0_i32_0 : i32, i32
  }
  func.func @transform_3(%arg0: i32) -> (i32, i32) {
    %c0_i32 = arith.constant 0 : i32
    %c0_i32_0 = arith.constant 0 : i32
    %c0_i32_1 = arith.constant 0 : i32
    return %c0_i32, %c0_i32_0 : i32, i32
  }
  func.func @transform_4(%arg0: i32) -> (i32, i32) {
    %c0_i32 = arith.constant 0 : i32
    %c0_i32_0 = arith.constant 0 : i32
    %c0_i32_1 = arith.constant 0 : i32
    return %c0_i32, %c0_i32_0 : i32, i32
  }
  func.func @transform_5(%arg0: i32) -> (i32, i32) {
    %c0_i32 = arith.constant 0 : i32
    %c0_i32_0 = arith.constant 0 : i32
    %c0_i32_1 = arith.constant 0 : i32
    return %c0_i32, %c0_i32_0 : i32, i32
  }
}

module attributes {stable_mosaic.version = 11 : i64} {
  func.func @_mm_bias_act_kernel(%arg0: i32, %arg1: memref<256x128xbf16, #tpu.memory_space<vmem>>, %arg2: memref<128x128xbf16, #tpu.memory_space<vmem>>, %arg3: memref<1x128xf32, #tpu.memory_space<vmem>>, %arg4: memref<256x128xf32, #tpu.memory_space<vmem>>) attributes {dimension_semantics = [#tpu.dimension_semantics<parallel>], iteration_bounds = array<i64: 2>, scalar_prefetch = 0 : i64, scratch_operands = 0 : i64, tpu.core_type = #tpu.core_type<tc>, window_params = [{transform_indices = @transform_0, window_bounds = array<i64: 256, 128>}, {pipeline_mode = #tpu.pipeline_mode<synchronous>, transform_indices = @transform_1, window_bounds = array<i64: 128, 128>}, {pipeline_mode = #tpu.pipeline_mode<synchronous>, transform_indices = @transform_2, window_bounds = array<i64: 1, 128>}, {transform_indices = @transform_3, window_bounds = array<i64: 256, 128>}]} {
    %c0 = arith.constant 0 : index
    %c0_0 = arith.constant 0 : index
    %0 = vector.load %arg1[%c0, %c0_0] : memref<256x128xbf16, #tpu.memory_space<vmem>>, vector<256x128xbf16>
    %c0_1 = arith.constant 0 : index
    %c0_2 = arith.constant 0 : index
    %1 = vector.load %arg2[%c0_1, %c0_2] : memref<128x128xbf16, #tpu.memory_space<vmem>>, vector<128x128xbf16>
    %cst = arith.constant dense<0.000000e+00> : vector<256x128xf32>
    %2 = tpu.matmul %0, %1, %cst {dimension_numbers = #tpu.dot_dimension_numbers<[1], [0], [0], [1], [0, 0, 1, 1], [], []>} : vector<256x128xbf16>, vector<128x128xbf16>, vector<256x128xf32> -> vector<256x128xf32>
    %c0_3 = arith.constant 0 : index
    %c0_4 = arith.constant 0 : index
    %3 = vector.load %arg3[%c0_3, %c0_4] : memref<1x128xf32, #tpu.memory_space<vmem>>, vector<1x128xf32>
    %4 = vector.broadcast %3 : vector<1x128xf32> to vector<256x128xf32>
    %5 = arith.addf %2, %4 : vector<256x128xf32>
    %cst_5 = arith.constant 0.000000e+00 : f32
    %6 = vector.broadcast %cst_5 : f32 to vector<256x128xf32>
    %7 = arith.maximumf %5, %6 : vector<256x128xf32>
    %c0_6 = arith.constant 0 : index
    %c0_7 = arith.constant 0 : index
    %8 = vector.load %arg4[%c0_6, %c0_7] : memref<256x128xf32, #tpu.memory_space<vmem>>, vector<256x128xf32>
    tpu.vector_store %arg4[%c0_6, %c0_7], %7 {strides = array<i32>} : memref<256x128xf32, #tpu.memory_space<vmem>>, vector<256x128xf32>,
    return
  }
  func.func @transform_0(%arg0: i32) -> (i32, i32) {
    %c0_i32 = arith.constant 0 : i32
    %c0_i32_0 = arith.constant 0 : i32
    return %arg0, %c0_i32 : i32, i32
  }
  func.func @transform_1(%arg0: i32) -> (i32, i32) {
    %c0_i32 = arith.constant 0 : i32
    %c0_i32_0 = arith.constant 0 : i32
    %c0_i32_1 = arith.constant 0 : i32
    return %c0_i32, %c0_i32_0 : i32, i32
  }
  func.func @transform_2(%arg0: i32) -> (i32, i32) {
    %c0_i32 = arith.constant 0 : i32
    %c0_i32_0 = arith.constant 0 : i32
    %c0_i32_1 = arith.constant 0 : i32
    return %c0_i32, %c0_i32_0 : i32, i32
  }
  func.func @transform_3(%arg0: i32) -> (i32, i32) {
    %c0_i32 = arith.constant 0 : i32
    %c0_i32_0 = arith.constant 0 : i32
    return %arg0, %c0_i32 : i32, i32
  }
}

module attributes {stable_mosaic.version = 11 : i64} {
  func.func @_mm_bias_act_kernel(%arg0: i32, %arg1: memref<128x256xbf16, #tpu.memory_space<vmem>>, %arg2: memref<256x128xbf16, #tpu.memory_space<vmem>>, %arg3: memref<1x128xf32, #tpu.memory_space<vmem>>, %arg4: memref<128x128xf32, #tpu.memory_space<vmem>>) attributes {dimension_semantics = [#tpu.dimension_semantics<parallel>], iteration_bounds = array<i64: 1>, scalar_prefetch = 0 : i64, scratch_operands = 0 : i64, tpu.core_type = #tpu.core_type<tc>, window_params = [{transform_indices = @transform_0, window_bounds = array<i64: 128, 256>}, {pipeline_mode = #tpu.pipeline_mode<synchronous>, transform_indices = @transform_1, window_bounds = array<i64: 256, 128>}, {pipeline_mode = #tpu.pipeline_mode<synchronous>, transform_indices = @transform_2, window_bounds = array<i64: 1, 128>}, {transform_indices = @transform_3, window_bounds = array<i64: 128, 128>}]} {
    %c0 = arith.constant 0 : index
    %c0_0 = arith.constant 0 : index
    %0 = vector.load %arg1[%c0, %c0_0] : memref<128x256xbf16, #tpu.memory_space<vmem>>, vector<128x256xbf16>
    %c0_1 = arith.constant 0 : index
    %c0_2 = arith.constant 0 : index
    %1 = vector.load %arg2[%c0_1, %c0_2] : memref<256x128xbf16, #tpu.memory_space<vmem>>, vector<256x128xbf16>
    %cst = arith.constant dense<0.000000e+00> : vector<128x128xf32>
    %2 = tpu.matmul %0, %1, %cst {dimension_numbers = #tpu.dot_dimension_numbers<[1], [0], [0], [1], [0, 0, 1, 1], [], []>} : vector<128x256xbf16>, vector<256x128xbf16>, vector<128x128xf32> -> vector<128x128xf32>
    %c0_3 = arith.constant 0 : index
    %c0_4 = arith.constant 0 : index
    %3 = vector.load %arg3[%c0_3, %c0_4] : memref<1x128xf32, #tpu.memory_space<vmem>>, vector<1x128xf32>
    %4 = vector.broadcast %3 : vector<1x128xf32> to vector<128x128xf32>
    %5 = arith.addf %2, %4 : vector<128x128xf32>
    %cst_5 = arith.constant 0.000000e+00 : f32
    %6 = vector.broadcast %cst_5 : f32 to vector<128x128xf32>
    %7 = arith.maximumf %5, %6 : vector<128x128xf32>
    %c0_6 = arith.constant 0 : index
    %c0_7 = arith.constant 0 : index
    %8 = vector.load %arg4[%c0_6, %c0_7] : memref<128x128xf32, #tpu.memory_space<vmem>>, vector<128x128xf32>
    tpu.vector_store %arg4[%c0_6, %c0_7], %7 {strides = array<i32>} : memref<128x128xf32, #tpu.memory_space<vmem>>, vector<128x128xf32>,
    return
  }
  func.func @transform_0(%arg0: i32) -> (i32, i32) {
    %c0_i32 = arith.constant 0 : i32
    %c0_i32_0 = arith.constant 0 : i32
    return %arg0, %c0_i32 : i32, i32
  }
  func.func @transform_1(%arg0: i32) -> (i32, i32) {
    %c0_i32 = arith.constant 0 : i32
    %c0_i32_0 = arith.constant 0 : i32
    %c0_i32_1 = arith.constant 0 : i32
    return %c0_i32, %c0_i32_0 : i32, i32
  }
  func.func @transform_2(%arg0: i32) -> (i32, i32) {
    %c0_i32 = arith.constant 0 : i32
    %c0_i32_0 = arith.constant 0 : i32
    %c0_i32_1 = arith.constant 0 : i32
    return %c0_i32, %c0_i32_0 : i32, i32
  }
  func.func @transform_3(%arg0: i32) -> (i32, i32) {
    %c0_i32 = arith.constant 0 : i32
    %c0_i32_0 = arith.constant 0 : i32
    return %arg0, %c0_i32 : i32, i32
  }
}

module attributes {stable_mosaic.version = 11 : i64} {
  func.func @_mm_bias_act_kernel(%arg0: i32, %arg1: memref<32x384xbf16, #tpu.memory_space<vmem>>, %arg2: memref<384x128xbf16, #tpu.memory_space<vmem>>, %arg3: memref<1x128xf32, #tpu.memory_space<vmem>>, %arg4: memref<32x128xf32, #tpu.memory_space<vmem>>) attributes {dimension_semantics = [#tpu.dimension_semantics<parallel>], iteration_bounds = array<i64: 1>, scalar_prefetch = 0 : i64, scratch_operands = 0 : i64, tpu.core_type = #tpu.core_type<tc>, window_params = [{transform_indices = @transform_0, window_bounds = array<i64: 32, 384>}, {pipeline_mode = #tpu.pipeline_mode<synchronous>, transform_indices = @transform_1, window_bounds = array<i64: 384, 128>}, {pipeline_mode = #tpu.pipeline_mode<synchronous>, transform_indices = @transform_2, window_bounds = array<i64: 1, 128>}, {transform_indices = @transform_3, window_bounds = array<i64: 32, 128>}]} {
    %c0 = arith.constant 0 : index
    %c0_0 = arith.constant 0 : index
    %0 = vector.load %arg1[%c0, %c0_0] : memref<32x384xbf16, #tpu.memory_space<vmem>>, vector<32x384xbf16>
    %c0_1 = arith.constant 0 : index
    %c0_2 = arith.constant 0 : index
    %1 = vector.load %arg2[%c0_1, %c0_2] : memref<384x128xbf16, #tpu.memory_space<vmem>>, vector<384x128xbf16>
    %cst = arith.constant dense<0.000000e+00> : vector<32x128xf32>
    %2 = tpu.matmul %0, %1, %cst {dimension_numbers = #tpu.dot_dimension_numbers<[1], [0], [0], [1], [0, 0, 1, 1], [], []>} : vector<32x384xbf16>, vector<384x128xbf16>, vector<32x128xf32> -> vector<32x128xf32>
    %c0_3 = arith.constant 0 : index
    %c0_4 = arith.constant 0 : index
    %3 = vector.load %arg3[%c0_3, %c0_4] : memref<1x128xf32, #tpu.memory_space<vmem>>, vector<1x128xf32>
    %4 = vector.broadcast %3 : vector<1x128xf32> to vector<32x128xf32>
    %5 = arith.addf %2, %4 : vector<32x128xf32>
    %cst_5 = arith.constant 0.000000e+00 : f32
    %6 = vector.broadcast %cst_5 : f32 to vector<32x128xf32>
    %7 = arith.maximumf %5, %6 : vector<32x128xf32>
    %c0_6 = arith.constant 0 : index
    %c0_7 = arith.constant 0 : index
    %8 = vector.load %arg4[%c0_6, %c0_7] : memref<32x128xf32, #tpu.memory_space<vmem>>, vector<32x128xf32>
    tpu.vector_store %arg4[%c0_6, %c0_7], %7 {strides = array<i32>} : memref<32x128xf32, #tpu.memory_space<vmem>>, vector<32x128xf32>,
    return
  }
  func.func @transform_0(%arg0: i32) -> (i32, i32) {
    %c0_i32 = arith.constant 0 : i32
    %c0_i32_0 = arith.constant 0 : i32
    return %arg0, %c0_i32 : i32, i32
  }
  func.func @transform_1(%arg0: i32) -> (i32, i32) {
    %c0_i32 = arith.constant 0 : i32
    %c0_i32_0 = arith.constant 0 : i32
    %c0_i32_1 = arith.constant 0 : i32
    return %c0_i32, %c0_i32_0 : i32, i32
  }
  func.func @transform_2(%arg0: i32) -> (i32, i32) {
    %c0_i32 = arith.constant 0 : i32
    %c0_i32_0 = arith.constant 0 : i32
    %c0_i32_1 = arith.constant 0 : i32
    return %c0_i32, %c0_i32_0 : i32, i32
  }
  func.func @transform_3(%arg0: i32) -> (i32, i32) {
    %c0_i32 = arith.constant 0 : i32
    %c0_i32_0 = arith.constant 0 : i32
    return %arg0, %c0_i32 : i32, i32
  }
}

module attributes {stable_mosaic.version = 11 : i64} {
  func.func @_mm_bias_act_kernel(%arg0: i32, %arg1: memref<32x128xbf16, #tpu.memory_space<vmem>>, %arg2: memref<128x128xbf16, #tpu.memory_space<vmem>>, %arg3: memref<1x128xf32, #tpu.memory_space<vmem>>, %arg4: memref<32x128xf32, #tpu.memory_space<vmem>>) attributes {dimension_semantics = [#tpu.dimension_semantics<parallel>], iteration_bounds = array<i64: 1>, scalar_prefetch = 0 : i64, scratch_operands = 0 : i64, tpu.core_type = #tpu.core_type<tc>, window_params = [{transform_indices = @transform_0, window_bounds = array<i64: 32, 128>}, {pipeline_mode = #tpu.pipeline_mode<synchronous>, transform_indices = @transform_1, window_bounds = array<i64: 128, 128>}, {pipeline_mode = #tpu.pipeline_mode<synchronous>, transform_indices = @transform_2, window_bounds = array<i64: 1, 128>}, {transform_indices = @transform_3, window_bounds = array<i64: 32, 128>}]} {
    %c0 = arith.constant 0 : index
    %c0_0 = arith.constant 0 : index
    %0 = vector.load %arg1[%c0, %c0_0] : memref<32x128xbf16, #tpu.memory_space<vmem>>, vector<32x128xbf16>
    %c0_1 = arith.constant 0 : index
    %c0_2 = arith.constant 0 : index
    %1 = vector.load %arg2[%c0_1, %c0_2] : memref<128x128xbf16, #tpu.memory_space<vmem>>, vector<128x128xbf16>
    %cst = arith.constant dense<0.000000e+00> : vector<32x128xf32>
    %2 = tpu.matmul %0, %1, %cst {dimension_numbers = #tpu.dot_dimension_numbers<[1], [0], [0], [1], [0, 0, 1, 1], [], []>} : vector<32x128xbf16>, vector<128x128xbf16>, vector<32x128xf32> -> vector<32x128xf32>
    %c0_3 = arith.constant 0 : index
    %c0_4 = arith.constant 0 : index
    %3 = vector.load %arg3[%c0_3, %c0_4] : memref<1x128xf32, #tpu.memory_space<vmem>>, vector<1x128xf32>
    %4 = vector.broadcast %3 : vector<1x128xf32> to vector<32x128xf32>
    %5 = arith.addf %2, %4 : vector<32x128xf32>
    %c0_5 = arith.constant 0 : index
    %c0_6 = arith.constant 0 : index
    %6 = vector.load %arg4[%c0_5, %c0_6] : memref<32x128xf32, #tpu.memory_space<vmem>>, vector<32x128xf32>
    tpu.vector_store %arg4[%c0_5, %c0_6], %5 {strides = array<i32>} : memref<32x128xf32, #tpu.memory_space<vmem>>, vector<32x128xf32>,
    return
  }
  func.func @transform_0(%arg0: i32) -> (i32, i32) {
    %c0_i32 = arith.constant 0 : i32
    %c0_i32_0 = arith.constant 0 : i32
    return %arg0, %c0_i32 : i32, i32
  }
  func.func @transform_1(%arg0: i32) -> (i32, i32) {
    %c0_i32 = arith.constant 0 : i32
    %c0_i32_0 = arith.constant 0 : i32
    %c0_i32_1 = arith.constant 0 : i32
    return %c0_i32, %c0_i32_0 : i32, i32
  }
  func.func @transform_2(%arg0: i32) -> (i32, i32) {
    %c0_i32 = arith.constant 0 : i32
    %c0_i32_0 = arith.constant 0 : i32
    %c0_i32_1 = arith.constant 0 : i32
    return %c0_i32, %c0_i32_0 : i32, i32
  }
  func.func @transform_3(%arg0: i32) -> (i32, i32) {
    %c0_i32 = arith.constant 0 : i32
    %c0_i32_0 = arith.constant 0 : i32
    return %arg0, %c0_i32 : i32, i32
  }
}

module attributes {stable_mosaic.version = 11 : i64} {
  func.func @_mm_bias_act_kernel(%arg0: i32, %arg1: memref<96x128xbf16, #tpu.memory_space<vmem>>, %arg2: memref<128x128xbf16, #tpu.memory_space<vmem>>, %arg3: memref<1x128xf32, #tpu.memory_space<vmem>>, %arg4: memref<96x128xf32, #tpu.memory_space<vmem>>) attributes {dimension_semantics = [#tpu.dimension_semantics<parallel>], iteration_bounds = array<i64: 1>, scalar_prefetch = 0 : i64, scratch_operands = 0 : i64, tpu.core_type = #tpu.core_type<tc>, window_params = [{transform_indices = @transform_0, window_bounds = array<i64: 96, 128>}, {pipeline_mode = #tpu.pipeline_mode<synchronous>, transform_indices = @transform_1, window_bounds = array<i64: 128, 128>}, {pipeline_mode = #tpu.pipeline_mode<synchronous>, transform_indices = @transform_2, window_bounds = array<i64: 1, 128>}, {transform_indices = @transform_3, window_bounds = array<i64: 96, 128>}]} {
    %c0 = arith.constant 0 : index
    %c0_0 = arith.constant 0 : index
    %0 = vector.load %arg1[%c0, %c0_0] : memref<96x128xbf16, #tpu.memory_space<vmem>>, vector<96x128xbf16>
    %c0_1 = arith.constant 0 : index
    %c0_2 = arith.constant 0 : index
    %1 = vector.load %arg2[%c0_1, %c0_2] : memref<128x128xbf16, #tpu.memory_space<vmem>>, vector<128x128xbf16>
    %cst = arith.constant dense<0.000000e+00> : vector<96x128xf32>
    %2 = tpu.matmul %0, %1, %cst {dimension_numbers = #tpu.dot_dimension_numbers<[1], [0], [0], [1], [0, 0, 1, 1], [], []>} : vector<96x128xbf16>, vector<128x128xbf16>, vector<96x128xf32> -> vector<96x128xf32>
    %c0_3 = arith.constant 0 : index
    %c0_4 = arith.constant 0 : index
    %3 = vector.load %arg3[%c0_3, %c0_4] : memref<1x128xf32, #tpu.memory_space<vmem>>, vector<1x128xf32>
    %4 = vector.broadcast %3 : vector<1x128xf32> to vector<96x128xf32>
    %5 = arith.addf %2, %4 : vector<96x128xf32>
    %cst_5 = arith.constant 0.000000e+00 : f32
    %6 = vector.broadcast %cst_5 : f32 to vector<96x128xf32>
    %7 = arith.maximumf %5, %6 : vector<96x128xf32>
    %c0_6 = arith.constant 0 : index
    %c0_7 = arith.constant 0 : index
    %8 = vector.load %arg4[%c0_6, %c0_7] : memref<96x128xf32, #tpu.memory_space<vmem>>, vector<96x128xf32>
    tpu.vector_store %arg4[%c0_6, %c0_7], %7 {strides = array<i32>} : memref<96x128xf32, #tpu.memory_space<vmem>>, vector<96x128xf32>,
    return
  }
  func.func @transform_0(%arg0: i32) -> (i32, i32) {
    %c0_i32 = arith.constant 0 : i32
    %c0_i32_0 = arith.constant 0 : i32
    return %arg0, %c0_i32 : i32, i32
  }
  func.func @transform_1(%arg0: i32) -> (i32, i32) {
    %c0_i32 = arith.constant 0 : i32
    %c0_i32_0 = arith.constant 0 : i32
    %c0_i32_1 = arith.constant 0 : i32
    return %c0_i32, %c0_i32_0 : i32, i32
  }
  func.func @transform_2(%arg0: i32) -> (i32, i32) {
    %c0_i32 = arith.constant 0 : i32
    %c0_i32_0 = arith.constant 0 : i32
    %c0_i32_1 = arith.constant 0 : i32
    return %c0_i32, %c0_i32_0 : i32, i32
  }
  func.func @transform_3(%arg0: i32) -> (i32, i32) {
    %c0_i32 = arith.constant 0 : i32
    %c0_i32_0 = arith.constant 0 : i32
    return %arg0, %c0_i32 : i32, i32
  }
}

module attributes {stable_mosaic.version = 11 : i64} {
  func.func @_mm_bias_act_kernel(%arg0: i32, %arg1: memref<256x640xbf16, #tpu.memory_space<vmem>>, %arg2: memref<640x128xbf16, #tpu.memory_space<vmem>>, %arg3: memref<1x128xf32, #tpu.memory_space<vmem>>, %arg4: memref<256x128xf32, #tpu.memory_space<vmem>>) attributes {dimension_semantics = [#tpu.dimension_semantics<parallel>], iteration_bounds = array<i64: 2>, scalar_prefetch = 0 : i64, scratch_operands = 0 : i64, tpu.core_type = #tpu.core_type<tc>, window_params = [{transform_indices = @transform_0, window_bounds = array<i64: 256, 640>}, {pipeline_mode = #tpu.pipeline_mode<synchronous>, transform_indices = @transform_1, window_bounds = array<i64: 640, 128>}, {pipeline_mode = #tpu.pipeline_mode<synchronous>, transform_indices = @transform_2, window_bounds = array<i64: 1, 128>}, {transform_indices = @transform_3, window_bounds = array<i64: 256, 128>}]} {
    %c0 = arith.constant 0 : index
    %c0_0 = arith.constant 0 : index
    %0 = vector.load %arg1[%c0, %c0_0] : memref<256x640xbf16, #tpu.memory_space<vmem>>, vector<256x640xbf16>
    %c0_1 = arith.constant 0 : index
    %c0_2 = arith.constant 0 : index
    %1 = vector.load %arg2[%c0_1, %c0_2] : memref<640x128xbf16, #tpu.memory_space<vmem>>, vector<640x128xbf16>
    %cst = arith.constant dense<0.000000e+00> : vector<256x128xf32>
    %2 = tpu.matmul %0, %1, %cst {dimension_numbers = #tpu.dot_dimension_numbers<[1], [0], [0], [1], [0, 0, 1, 1], [], []>} : vector<256x640xbf16>, vector<640x128xbf16>, vector<256x128xf32> -> vector<256x128xf32>
    %c0_3 = arith.constant 0 : index
    %c0_4 = arith.constant 0 : index
    %3 = vector.load %arg3[%c0_3, %c0_4] : memref<1x128xf32, #tpu.memory_space<vmem>>, vector<1x128xf32>
    %4 = vector.broadcast %3 : vector<1x128xf32> to vector<256x128xf32>
    %5 = arith.addf %2, %4 : vector<256x128xf32>
    %cst_5 = arith.constant 0.000000e+00 : f32
    %6 = vector.broadcast %cst_5 : f32 to vector<256x128xf32>
    %7 = arith.maximumf %5, %6 : vector<256x128xf32>
    %c0_6 = arith.constant 0 : index
    %c0_7 = arith.constant 0 : index
    %8 = vector.load %arg4[%c0_6, %c0_7] : memref<256x128xf32, #tpu.memory_space<vmem>>, vector<256x128xf32>
    tpu.vector_store %arg4[%c0_6, %c0_7], %7 {strides = array<i32>} : memref<256x128xf32, #tpu.memory_space<vmem>>, vector<256x128xf32>,
    return
  }
  func.func @transform_0(%arg0: i32) -> (i32, i32) {
    %c0_i32 = arith.constant 0 : i32
    %c0_i32_0 = arith.constant 0 : i32
    return %arg0, %c0_i32 : i32, i32
  }
  func.func @transform_1(%arg0: i32) -> (i32, i32) {
    %c0_i32 = arith.constant 0 : i32
    %c0_i32_0 = arith.constant 0 : i32
    %c0_i32_1 = arith.constant 0 : i32
    return %c0_i32, %c0_i32_0 : i32, i32
  }
  func.func @transform_2(%arg0: i32) -> (i32, i32) {
    %c0_i32 = arith.constant 0 : i32
    %c0_i32_0 = arith.constant 0 : i32
    %c0_i32_1 = arith.constant 0 : i32
    return %c0_i32, %c0_i32_0 : i32, i32
  }
  func.func @transform_3(%arg0: i32) -> (i32, i32) {
    %c0_i32 = arith.constant 0 : i32
    %c0_i32_0 = arith.constant 0 : i32
    return %arg0, %c0_i32 : i32, i32
  }
}

module attributes {stable_mosaic.version = 11 : i64} {
  func.func @_mm_bias_act_kernel(%arg0: i32, %arg1: memref<256x384xbf16, #tpu.memory_space<vmem>>, %arg2: memref<384x128xbf16, #tpu.memory_space<vmem>>, %arg3: memref<1x128xf32, #tpu.memory_space<vmem>>, %arg4: memref<256x128xf32, #tpu.memory_space<vmem>>) attributes {dimension_semantics = [#tpu.dimension_semantics<parallel>], iteration_bounds = array<i64: 6>, scalar_prefetch = 0 : i64, scratch_operands = 0 : i64, tpu.core_type = #tpu.core_type<tc>, window_params = [{transform_indices = @transform_0, window_bounds = array<i64: 256, 384>}, {pipeline_mode = #tpu.pipeline_mode<synchronous>, transform_indices = @transform_1, window_bounds = array<i64: 384, 128>}, {pipeline_mode = #tpu.pipeline_mode<synchronous>, transform_indices = @transform_2, window_bounds = array<i64: 1, 128>}, {transform_indices = @transform_3, window_bounds = array<i64: 256, 128>}]} {
    %c0 = arith.constant 0 : index
    %c0_0 = arith.constant 0 : index
    %0 = vector.load %arg1[%c0, %c0_0] : memref<256x384xbf16, #tpu.memory_space<vmem>>, vector<256x384xbf16>
    %c0_1 = arith.constant 0 : index
    %c0_2 = arith.constant 0 : index
    %1 = vector.load %arg2[%c0_1, %c0_2] : memref<384x128xbf16, #tpu.memory_space<vmem>>, vector<384x128xbf16>
    %cst = arith.constant dense<0.000000e+00> : vector<256x128xf32>
    %2 = tpu.matmul %0, %1, %cst {dimension_numbers = #tpu.dot_dimension_numbers<[1], [0], [0], [1], [0, 0, 1, 1], [], []>} : vector<256x384xbf16>, vector<384x128xbf16>, vector<256x128xf32> -> vector<256x128xf32>
    %c0_3 = arith.constant 0 : index
    %c0_4 = arith.constant 0 : index
    %3 = vector.load %arg3[%c0_3, %c0_4] : memref<1x128xf32, #tpu.memory_space<vmem>>, vector<1x128xf32>
    %4 = vector.broadcast %3 : vector<1x128xf32> to vector<256x128xf32>
    %5 = arith.addf %2, %4 : vector<256x128xf32>
    %cst_5 = arith.constant 0.000000e+00 : f32
    %6 = vector.broadcast %cst_5 : f32 to vector<256x128xf32>
    %7 = arith.maximumf %5, %6 : vector<256x128xf32>
    %c0_6 = arith.constant 0 : index
    %c0_7 = arith.constant 0 : index
    %8 = vector.load %arg4[%c0_6, %c0_7] : memref<256x128xf32, #tpu.memory_space<vmem>>, vector<256x128xf32>
    tpu.vector_store %arg4[%c0_6, %c0_7], %7 {strides = array<i32>} : memref<256x128xf32, #tpu.memory_space<vmem>>, vector<256x128xf32>,
    return
  }
  func.func @transform_0(%arg0: i32) -> (i32, i32) {
    %c0_i32 = arith.constant 0 : i32
    %c0_i32_0 = arith.constant 0 : i32
    return %arg0, %c0_i32 : i32, i32
  }
  func.func @transform_1(%arg0: i32) -> (i32, i32) {
    %c0_i32 = arith.constant 0 : i32
    %c0_i32_0 = arith.constant 0 : i32
    %c0_i32_1 = arith.constant 0 : i32
    return %c0_i32, %c0_i32_0 : i32, i32
  }
  func.func @transform_2(%arg0: i32) -> (i32, i32) {
    %c0_i32 = arith.constant 0 : i32
    %c0_i32_0 = arith.constant 0 : i32
    %c0_i32_1 = arith.constant 0 : i32
    return %c0_i32, %c0_i32_0 : i32, i32
  }
  func.func @transform_3(%arg0: i32) -> (i32, i32) {
    %c0_i32 = arith.constant 0 : i32
    %c0_i32_0 = arith.constant 0 : i32
    return %arg0, %c0_i32 : i32, i32
  }
}

module attributes {stable_mosaic.version = 11 : i64} {
  func.func @_mm_bias_act_kernel(%arg0: i32, %arg1: memref<256x128xbf16, #tpu.memory_space<vmem>>, %arg2: memref<128x128xbf16, #tpu.memory_space<vmem>>, %arg3: memref<1x128xf32, #tpu.memory_space<vmem>>, %arg4: memref<256x128xf32, #tpu.memory_space<vmem>>) attributes {dimension_semantics = [#tpu.dimension_semantics<parallel>], iteration_bounds = array<i64: 6>, scalar_prefetch = 0 : i64, scratch_operands = 0 : i64, tpu.core_type = #tpu.core_type<tc>, window_params = [{transform_indices = @transform_0, window_bounds = array<i64: 256, 128>}, {pipeline_mode = #tpu.pipeline_mode<synchronous>, transform_indices = @transform_1, window_bounds = array<i64: 128, 128>}, {pipeline_mode = #tpu.pipeline_mode<synchronous>, transform_indices = @transform_2, window_bounds = array<i64: 1, 128>}, {transform_indices = @transform_3, window_bounds = array<i64: 256, 128>}]} {
    %c0 = arith.constant 0 : index
    %c0_0 = arith.constant 0 : index
    %0 = vector.load %arg1[%c0, %c0_0] : memref<256x128xbf16, #tpu.memory_space<vmem>>, vector<256x128xbf16>
    %c0_1 = arith.constant 0 : index
    %c0_2 = arith.constant 0 : index
    %1 = vector.load %arg2[%c0_1, %c0_2] : memref<128x128xbf16, #tpu.memory_space<vmem>>, vector<128x128xbf16>
    %cst = arith.constant dense<0.000000e+00> : vector<256x128xf32>
    %2 = tpu.matmul %0, %1, %cst {dimension_numbers = #tpu.dot_dimension_numbers<[1], [0], [0], [1], [0, 0, 1, 1], [], []>} : vector<256x128xbf16>, vector<128x128xbf16>, vector<256x128xf32> -> vector<256x128xf32>
    %c0_3 = arith.constant 0 : index
    %c0_4 = arith.constant 0 : index
    %3 = vector.load %arg3[%c0_3, %c0_4] : memref<1x128xf32, #tpu.memory_space<vmem>>, vector<1x128xf32>
    %4 = vector.broadcast %3 : vector<1x128xf32> to vector<256x128xf32>
    %5 = arith.addf %2, %4 : vector<256x128xf32>
    %c0_5 = arith.constant 0 : index
    %c0_6 = arith.constant 0 : index
    %6 = vector.load %arg4[%c0_5, %c0_6] : memref<256x128xf32, #tpu.memory_space<vmem>>, vector<256x128xf32>
    tpu.vector_store %arg4[%c0_5, %c0_6], %5 {strides = array<i32>} : memref<256x128xf32, #tpu.memory_space<vmem>>, vector<256x128xf32>,
    return
  }
  func.func @transform_0(%arg0: i32) -> (i32, i32) {
    %c0_i32 = arith.constant 0 : i32
    %c0_i32_0 = arith.constant 0 : i32
    return %arg0, %c0_i32 : i32, i32
  }
  func.func @transform_1(%arg0: i32) -> (i32, i32) {
    %c0_i32 = arith.constant 0 : i32
    %c0_i32_0 = arith.constant 0 : i32
    %c0_i32_1 = arith.constant 0 : i32
    return %c0_i32, %c0_i32_0 : i32, i32
  }
  func.func @transform_2(%arg0: i32) -> (i32, i32) {
    %c0_i32 = arith.constant 0 : i32
    %c0_i32_0 = arith.constant 0 : i32
    %c0_i32_1 = arith.constant 0 : i32
    return %c0_i32, %c0_i32_0 : i32, i32
  }
  func.func @transform_3(%arg0: i32) -> (i32, i32) {
    %c0_i32 = arith.constant 0 : i32
    %c0_i32_0 = arith.constant 0 : i32
    return %arg0, %c0_i32 : i32, i32
  }
}

</mosaic_0001>

<llo_original>
// kernel: ulosd_forward.14
$region0: #{ulosd_forward.14}
  #allocation0 [shape = 'u32[]', space=smem, size = 0x4, offset = 0x4, fixed_abs, tag = 'smem constant byte address 0x4 - core index']
  #allocation1 [shape = 'u32[144,128]{1,0:T(1,128)}', space=vmem, size = 0x12000, scoped, tag = 'internal scratch']
  %s0 = inlined_call_operand.vmem [shape: bf16[1536,128], index: 0, kind: input, shape index: {}]
  %s1 = inlined_call_operand.vmem [shape: bf16[128,128], index: 1, kind: input, shape index: {}]
  %s2 = inlined_call_operand.vmem [shape: f32[1,128], index: 2, kind: input, shape index: {}]
  %s3 = inlined_call_operand.vmem [shape: f32[1536,128], index: 3, kind: output, shape index: {}]
  %s4 = sld [smem:[#allocation0]]
  $region45: #{ulosd_forward.14} parent=0
    _
  %s6 = ssub.s32 1, %s4
  %s7 = scalar_select 0, %s6, %s4
  loop: start=0, step=1, limit=8
  $region2: #{ulosd_forward.14} parent=0 // loop_pre_header
    _
  $region3: #{ulosd_forward.14} parent=0 // loop_header
    %s9 = sphi 0, %s13
    %p10 = scmp.ge.s32.totalorder %s9, 8
    %s19 = sphi 0, %s21
    %s22 = sphi 0, %s19
    %s23 = sphi 0, %s22
    %s39 = sphi 0, %s23
    %s43 = sphi 0, %s43
    %s45 = sphi 0, %s43
    %s46 = sphi 0, %s45
    %s60 = sphi 0, %s46
    %s64 = sphi 0, %s64
    %s66 = sphi 0, %s64
    %s67 = sphi 0, %s66
    %s81 = sphi 0, %s67
    %s87 = sphi 0, %s89
    %s90 = sphi 0, %s87
    %s91 = sphi 0, %s90
    %s107 = sphi 0, %s91
  $region4: #{ulosd_forward.14} parent=0 // loop_header_branch
    %12 = sbr.rel (%p10) target = $region8
  $region5: #{ulosd_forward.14} parent=0 // loop_body
    %s14 = ssub.s32 %s9, 1
    %s15 = ssub.s32 %s9, 2
    %s16 = sadd.s32 %s9, 1
    %s17 = ssub.s32 %s9, %s16
    %p18 = scmp.eq.s32.totalorder %s17, 0
    %s20 = sadd.s32 %s19, 1
    %s21 = scalar_select %p18, %s19, %s20
    %p24 = pneg %p18
    %p25 = scmp.eq.s32.totalorder %s9, 5
    %p26 = por %p24, %p25
    %p27 = scmp.ne.s32.totalorder %s19, %s22
    %p28 = scmp.eq.s32.totalorder %s9, 0
    %p29 = por %p27, %p28
    %p30 = scmp.ne.s32.totalorder %s19, %s22
    %p31 = scmp.eq.s32.totalorder %s14, 5
    %p32 = por %p30, %p31
    %p33 = scmp.ne.s32.totalorder %s22, %s23
    %p34 = scmp.eq.s32.totalorder %s14, 0
    %p35 = por %p33, %p34
    %p36 = scmp.ne.s32.totalorder %s22, %s23
    %p37 = scmp.eq.s32.totalorder %s15, 5
    %p38 = por %p36, %p37
    %p40 = scmp.ne.s32.totalorder %s23, %s39
    %p41 = scmp.eq.s32.totalorder %s15, 0
    %p42 = por %p40, %p41
    %s44 = sadd.s32 %s43, 1
    %p47 = scmp.eq.s32.totalorder %s9, 5
    %p48 = scmp.ne.s32.totalorder %s43, %s45
    %p49 = scmp.eq.s32.totalorder %s9, 0
    %p50 = por %p48, %p49
    %p51 = scmp.ne.s32.totalorder %s43, %s45
    %p52 = scmp.eq.s32.totalorder %s14, 5
    %p53 = por %p51, %p52
    %p54 = scmp.ne.s32.totalorder %s45, %s46
    %p55 = scmp.eq.s32.totalorder %s14, 0
    %p56 = por %p54, %p55
    %p57 = scmp.ne.s32.totalorder %s45, %s46
    %p58 = scmp.eq.s32.totalorder %s15, 5
    %p59 = por %p57, %p58
    %p61 = scmp.ne.s32.totalorder %s46, %s60
    %p62 = scmp.eq.s32.totalorder %s15, 0
    %p63 = por %p61, %p62
    %s65 = sadd.s32 %s64, 1
    %p68 = scmp.eq.s32.totalorder %s9, 5
    %p69 = scmp.ne.s32.totalorder %s64, %s66
    %p70 = scmp.eq.s32.totalorder %s9, 0
    %p71 = por %p69, %p70
    %p72 = scmp.ne.s32.totalorder %s64, %s66
    %p73 = scmp.eq.s32.totalorder %s14, 5
    %p74 = por %p72, %p73
    %p75 = scmp.ne.s32.totalorder %s66, %s67
    %p76 = scmp.eq.s32.totalorder %s14, 0
    %p77 = por %p75, %p76
    %p78 = scmp.ne.s32.totalorder %s66, %s67
    %p79 = scmp.eq.s32.totalorder %s15, 5
    %p80 = por %p78, %p79
    %p82 = scmp.ne.s32.totalorder %s67, %s81
    %p83 = scmp.eq.s32.totalorder %s15, 0
    %p84 = por %p82, %p83
    %s85 = ssub.s32 %s9, %s16
    %p86 = scmp.eq.s32.totalorder %s85, 0
    %s88 = sadd.s32 %s87, 1
    %s89 = scalar_select %p86, %s87, %s88
    %p92 = pneg %p86
    %p93 = scmp.eq.s32.totalorder %s9, 5
    %p94 = por %p92, %p93
    %p95 = scmp.ne.s32.totalorder %s87, %s90
    %p96 = scmp.eq.s32.totalorder %s9, 0
    %p97 = por %p95, %p96
    %p98 = scmp.ne.s32.totalorder %s87, %s90
    %p99 = scmp.eq.s32.totalorder %s14, 5
    %p100 = por %p98, %p99
    %p101 = scmp.ne.s32.totalorder %s90, %s91
    %p102 = scmp.eq.s32.totalorder %s14, 0
    %p103 = por %p101, %p102
    %p104 = scmp.ne.s32.totalorder %s90, %s91
    %p105 = scmp.eq.s32.totalorder %s15, 5
    %p106 = por %p104, %p105
    %p108 = scmp.ne.s32.totalorder %s91, %s107
    %p109 = scmp.eq.s32.totalorder %s15, 0
    %p110 = por %p108, %p109
    %p111 = scmp.le.s32.totalorder 1, %s9
    %p112 = scmp.lt.s32.totalorder %s9, 7
    %p113 = pnand %p111, %p112
    %p114 = pneg %p113
    // Predicated region
    $region9: #{ulosd_forward.14} parent=5 // pred_check
      _
    $region10: #{ulosd_forward.14} parent=5 // pred_check_branch
      %116 = sbr.rel (%p113) target = $region12
    $region11: #{ulosd_forward.14} parent=5 // pred_region
      %s117 = ssub.s32 %s9, 1
      // Predicated region
      $region13: #{ulosd_forward.14} parent=11 // pred_check
        %p118 = pneg %p56
      $region14: #{ulosd_forward.14} parent=11 // pred_check_branch
        %120 = sbr.rel (%p118) target = $region16
      $region15: #{ulosd_forward.14} parent=11 // pred_region
        _
      $region16: #{ulosd_forward.14} parent=11 // pred_fallthru
        _
      // Predicated region
      $region17: #{ulosd_forward.14} parent=11 // pred_check
        %p121 = pneg %p77
      $region18: #{ulosd_forward.14} parent=11 // pred_check_branch
        %123 = sbr.rel (%p121) target = $region20
      $region19: #{ulosd_forward.14} parent=11 // pred_region
        _
      $region20: #{ulosd_forward.14} parent=11 // pred_fallthru
        _
    $region12: #{ulosd_forward.14} parent=5 // pred_fallthru
      _
    %p124 = scmp.lt.s32.totalorder %s9, 6
    // Predicated region
    $region21: #{ulosd_forward.14} parent=5 // pred_check
      %p125 = pneg %p124
    $region22: #{ulosd_forward.14} parent=5 // pred_check_branch
      %127 = sbr.rel (%p125) target = $region24
    $region23: #{ulosd_forward.14} parent=5 // pred_region
      // Predicated region
      $region25: #{ulosd_forward.14} parent=23 // pred_check
        %p128 = pneg %p29
      $region26: #{ulosd_forward.14} parent=23 // pred_check_branch
        %130 = sbr.rel (%p128) target = $region28
      $region27: #{ulosd_forward.14} parent=23 // pred_region
        %s131 = smul.u32 32, %s9
        %p132 = scmp.lt.s32.totalorder %s131, 191
        %s133 = scalar_select %p132, %s131, 191
        %s134 = smul.addr %s133, 4
        %s135 = scalar_lea.vmem %s0, %s134
        %s136 = smul.u32 32, %s9
      $region28: #{ulosd_forward.14} parent=23 // pred_fallthru
        _
    $region24: #{ulosd_forward.14} parent=5 // pred_fallthru
      _
    %p137 = scmp.le.s32.totalorder 1, %s9
    %p138 = scmp.lt.s32.totalorder %s9, 7
    %p139 = pnand %p137, %p138
    %p140 = pneg %p139
    // Predicated region
    $region29: #{ulosd_forward.14} parent=5 // pred_check
      _
    $region30: #{ulosd_forward.14} parent=5 // pred_check_branch
      %142 = sbr.rel (%p139) target = $region32
    $region31: #{ulosd_forward.14} parent=5 // pred_region
      %s143 = ssub.s32 %s9, 1
      %s144 = smul.u32 32, %s14
      %p145 = scmp.lt.s32.totalorder %s144, 191
      %s146 = scalar_select %p145, %s144, 191
      %s147 = smul.addr %s146, 4
      %s148 = scalar_lea.vmem %s0, %s147
      %p149 = pneg %p35
      %p150 = pneg %p32
      %p151 = pneg %p56
      %p152 = pneg %p53
      %p153 = pneg %p77
      %p154 = pneg %p74
      %p155 = pneg %p103
      %p156 = pneg %p100
      %s157 = smul.u32 32, %s14
      %p158 = scmp.lt.s32.totalorder %s157, 191
      %s159 = scalar_select %p158, %s157, 191
      %s160 = smul.addr %s159, 8
      %s161 = scalar_lea.vmem %s3, %s160
      %s162 = smul.u32 32, %s14
      %p163 = scmp.lt.s32.totalorder %s162, 191
      %s164 = scalar_select %p163, %s162, 191
      %s165 = smul.addr %s164, 4
      %s166 = scalar_lea.vmem %s0, %s165
      %s167 = smul.u32 32, %s14
      %s168 = smul.u32 32, %s14
      %p169 = scmp.lt.s32.totalorder %s168, 191
      %s170 = scalar_select %p169, %s168, 191
      %s171 = smul.addr %s170, 8
      %s172 = scalar_lea.vmem %s3, %s171
      %s173 = smul.u32 32, %s14
      %v175 = vld [vmem:[%s166] sm:$0xf]
      %v176 = vld [vmem:[%s166 + $0x4] sm:$0xf]
      %v177 = vld [vmem:[%s166 + $0x8] sm:$0xf]
      %v178 = vld [vmem:[%s166 + $0xc] sm:$0xf]
      %v179 = vld [vmem:[%s166 + $0x10] sm:$0xf]
      %v180 = vld [vmem:[%s166 + $0x14] sm:$0xf]
      %v181 = vld [vmem:[%s166 + $0x18] sm:$0xf]
      %v182 = vld [vmem:[%s166 + $0x1c] sm:$0xf]
      %v183 = vld [vmem:[%s166 + $0x20] sm:$0xf]
      %v184 = vld [vmem:[%s166 + $0x24] sm:$0xf]
      %v185 = vld [vmem:[%s166 + $0x28] sm:$0xf]
      %v186 = vld [vmem:[%s166 + $0x2c] sm:$0xf]
      %v187 = vld [vmem:[%s166 + $0x30] sm:$0xf]
      %v188 = vld [vmem:[%s166 + $0x34] sm:$0xf]
      %v189 = vld [vmem:[%s166 + $0x38] sm:$0xf]
      %v190 = vld [vmem:[%s166 + $0x3c] sm:$0xf]
      %v191 = vld [vmem:[%s166 + $0x40] sm:$0xf]
      %v192 = vld [vmem:[%s166 + $0x44] sm:$0xf]
      %v193 = vld [vmem:[%s166 + $0x48] sm:$0xf]
      %v194 = vld [vmem:[%s166 + $0x4c] sm:$0xf]
      %v195 = vld [vmem:[%s166 + $0x50] sm:$0xf]
      %v196 = vld [vmem:[%s166 + $0x54] sm:$0xf]
      %v197 = vld [vmem:[%s166 + $0x58] sm:$0xf]
      %v198 = vld [vmem:[%s166 + $0x5c] sm:$0xf]
      %v199 = vld [vmem:[%s166 + $0x60] sm:$0xf]
      %v200 = vld [vmem:[%s166 + $0x64] sm:$0xf]
      %v201 = vld [vmem:[%s166 + $0x68] sm:$0xf]
      %v202 = vld [vmem:[%s166 + $0x6c] sm:$0xf]
      %v203 = vld [vmem:[%s166 + $0x70] sm:$0xf]
      %v204 = vld [vmem:[%s166 + $0x74] sm:$0xf]
      %v205 = vld [vmem:[%s166 + $0x78] sm:$0xf]
      %v206 = vld [vmem:[%s166 + $0x7c] sm:$0xf]
      %v207 = vld [vmem:[%s1] sm:$0xf]
      %v208 = vld [vmem:[%s1 + $0x4] sm:$0xf]
      %v209 = vld [vmem:[%s1 + $0x8] sm:$0xf]
      %v210 = vld [vmem:[%s1 + $0xc] sm:$0xf]
      %v211 = vld [vmem:[%s1 + $0x10] sm:$0xf]
      %v212 = vld [vmem:[%s1 + $0x14] sm:$0xf]
      %v213 = vld [vmem:[%s1 + $0x18] sm:$0xf]
      %v214 = vld [vmem:[%s1 + $0x1c] sm:$0xf]
      %v215 = vld [vmem:[%s1 + $0x20] sm:$0xf]
      %v216 = vld [vmem:[%s1 + $0x24] sm:$0xf]
      %v217 = vld [vmem:[%s1 + $0x28] sm:$0xf]
      %v218 = vld [vmem:[%s1 + $0x2c] sm:$0xf]
      %v219 = vld [vmem:[%s1 + $0x30] sm:$0xf]
      %v220 = vld [vmem:[%s1 + $0x34] sm:$0xf]
      %v221 = vld [vmem:[%s1 + $0x38] sm:$0xf]
      %v222 = vld [vmem:[%s1 + $0x3c] sm:$0xf]
      %v223 = vld [vmem:[%s2] sm:$0x1]
      %v225 = vlaneseq
      %v226 = vshrl.u32 %v225, 7
      %v227 = vsub.s32 0, %v226
      %v228 = vrot.slane %v223, %v227
      %v262 = vunpack.c.l.b16 %v175
      %v263 = vunpack.c.l.b16 %v176
      %v264 = vunpack.c.l.b16 %v177
      %v265 = vunpack.c.l.b16 %v178
      %v266 = vunpack.c.l.b16 %v179
      %v267 = vunpack.c.l.b16 %v180
      %v268 = vunpack.c.l.b16 %v181
      %v269 = vunpack.c.l.b16 %v182
      %v270 = vunpack.c.l.b16 %v183
      %v271 = vunpack.c.l.b16 %v184
      %v272 = vunpack.c.l.b16 %v185
      %v273 = vunpack.c.l.b16 %v186
      %v274 = vunpack.c.l.b16 %v187
      %v275 = vunpack.c.l.b16 %v188
      %v276 = vunpack.c.l.b16 %v189
      %v277 = vunpack.c.l.b16 %v190
      %v278 = vunpack.c.l.b16 %v191
      %v279 = vunpack.c.l.b16 %v192
      %v280 = vunpack.c.l.b16 %v193
      %v281 = vunpack.c.l.b16 %v194
      %v282 = vunpack.c.l.b16 %v195
      %v283 = vunpack.c.l.b16 %v196
      %v284 = vunpack.c.l.b16 %v197
      %v285 = vunpack.c.l.b16 %v198
      %v286 = vunpack.c.l.b16 %v199
      %v287 = vunpack.c.l.b16 %v200
      %v288 = vunpack.c.l.b16 %v201
      %v289 = vunpack.c.l.b16 %v202
      %v290 = vunpack.c.l.b16 %v203
      %v291 = vunpack.c.l.b16 %v204
      %v292 = vunpack.c.l.b16 %v205
      %v293 = vunpack.c.l.b16 %v206
      %v294 = vpack.c.b16 %v263, %v262
      %v295 = vpack.c.b16 %v265, %v264
      %v296 = vpack.c.b16 %v267, %v266
      %v297 = vpack.c.b16 %v269, %v268
      %v298 = vpack.c.b16 %v271, %v270
      %v299 = vpack.c.b16 %v273, %v272
      %v300 = vpack.c.b16 %v275, %v274
      %v301 = vpack.c.b16 %v277, %v276
      %v302 = vpack.c.b16 %v279, %v278
      %v303 = vpack.c.b16 %v281, %v280
      %v304 = vpack.c.b16 %v283, %v282
      %v305 = vpack.c.b16 %v285, %v284
      %v306 = vpack.c.b16 %v287, %v286
      %v307 = vpack.c.b16 %v289, %v288
      %v308 = vpack.c.b16 %v291, %v290
      %v309 = vpack.c.b16 %v293, %v292
      %v342 = vunpack.c.l.b16 %v207
      %v343 = vunpack.c.l.b16 %v208
      %v344 = vunpack.c.l.b16 %v209
      %v345 = vunpack.c.l.b16 %v210
      %v346 = vunpack.c.l.b16 %v211
      %v347 = vunpack.c.l.b16 %v212
      %v348 = vunpack.c.l.b16 %v213
      %v349 = vunpack.c.l.b16 %v214
      %v350 = vunpack.c.l.b16 %v215
      %v351 = vunpack.c.l.b16 %v216
      %v352 = vunpack.c.l.b16 %v217
      %v353 = vunpack.c.l.b16 %v218
      %v354 = vunpack.c.l.b16 %v219
      %v355 = vunpack.c.l.b16 %v220
      %v356 = vunpack.c.l.b16 %v221
      %v357 = vunpack.c.l.b16 %v222
      %v358 = vpack.c.b16 %v343, %v342
      %v359 = vpack.c.b16 %v345, %v344
      %v360 = vpack.c.b16 %v347, %v346
      %v361 = vpack.c.b16 %v349, %v348
      %v362 = vpack.c.b16 %v351, %v350
      %v363 = vpack.c.b16 %v353, %v352
      %v364 = vpack.c.b16 %v355, %v354
      %v365 = vpack.c.b16 %v357, %v356
      %374 = vmatprep.subr.bf16.mxu0 0
      %375 = vmatpush1.bf16.msra.mxu0 %v358
      %376 = vmatprep.subr.bf16.mxu0 0
      %377 = vmatpush1.bf16.msra.mxu0 %v359
      %378 = vmatprep.subr.bf16.mxu0 0
      %379 = vmatpush1.bf16.msra.mxu0 %v360
      %380 = vmatprep.subr.bf16.mxu0 0
      %381 = vmatpush1.bf16.msra.mxu0 %v361
      %382 = vmatprep.subr.bf16.mxu0 0
      %383 = vmatpush1.bf16.msra.mxu0 %v362
      %384 = vmatprep.subr.bf16.mxu0 0
      %385 = vmatpush1.bf16.msra.mxu0 %v363
      %386 = vmatprep.subr.bf16.mxu0 0
      %387 = vmatpush1.bf16.msra.mxu0 %v364
      %388 = vmatprep.subr.bf16.mxu0 0
      %389 = vmatpush1.bf16.msra.mxu0 %v365
      %390 = vmatprep.subr.bf16.mxu0 0
      %391 = vmatpush1.bf16.msra.mxu0 0
      %392 = vmatprep.subr.bf16.mxu0 0
      %393 = vmatpush1.bf16.msra.mxu0 0
      %394 = vmatprep.subr.bf16.mxu0 0
      %395 = vmatpush1.bf16.msra.mxu0 0
      %396 = vmatprep.subr.bf16.mxu0 0
      %397 = vmatpush1.bf16.msra.mxu0 0
      %398 = vmatprep.subr.bf16.mxu0 0
      %399 = vmatpush1.bf16.msra.mxu0 0
      %400 = vmatprep.subr.bf16.mxu0 0
      %401 = vmatpush1.bf16.msra.mxu0 0
      %402 = vmatprep.subr.bf16.mxu0 0
      %403 = vmatpush1.bf16.msra.mxu0 0
      %404 = vmatprep.subr.bf16.mxu0 0
      %405 = vmatpush1.bf16.msra.mxu0 0
      %406 = vmatprep.mubr.bf16.mxu0 0
      %407 = vmatmul.mubr.bf16.gmra.mrb[0].mxu0 %v294
      %v408 = vpop.f32.mrb[0].mxu0
      %v409 = vadd.f32 %v228, %v408
      %v410 = vpop.f32.mrb[0].mxu0
      %v411 = vpop.f32.mrb[0].mxu0
      %v412 = vadd.f32 %v228, %v411
      %v413 = vpop.f32.mrb[0].mxu0
      %414 = vmatprep.mubr.bf16.mxu0 0
      %415 = vmatmul.mubr.bf16.gmra.mrb[0].mxu0 %v295
      %v416 = vpop.f32.mrb[0].mxu0
      %v417 = vadd.f32 %v228, %v416
      %v418 = vpop.f32.mrb[0].mxu0
      %v419 = vpop.f32.mrb[0].mxu0
      %v420 = vadd.f32 %v228, %v419
      %v421 = vpop.f32.mrb[0].mxu0
      %422 = vmatprep.mubr.bf16.mxu0 0
      %423 = vmatmul.mubr.bf16.gmra.mrb[0].mxu0 %v296
      %v424 = vpop.f32.mrb[0].mxu0
      %v425 = vadd.f32 %v228, %v424
      %v426 = vpop.f32.mrb[0].mxu0
      %v427 = vpop.f32.mrb[0].mxu0
      %v428 = vadd.f32 %v228, %v427
      %v429 = vpop.f32.mrb[0].mxu0
      %430 = vmatprep.mubr.bf16.mxu0 0
      %431 = vmatmul.mubr.bf16.gmra.mrb[0].mxu0 %v297
      %v432 = vpop.f32.mrb[0].mxu0
      %v433 = vadd.f32 %v228, %v432
      %v434 = vpop.f32.mrb[0].mxu0
      %v435 = vpop.f32.mrb[0].mxu0
      %v436 = vadd.f32 %v228, %v435
      %v437 = vpop.f32.mrb[0].mxu0
      %438 = vmatprep.mubr.bf16.mxu0 0
      %439 = vmatmul.mubr.bf16.gmra.mrb[0].mxu0 %v298
      %v440 = vpop.f32.mrb[0].mxu0
      %v441 = vadd.f32 %v228, %v440
      %v442 = vpop.f32.mrb[0].mxu0
      %v443 = vpop.f32.mrb[0].mxu0
      %v444 = vadd.f32 %v228, %v443
      %v445 = vpop.f32.mrb[0].mxu0
      %446 = vmatprep.mubr.bf16.mxu0 0
      %447 = vmatmul.mubr.bf16.gmra.mrb[0].mxu0 %v299
      %v448 = vpop.f32.mrb[0].mxu0
      %v449 = vadd.f32 %v228, %v448
      %v450 = vpop.f32.mrb[0].mxu0
      %v451 = vpop.f32.mrb[0].mxu0
      %v452 = vadd.f32 %v228, %v451
      %v453 = vpop.f32.mrb[0].mxu0
      %454 = vmatprep.mubr.bf16.mxu0 0
      %455 = vmatmul.mubr.bf16.gmra.mrb[0].mxu0 %v300
      %v456 = vpop.f32.mrb[0].mxu0
      %v457 = vadd.f32 %v228, %v456
      %v458 = vpop.f32.mrb[0].mxu0
      %v459 = vpop.f32.mrb[0].mxu0
      %v460 = vadd.f32 %v228, %v459
      %v461 = vpop.f32.mrb[0].mxu0
      %462 = vmatprep.mubr.bf16.mxu0 0
      %463 = vmatmul.mubr.bf16.gmra.mrb[0].mxu0 %v301
      %v464 = vpop.f32.mrb[0].mxu0
      %v465 = vadd.f32 %v228, %v464
      %v466 = vpop.f32.mrb[0].mxu0
      %v467 = vpop.f32.mrb[0].mxu0
      %v468 = vadd.f32 %v228, %v467
      %v469 = vpop.f32.mrb[0].mxu0
      %470 = vmatprep.mubr.bf16.mxu0 0
      %471 = vmatmul.mubr.bf16.gmra.mrb[0].mxu0 %v302
      %v472 = vpop.f32.mrb[0].mxu0
      %v473 = vadd.f32 %v228, %v472
      %v474 = vpop.f32.mrb[0].mxu0
      %v475 = vpop.f32.mrb[0].mxu0
      %v476 = vadd.f32 %v228, %v475
      %v477 = vpop.f32.mrb[0].mxu0
      %478 = vmatprep.mubr.bf16.mxu0 0
      %479 = vmatmul.mubr.bf16.gmra.mrb[0].mxu0 %v303
      %v480 = vpop.f32.mrb[0].mxu0
      %v481 = vadd.f32 %v228, %v480
      %v482 = vpop.f32.mrb[0].mxu0
      %v483 = vpop.f32.mrb[0].mxu0
      %v484 = vadd.f32 %v228, %v483
      %v485 = vpop.f32.mrb[0].mxu0
      %486 = vmatprep.mubr.bf16.mxu0 0
      %487 = vmatmul.mubr.bf16.gmra.mrb[0].mxu0 %v304
      %v488 = vpop.f32.mrb[0].mxu0
      %v489 = vadd.f32 %v228, %v488
      %v490 = vpop.f32.mrb[0].mxu0
      %v491 = vpop.f32.mrb[0].mxu0
      %v492 = vadd.f32 %v228, %v491
      %v493 = vpop.f32.mrb[0].mxu0
      %494 = vmatprep.mubr.bf16.mxu0 0
      %495 = vmatmul.mubr.bf16.gmra.mrb[0].mxu0 %v305
      %v496 = vpop.f32.mrb[0].mxu0
      %v497 = vadd.f32 %v228, %v496
      %v498 = vpop.f32.mrb[0].mxu0
      %v499 = vpop.f32.mrb[0].mxu0
      %v500 = vadd.f32 %v228, %v499
      %v501 = vpop.f32.mrb[0].mxu0
      %502 = vmatprep.mubr.bf16.mxu0 0
      %503 = vmatmul.mubr.bf16.gmra.mrb[0].mxu0 %v306
      %v504 = vpop.f32.mrb[0].mxu0
      %v505 = vadd.f32 %v228, %v504
      %v506 = vpop.f32.mrb[0].mxu0
      %v507 = vpop.f32.mrb[0].mxu0
      %v508 = vadd.f32 %v228, %v507
      %v509 = vpop.f32.mrb[0].mxu0
      %510 = vmatprep.mubr.bf16.mxu0 0
      %511 = vmatmul.mubr.bf16.gmra.mrb[0].mxu0 %v307
      %v512 = vpop.f32.mrb[0].mxu0
      %v513 = vadd.f32 %v228, %v512
      %v514 = vpop.f32.mrb[0].mxu0
      %v515 = vpop.f32.mrb[0].mxu0
      %v516 = vadd.f32 %v228, %v515
      %v517 = vpop.f32.mrb[0].mxu0
      %518 = vmatprep.mubr.bf16.mxu0 0
      %519 = vmatmul.mubr.bf16.gmra.mrb[0].mxu0 %v308
      %v520 = vpop.f32.mrb[0].mxu0
      %v521 = vadd.f32 %v228, %v520
      %v522 = vpop.f32.mrb[0].mxu0
      %v523 = vpop.f32.mrb[0].mxu0
      %v524 = vadd.f32 %v228, %v523
      %v525 = vpop.f32.mrb[0].mxu0
      %526 = vmatprep.mubr.bf16.mxu0 0
      %527 = vmatmul.mubr.bf16.gmra.mrb[0].mxu0 %v309
      %v528 = vpop.f32.mrb[0].mxu0
      %v529 = vadd.f32 %v228, %v528
      %v530 = vpop.f32.mrb[0].mxu0
      %v531 = vpop.f32.mrb[0].mxu0
      %v532 = vadd.f32 %v228, %v531
      %v533 = vpop.f32.mrb[0].mxu0
      %534 = vdwg.mxu0
      %v535 = vmax.f32 %v409, 0.0
      %v536 = vmax.f32 %v412, 0.0
      %v537 = vmax.f32 %v417, 0.0
      %v538 = vmax.f32 %v420, 0.0
      %v539 = vmax.f32 %v425, 0.0
      %v540 = vmax.f32 %v428, 0.0
      %v541 = vmax.f32 %v433, 0.0
      %v542 = vmax.f32 %v436, 0.0
      %v543 = vmax.f32 %v441, 0.0
      %v544 = vmax.f32 %v444, 0.0
      %v545 = vmax.f32 %v449, 0.0
      %v546 = vmax.f32 %v452, 0.0
      %v547 = vmax.f32 %v457, 0.0
      %v548 = vmax.f32 %v460, 0.0
      %v549 = vmax.f32 %v465, 0.0
      %v550 = vmax.f32 %v468, 0.0
      %v551 = vmax.f32 %v473, 0.0
      %v552 = vmax.f32 %v476, 0.0
      %v553 = vmax.f32 %v481, 0.0
      %v554 = vmax.f32 %v484, 0.0
      %v555 = vmax.f32 %v489, 0.0
      %v556 = vmax.f32 %v492, 0.0
      %v557 = vmax.f32 %v497, 0.0
      %v558 = vmax.f32 %v500, 0.0
      %v559 = vmax.f32 %v505, 0.0
      %v560 = vmax.f32 %v508, 0.0
      %v561 = vmax.f32 %v513, 0.0
      %v562 = vmax.f32 %v516, 0.0
      %v563 = vmax.f32 %v521, 0.0
      %v564 = vmax.f32 %v524, 0.0
      %v565 = vmax.f32 %v529, 0.0
      %v566 = vmax.f32 %v532, 0.0
      %567 = vst [vmem:[%s172] sm:$0xff] %v535
      %568 = vst [vmem:[%s172 + $0x8] sm:$0xff] %v536
      %569 = vst [vmem:[%s172 + $0x10] sm:$0xff] %v537
      %570 = vst [vmem:[%s172 + $0x18] sm:$0xff] %v538
      %571 = vst [vmem:[%s172 + $0x20] sm:$0xff] %v539
      %572 = vst [vmem:[%s172 + $0x28] sm:$0xff] %v540
      %573 = vst [vmem:[%s172 + $0x30] sm:$0xff] %v541
      %574 = vst [vmem:[%s172 + $0x38] sm:$0xff] %v542
      %575 = vst [vmem:[%s172 + $0x40] sm:$0xff] %v543
      %576 = vst [vmem:[%s172 + $0x48] sm:$0xff] %v544
      %577 = vst [vmem:[%s172 + $0x50] sm:$0xff] %v545
      %578 = vst [vmem:[%s172 + $0x58] sm:$0xff] %v546
      %579 = vst [vmem:[%s172 + $0x60] sm:$0xff] %v547
      %580 = vst [vmem:[%s172 + $0x68] sm:$0xff] %v548
      %581 = vst [vmem:[%s172 + $0x70] sm:$0xff] %v549
      %582 = vst [vmem:[%s172 + $0x78] sm:$0xff] %v550
      %583 = vst [vmem:[%s172 + $0x80] sm:$0xff] %v551
      %584 = vst [vmem:[%s172 + $0x88] sm:$0xff] %v552
      %585 = vst [vmem:[%s172 + $0x90] sm:$0xff] %v553
      %586 = vst [vmem:[%s172 + $0x98] sm:$0xff] %v554
      %587 = vst [vmem:[%s172 + $0xa0] sm:$0xff] %v555
      %588 = vst [vmem:[%s172 + $0xa8] sm:$0xff] %v556
      %589 = vst [vmem:[%s172 + $0xb0] sm:$0xff] %v557
      %590 = vst [vmem:[%s172 + $0xb8] sm:$0xff] %v558
      %591 = vst [vmem:[%s172 + $0xc0] sm:$0xff] %v559
      %592 = vst [vmem:[%s172 + $0xc8] sm:$0xff] %v560
      %593 = vst [vmem:[%s172 + $0xd0] sm:$0xff] %v561
      %594 = vst [vmem:[%s172 + $0xd8] sm:$0xff] %v562
      %595 = vst [vmem:[%s172 + $0xe0] sm:$0xff] %v563
      %596 = vst [vmem:[%s172 + $0xe8] sm:$0xff] %v564
      %597 = vst [vmem:[%s172 + $0xf0] sm:$0xff] %v565
      %598 = vst [vmem:[%s172 + $0xf8] sm:$0xff] %v566
      %s599 = smul.u32 32, %s14
      %p600 = scmp.lt.s32.totalorder %s599, 191
      %s601 = scalar_select %p600, %s599, 191
      %s602 = smul.addr %s601, 8
      %s603 = scalar_lea.vmem %s3, %s602
      // Predicated region
      $region33: #{ulosd_forward.14} parent=31 // pred_check
        %p604 = pneg %p100
      $region34: #{ulosd_forward.14} parent=31 // pred_check_branch
        %606 = sbr.rel (%p604) target = $region36
      $region35: #{ulosd_forward.14} parent=31 // pred_region
        %s607 = smul.u32 32, %s14
      $region36: #{ulosd_forward.14} parent=31 // pred_fallthru
        _
    $region32: #{ulosd_forward.14} parent=5 // pred_fallthru
      _
    %p608 = scmp.le.s32.totalorder 2, %s9
    // Predicated region
    $region37: #{ulosd_forward.14} parent=5 // pred_check
      %p609 = pneg %p608
    $region38: #{ulosd_forward.14} parent=5 // pred_check_branch
      %611 = sbr.rel (%p609) target = $region40
    $region39: #{ulosd_forward.14} parent=5 // pred_region
      %s612 = ssub.s32 %s9, 2
      // Predicated region
      $region41: #{ulosd_forward.14} parent=39 // pred_check
        %p613 = pneg %p106
      $region42: #{ulosd_forward.14} parent=39 // pred_check_branch
        %615 = sbr.rel (%p613) target = $region44
      $region43: #{ulosd_forward.14} parent=39 // pred_region
        %s616 = smul.u32 32, %s15
        %p617 = scmp.lt.s32.totalorder %s616, 191
        %s618 = scalar_select %p617, %s616, 191
        %s619 = smul.addr %s618, 8
        %s620 = scalar_lea.vmem %s3, %s619
      $region44: #{ulosd_forward.14} parent=39 // pred_fallthru
        _
    $region40: #{ulosd_forward.14} parent=5 // pred_fallthru
      _
  $region6: #{ulosd_forward.14} parent=0 // loop_footer
    %s13 = sadd.s32 1, %s9
  $region7: #{ulosd_forward.14} parent=0 // loop_footer_branch
    %8 = sbr.rel target = $region3
  $region8: #{ulosd_forward.14} parent=0 // loop_exit
    _

// kernel: ulosd_forward.15
$region0: #{ulosd_forward.15}
  #allocation0 [shape = 'u32[]', space=smem, size = 0x4, offset = 0x4, fixed_abs, tag = 'smem constant byte address 0x4 - core index']
  #allocation1 [shape = 'u32[144,128]{1,0:T(1,128)}', space=vmem, size = 0x12000, scoped, tag = 'internal scratch']
  %s0 = inlined_call_operand.vmem [shape: bf16[512,256], index: 0, kind: input, shape index: {}]
  %s1 = inlined_call_operand.vmem [shape: bf16[256,128], index: 1, kind: input, shape index: {}]
  %s2 = inlined_call_operand.vmem [shape: f32[1,128], index: 2, kind: input, shape index: {}]
  %s3 = inlined_call_operand.vmem [shape: f32[512,128], index: 3, kind: output, shape index: {}]
  %s4 = sld [smem:[#allocation0]]
  $region45: #{ulosd_forward.15} parent=0
    _
  %s6 = ssub.s32 1, %s4
  %s7 = scalar_select 0, %s6, %s4
  loop: start=0, step=1, limit=4
  $region2: #{ulosd_forward.15} parent=0 // loop_pre_header
    _
  $region3: #{ulosd_forward.15} parent=0 // loop_header
    %s9 = sphi 0, %s13
    %p10 = scmp.ge.s32.totalorder %s9, 4
    %s19 = sphi 0, %s21
    %s22 = sphi 0, %s19
    %s23 = sphi 0, %s22
    %s39 = sphi 0, %s23
    %s43 = sphi 0, %s43
    %s45 = sphi 0, %s43
    %s46 = sphi 0, %s45
    %s60 = sphi 0, %s46
    %s64 = sphi 0, %s64
    %s66 = sphi 0, %s64
    %s67 = sphi 0, %s66
    %s81 = sphi 0, %s67
    %s87 = sphi 0, %s89
    %s90 = sphi 0, %s87
    %s91 = sphi 0, %s90
    %s107 = sphi 0, %s91
  $region4: #{ulosd_forward.15} parent=0 // loop_header_branch
    %12 = sbr.rel (%p10) target = $region8
  $region5: #{ulosd_forward.15} parent=0 // loop_body
    %s14 = ssub.s32 %s9, 1
    %s15 = ssub.s32 %s9, 2
    %s16 = sadd.s32 %s9, 1
    %s17 = ssub.s32 %s9, %s16
    %p18 = scmp.eq.s32.totalorder %s17, 0
    %s20 = sadd.s32 %s19, 1
    %s21 = scalar_select %p18, %s19, %s20
    %p24 = pneg %p18
    %p25 = scmp.eq.s32.totalorder %s9, 1
    %p26 = por %p24, %p25
    %p27 = scmp.ne.s32.totalorder %s19, %s22
    %p28 = scmp.eq.s32.totalorder %s9, 0
    %p29 = por %p27, %p28
    %p30 = scmp.ne.s32.totalorder %s19, %s22
    %p31 = scmp.eq.s32.totalorder %s14, 1
    %p32 = por %p30, %p31
    %p33 = scmp.ne.s32.totalorder %s22, %s23
    %p34 = scmp.eq.s32.totalorder %s14, 0
    %p35 = por %p33, %p34
    %p36 = scmp.ne.s32.totalorder %s22, %s23
    %p37 = scmp.eq.s32.totalorder %s15, 1
    %p38 = por %p36, %p37
    %p40 = scmp.ne.s32.totalorder %s23, %s39
    %p41 = scmp.eq.s32.totalorder %s15, 0
    %p42 = por %p40, %p41
    %s44 = sadd.s32 %s43, 1
    %p47 = scmp.eq.s32.totalorder %s9, 1
    %p48 = scmp.ne.s32.totalorder %s43, %s45
    %p49 = scmp.eq.s32.totalorder %s9, 0
    %p50 = por %p48, %p49
    %p51 = scmp.ne.s32.totalorder %s43, %s45
    %p52 = scmp.eq.s32.totalorder %s14, 1
    %p53 = por %p51, %p52
    %p54 = scmp.ne.s32.totalorder %s45, %s46
    %p55 = scmp.eq.s32.totalorder %s14, 0
    %p56 = por %p54, %p55
    %p57 = scmp.ne.s32.totalorder %s45, %s46
    %p58 = scmp.eq.s32.totalorder %s15, 1
    %p59 = por %p57, %p58
    %p61 = scmp.ne.s32.totalorder %s46, %s60
    %p62 = scmp.eq.s32.totalorder %s15, 0
    %p63 = por %p61, %p62
    %s65 = sadd.s32 %s64, 1
    %p68 = scmp.eq.s32.totalorder %s9, 1
    %p69 = scmp.ne.s32.totalorder %s64, %s66
    %p70 = scmp.eq.s32.totalorder %s9, 0
    %p71 = por %p69, %p70
    %p72 = scmp.ne.s32.totalorder %s64, %s66
    %p73 = scmp.eq.s32.totalorder %s14, 1
    %p74 = por %p72, %p73
    %p75 = scmp.ne.s32.totalorder %s66, %s67
    %p76 = scmp.eq.s32.totalorder %s14, 0
    %p77 = por %p75, %p76
    %p78 = scmp.ne.s32.totalorder %s66, %s67
    %p79 = scmp.eq.s32.totalorder %s15, 1
    %p80 = por %p78, %p79
    %p82 = scmp.ne.s32.totalorder %s67, %s81
    %p83 = scmp.eq.s32.totalorder %s15, 0
    %p84 = por %p82, %p83
    %s85 = ssub.s32 %s9, %s16
    %p86 = scmp.eq.s32.totalorder %s85, 0
    %s88 = sadd.s32 %s87, 1
    %s89 = scalar_select %p86, %s87, %s88
    %p92 = pneg %p86
    %p93 = scmp.eq.s32.totalorder %s9, 1
    %p94 = por %p92, %p93
    %p95 = scmp.ne.s32.totalorder %s87, %s90
    %p96 = scmp.eq.s32.totalorder %s9, 0
    %p97 = por %p95, %p96
    %p98 = scmp.ne.s32.totalorder %s87, %s90
    %p99 = scmp.eq.s32.totalorder %s14, 1
    %p100 = por %p98, %p99
    %p101 = scmp.ne.s32.totalorder %s90, %s91
    %p102 = scmp.eq.s32.totalorder %s14, 0
    %p103 = por %p101, %p102
    %p104 = scmp.ne.s32.totalorder %s90, %s91
    %p105 = scmp.eq.s32.totalorder %s15, 1
    %p106 = por %p104, %p105
    %p108 = scmp.ne.s32.totalorder %s91, %s107
    %p109 = scmp.eq.s32.totalorder %s15, 0
    %p110 = por %p108, %p109
    %p111 = scmp.le.s32.totalorder 1, %s9
    %p112 = scmp.lt.s32.totalorder %s9, 3
    %p113 = pnand %p111, %p112
    %p114 = pneg %p113
    // Predicated region
    $region9: #{ulosd_forward.15} parent=5 // pred_check
      _
    $region10: #{ulosd_forward.15} parent=5 // pred_check_branch
      %116 = sbr.rel (%p113) target = $region12
    $region11: #{ulosd_forward.15} parent=5 // pred_region
      %s117 = ssub.s32 %s9, 1
      // Predicated region
      $region13: #{ulosd_forward.15} parent=11 // pred_check
        %p118 = pneg %p56
      $region14: #{ulosd_forward.15} parent=11 // pred_check_branch
        %120 = sbr.rel (%p118) target = $region16
      $region15: #{ulosd_forward.15} parent=11 // pred_region
        _
      $region16: #{ulosd_forward.15} parent=11 // pred_fallthru
        _
      // Predicated region
      $region17: #{ulosd_forward.15} parent=11 // pred_check
        %p121 = pneg %p77
      $region18: #{ulosd_forward.15} parent=11 // pred_check_branch
        %123 = sbr.rel (%p121) target = $region20
      $region19: #{ulosd_forward.15} parent=11 // pred_region
        _
      $region20: #{ulosd_forward.15} parent=11 // pred_fallthru
        _
    $region12: #{ulosd_forward.15} parent=5 // pred_fallthru
      _
    %p124 = scmp.lt.s32.totalorder %s9, 2
    // Predicated region
    $region21: #{ulosd_forward.15} parent=5 // pred_check
      %p125 = pneg %p124
    $region22: #{ulosd_forward.15} parent=5 // pred_check_branch
      %127 = sbr.rel (%p125) target = $region24
    $region23: #{ulosd_forward.15} parent=5 // pred_region
      // Predicated region
      $region25: #{ulosd_forward.15} parent=23 // pred_check
        %p128 = pneg %p29
      $region26: #{ulosd_forward.15} parent=23 // pred_check_branch
        %130 = sbr.rel (%p128) target = $region28
      $region27: #{ulosd_forward.15} parent=23 // pred_region
        %s131 = smul.u32 32, %s9
        %p132 = scmp.lt.s32.totalorder %s131, 63
        %s133 = scalar_select %p132, %s131, 63
        %s134 = smul.addr %s133, 2
        %s135 = smul.addr %s134, 4
        %s136 = scalar_lea.vmem %s0, %s135
        %s137 = smul.u32 32, %s9
      $region28: #{ulosd_forward.15} parent=23 // pred_fallthru
        _
    $region24: #{ulosd_forward.15} parent=5 // pred_fallthru
      _
    %p138 = scmp.le.s32.totalorder 1, %s9
    %p139 = scmp.lt.s32.totalorder %s9, 3
    %p140 = pnand %p138, %p139
    %p141 = pneg %p140
    // Predicated region
    $region29: #{ulosd_forward.15} parent=5 // pred_check
      _
    $region30: #{ulosd_forward.15} parent=5 // pred_check_branch
      %143 = sbr.rel (%p140) target = $region32
    $region31: #{ulosd_forward.15} parent=5 // pred_region
      %s144 = ssub.s32 %s9, 1
      %s145 = smul.u32 32, %s14
      %p146 = scmp.lt.s32.totalorder %s145, 63
      %s147 = scalar_select %p146, %s145, 63
      %s148 = smul.addr %s147, 2
      %s149 = smul.addr %s148, 4
      %s150 = scalar_lea.vmem %s0, %s149
      %p151 = pneg %p35
      %p152 = pneg %p32
      %p153 = pneg %p56
      %p154 = pneg %p53
      %p155 = pneg %p77
      %p156 = pneg %p74
      %p157 = pneg %p103
      %p158 = pneg %p100
      %s159 = smul.u32 32, %s14
      %p160 = scmp.lt.s32.totalorder %s159, 63
      %s161 = scalar_select %p160, %s159, 63
      %s162 = smul.addr %s161, 8
      %s163 = scalar_lea.vmem %s3, %s162
      %s164 = smul.u32 32, %s14
      %p165 = scmp.lt.s32.totalorder %s164, 63
      %s166 = scalar_select %p165, %s164, 63
      %s167 = smul.addr %s166, 2
      %s168 = smul.addr %s167, 4
      %s169 = scalar_lea.vmem %s0, %s168
      %s170 = smul.u32 32, %s14
      %s171 = smul.u32 32, %s14
      %p172 = scmp.lt.s32.totalorder %s171, 63
      %s173 = scalar_select %p172, %s171, 63
      %s174 = smul.addr %s173, 8
      %s175 = scalar_lea.vmem %s3, %s174
      %s176 = smul.u32 32, %s14
      %v178 = vld [vmem:[%s169] sm:$0xff]
      %v179 = vld [vmem:[%s169 + $0x8] sm:$0xff]
      %v180 = vld [vmem:[%s169 + $0x10] sm:$0xff]
      %v181 = vld [vmem:[%s169 + $0x18] sm:$0xff]
      %v182 = vld [vmem:[%s169 + $0x20] sm:$0xff]
      %v183 = vld [vmem:[%s169 + $0x28] sm:$0xff]
      %v184 = vld [vmem:[%s169 + $0x30] sm:$0xff]
      %v185 = vld [vmem:[%s169 + $0x38] sm:$0xff]
      %v186 = vld [vmem:[%s169 + $0x40] sm:$0xff]
      %v187 = vld [vmem:[%s169 + $0x48] sm:$0xff]
      %v188 = vld [vmem:[%s169 + $0x50] sm:$0xff]
      %v189 = vld [vmem:[%s169 + $0x58] sm:$0xff]
      %v190 = vld [vmem:[%s169 + $0x60] sm:$0xff]
      %v191 = vld [vmem:[%s169 + $0x68] sm:$0xff]
      %v192 = vld [vmem:[%s169 + $0x70] sm:$0xff]
      %v193 = vld [vmem:[%s169 + $0x78] sm:$0xff]
      %v194 = vld [vmem:[%s169 + $0x80] sm:$0xff]
      %v195 = vld [vmem:[%s169 + $0x88] sm:$0xff]
      %v196 = vld [vmem:[%s169 + $0x90] sm:$0xff]
      %v197 = vld [vmem:[%s169 + $0x98] sm:$0xff]
      %v198 = vld [vmem:[%s169 + $0xa0] sm:$0xff]
      %v199 = vld [vmem:[%s169 + $0xa8] sm:$0xff]
      %v200 = vld [vmem:[%s169 + $0xb0] sm:$0xff]
      %v201 = vld [vmem:[%s169 + $0xb8] sm:$0xff]
      %v202 = vld [vmem:[%s169 + $0xc0] sm:$0xff]
      %v203 = vld [vmem:[%s169 + $0xc8] sm:$0xff]
      %v204 = vld [vmem:[%s169 + $0xd0] sm:$0xff]
      %v205 = vld [vmem:[%s169 + $0xd8] sm:$0xff]
      %v206 = vld [vmem:[%s169 + $0xe0] sm:$0xff]
      %v207 = vld [vmem:[%s169 + $0xe8] sm:$0xff]
      %v208 = vld [vmem:[%s169 + $0xf0] sm:$0xff]
      %v209 = vld [vmem:[%s169 + $0xf8] sm:$0xff]
      %v210 = vld [vmem:[%s1] sm:$0xf]
      %v211 = vld [vmem:[%s1 + $0x4] sm:$0xf]
      %v212 = vld [vmem:[%s1 + $0x8] sm:$0xf]
      %v213 = vld [vmem:[%s1 + $0xc] sm:$0xf]
      %v214 = vld [vmem:[%s1 + $0x10] sm:$0xf]
      %v215 = vld [vmem:[%s1 + $0x14] sm:$0xf]
      %v216 = vld [vmem:[%s1 + $0x18] sm:$0xf]
      %v217 = vld [vmem:[%s1 + $0x1c] sm:$0xf]
      %v218 = vld [vmem:[%s1 + $0x20] sm:$0xf]
      %v219 = vld [vmem:[%s1 + $0x24] sm:$0xf]
      %v220 = vld [vmem:[%s1 + $0x28] sm:$0xf]
      %v221 = vld [vmem:[%s1 + $0x2c] sm:$0xf]
      %v222 = vld [vmem:[%s1 + $0x30] sm:$0xf]
      %v223 = vld [vmem:[%s1 + $0x34] sm:$0xf]
      %v224 = vld [vmem:[%s1 + $0x38] sm:$0xf]
      %v225 = vld [vmem:[%s1 + $0x3c] sm:$0xf]
      %v226 = vld [vmem:[%s1 + $0x40] sm:$0xf]
      %v227 = vld [vmem:[%s1 + $0x44] sm:$0xf]
      %v228 = vld [vmem:[%s1 + $0x48] sm:$0xf]
      %v229 = vld [vmem:[%s1 + $0x4c] sm:$0xf]
      %v230 = vld [vmem:[%s1 + $0x50] sm:$0xf]
      %v231 = vld [vmem:[%s1 + $0x54] sm:$0xf]
      %v232 = vld [vmem:[%s1 + $0x58] sm:$0xf]
      %v233 = vld [vmem:[%s1 + $0x5c] sm:$0xf]
      %v234 = vld [vmem:[%s1 + $0x60] sm:$0xf]
      %v235 = vld [vmem:[%s1 + $0x64] sm:$0xf]
      %v236 = vld [vmem:[%s1 + $0x68] sm:$0xf]
      %v237 = vld [vmem:[%s1 + $0x6c] sm:$0xf]
      %v238 = vld [vmem:[%s1 + $0x70] sm:$0xf]
      %v239 = vld [vmem:[%s1 + $0x74] sm:$0xf]
      %v240 = vld [vmem:[%s1 + $0x78] sm:$0xf]
      %v241 = vld [vmem:[%s1 + $0x7c] sm:$0xf]
      %v242 = vld [vmem:[%s2] sm:$0x1]
      %v244 = vlaneseq
      %v245 = vshrl.u32 %v244, 7
      %v246 = vsub.s32 0, %v245
      %v247 = vrot.slane %v242, %v246
      %v281 = vunpack.c.l.b16 %v178
      %v282 = vunpack.c.h.b16 %v178
      %v283 = vunpack.c.l.b16 %v179
      %v284 = vunpack.c.h.b16 %v179
      %v285 = vunpack.c.l.b16 %v180
      %v286 = vunpack.c.h.b16 %v180
      %v287 = vunpack.c.l.b16 %v181
      %v288 = vunpack.c.h.b16 %v181
      %v289 = vunpack.c.l.b16 %v182
      %v290 = vunpack.c.h.b16 %v182
      %v291 = vunpack.c.l.b16 %v183
      %v292 = vunpack.c.h.b16 %v183
      %v293 = vunpack.c.l.b16 %v184
      %v294 = vunpack.c.h.b16 %v184
      %v295 = vunpack.c.l.b16 %v185
      %v296 = vunpack.c.h.b16 %v185
      %v297 = vunpack.c.l.b16 %v186
      %v298 = vunpack.c.h.b16 %v186
      %v299 = vunpack.c.l.b16 %v187
      %v300 = vunpack.c.h.b16 %v187
      %v301 = vunpack.c.l.b16 %v188
      %v302 = vunpack.c.h.b16 %v188
      %v303 = vunpack.c.l.b16 %v189
      %v304 = vunpack.c.h.b16 %v189
      %v305 = vunpack.c.l.b16 %v190
      %v306 = vunpack.c.h.b16 %v190
      %v307 = vunpack.c.l.b16 %v191
      %v308 = vunpack.c.h.b16 %v191
      %v309 = vunpack.c.l.b16 %v192
      %v310 = vunpack.c.h.b16 %v192
      %v311 = vunpack.c.l.b16 %v193
      %v312 = vunpack.c.h.b16 %v193
      %v313 = vunpack.c.l.b16 %v194
      %v314 = vunpack.c.h.b16 %v194
      %v315 = vunpack.c.l.b16 %v195
      %v316 = vunpack.c.h.b16 %v195
      %v317 = vunpack.c.l.b16 %v196
      %v318 = vunpack.c.h.b16 %v196
      %v319 = vunpack.c.l.b16 %v197
      %v320 = vunpack.c.h.b16 %v197
      %v321 = vunpack.c.l.b16 %v198
      %v322 = vunpack.c.h.b16 %v198
      %v323 = vunpack.c.l.b16 %v199
      %v324 = vunpack.c.h.b16 %v199
      %v325 = vunpack.c.l.b16 %v200
      %v326 = vunpack.c.h.b16 %v200
      %v327 = vunpack.c.l.b16 %v201
      %v328 = vunpack.c.h.b16 %v201
      %v329 = vunpack.c.l.b16 %v202
      %v330 = vunpack.c.h.b16 %v202
      %v331 = vunpack.c.l.b16 %v203
      %v332 = vunpack.c.h.b16 %v203
      %v333 = vunpack.c.l.b16 %v204
      %v334 = vunpack.c.h.b16 %v204
      %v335 = vunpack.c.l.b16 %v205
      %v336 = vunpack.c.h.b16 %v205
      %v337 = vunpack.c.l.b16 %v206
      %v338 = vunpack.c.h.b16 %v206
      %v339 = vunpack.c.l.b16 %v207
      %v340 = vunpack.c.h.b16 %v207
      %v341 = vunpack.c.l.b16 %v208
      %v342 = vunpack.c.h.b16 %v208
      %v343 = vunpack.c.l.b16 %v209
      %v344 = vunpack.c.h.b16 %v209
      %v345 = vpack.c.b16 %v283, %v281
      %v346 = vpack.c.b16 %v284, %v282
      %v347 = vpack.c.b16 %v287, %v285
      %v348 = vpack.c.b16 %v288, %v286
      %v349 = vpack.c.b16 %v291, %v289
      %v350 = vpack.c.b16 %v292, %v290
      %v351 = vpack.c.b16 %v295, %v293
      %v352 = vpack.c.b16 %v296, %v294
      %v353 = vpack.c.b16 %v299, %v297
      %v354 = vpack.c.b16 %v300, %v298
      %v355 = vpack.c.b16 %v303, %v301
      %v356 = vpack.c.b16 %v304, %v302
      %v357 = vpack.c.b16 %v307, %v305
      %v358 = vpack.c.b16 %v308, %v306
      %v359 = vpack.c.b16 %v311, %v309
      %v360 = vpack.c.b16 %v312, %v310
      %v361 = vpack.c.b16 %v315, %v313
      %v362 = vpack.c.b16 %v316, %v314
      %v363 = vpack.c.b16 %v319, %v317
      %v364 = vpack.c.b16 %v320, %v318
      %v365 = vpack.c.b16 %v323, %v321
      %v366 = vpack.c.b16 %v324, %v322
      %v367 = vpack.c.b16 %v327, %v325
      %v368 = vpack.c.b16 %v328, %v326
      %v369 = vpack.c.b16 %v331, %v329
      %v370 = vpack.c.b16 %v332, %v330
      %v371 = vpack.c.b16 %v335, %v333
      %v372 = vpack.c.b16 %v336, %v334
      %v373 = vpack.c.b16 %v339, %v337
      %v374 = vpack.c.b16 %v340, %v338
      %v375 = vpack.c.b16 %v343, %v341
      %v376 = vpack.c.b16 %v344, %v342
      %v441 = vunpack.c.l.b16 %v210
      %v442 = vunpack.c.l.b16 %v211
      %v443 = vunpack.c.l.b16 %v212
      %v444 = vunpack.c.l.b16 %v213
      %v445 = vunpack.c.l.b16 %v214
      %v446 = vunpack.c.l.b16 %v215
      %v447 = vunpack.c.l.b16 %v216
      %v448 = vunpack.c.l.b16 %v217
      %v449 = vunpack.c.l.b16 %v218
      %v450 = vunpack.c.l.b16 %v219
      %v451 = vunpack.c.l.b16 %v220
      %v452 = vunpack.c.l.b16 %v221
      %v453 = vunpack.c.l.b16 %v222
      %v454 = vunpack.c.l.b16 %v223
      %v455 = vunpack.c.l.b16 %v224
      %v456 = vunpack.c.l.b16 %v225
      %v457 = vunpack.c.l.b16 %v226
      %v458 = vunpack.c.l.b16 %v227
      %v459 = vunpack.c.l.b16 %v228
      %v460 = vunpack.c.l.b16 %v229
      %v461 = vunpack.c.l.b16 %v230
      %v462 = vunpack.c.l.b16 %v231
      %v463 = vunpack.c.l.b16 %v232
      %v464 = vunpack.c.l.b16 %v233
      %v465 = vunpack.c.l.b16 %v234
      %v466 = vunpack.c.l.b16 %v235
      %v467 = vunpack.c.l.b16 %v236
      %v468 = vunpack.c.l.b16 %v237
      %v469 = vunpack.c.l.b16 %v238
      %v470 = vunpack.c.l.b16 %v239
      %v471 = vunpack.c.l.b16 %v240
      %v472 = vunpack.c.l.b16 %v241
      %v473 = vpack.c.b16 %v442, %v441
      %v474 = vpack.c.b16 %v444, %v443
      %v475 = vpack.c.b16 %v446, %v445
      %v476 = vpack.c.b16 %v448, %v447
      %v477 = vpack.c.b16 %v450, %v449
      %v478 = vpack.c.b16 %v452, %v451
      %v479 = vpack.c.b16 %v454, %v453
      %v480 = vpack.c.b16 %v456, %v455
      %v481 = vpack.c.b16 %v458, %v457
      %v482 = vpack.c.b16 %v460, %v459
      %v483 = vpack.c.b16 %v462, %v461
      %v484 = vpack.c.b16 %v464, %v463
      %v485 = vpack.c.b16 %v466, %v465
      %v486 = vpack.c.b16 %v468, %v467
      %v487 = vpack.c.b16 %v470, %v469
      %v488 = vpack.c.b16 %v472, %v471
      %505 = vmatprep.subr.bf16.mxu0 0
      %506 = vmatpush1.bf16.msra.mxu0 %v473
      %507 = vmatprep.subr.bf16.mxu0 0
      %508 = vmatpush1.bf16.msra.mxu0 %v474
      %509 = vmatprep.subr.bf16.mxu0 0
      %510 = vmatpush1.bf16.msra.mxu0 %v475
      %511 = vmatprep.subr.bf16.mxu0 0
      %512 = vmatpush1.bf16.msra.mxu0 %v476
      %513 = vmatprep.subr.bf16.mxu0 0
      %514 = vmatpush1.bf16.msra.mxu0 %v477
      %515 = vmatprep.subr.bf16.mxu0 0
      %516 = vmatpush1.bf16.msra.mxu0 %v478
      %517 = vmatprep.subr.bf16.mxu0 0
      %518 = vmatpush1.bf16.msra.mxu0 %v479
      %519 = vmatprep.subr.bf16.mxu0 0
      %520 = vmatpush1.bf16.msra.mxu0 %v480
      %521 = vmatprep.subr.bf16.mxu0 0
      %522 = vmatpush1.bf16.msra.mxu0 %v481
      %523 = vmatprep.subr.bf16.mxu0 0
      %524 = vmatpush1.bf16.msra.mxu0 %v482
      %525 = vmatprep.subr.bf16.mxu0 0
      %526 = vmatpush1.bf16.msra.mxu0 %v483
      %527 = vmatprep.subr.bf16.mxu0 0
      %528 = vmatpush1.bf16.msra.mxu0 %v484
      %529 = vmatprep.subr.bf16.mxu0 0
      %530 = vmatpush1.bf16.msra.mxu0 %v485
      %531 = vmatprep.subr.bf16.mxu0 0
      %532 = vmatpush1.bf16.msra.mxu0 %v486
      %533 = vmatprep.subr.bf16.mxu0 0
      %534 = vmatpush1.bf16.msra.mxu0 %v487
      %535 = vmatprep.subr.bf16.mxu0 0
      %536 = vmatpush1.bf16.msra.mxu0 %v488
      %537 = vmatprep.mubr.bf16.mxu0 %v346
      %538 = vmatmul.mubr.bf16.gmra.mrb[0].mxu0 %v345
      %v539 = vpop.f32.mrb[0].mxu0
      %v540 = vadd.f32 %v247, %v539
      %v541 = vpop.f32.mrb[0].mxu0
      %v542 = vpop.f32.mrb[0].mxu0
      %v543 = vadd.f32 %v247, %v542
      %v544 = vpop.f32.mrb[0].mxu0
      %545 = vmatprep.mubr.bf16.mxu0 %v348
      %546 = vmatmul.mubr.bf16.gmra.mrb[0].mxu0 %v347
      %v547 = vpop.f32.mrb[0].mxu0
      %v548 = vadd.f32 %v247, %v547
      %v549 = vpop.f32.mrb[0].mxu0
      %v550 = vpop.f32.mrb[0].mxu0
      %v551 = vadd.f32 %v247, %v550
      %v552 = vpop.f32.mrb[0].mxu0
      %553 = vmatprep.mubr.bf16.mxu0 %v350
      %554 = vmatmul.mubr.bf16.gmra.mrb[0].mxu0 %v349
      %v555 = vpop.f32.mrb[0].mxu0
      %v556 = vadd.f32 %v247, %v555
      %v557 = vpop.f32.mrb[0].mxu0
      %v558 = vpop.f32.mrb[0].mxu0
      %v559 = vadd.f32 %v247, %v558
      %v560 = vpop.f32.mrb[0].mxu0
      %561 = vmatprep.mubr.bf16.mxu0 %v352
      %562 = vmatmul.mubr.bf16.gmra.mrb[0].mxu0 %v351
      %v563 = vpop.f32.mrb[0].mxu0
      %v564 = vadd.f32 %v247, %v563
      %v565 = vpop.f32.mrb[0].mxu0
      %v566 = vpop.f32.mrb[0].mxu0
      %v567 = vadd.f32 %v247, %v566
      %v568 = vpop.f32.mrb[0].mxu0
      %569 = vmatprep.mubr.bf16.mxu0 %v354
      %570 = vmatmul.mubr.bf16.gmra.mrb[0].mxu0 %v353
      %v571 = vpop.f32.mrb[0].mxu0
      %v572 = vadd.f32 %v247, %v571
      %v573 = vpop.f32.mrb[0].mxu0
      %v574 = vpop.f32.mrb[0].mxu0
      %v575 = vadd.f32 %v247, %v574
      %v576 = vpop.f32.mrb[0].mxu0
      %577 = vmatprep.mubr.bf16.mxu0 %v356
      %578 = vmatmul.mubr.bf16.gmra.mrb[0].mxu0 %v355
      %v579 = vpop.f32.mrb[0].mxu0
      %v580 = vadd.f32 %v247, %v579
      %v581 = vpop.f32.mrb[0].mxu0
      %v582 = vpop.f32.mrb[0].mxu0
      %v583 = vadd.f32 %v247, %v582
      %v584 = vpop.f32.mrb[0].mxu0
      %585 = vmatprep.mubr.bf16.mxu0 %v358
      %586 = vmatmul.mubr.bf16.gmra.mrb[0].mxu0 %v357
      %v587 = vpop.f32.mrb[0].mxu0
      %v588 = vadd.f32 %v247, %v587
      %v589 = vpop.f32.mrb[0].mxu0
      %v590 = vpop.f32.mrb[0].mxu0
      %v591 = vadd.f32 %v247, %v590
      %v592 = vpop.f32.mrb[0].mxu0
      %593 = vmatprep.mubr.bf16.mxu0 %v360
      %594 = vmatmul.mubr.bf16.gmra.mrb[0].mxu0 %v359
      %v595 = vpop.f32.mrb[0].mxu0
      %v596 = vadd.f32 %v247, %v595
      %v597 = vpop.f32.mrb[0].mxu0
      %v598 = vpop.f32.mrb[0].mxu0
      %v599 = vadd.f32 %v247, %v598
      %v600 = vpop.f32.mrb[0].mxu0
      %601 = vmatprep.mubr.bf16.mxu0 %v362
      %602 = vmatmul.mubr.bf16.gmra.mrb[0].mxu0 %v361
      %v603 = vpop.f32.mrb[0].mxu0
      %v604 = vadd.f32 %v247, %v603
      %v605 = vpop.f32.mrb[0].mxu0
      %v606 = vpop.f32.mrb[0].mxu0
      %v607 = vadd.f32 %v247, %v606
      %v608 = vpop.f32.mrb[0].mxu0
      %609 = vmatprep.mubr.bf16.mxu0 %v364
      %610 = vmatmul.mubr.bf16.gmra.mrb[0].mxu0 %v363
      %v611 = vpop.f32.mrb[0].mxu0
      %v612 = vadd.f32 %v247, %v611
      %v613 = vpop.f32.mrb[0].mxu0
      %v614 = vpop.f32.mrb[0].mxu0
      %v615 = vadd.f32 %v247, %v614
      %v616 = vpop.f32.mrb[0].mxu0
      %617 = vmatprep.mubr.bf16.mxu0 %v366
      %618 = vmatmul.mubr.bf16.gmra.mrb[0].mxu0 %v365
      %v619 = vpop.f32.mrb[0].mxu0
      %v620 = vadd.f32 %v247, %v619
      %v621 = vpop.f32.mrb[0].mxu0
      %v622 = vpop.f32.mrb[0].mxu0
      %v623 = vadd.f32 %v247, %v622
      %v624 = vpop.f32.mrb[0].mxu0
      %625 = vmatprep.mubr.bf16.mxu0 %v368
      %626 = vmatmul.mubr.bf16.gmra.mrb[0].mxu0 %v367
      %v627 = vpop.f32.mrb[0].mxu0
      %v628 = vadd.f32 %v247, %v627
      %v629 = vpop.f32.mrb[0].mxu0
      %v630 = vpop.f32.mrb[0].mxu0
      %v631 = vadd.f32 %v247, %v630
      %v632 = vpop.f32.mrb[0].mxu0
      %633 = vmatprep.mubr.bf16.mxu0 %v370
      %634 = vmatmul.mubr.bf16.gmra.mrb[0].mxu0 %v369
      %v635 = vpop.f32.mrb[0].mxu0
      %v636 = vadd.f32 %v247, %v635
      %v637 = vpop.f32.mrb[0].mxu0
      %v638 = vpop.f32.mrb[0].mxu0
      %v639 = vadd.f32 %v247, %v638
      %v640 = vpop.f32.mrb[0].mxu0
      %641 = vmatprep.mubr.bf16.mxu0 %v372
      %642 = vmatmul.mubr.bf16.gmra.mrb[0].mxu0 %v371
      %v643 = vpop.f32.mrb[0].mxu0
      %v644 = vadd.f32 %v247, %v643
      %v645 = vpop.f32.mrb[0].mxu0
      %v646 = vpop.f32.mrb[0].mxu0
      %v647 = vadd.f32 %v247, %v646
      %v648 = vpop.f32.mrb[0].mxu0
      %649 = vmatprep.mubr.bf16.mxu0 %v374
      %650 = vmatmul.mubr.bf16.gmra.mrb[0].mxu0 %v373
      %v651 = vpop.f32.mrb[0].mxu0
      %v652 = vadd.f32 %v247, %v651
      %v653 = vpop.f32.mrb[0].mxu0
      %v654 = vpop.f32.mrb[0].mxu0
      %v655 = vadd.f32 %v247, %v654
      %v656 = vpop.f32.mrb[0].mxu0
      %657 = vmatprep.mubr.bf16.mxu0 %v376
      %658 = vmatmul.mubr.bf16.gmra.mrb[0].mxu0 %v375
      %v659 = vpop.f32.mrb[0].mxu0
      %v660 = vadd.f32 %v247, %v659
      %v661 = vpop.f32.mrb[0].mxu0
      %v662 = vpop.f32.mrb[0].mxu0
      %v663 = vadd.f32 %v247, %v662
      %v664 = vpop.f32.mrb[0].mxu0
      %665 = vdwg.mxu0
      %v666 = vmax.f32 %v540, 0.0
      %v667 = vmax.f32 %v543, 0.0
      %v668 = vmax.f32 %v548, 0.0
      %v669 = vmax.f32 %v551, 0.0
      %v670 = vmax.f32 %v556, 0.0
      %v671 = vmax.f32 %v559, 0.0
      %v672 = vmax.f32 %v564, 0.0
      %v673 = vmax.f32 %v567, 0.0
      %v674 = vmax.f32 %v572, 0.0
      %v675 = vmax.f32 %v575, 0.0
      %v676 = vmax.f32 %v580, 0.0
      %v677 = vmax.f32 %v583, 0.0
      %v678 = vmax.f32 %v588, 0.0
      %v679 = vmax.f32 %v591, 0.0
      %v680 = vmax.f32 %v596, 0.0
      %v681 = vmax.f32 %v599, 0.0
      %v682 = vmax.f32 %v604, 0.0
      %v683 = vmax.f32 %v607, 0.0
      %v684 = vmax.f32 %v612, 0.0
      %v685 = vmax.f32 %v615, 0.0
      %v686 = vmax.f32 %v620, 0.0
      %v687 = vmax.f32 %v623, 0.0
      %v688 = vmax.f32 %v628, 0.0
      %v689 = vmax.f32 %v631, 0.0
      %v690 = vmax.f32 %v636, 0.0
      %v691 = vmax.f32 %v639, 0.0
      %v692 = vmax.f32 %v644, 0.0
      %v693 = vmax.f32 %v647, 0.0
      %v694 = vmax.f32 %v652, 0.0
      %v695 = vmax.f32 %v655, 0.0
      %v696 = vmax.f32 %v660, 0.0
      %v697 = vmax.f32 %v663, 0.0
      %698 = vst [vmem:[%s175] sm:$0xff] %v666
      %699 = vst [vmem:[%s175 + $0x8] sm:$0xff] %v667
      %700 = vst [vmem:[%s175 + $0x10] sm:$0xff] %v668
      %701 = vst [vmem:[%s175 + $0x18] sm:$0xff] %v669
      %702 = vst [vmem:[%s175 + $0x20] sm:$0xff] %v670
      %703 = vst [vmem:[%s175 + $0x28] sm:$0xff] %v671
      %704 = vst [vmem:[%s175 + $0x30] sm:$0xff] %v672
      %705 = vst [vmem:[%s175 + $0x38] sm:$0xff] %v673
      %706 = vst [vmem:[%s175 + $0x40] sm:$0xff] %v674
      %707 = vst [vmem:[%s175 + $0x48] sm:$0xff] %v675
      %708 = vst [vmem:[%s175 + $0x50] sm:$0xff] %v676
      %709 = vst [vmem:[%s175 + $0x58] sm:$0xff] %v677
      %710 = vst [vmem:[%s175 + $0x60] sm:$0xff] %v678
      %711 = vst [vmem:[%s175 + $0x68] sm:$0xff] %v679
      %712 = vst [vmem:[%s175 + $0x70] sm:$0xff] %v680
      %713 = vst [vmem:[%s175 + $0x78] sm:$0xff] %v681
      %714 = vst [vmem:[%s175 + $0x80] sm:$0xff] %v682
      %715 = vst [vmem:[%s175 + $0x88] sm:$0xff] %v683
      %716 = vst [vmem:[%s175 + $0x90] sm:$0xff] %v684
      %717 = vst [vmem:[%s175 + $0x98] sm:$0xff] %v685
      %718 = vst [vmem:[%s175 + $0xa0] sm:$0xff] %v686
      %719 = vst [vmem:[%s175 + $0xa8] sm:$0xff] %v687
      %720 = vst [vmem:[%s175 + $0xb0] sm:$0xff] %v688
      %721 = vst [vmem:[%s175 + $0xb8] sm:$0xff] %v689
      %722 = vst [vmem:[%s175 + $0xc0] sm:$0xff] %v690
      %723 = vst [vmem:[%s175 + $0xc8] sm:$0xff] %v691
      %724 = vst [vmem:[%s175 + $0xd0] sm:$0xff] %v692
      %725 = vst [vmem:[%s175 + $0xd8] sm:$0xff] %v693
      %726 = vst [vmem:[%s175 + $0xe0] sm:$0xff] %v694
      %727 = vst [vmem:[%s175 + $0xe8] sm:$0xff] %v695
      %728 = vst [vmem:[%s175 + $0xf0] sm:$0xff] %v696
      %729 = vst [vmem:[%s175 + $0xf8] sm:$0xff] %v697
      %s730 = smul.u32 32, %s14
      %p731 = scmp.lt.s32.totalorder %s730, 63
      %s732 = scalar_select %p731, %s730, 63
      %s733 = smul.addr %s732, 8
      %s734 = scalar_lea.vmem %s3, %s733
      // Predicated region
      $region33: #{ulosd_forward.15} parent=31 // pred_check
        %p735 = pneg %p100
      $region34: #{ulosd_forward.15} parent=31 // pred_check_branch
        %737 = sbr.rel (%p735) target = $region36
      $region35: #{ulosd_forward.15} parent=31 // pred_region
        %s738 = smul.u32 32, %s14
      $region36: #{ulosd_forward.15} parent=31 // pred_fallthru
        _
    $region32: #{ulosd_forward.15} parent=5 // pred_fallthru
      _
    %p739 = scmp.le.s32.totalorder 2, %s9
    // Predicated region
    $region37: #{ulosd_forward.15} parent=5 // pred_check
      %p740 = pneg %p739
    $region38: #{ulosd_forward.15} parent=5 // pred_check_branch
      %742 = sbr.rel (%p740) target = $region40
    $region39: #{ulosd_forward.15} parent=5 // pred_region
      %s743 = ssub.s32 %s9, 2
      // Predicated region
      $region41: #{ulosd_forward.15} parent=39 // pred_check
        %p744 = pneg %p106
      $region42: #{ulosd_forward.15} parent=39 // pred_check_branch
        %746 = sbr.rel (%p744) target = $region44
      $region43: #{ulosd_forward.15} parent=39 // pred_region
        %s747 = smul.u32 32, %s15
        %p748 = scmp.lt.s32.totalorder %s747, 63
        %s749 = scalar_select %p748, %s747, 63
        %s750 = smul.addr %s749, 8
        %s751 = scalar_lea.vmem %s3, %s750
      $region44: #{ulosd_forward.15} parent=39 // pred_fallthru
        _
    $region40: #{ulosd_forward.15} parent=5 // pred_fallthru
      _
  $region6: #{ulosd_forward.15} parent=0 // loop_footer
    %s13 = sadd.s32 1, %s9
  $region7: #{ulosd_forward.15} parent=0 // loop_footer_branch
    %8 = sbr.rel target = $region3
  $region8: #{ulosd_forward.15} parent=0 // loop_exit
    _

// kernel: ulosd_forward.16
$region0: #{ulosd_forward.16}
  #allocation0 [shape = 'u32[]', space=smem, size = 0x4, offset = 0x4, fixed_abs, tag = 'smem constant byte address 0x4 - core index']
  #allocation1 [shape = 'u32[144,128]{1,0:T(1,128)}', space=vmem, size = 0x12000, scoped, tag = 'internal scratch']
  %s0 = inlined_call_operand.vmem [shape: bf16[96,384], index: 0, kind: input, shape index: {}]
  %s1 = inlined_call_operand.vmem [shape: bf16[384,128], index: 1, kind: input, shape index: {}]
  %s2 = inlined_call_operand.vmem [shape: f32[1,128], index: 2, kind: input, shape index: {}]
  %s3 = inlined_call_operand.vmem [shape: f32[96,128], index: 3, kind: output, shape index: {}]
  %s4 = sld [smem:[#allocation0]]
  $region22: #{ulosd_forward.16} parent=0
    _
  %s6 = ssub.s32 1, %s4
  %s7 = scalar_select 0, %s6, %s4
  // Predicated region
  $region2: #{ulosd_forward.16} parent=0 // pred_check
    _
  $region3: #{ulosd_forward.16} parent=0 // pred_check_branch
    %9 = sbr.rel (0) target = $region5
  $region4: #{ulosd_forward.16} parent=0 // pred_region
    _
  $region5: #{ulosd_forward.16} parent=0 // pred_fallthru
    _
  // Predicated region
  $region6: #{ulosd_forward.16} parent=0 // pred_check
    _
  $region7: #{ulosd_forward.16} parent=0 // pred_check_branch
    %11 = sbr.rel (0) target = $region9
  $region8: #{ulosd_forward.16} parent=0 // pred_region
    _
  $region9: #{ulosd_forward.16} parent=0 // pred_fallthru
    _
  // Predicated region
  $region10: #{ulosd_forward.16} parent=0 // pred_check
    _
  $region11: #{ulosd_forward.16} parent=0 // pred_check_branch
    %13 = sbr.rel (0) target = $region13
  $region12: #{ulosd_forward.16} parent=0 // pred_region
    _
  $region13: #{ulosd_forward.16} parent=0 // pred_fallthru
    _
  %v15 = vld [vmem:[%s0] sm:$0xff]
  %v16 = vld [vmem:[%s0 + $0x8] sm:$0xf]
  %v17 = vld [vmem:[%s0 + $0xc] sm:$0xff]
  %v18 = vld [vmem:[%s0 + $0x14] sm:$0xf]
  %v19 = vld [vmem:[%s0 + $0x18] sm:$0xff]
  %v20 = vld [vmem:[%s0 + $0x20] sm:$0xf]
  %v21 = vld [vmem:[%s0 + $0x24] sm:$0xff]
  %v22 = vld [vmem:[%s0 + $0x2c] sm:$0xf]
  %v23 = vld [vmem:[%s0 + $0x30] sm:$0xff]
  %v24 = vld [vmem:[%s0 + $0x38] sm:$0xf]
  %v25 = vld [vmem:[%s0 + $0x3c] sm:$0xff]
  %v26 = vld [vmem:[%s0 + $0x44] sm:$0xf]
  %v27 = vld [vmem:[%s0 + $0x48] sm:$0xff]
  %v28 = vld [vmem:[%s0 + $0x50] sm:$0xf]
  %v29 = vld [vmem:[%s0 + $0x54] sm:$0xff]
  %v30 = vld [vmem:[%s0 + $0x5c] sm:$0xf]
  %v31 = vld [vmem:[%s0 + $0x60] sm:$0xff]
  %v32 = vld [vmem:[%s0 + $0x68] sm:$0xf]
  %v33 = vld [vmem:[%s0 + $0x6c] sm:$0xff]
  %v34 = vld [vmem:[%s0 + $0x74] sm:$0xf]
  %v35 = vld [vmem:[%s0 + $0x78] sm:$0xff]
  %v36 = vld [vmem:[%s0 + $0x80] sm:$0xf]
  %v37 = vld [vmem:[%s0 + $0x84] sm:$0xff]
  %v38 = vld [vmem:[%s0 + $0x8c] sm:$0xf]
  %v39 = vld [vmem:[%s1] sm:$0xf]
  %v40 = vld [vmem:[%s1 + $0x4] sm:$0xf]
  %v41 = vld [vmem:[%s1 + $0x8] sm:$0xf]
  %v42 = vld [vmem:[%s1 + $0xc] sm:$0xf]
  %v43 = vld [vmem:[%s1 + $0x10] sm:$0xf]
  %v44 = vld [vmem:[%s1 + $0x14] sm:$0xf]
  %v45 = vld [vmem:[%s1 + $0x18] sm:$0xf]
  %v46 = vld [vmem:[%s1 + $0x1c] sm:$0xf]
  %v47 = vld [vmem:[%s1 + $0x20] sm:$0xf]
  %v48 = vld [vmem:[%s1 + $0x24] sm:$0xf]
  %v49 = vld [vmem:[%s1 + $0x28] sm:$0xf]
  %v50 = vld [vmem:[%s1 + $0x2c] sm:$0xf]
  %v51 = vld [vmem:[%s1 + $0x30] sm:$0xf]
  %v52 = vld [vmem:[%s1 + $0x34] sm:$0xf]
  %v53 = vld [vmem:[%s1 + $0x38] sm:$0xf]
  %v54 = vld [vmem:[%s1 + $0x3c] sm:$0xf]
  %v55 = vld [vmem:[%s1 + $0x40] sm:$0xf]
  %v56 = vld [vmem:[%s1 + $0x44] sm:$0xf]
  %v57 = vld [vmem:[%s1 + $0x48] sm:$0xf]
  %v58 = vld [vmem:[%s1 + $0x4c] sm:$0xf]
  %v59 = vld [vmem:[%s1 + $0x50] sm:$0xf]
  %v60 = vld [vmem:[%s1 + $0x54] sm:$0xf]
  %v61 = vld [vmem:[%s1 + $0x58] sm:$0xf]
  %v62 = vld [vmem:[%s1 + $0x5c] sm:$0xf]
  %v63 = vld [vmem:[%s1 + $0x60] sm:$0xf]
  %v64 = vld [vmem:[%s1 + $0x64] sm:$0xf]
  %v65 = vld [vmem:[%s1 + $0x68] sm:$0xf]
  %v66 = vld [vmem:[%s1 + $0x6c] sm:$0xf]
  %v67 = vld [vmem:[%s1 + $0x70] sm:$0xf]
  %v68 = vld [vmem:[%s1 + $0x74] sm:$0xf]
  %v69 = vld [vmem:[%s1 + $0x78] sm:$0xf]
  %v70 = vld [vmem:[%s1 + $0x7c] sm:$0xf]
  %v71 = vld [vmem:[%s1 + $0x80] sm:$0xf]
  %v72 = vld [vmem:[%s1 + $0x84] sm:$0xf]
  %v73 = vld [vmem:[%s1 + $0x88] sm:$0xf]
  %v74 = vld [vmem:[%s1 + $0x8c] sm:$0xf]
  %v75 = vld [vmem:[%s1 + $0x90] sm:$0xf]
  %v76 = vld [vmem:[%s1 + $0x94] sm:$0xf]
  %v77 = vld [vmem:[%s1 + $0x98] sm:$0xf]
  %v78 = vld [vmem:[%s1 + $0x9c] sm:$0xf]
  %v79 = vld [vmem:[%s1 + $0xa0] sm:$0xf]
  %v80 = vld [vmem:[%s1 + $0xa4] sm:$0xf]
  %v81 = vld [vmem:[%s1 + $0xa8] sm:$0xf]
  %v82 = vld [vmem:[%s1 + $0xac] sm:$0xf]
  %v83 = vld [vmem:[%s1 + $0xb0] sm:$0xf]
  %v84 = vld [vmem:[%s1 + $0xb4] sm:$0xf]
  %v85 = vld [vmem:[%s1 + $0xb8] sm:$0xf]
  %v86 = vld [vmem:[%s1 + $0xbc] sm:$0xf]
  %v87 = vld [vmem:[%s2] sm:$0x1]
  %v89 = vlaneseq
  %v90 = vshrl.u32 %v89, 7
  %v91 = vsub.s32 0, %v90
  %v92 = vrot.slane %v87, %v91
  %v118 = vunpack.c.l.b16 %v15
  %v119 = vunpack.c.h.b16 %v15
  %v120 = vunpack.c.l.b16 %v16
  %v121 = vunpack.c.l.b16 %v17
  %v122 = vunpack.c.h.b16 %v17
  %v123 = vunpack.c.l.b16 %v18
  %v124 = vunpack.c.l.b16 %v19
  %v125 = vunpack.c.h.b16 %v19
  %v126 = vunpack.c.l.b16 %v20
  %v127 = vunpack.c.l.b16 %v21
  %v128 = vunpack.c.h.b16 %v21
  %v129 = vunpack.c.l.b16 %v22
  %v130 = vunpack.c.l.b16 %v23
  %v131 = vunpack.c.h.b16 %v23
  %v132 = vunpack.c.l.b16 %v24
  %v133 = vunpack.c.l.b16 %v25
  %v134 = vunpack.c.h.b16 %v25
  %v135 = vunpack.c.l.b16 %v26
  %v136 = vunpack.c.l.b16 %v27
  %v137 = vunpack.c.h.b16 %v27
  %v138 = vunpack.c.l.b16 %v28
  %v139 = vunpack.c.l.b16 %v29
  %v140 = vunpack.c.h.b16 %v29
  %v141 = vunpack.c.l.b16 %v30
  %v142 = vunpack.c.l.b16 %v31
  %v143 = vunpack.c.h.b16 %v31
  %v144 = vunpack.c.l.b16 %v32
  %v145 = vunpack.c.l.b16 %v33
  %v146 = vunpack.c.h.b16 %v33
  %v147 = vunpack.c.l.b16 %v34
  %v148 = vunpack.c.l.b16 %v35
  %v149 = vunpack.c.h.b16 %v35
  %v150 = vunpack.c.l.b16 %v36
  %v151 = vunpack.c.l.b16 %v37
  %v152 = vunpack.c.h.b16 %v37
  %v153 = vunpack.c.l.b16 %v38
  %v154 = vpack.c.b16 %v121, %v118
  %v155 = vpack.c.b16 %v122, %v119
  %v156 = vpack.c.b16 %v123, %v120
  %v157 = vpack.c.b16 %v127, %v124
  %v158 = vpack.c.b16 %v128, %v125
  %v159 = vpack.c.b16 %v129, %v126
  %v160 = vpack.c.b16 %v133, %v130
  %v161 = vpack.c.b16 %v134, %v131
  %v162 = vpack.c.b16 %v135, %v132
  %v163 = vpack.c.b16 %v139, %v136
  %v164 = vpack.c.b16 %v140, %v137
  %v165 = vpack.c.b16 %v141, %v138
  %v166 = vpack.c.b16 %v145, %v142
  %v167 = vpack.c.b16 %v146, %v143
  %v168 = vpack.c.b16 %v147, %v144
  %v169 = vpack.c.b16 %v151, %v148
  %v170 = vpack.c.b16 %v152, %v149
  %v171 = vpack.c.b16 %v153, %v150
  %v238 = vunpack.c.l.b16 %v39
  %v239 = vunpack.c.l.b16 %v40
  %v240 = vunpack.c.l.b16 %v41
  %v241 = vunpack.c.l.b16 %v42
  %v242 = vunpack.c.l.b16 %v43
  %v243 = vunpack.c.l.b16 %v44
  %v244 = vunpack.c.l.b16 %v45
  %v245 = vunpack.c.l.b16 %v46
  %v246 = vunpack.c.l.b16 %v47
  %v247 = vunpack.c.l.b16 %v48
  %v248 = vunpack.c.l.b16 %v49
  %v249 = vunpack.c.l.b16 %v50
  %v250 = vunpack.c.l.b16 %v51
  %v251 = vunpack.c.l.b16 %v52
  %v252 = vunpack.c.l.b16 %v53
  %v253 = vunpack.c.l.b16 %v54
  %v254 = vunpack.c.l.b16 %v55
  %v255 = vunpack.c.l.b16 %v56
  %v256 = vunpack.c.l.b16 %v57
  %v257 = vunpack.c.l.b16 %v58
  %v258 = vunpack.c.l.b16 %v59
  %v259 = vunpack.c.l.b16 %v60
  %v260 = vunpack.c.l.b16 %v61
  %v261 = vunpack.c.l.b16 %v62
  %v262 = vunpack.c.l.b16 %v63
  %v263 = vunpack.c.l.b16 %v64
  %v264 = vunpack.c.l.b16 %v65
  %v265 = vunpack.c.l.b16 %v66
  %v266 = vunpack.c.l.b16 %v67
  %v267 = vunpack.c.l.b16 %v68
  %v268 = vunpack.c.l.b16 %v69
  %v269 = vunpack.c.l.b16 %v70
  %v270 = vunpack.c.l.b16 %v71
  %v271 = vunpack.c.l.b16 %v72
  %v272 = vunpack.c.l.b16 %v73
  %v273 = vunpack.c.l.b16 %v74
  %v274 = vunpack.c.l.b16 %v75
  %v275 = vunpack.c.l.b16 %v76
  %v276 = vunpack.c.l.b16 %v77
  %v277 = vunpack.c.l.b16 %v78
  %v278 = vunpack.c.l.b16 %v79
  %v279 = vunpack.c.l.b16 %v80
  %v280 = vunpack.c.l.b16 %v81
  %v281 = vunpack.c.l.b16 %v82
  %v282 = vunpack.c.l.b16 %v83
  %v283 = vunpack.c.l.b16 %v84
  %v284 = vunpack.c.l.b16 %v85
  %v285 = vunpack.c.l.b16 %v86
  %v286 = vpack.c.b16 %v239, %v238
  %v287 = vpack.c.b16 %v241, %v240
  %v288 = vpack.c.b16 %v243, %v242
  %v289 = vpack.c.b16 %v245, %v244
  %v290 = vpack.c.b16 %v247, %v246
  %v291 = vpack.c.b16 %v249, %v248
  %v292 = vpack.c.b16 %v251, %v250
  %v293 = vpack.c.b16 %v253, %v252
  %v294 = vpack.c.b16 %v255, %v254
  %v295 = vpack.c.b16 %v257, %v256
  %v296 = vpack.c.b16 %v259, %v258
  %v297 = vpack.c.b16 %v261, %v260
  %v298 = vpack.c.b16 %v263, %v262
  %v299 = vpack.c.b16 %v265, %v264
  %v300 = vpack.c.b16 %v267, %v266
  %v301 = vpack.c.b16 %v269, %v268
  %v302 = vpack.c.b16 %v271, %v270
  %v303 = vpack.c.b16 %v273, %v272
  %v304 = vpack.c.b16 %v275, %v274
  %v305 = vpack.c.b16 %v277, %v276
  %v306 = vpack.c.b16 %v279, %v278
  %v307 = vpack.c.b16 %v281, %v280
  %v308 = vpack.c.b16 %v283, %v282
  %v309 = vpack.c.b16 %v285, %v284
  %334 = vmatprep.subr.bf16.mxu0 0
  %335 = vmatpush1.bf16.msra.mxu0 %v286
  %336 = vmatprep.subr.bf16.mxu0 0
  %337 = vmatpush1.bf16.msra.mxu0 %v287
  %338 = vmatprep.subr.bf16.mxu0 0
  %339 = vmatpush1.bf16.msra.mxu0 %v288
  %340 = vmatprep.subr.bf16.mxu0 0
  %341 = vmatpush1.bf16.msra.mxu0 %v289
  %342 = vmatprep.subr.bf16.mxu0 0
  %343 = vmatpush1.bf16.msra.mxu0 %v290
  %344 = vmatprep.subr.bf16.mxu0 0
  %345 = vmatpush1.bf16.msra.mxu0 %v291
  %346 = vmatprep.subr.bf16.mxu0 0
  %347 = vmatpush1.bf16.msra.mxu0 %v292
  %348 = vmatprep.subr.bf16.mxu0 0
  %349 = vmatpush1.bf16.msra.mxu0 %v293
  %350 = vmatprep.subr.bf16.mxu0 0
  %351 = vmatpush1.bf16.msra.mxu0 %v294
  %352 = vmatprep.subr.bf16.mxu0 0
  %353 = vmatpush1.bf16.msra.mxu0 %v295
  %354 = vmatprep.subr.bf16.mxu0 0
  %355 = vmatpush1.bf16.msra.mxu0 %v296
  %356 = vmatprep.subr.bf16.mxu0 0
  %357 = vmatpush1.bf16.msra.mxu0 %v297
  %358 = vmatprep.subr.bf16.mxu0 0
  %359 = vmatpush1.bf16.msra.mxu0 %v298
  %360 = vmatprep.subr.bf16.mxu0 0
  %361 = vmatpush1.bf16.msra.mxu0 %v299
  %362 = vmatprep.subr.bf16.mxu0 0
  %363 = vmatpush1.bf16.msra.mxu0 %v300
  %364 = vmatprep.subr.bf16.mxu0 0
  %365 = vmatpush1.bf16.msra.mxu0 %v301
  %366 = vmatprep.mubr.bf16.mxu0 %v155
  %367 = vmatmul.mubr.bf16.gmra.mrb[0].mxu0 %v154
  %v368 = vpop.f32.mrb[0].mxu0
  %v369 = vadd.f32 %v92, %v368
  %v370 = vpop.f32.mrb[0].mxu0
  %v371 = vpop.f32.mrb[0].mxu0
  %v372 = vadd.f32 %v92, %v371
  %v373 = vpop.f32.mrb[0].mxu0
  %374 = vmatprep.mubr.bf16.mxu0 %v158
  %375 = vmatmul.mubr.bf16.gmra.mrb[0].mxu0 %v157
  %v376 = vpop.f32.mrb[0].mxu0
  %v377 = vadd.f32 %v92, %v376
  %v378 = vpop.f32.mrb[0].mxu0
  %v379 = vpop.f32.mrb[0].mxu0
  %v380 = vadd.f32 %v92, %v379
  %v381 = vpop.f32.mrb[0].mxu0
  %382 = vmatprep.mubr.bf16.mxu0 %v161
  %383 = vmatmul.mubr.bf16.gmra.mrb[0].mxu0 %v160
  %v384 = vpop.f32.mrb[0].mxu0
  %v385 = vadd.f32 %v92, %v384
  %v386 = vpop.f32.mrb[0].mxu0
  %v387 = vpop.f32.mrb[0].mxu0
  %v388 = vadd.f32 %v92, %v387
  %v389 = vpop.f32.mrb[0].mxu0
  %390 = vmatprep.mubr.bf16.mxu0 %v164
  %391 = vmatmul.mubr.bf16.gmra.mrb[0].mxu0 %v163
  %v392 = vpop.f32.mrb[0].mxu0
  %v393 = vadd.f32 %v92, %v392
  %v394 = vpop.f32.mrb[0].mxu0
  %v395 = vpop.f32.mrb[0].mxu0
  %v396 = vadd.f32 %v92, %v395
  %v397 = vpop.f32.mrb[0].mxu0
  %398 = vmatprep.mubr.bf16.mxu0 %v167
  %399 = vmatmul.mubr.bf16.gmra.mrb[0].mxu0 %v166
  %v400 = vpop.f32.mrb[0].mxu0
  %v401 = vadd.f32 %v92, %v400
  %v402 = vpop.f32.mrb[0].mxu0
  %v403 = vpop.f32.mrb[0].mxu0
  %v404 = vadd.f32 %v92, %v403
  %v405 = vpop.f32.mrb[0].mxu0
  %406 = vmatprep.mubr.bf16.mxu0 %v170
  %407 = vmatmul.mubr.bf16.gmra.mrb[0].mxu0 %v169
  %v408 = vpop.f32.mrb[0].mxu0
  %v409 = vadd.f32 %v92, %v408
  %v410 = vpop.f32.mrb[0].mxu0
  %v411 = vpop.f32.mrb[0].mxu0
  %v412 = vadd.f32 %v92, %v411
  %v413 = vpop.f32.mrb[0].mxu0
  %414 = vdwg.mxu0
  %415 = vmatprep.subr.bf16.mxu0 0
  %416 = vmatpush1.bf16.msra.mxu0 %v302
  %417 = vmatprep.subr.bf16.mxu0 0
  %418 = vmatpush1.bf16.msra.mxu0 %v303
  %419 = vmatprep.subr.bf16.mxu0 0
  %420 = vmatpush1.bf16.msra.mxu0 %v304
  %421 = vmatprep.subr.bf16.mxu0 0
  %422 = vmatpush1.bf16.msra.mxu0 %v305
  %423 = vmatprep.subr.bf16.mxu0 0
  %424 = vmatpush1.bf16.msra.mxu0 %v306
  %425 = vmatprep.subr.bf16.mxu0 0
  %426 = vmatpush1.bf16.msra.mxu0 %v307
  %427 = vmatprep.subr.bf16.mxu0 0
  %428 = vmatpush1.bf16.msra.mxu0 %v308
  %429 = vmatprep.subr.bf16.mxu0 0
  %430 = vmatpush1.bf16.msra.mxu0 %v309
  %431 = vmatprep.subr.bf16.mxu0 0
  %432 = vmatpush1.bf16.msra.mxu0 0
  %433 = vmatprep.subr.bf16.mxu0 0
  %434 = vmatpush1.bf16.msra.mxu0 0
  %435 = vmatprep.subr.bf16.mxu0 0
  %436 = vmatpush1.bf16.msra.mxu0 0
  %437 = vmatprep.subr.bf16.mxu0 0
  %438 = vmatpush1.bf16.msra.mxu0 0
  %439 = vmatprep.subr.bf16.mxu0 0
  %440 = vmatpush1.bf16.msra.mxu0 0
  %441 = vmatprep.subr.bf16.mxu0 0
  %442 = vmatpush1.bf16.msra.mxu0 0
  %443 = vmatprep.subr.bf16.mxu0 0
  %444 = vmatpush1.bf16.msra.mxu0 0
  %445 = vmatprep.subr.bf16.mxu0 0
  %446 = vmatpush1.bf16.msra.mxu0 0
  %447 = vmatprep.mubr.bf16.mxu0 0
  %448 = vmatmul.mubr.bf16.gmra.mrb[0].mxu0 %v156
  %v449 = vpop.f32.mrb[0].mxu0
  %v450 = vadd.f32 %v369, %v449
  %v451 = vpop.f32.mrb[0].mxu0
  %v452 = vpop.f32.mrb[0].mxu0
  %v453 = vadd.f32 %v372, %v452
  %v454 = vpop.f32.mrb[0].mxu0
  %455 = vmatprep.mubr.bf16.mxu0 0
  %456 = vmatmul.mubr.bf16.gmra.mrb[0].mxu0 %v159
  %v457 = vpop.f32.mrb[0].mxu0
  %v458 = vadd.f32 %v377, %v457
  %v459 = vpop.f32.mrb[0].mxu0
  %v460 = vpop.f32.mrb[0].mxu0
  %v461 = vadd.f32 %v380, %v460
  %v462 = vpop.f32.mrb[0].mxu0
  %463 = vmatprep.mubr.bf16.mxu0 0
  %464 = vmatmul.mubr.bf16.gmra.mrb[0].mxu0 %v162
  %v465 = vpop.f32.mrb[0].mxu0
  %v466 = vadd.f32 %v385, %v465
  %v467 = vpop.f32.mrb[0].mxu0
  %v468 = vpop.f32.mrb[0].mxu0
  %v469 = vadd.f32 %v388, %v468
  %v470 = vpop.f32.mrb[0].mxu0
  %471 = vmatprep.mubr.bf16.mxu0 0
  %472 = vmatmul.mubr.bf16.gmra.mrb[0].mxu0 %v165
  %v473 = vpop.f32.mrb[0].mxu0
  %v474 = vadd.f32 %v393, %v473
  %v475 = vpop.f32.mrb[0].mxu0
  %v476 = vpop.f32.mrb[0].mxu0
  %v477 = vadd.f32 %v396, %v476
  %v478 = vpop.f32.mrb[0].mxu0
  %479 = vmatprep.mubr.bf16.mxu0 0
  %480 = vmatmul.mubr.bf16.gmra.mrb[0].mxu0 %v168
  %v481 = vpop.f32.mrb[0].mxu0
  %v482 = vadd.f32 %v401, %v481
  %v483 = vpop.f32.mrb[0].mxu0
  %v484 = vpop.f32.mrb[0].mxu0
  %v485 = vadd.f32 %v404, %v484
  %v486 = vpop.f32.mrb[0].mxu0
  %487 = vmatprep.mubr.bf16.mxu0 0
  %488 = vmatmul.mubr.bf16.gmra.mrb[0].mxu0 %v171
  %v489 = vpop.f32.mrb[0].mxu0
  %v490 = vadd.f32 %v409, %v489
  %v491 = vpop.f32.mrb[0].mxu0
  %v492 = vpop.f32.mrb[0].mxu0
  %v493 = vadd.f32 %v412, %v492
  %v494 = vpop.f32.mrb[0].mxu0
  %495 = vdwg.mxu0
  %v496 = vmax.f32 %v450, 0.0
  %v497 = vmax.f32 %v453, 0.0
  %v498 = vmax.f32 %v458, 0.0
  %v499 = vmax.f32 %v461, 0.0
  %v500 = vmax.f32 %v466, 0.0
  %v501 = vmax.f32 %v469, 0.0
  %v502 = vmax.f32 %v474, 0.0
  %v503 = vmax.f32 %v477, 0.0
  %v504 = vmax.f32 %v482, 0.0
  %v505 = vmax.f32 %v485, 0.0
  %v506 = vmax.f32 %v490, 0.0
  %v507 = vmax.f32 %v493, 0.0
  %508 = vst [vmem:[%s3] sm:$0xff] %v496
  %509 = vst [vmem:[%s3 + $0x8] sm:$0xff] %v497
  %510 = vst [vmem:[%s3 + $0x10] sm:$0xff] %v498
  %511 = vst [vmem:[%s3 + $0x18] sm:$0xff] %v499
  %512 = vst [vmem:[%s3 + $0x20] sm:$0xff] %v500
  %513 = vst [vmem:[%s3 + $0x28] sm:$0xff] %v501
  %514 = vst [vmem:[%s3 + $0x30] sm:$0xff] %v502
  %515 = vst [vmem:[%s3 + $0x38] sm:$0xff] %v503
  %516 = vst [vmem:[%s3 + $0x40] sm:$0xff] %v504
  %517 = vst [vmem:[%s3 + $0x48] sm:$0xff] %v505
  %518 = vst [vmem:[%s3 + $0x50] sm:$0xff] %v506
  %519 = vst [vmem:[%s3 + $0x58] sm:$0xff] %v507
  // Predicated region
  $region14: #{ulosd_forward.16} parent=0 // pred_check
    _
  $region15: #{ulosd_forward.16} parent=0 // pred_check_branch
    %521 = sbr.rel (0) target = $region17
  $region16: #{ulosd_forward.16} parent=0 // pred_region
    _
  $region17: #{ulosd_forward.16} parent=0 // pred_fallthru
    _
  // Predicated region
  $region18: #{ulosd_forward.16} parent=0 // pred_check
    _
  $region19: #{ulosd_forward.16} parent=0 // pred_check_branch
    %523 = sbr.rel (0) target = $region21
  $region20: #{ulosd_forward.16} parent=0 // pred_region
    _
  $region21: #{ulosd_forward.16} parent=0 // pred_fallthru
    _

// kernel: ulosd_forward.17
$region0: #{ulosd_forward.17}
  #allocation0 [shape = 'u32[]', space=smem, size = 0x4, offset = 0x4, fixed_abs, tag = 'smem constant byte address 0x4 - core index']
  #allocation1 [shape = 'u32[144,128]{1,0:T(1,128)}', space=vmem, size = 0x12000, scoped, tag = 'internal scratch']
  %s0 = inlined_call_operand.vmem [shape: bf16[96,128], index: 0, kind: input, shape index: {}]
  %s1 = inlined_call_operand.vmem [shape: bf16[128,128], index: 1, kind: input, shape index: {}]
  %s2 = inlined_call_operand.vmem [shape: f32[1,128], index: 2, kind: input, shape index: {}]
  %s3 = inlined_call_operand.vmem [shape: f32[96,128], index: 3, kind: output, shape index: {}]
  %s4 = sld [smem:[#allocation0]]
  $region22: #{ulosd_forward.17} parent=0
    _
  %s6 = ssub.s32 1, %s4
  %s7 = scalar_select 0, %s6, %s4
  // Predicated region
  $region2: #{ulosd_forward.17} parent=0 // pred_check
    _
  $region3: #{ulosd_forward.17} parent=0 // pred_check_branch
    %9 = sbr.rel (0) target = $region5
  $region4: #{ulosd_forward.17} parent=0 // pred_region
    _
  $region5: #{ulosd_forward.17} parent=0 // pred_fallthru
    _
  // Predicated region
  $region6: #{ulosd_forward.17} parent=0 // pred_check
    _
  $region7: #{ulosd_forward.17} parent=0 // pred_check_branch
    %11 = sbr.rel (0) target = $region9
  $region8: #{ulosd_forward.17} parent=0 // pred_region
    _
  $region9: #{ulosd_forward.17} parent=0 // pred_fallthru
    _
  // Predicated region
  $region10: #{ulosd_forward.17} parent=0 // pred_check
    _
  $region11: #{ulosd_forward.17} parent=0 // pred_check_branch
    %13 = sbr.rel (0) target = $region13
  $region12: #{ulosd_forward.17} parent=0 // pred_region
    _
  $region13: #{ulosd_forward.17} parent=0 // pred_fallthru
    _
  %v15 = vld [vmem:[%s0] sm:$0xf]
  %v16 = vld [vmem:[%s0 + $0x4] sm:$0xf]
  %v17 = vld [vmem:[%s0 + $0x8] sm:$0xf]
  %v18 = vld [vmem:[%s0 + $0xc] sm:$0xf]
  %v19 = vld [vmem:[%s0 + $0x10] sm:$0xf]
  %v20 = vld [vmem:[%s0 + $0x14] sm:$0xf]
  %v21 = vld [vmem:[%s0 + $0x18] sm:$0xf]
  %v22 = vld [vmem:[%s0 + $0x1c] sm:$0xf]
  %v23 = vld [vmem:[%s0 + $0x20] sm:$0xf]
  %v24 = vld [vmem:[%s0 + $0x24] sm:$0xf]
  %v25 = vld [vmem:[%s0 + $0x28] sm:$0xf]
  %v26 = vld [vmem:[%s0 + $0x2c] sm:$0xf]
  %v27 = vld [vmem:[%s1] sm:$0xf]
  %v28 = vld [vmem:[%s1 + $0x4] sm:$0xf]
  %v29 = vld [vmem:[%s1 + $0x8] sm:$0xf]
  %v30 = vld [vmem:[%s1 + $0xc] sm:$0xf]
  %v31 = vld [vmem:[%s1 + $0x10] sm:$0xf]
  %v32 = vld [vmem:[%s1 + $0x14] sm:$0xf]
  %v33 = vld [vmem:[%s1 + $0x18] sm:$0xf]
  %v34 = vld [vmem:[%s1 + $0x1c] sm:$0xf]
  %v35 = vld [vmem:[%s1 + $0x20] sm:$0xf]
  %v36 = vld [vmem:[%s1 + $0x24] sm:$0xf]
  %v37 = vld [vmem:[%s1 + $0x28] sm:$0xf]
  %v38 = vld [vmem:[%s1 + $0x2c] sm:$0xf]
  %v39 = vld [vmem:[%s1 + $0x30] sm:$0xf]
  %v40 = vld [vmem:[%s1 + $0x34] sm:$0xf]
  %v41 = vld [vmem:[%s1 + $0x38] sm:$0xf]
  %v42 = vld [vmem:[%s1 + $0x3c] sm:$0xf]
  %v43 = vld [vmem:[%s2] sm:$0x1]
  %v45 = vlaneseq
  %v46 = vshrl.u32 %v45, 7
  %v47 = vsub.s32 0, %v46
  %v48 = vrot.slane %v43, %v47
  %v62 = vunpack.c.l.b16 %v15
  %v63 = vunpack.c.l.b16 %v16
  %v64 = vunpack.c.l.b16 %v17
  %v65 = vunpack.c.l.b16 %v18
  %v66 = vunpack.c.l.b16 %v19
  %v67 = vunpack.c.l.b16 %v20
  %v68 = vunpack.c.l.b16 %v21
  %v69 = vunpack.c.l.b16 %v22
  %v70 = vunpack.c.l.b16 %v23
  %v71 = vunpack.c.l.b16 %v24
  %v72 = vunpack.c.l.b16 %v25
  %v73 = vunpack.c.l.b16 %v26
  %v74 = vpack.c.b16 %v63, %v62
  %v75 = vpack.c.b16 %v65, %v64
  %v76 = vpack.c.b16 %v67, %v66
  %v77 = vpack.c.b16 %v69, %v68
  %v78 = vpack.c.b16 %v71, %v70
  %v79 = vpack.c.b16 %v73, %v72
  %v102 = vunpack.c.l.b16 %v27
  %v103 = vunpack.c.l.b16 %v28
  %v104 = vunpack.c.l.b16 %v29
  %v105 = vunpack.c.l.b16 %v30
  %v106 = vunpack.c.l.b16 %v31
  %v107 = vunpack.c.l.b16 %v32
  %v108 = vunpack.c.l.b16 %v33
  %v109 = vunpack.c.l.b16 %v34
  %v110 = vunpack.c.l.b16 %v35
  %v111 = vunpack.c.l.b16 %v36
  %v112 = vunpack.c.l.b16 %v37
  %v113 = vunpack.c.l.b16 %v38
  %v114 = vunpack.c.l.b16 %v39
  %v115 = vunpack.c.l.b16 %v40
  %v116 = vunpack.c.l.b16 %v41
  %v117 = vunpack.c.l.b16 %v42
  %v118 = vpack.c.b16 %v103, %v102
  %v119 = vpack.c.b16 %v105, %v104
  %v120 = vpack.c.b16 %v107, %v106
  %v121 = vpack.c.b16 %v109, %v108
  %v122 = vpack.c.b16 %v111, %v110
  %v123 = vpack.c.b16 %v113, %v112
  %v124 = vpack.c.b16 %v115, %v114
  %v125 = vpack.c.b16 %v117, %v116
  %134 = vmatprep.subr.bf16.mxu0 0
  %135 = vmatpush1.bf16.msra.mxu0 %v118
  %136 = vmatprep.subr.bf16.mxu0 0
  %137 = vmatpush1.bf16.msra.mxu0 %v119
  %138 = vmatprep.subr.bf16.mxu0 0
  %139 = vmatpush1.bf16.msra.mxu0 %v120
  %140 = vmatprep.subr.bf16.mxu0 0
  %141 = vmatpush1.bf16.msra.mxu0 %v121
  %142 = vmatprep.subr.bf16.mxu0 0
  %143 = vmatpush1.bf16.msra.mxu0 %v122
  %144 = vmatprep.subr.bf16.mxu0 0
  %145 = vmatpush1.bf16.msra.mxu0 %v123
  %146 = vmatprep.subr.bf16.mxu0 0
  %147 = vmatpush1.bf16.msra.mxu0 %v124
  %148 = vmatprep.subr.bf16.mxu0 0
  %149 = vmatpush1.bf16.msra.mxu0 %v125
  %150 = vmatprep.subr.bf16.mxu0 0
  %151 = vmatpush1.bf16.msra.mxu0 0
  %152 = vmatprep.subr.bf16.mxu0 0
  %153 = vmatpush1.bf16.msra.mxu0 0
  %154 = vmatprep.subr.bf16.mxu0 0
  %155 = vmatpush1.bf16.msra.mxu0 0
  %156 = vmatprep.subr.bf16.mxu0 0
  %157 = vmatpush1.bf16.msra.mxu0 0
  %158 = vmatprep.subr.bf16.mxu0 0
  %159 = vmatpush1.bf16.msra.mxu0 0
  %160 = vmatprep.subr.bf16.mxu0 0
  %161 = vmatpush1.bf16.msra.mxu0 0
  %162 = vmatprep.subr.bf16.mxu0 0
  %163 = vmatpush1.bf16.msra.mxu0 0
  %164 = vmatprep.subr.bf16.mxu0 0
  %165 = vmatpush1.bf16.msra.mxu0 0
  %166 = vmatprep.mubr.bf16.mxu0 0
  %167 = vmatmul.mubr.bf16.gmra.mrb[0].mxu0 %v74
  %v168 = vpop.f32.mrb[0].mxu0
  %v169 = vadd.f32 %v48, %v168
  %v170 = vpop.f32.mrb[0].mxu0
  %v171 = vpop.f32.mrb[0].mxu0
  %v172 = vadd.f32 %v48, %v171
  %v173 = vpop.f32.mrb[0].mxu0
  %174 = vmatprep.mubr.bf16.mxu0 0
  %175 = vmatmul.mubr.bf16.gmra.mrb[0].mxu0 %v75
  %v176 = vpop.f32.mrb[0].mxu0
  %v177 = vadd.f32 %v48, %v176
  %v178 = vpop.f32.mrb[0].mxu0
  %v179 = vpop.f32.mrb[0].mxu0
  %v180 = vadd.f32 %v48, %v179
  %v181 = vpop.f32.mrb[0].mxu0
  %182 = vmatprep.mubr.bf16.mxu0 0
  %183 = vmatmul.mubr.bf16.gmra.mrb[0].mxu0 %v76
  %v184 = vpop.f32.mrb[0].mxu0
  %v185 = vadd.f32 %v48, %v184
  %v186 = vpop.f32.mrb[0].mxu0
  %v187 = vpop.f32.mrb[0].mxu0
  %v188 = vadd.f32 %v48, %v187
  %v189 = vpop.f32.mrb[0].mxu0
  %190 = vmatprep.mubr.bf16.mxu0 0
  %191 = vmatmul.mubr.bf16.gmra.mrb[0].mxu0 %v77
  %v192 = vpop.f32.mrb[0].mxu0
  %v193 = vadd.f32 %v48, %v192
  %v194 = vpop.f32.mrb[0].mxu0
  %v195 = vpop.f32.mrb[0].mxu0
  %v196 = vadd.f32 %v48, %v195
  %v197 = vpop.f32.mrb[0].mxu0
  %198 = vmatprep.mubr.bf16.mxu0 0
  %199 = vmatmul.mubr.bf16.gmra.mrb[0].mxu0 %v78
  %v200 = vpop.f32.mrb[0].mxu0
  %v201 = vadd.f32 %v48, %v200
  %v202 = vpop.f32.mrb[0].mxu0
  %v203 = vpop.f32.mrb[0].mxu0
  %v204 = vadd.f32 %v48, %v203
  %v205 = vpop.f32.mrb[0].mxu0
  %206 = vmatprep.mubr.bf16.mxu0 0
  %207 = vmatmul.mubr.bf16.gmra.mrb[0].mxu0 %v79
  %v208 = vpop.f32.mrb[0].mxu0
  %v209 = vadd.f32 %v48, %v208
  %v210 = vpop.f32.mrb[0].mxu0
  %v211 = vpop.f32.mrb[0].mxu0
  %v212 = vadd.f32 %v48, %v211
  %v213 = vpop.f32.mrb[0].mxu0
  %214 = vdwg.mxu0
  %v215 = vmax.f32 %v169, 0.0
  %v216 = vmax.f32 %v172, 0.0
  %v217 = vmax.f32 %v177, 0.0
  %v218 = vmax.f32 %v180, 0.0
  %v219 = vmax.f32 %v185, 0.0
  %v220 = vmax.f32 %v188, 0.0
  %v221 = vmax.f32 %v193, 0.0
  %v222 = vmax.f32 %v196, 0.0
  %v223 = vmax.f32 %v201, 0.0
  %v224 = vmax.f32 %v204, 0.0
  %v225 = vmax.f32 %v209, 0.0
  %v226 = vmax.f32 %v212, 0.0
  %v227 = vand.u32 2147483647, %v169
  %v228 = vand.u32 2147483647, %v172
  %v229 = vand.u32 2147483647, %v177
  %v230 = vand.u32 2147483647, %v180
  %v231 = vand.u32 2147483647, %v185
  %v232 = vand.u32 2147483647, %v188
  %v233 = vand.u32 2147483647, %v193
  %v234 = vand.u32 2147483647, %v196
  %v235 = vand.u32 2147483647, %v201
  %v236 = vand.u32 2147483647, %v204
  %v237 = vand.u32 2147483647, %v209
  %v238 = vand.u32 2147483647, %v212
  %v239 = vsub.f32 0.0, %v227
  %v240 = vsub.f32 0.0, %v228
  %v241 = vsub.f32 0.0, %v229
  %v242 = vsub.f32 0.0, %v230
  %v243 = vsub.f32 0.0, %v231
  %v244 = vsub.f32 0.0, %v232
  %v245 = vsub.f32 0.0, %v233
  %v246 = vsub.f32 0.0, %v234
  %v247 = vsub.f32 0.0, %v235
  %v248 = vsub.f32 0.0, %v236
  %v249 = vsub.f32 0.0, %v237
  %v250 = vsub.f32 0.0, %v238
  %v251 = vmul.f32 %v239, 1.442695
  %v252 = vpow.pop %v251
  %v253 = vmul.f32 %v240, 1.442695
  %v254 = vpow.pop %v253
  %v255 = vmul.f32 %v241, 1.442695
  %v256 = vpow.pop %v255
  %v257 = vmul.f32 %v242, 1.442695
  %v258 = vpow.pop %v257
  %v259 = vmul.f32 %v243, 1.442695
  %v260 = vpow.pop %v259
  %v261 = vmul.f32 %v244, 1.442695
  %v262 = vpow.pop %v261
  %v263 = vmul.f32 %v245, 1.442695
  %v264 = vpow.pop %v263
  %v265 = vmul.f32 %v246, 1.442695
  %v266 = vpow.pop %v265
  %v267 = vmul.f32 %v247, 1.442695
  %v268 = vpow.pop %v267
  %v269 = vmul.f32 %v248, 1.442695
  %v270 = vpow.pop %v269
  %v271 = vmul.f32 %v249, 1.442695
  %v272 = vpow.pop %v271
  %v273 = vmul.f32 %v250, 1.442695
  %v274 = vpow.pop %v273
  %v275 = vadd.f32 %v252, 1.0
  %v276 = vlog2.pop %v275
  %v277 = vmul.f32 %v276, 0.6931472
  %v278 = vmul.f32 -0.5, %v252
  %v279 = vadd.f32 %v278, 1.0
  %v280 = vmul.f32 %v279, %v252
  %v281 = vand.u32 2147483647, %v252
  %vm282 = vcmp.lt.f32.partialorder %v281, 0.0004427343
  %v283 = vsel %vm282, %v280, %v277
  %v284 = vadd.f32 %v254, 1.0
  %v285 = vlog2.pop %v284
  %v286 = vmul.f32 %v285, 0.6931472
  %v287 = vmul.f32 -0.5, %v254
  %v288 = vadd.f32 %v287, 1.0
  %v289 = vmul.f32 %v288, %v254
  %v290 = vand.u32 2147483647, %v254
  %vm291 = vcmp.lt.f32.partialorder %v290, 0.0004427343
  %v292 = vsel %vm291, %v289, %v286
  %v293 = vadd.f32 %v256, 1.0
  %v294 = vlog2.pop %v293
  %v295 = vmul.f32 %v294, 0.6931472
  %v296 = vmul.f32 -0.5, %v256
  %v297 = vadd.f32 %v296, 1.0
  %v298 = vmul.f32 %v297, %v256
  %v299 = vand.u32 2147483647, %v256
  %vm300 = vcmp.lt.f32.partialorder %v299, 0.0004427343
  %v301 = vsel %vm300, %v298, %v295
  %v302 = vadd.f32 %v258, 1.0
  %v303 = vlog2.pop %v302
  %v304 = vmul.f32 %v303, 0.6931472
  %v305 = vmul.f32 -0.5, %v258
  %v306 = vadd.f32 %v305, 1.0
  %v307 = vmul.f32 %v306, %v258
  %v308 = vand.u32 2147483647, %v258
  %vm309 = vcmp.lt.f32.partialorder %v308, 0.0004427343
  %v310 = vsel %vm309, %v307, %v304
  %v311 = vadd.f32 %v260, 1.0
  %v312 = vlog2.pop %v311
  %v313 = vmul.f32 %v312, 0.6931472
  %v314 = vmul.f32 -0.5, %v260
  %v315 = vadd.f32 %v314, 1.0
  %v316 = vmul.f32 %v315, %v260
  %v317 = vand.u32 2147483647, %v260
  %vm318 = vcmp.lt.f32.partialorder %v317, 0.0004427343
  %v319 = vsel %vm318, %v316, %v313
  %v320 = vadd.f32 %v262, 1.0
  %v321 = vlog2.pop %v320
  %v322 = vmul.f32 %v321, 0.6931472
  %v323 = vmul.f32 -0.5, %v262
  %v324 = vadd.f32 %v323, 1.0
  %v325 = vmul.f32 %v324, %v262
  %v326 = vand.u32 2147483647, %v262
  %vm327 = vcmp.lt.f32.partialorder %v326, 0.0004427343
  %v328 = vsel %vm327, %v325, %v322
  %v329 = vadd.f32 %v264, 1.0
  %v330 = vlog2.pop %v329
  %v331 = vmul.f32 %v330, 0.6931472
  %v332 = vmul.f32 -0.5, %v264
  %v333 = vadd.f32 %v332, 1.0
  %v334 = vmul.f32 %v333, %v264
  %v335 = vand.u32 2147483647, %v264
  %vm336 = vcmp.lt.f32.partialorder %v335, 0.0004427343
  %v337 = vsel %vm336, %v334, %v331
  %v338 = vadd.f32 %v266, 1.0
  %v339 = vlog2.pop %v338
  %v340 = vmul.f32 %v339, 0.6931472
  %v341 = vmul.f32 -0.5, %v266
  %v342 = vadd.f32 %v341, 1.0
  %v343 = vmul.f32 %v342, %v266
  %v344 = vand.u32 2147483647, %v266
  %vm345 = vcmp.lt.f32.partialorder %v344, 0.0004427343
  %v346 = vsel %vm345, %v343, %v340
  %v347 = vadd.f32 %v268, 1.0
  %v348 = vlog2.pop %v347
  %v349 = vmul.f32 %v348, 0.6931472
  %v350 = vmul.f32 -0.5, %v268
  %v351 = vadd.f32 %v350, 1.0
  %v352 = vmul.f32 %v351, %v268
  %v353 = vand.u32 2147483647, %v268
  %vm354 = vcmp.lt.f32.partialorder %v353, 0.0004427343
  %v355 = vsel %vm354, %v352, %v349
  %v356 = vadd.f32 %v270, 1.0
  %v357 = vlog2.pop %v356
  %v358 = vmul.f32 %v357, 0.6931472
  %v359 = vmul.f32 -0.5, %v270
  %v360 = vadd.f32 %v359, 1.0
  %v361 = vmul.f32 %v360, %v270
  %v362 = vand.u32 2147483647, %v270
  %vm363 = vcmp.lt.f32.partialorder %v362, 0.0004427343
  %v364 = vsel %vm363, %v361, %v358
  %v365 = vadd.f32 %v272, 1.0
  %v366 = vlog2.pop %v365
  %v367 = vmul.f32 %v366, 0.6931472
  %v368 = vmul.f32 -0.5, %v272
  %v369 = vadd.f32 %v368, 1.0
  %v370 = vmul.f32 %v369, %v272
  %v371 = vand.u32 2147483647, %v272
  %vm372 = vcmp.lt.f32.partialorder %v371, 0.0004427343
  %v373 = vsel %vm372, %v370, %v367
  %v374 = vadd.f32 %v274, 1.0
  %v375 = vlog2.pop %v374
  %v376 = vmul.f32 %v375, 0.6931472
  %v377 = vmul.f32 -0.5, %v274
  %v378 = vadd.f32 %v377, 1.0
  %v379 = vmul.f32 %v378, %v274
  %v380 = vand.u32 2147483647, %v274
  %vm381 = vcmp.lt.f32.partialorder %v380, 0.0004427343
  %v382 = vsel %vm381, %v379, %v376
  %v383 = vadd.f32 %v215, %v283
  %v384 = vadd.f32 %v216, %v292
  %v385 = vadd.f32 %v217, %v301
  %v386 = vadd.f32 %v218, %v310
  %v387 = vadd.f32 %v219, %v319
  %v388 = vadd.f32 %v220, %v328
  %v389 = vadd.f32 %v221, %v337
  %v390 = vadd.f32 %v222, %v346
  %v391 = vadd.f32 %v223, %v355
  %v392 = vadd.f32 %v224, %v364
  %v393 = vadd.f32 %v225, %v373
  %v394 = vadd.f32 %v226, %v382
  %395 = vst [vmem:[%s3] sm:$0xff] %v383
  %396 = vst [vmem:[%s3 + $0x8] sm:$0xff] %v384
  %397 = vst [vmem:[%s3 + $0x10] sm:$0xff] %v385
  %398 = vst [vmem:[%s3 + $0x18] sm:$0xff] %v386
  %399 = vst [vmem:[%s3 + $0x20] sm:$0xff] %v387
  %400 = vst [vmem:[%s3 + $0x28] sm:$0xff] %v388
  %401 = vst [vmem:[%s3 + $0x30] sm:$0xff] %v389
  %402 = vst [vmem:[%s3 + $0x38] sm:$0xff] %v390
  %403 = vst [vmem:[%s3 + $0x40] sm:$0xff] %v391
  %404 = vst [vmem:[%s3 + $0x48] sm:$0xff] %v392
  %405 = vst [vmem:[%s3 + $0x50] sm:$0xff] %v393
  %406 = vst [vmem:[%s3 + $0x58] sm:$0xff] %v394
  // Predicated region
  $region14: #{ulosd_forward.17} parent=0 // pred_check
    _
  $region15: #{ulosd_forward.17} parent=0 // pred_check_branch
    %408 = sbr.rel (0) target = $region17
  $region16: #{ulosd_forward.17} parent=0 // pred_region
    _
  $region17: #{ulosd_forward.17} parent=0 // pred_fallthru
    _
  // Predicated region
  $region18: #{ulosd_forward.17} parent=0 // pred_check
    _
  $region19: #{ulosd_forward.17} parent=0 // pred_check_branch
    %410 = sbr.rel (0) target = $region21
  $region20: #{ulosd_forward.17} parent=0 // pred_region
    _
  $region21: #{ulosd_forward.17} parent=0 // pred_fallthru
    _

// kernel: tile.13
$region0: #{tile.13}
  #allocation0 [shape = 's32[1]{0}', space=sflag, size = 0x4, scoped, tag = 'scoped memory for tile.13']
  %s0 = inlined_call_operand.vmem [shape: f32[4], index: 0, kind: input, shape index: {}]
  %s1 = inlined_call_operand.vmem [shape: f32[4,4], index: 1, kind: output, shape index: {}]
  // Predicated region
  $region2: #{tile.13} parent=0 // pred_check
    _
  $region3: #{tile.13} parent=0 // pred_check_branch
    %3 = sbr.rel (0) target = $region5
  $region4: #{tile.13} parent=0 // pred_region
    _
  $region5: #{tile.13} parent=0 // pred_fallthru
    _
  %v4 = vld [vmem:[%s0] ss:$0 sm:$0xff]
  %5 = vst [vmem:[%s1] sm:$0xf] %v4

// kernel: div.0
$region0: #{div.0}
  #allocation0 [shape = 's32[1]{0}', space=sflag, size = 0x4, scoped, tag = 'scoped memory for div.0']
  %s0 = inlined_call_operand.vmem [shape: f32[24,1], index: 0, kind: input, shape index: {}]
  %s1 = inlined_call_operand.vmem [shape: f32[24,1], index: 1, kind: input, shape index: {}]
  %s2 = inlined_call_operand.vmem [shape: f32[24,1], index: 2, kind: output, shape index: {}]
  %v3 = vld [vmem:[%s0] sm:$0xff]
  %v4 = vld [vmem:[%s1] sm:$0xff]
  %5 = xla_tuple %v3, %v4
  %6 = xla_tuple %5
  %v7 = vrcp.pop %v4
  %v8 = vmul.f32 %v3, %v7
  %9 = xla_tuple %v8
  %10 = vst [vmem:[%s2] sm:$0xff] %v8
  %s11 = scalar_lea.vmem %s0, 8
  %v12 = vld [vmem:[%s11] sm:$0xff]
  %s13 = scalar_lea.vmem %s1, 8
  %v14 = vld [vmem:[%s13] sm:$0xff]
  %15 = xla_tuple %v12, %v14
  %16 = xla_tuple %15
  %v17 = vrcp.pop %v14
  %v18 = vmul.f32 %v12, %v17
  %19 = xla_tuple %v18
  %s20 = scalar_lea.vmem %s2, 8
  %21 = vst [vmem:[%s20] sm:$0xff] %v18
  %s22 = scalar_lea.vmem %s0, 16
  %v23 = vld [vmem:[%s22] sm:$0xff]
  %s24 = scalar_lea.vmem %s1, 16
  %v25 = vld [vmem:[%s24] sm:$0xff]
  %26 = xla_tuple %v23, %v25
  %27 = xla_tuple %26
  %v28 = vrcp.pop %v25
  %v29 = vmul.f32 %v23, %v28
  %30 = xla_tuple %v29
  %s31 = scalar_lea.vmem %s2, 16
  %32 = vst [vmem:[%s31] sm:$0xff] %v29

// kernel: ulosd_forward.18
$region0: #{ulosd_forward.18}
  #allocation0 [shape = 'u32[]', space=smem, size = 0x4, offset = 0x4, fixed_abs, tag = 'smem constant byte address 0x4 - core index']
  #allocation1 [shape = 'u32[144,128]{1,0:T(1,128)}', space=vmem, size = 0x12000, scoped, tag = 'internal scratch']
  %s0 = inlined_call_operand.vmem [shape: f32[24,16], index: 0, kind: input, shape index: {}]
  %s1 = inlined_call_operand.vmem [shape: f32[1,16], index: 1, kind: input, shape index: {}]
  %s2 = inlined_call_operand.vmem [shape: f32[1,16], index: 2, kind: input, shape index: {}]
  %s3 = inlined_call_operand.vmem [shape: f32[24,1], index: 3, kind: output, shape index: {0}]
  %s4 = inlined_call_operand.vmem [shape: f32[24,1], index: 4, kind: output, shape index: {1}]
  %s5 = inlined_call_operand.vmem [shape: f32[24,1], index: 5, kind: output, shape index: {2}]
  %6 = xla_tuple %s3, %s4, %s5
  %s7 = sld [smem:[#allocation0]]
  $region38: #{ulosd_forward.18} parent=0
    _
  %s9 = ssub.s32 1, %s7
  %s10 = scalar_select 0, %s9, %s7
  // Predicated region
  $region2: #{ulosd_forward.18} parent=0 // pred_check
    _
  $region3: #{ulosd_forward.18} parent=0 // pred_check_branch
    %12 = sbr.rel (0) target = $region5
  $region4: #{ulosd_forward.18} parent=0 // pred_region
    _
  $region5: #{ulosd_forward.18} parent=0 // pred_fallthru
    _
  // Predicated region
  $region6: #{ulosd_forward.18} parent=0 // pred_check
    _
  $region7: #{ulosd_forward.18} parent=0 // pred_check_branch
    %14 = sbr.rel (0) target = $region9
  $region8: #{ulosd_forward.18} parent=0 // pred_region
    _
  $region9: #{ulosd_forward.18} parent=0 // pred_fallthru
    _
  // Predicated region
  $region10: #{ulosd_forward.18} parent=0 // pred_check
    _
  $region11: #{ulosd_forward.18} parent=0 // pred_check_branch
    %16 = sbr.rel (0) target = $region13
  $region12: #{ulosd_forward.18} parent=0 // pred_region
    _
  $region13: #{ulosd_forward.18} parent=0 // pred_fallthru
    _
  %v17 = vld [vmem:[%s0] sm:$0xff]
  %v18 = vld [vmem:[%s0 + $0x8] sm:$0xff]
  %v19 = vld [vmem:[%s0 + $0x10] sm:$0xff]
  %vm20 = vcmask 130048
  %v21 = vsel %vm20, %v17, 0.0
  %22 = vadd.xlane.f32.xlu0 %v21
  %v23 = vpop.xlane.xlu0 %22
  %v24 = vsel %vm20, %v18, 0.0
  %25 = vadd.xlane.f32.xlu0 %v24
  %v26 = vpop.xlane.xlu0 %25
  %v27 = vsel %vm20, %v19, 0.0
  %28 = vadd.xlane.f32.xlu0 %v27
  %v29 = vpop.xlane.xlu0 %28
  %v30 = vadd.f32 %v23, 1e-06
  %v31 = vadd.f32 %v26, 1e-06
  %v32 = vadd.f32 %v29, 1e-06
  %v33 = vrcp.pop %v30
  %v34 = vrcp.pop %v31
  %v35 = vrcp.pop %v32
  %v36 = vld [vmem:[%s1] sm:$0x1]
  %v38 = vlaneseq
  %v39 = vshrl.u32 %v38, 7
  %v40 = vsub.s32 0, %v39
  %v41 = vrot.slane %v36, %v40
  %v43 = vmul.f32 %v17, %v41
  %v44 = vmul.f32 %v18, %v41
  %v45 = vmul.f32 %v19, %v41
  %v46 = vsel %vm20, %v43, 0.0
  %47 = vadd.xlane.f32.xlu0 %v46
  %v48 = vpop.xlane.xlu0 %47
  %v49 = vsel %vm20, %v44, 0.0
  %50 = vadd.xlane.f32.xlu0 %v49
  %v51 = vpop.xlane.xlu0 %50
  %v52 = vsel %vm20, %v45, 0.0
  %53 = vadd.xlane.f32.xlu0 %v52
  %v54 = vpop.xlane.xlu0 %53
  %v55 = vmul.f32 %v48, %v33
  %v56 = vmul.f32 %v51, %v34
  %v57 = vmul.f32 %v54, %v35
  %vm58 = vcmask 7168
  %59 = vst.msk [vmem:[%s3] sm:$0xff] %vm58, %v55
  %60 = vst.msk [vmem:[%s3 + $0x8] sm:$0xff] %vm58, %v56
  %61 = vst.msk [vmem:[%s3 + $0x10] sm:$0xff] %vm58, %v57
  %v62 = vld [vmem:[%s2] sm:$0x1]
  %v64 = vlaneseq
  %v65 = vshrl.u32 %v64, 7
  %v66 = vsub.s32 0, %v65
  %v67 = vrot.slane %v62, %v66
  %v69 = vmul.f32 %v17, %v67
  %v70 = vmul.f32 %v18, %v67
  %v71 = vmul.f32 %v19, %v67
  %v72 = vsel %vm20, %v69, 0.0
  %73 = vadd.xlane.f32.xlu0 %v72
  %v74 = vpop.xlane.xlu0 %73
  %v75 = vsel %vm20, %v70, 0.0
  %76 = vadd.xlane.f32.xlu0 %v75
  %v77 = vpop.xlane.xlu0 %76
  %v78 = vsel %vm20, %v71, 0.0
  %79 = vadd.xlane.f32.xlu0 %v78
  %v80 = vpop.xlane.xlu0 %79
  %v81 = vmul.f32 %v74, %v33
  %v82 = vmul.f32 %v77, %v34
  %v83 = vmul.f32 %v80, %v35
  %84 = vst.msk [vmem:[%s4] sm:$0xff] %vm58, %v81
  %85 = vst.msk [vmem:[%s4 + $0x8] sm:$0xff] %vm58, %v82
  %86 = vst.msk [vmem:[%s4 + $0x10] sm:$0xff] %vm58, %v83
  %v87 = vmul.f32 %v23, 0.0625
  %v88 = vmul.f32 %v26, 0.0625
  %v89 = vmul.f32 %v29, 0.0625
  %90 = vst.msk [vmem:[%s5] sm:$0xff] %vm58, %v87
  %91 = vst.msk [vmem:[%s5 + $0x8] sm:$0xff] %vm58, %v88
  %92 = vst.msk [vmem:[%s5 + $0x10] sm:$0xff] %vm58, %v89
  // Predicated region
  $region14: #{ulosd_forward.18} parent=0 // pred_check
    _
  $region15: #{ulosd_forward.18} parent=0 // pred_check_branch
    %94 = sbr.rel (0) target = $region17
  $region16: #{ulosd_forward.18} parent=0 // pred_region
    _
  $region17: #{ulosd_forward.18} parent=0 // pred_fallthru
    _
  // Predicated region
  $region18: #{ulosd_forward.18} parent=0 // pred_check
    _
  $region19: #{ulosd_forward.18} parent=0 // pred_check_branch
    %96 = sbr.rel (0) target = $region21
  $region20: #{ulosd_forward.18} parent=0 // pred_region
    _
  $region21: #{ulosd_forward.18} parent=0 // pred_fallthru
    _
  // Predicated region
  $region22: #{ulosd_forward.18} parent=0 // pred_check
    _
  $region23: #{ulosd_forward.18} parent=0 // pred_check_branch
    %98 = sbr.rel (0) target = $region25
  $region24: #{ulosd_forward.18} parent=0 // pred_region
    _
  $region25: #{ulosd_forward.18} parent=0 // pred_fallthru
    _
  // Predicated region
  $region26: #{ulosd_forward.18} parent=0 // pred_check
    _
  $region27: #{ulosd_forward.18} parent=0 // pred_check_branch
    %100 = sbr.rel (0) target = $region29
  $region28: #{ulosd_forward.18} parent=0 // pred_region
    _
  $region29: #{ulosd_forward.18} parent=0 // pred_fallthru
    _
  // Predicated region
  $region30: #{ulosd_forward.18} parent=0 // pred_check
    _
  $region31: #{ulosd_forward.18} parent=0 // pred_check_branch
    %102 = sbr.rel (0) target = $region33
  $region32: #{ulosd_forward.18} parent=0 // pred_region
    _
  $region33: #{ulosd_forward.18} parent=0 // pred_fallthru
    _
  // Predicated region
  $region34: #{ulosd_forward.18} parent=0 // pred_check
    _
  $region35: #{ulosd_forward.18} parent=0 // pred_check_branch
    %104 = sbr.rel (0) target = $region37
  $region36: #{ulosd_forward.18} parent=0 // pred_region
    _
  $region37: #{ulosd_forward.18} parent=0 // pred_fallthru
    _

// kernel: ulosd_forward.19
$region0: #{ulosd_forward.19}
  #allocation0 [shape = 'u32[]', space=smem, size = 0x4, offset = 0x4, fixed_abs, tag = 'smem constant byte address 0x4 - core index']
  #allocation1 [shape = 'u32[144,128]{1,0:T(1,128)}', space=vmem, size = 0x12000, scoped, tag = 'internal scratch']
  %s0 = inlined_call_operand.vmem [shape: f32[24,1], index: 0, kind: input, shape index: {}]
  %s1 = inlined_call_operand.vmem [shape: f32[24,1], index: 1, kind: input, shape index: {}]
  %s2 = inlined_call_operand.vmem [shape: f32[24,1], index: 2, kind: input, shape index: {}]
  %s3 = inlined_call_operand.vmem [shape: f32[1,16], index: 3, kind: input, shape index: {}]
  %s4 = inlined_call_operand.vmem [shape: f32[1,16], index: 4, kind: input, shape index: {}]
  %s5 = inlined_call_operand.vmem [shape: f32[24,16], index: 5, kind: output, shape index: {}]
  %s6 = sld [smem:[#allocation0]]
  $region30: #{ulosd_forward.19} parent=0
    _
  %s8 = ssub.s32 1, %s6
  %s9 = scalar_select 0, %s8, %s6
  // Predicated region
  $region2: #{ulosd_forward.19} parent=0 // pred_check
    _
  $region3: #{ulosd_forward.19} parent=0 // pred_check_branch
    %11 = sbr.rel (0) target = $region5
  $region4: #{ulosd_forward.19} parent=0 // pred_region
    _
  $region5: #{ulosd_forward.19} parent=0 // pred_fallthru
    _
  // Predicated region
  $region6: #{ulosd_forward.19} parent=0 // pred_check
    _
  $region7: #{ulosd_forward.19} parent=0 // pred_check_branch
    %13 = sbr.rel (0) target = $region9
  $region8: #{ulosd_forward.19} parent=0 // pred_region
    _
  $region9: #{ulosd_forward.19} parent=0 // pred_fallthru
    _
  // Predicated region
  $region10: #{ulosd_forward.19} parent=0 // pred_check
    _
  $region11: #{ulosd_forward.19} parent=0 // pred_check_branch
    %15 = sbr.rel (0) target = $region13
  $region12: #{ulosd_forward.19} parent=0 // pred_region
    _
  $region13: #{ulosd_forward.19} parent=0 // pred_fallthru
    _
  // Predicated region
  $region14: #{ulosd_forward.19} parent=0 // pred_check
    _
  $region15: #{ulosd_forward.19} parent=0 // pred_check_branch
    %17 = sbr.rel (0) target = $region17
  $region16: #{ulosd_forward.19} parent=0 // pred_region
    _
  $region17: #{ulosd_forward.19} parent=0 // pred_fallthru
    _
  // Predicated region
  $region18: #{ulosd_forward.19} parent=0 // pred_check
    _
  $region19: #{ulosd_forward.19} parent=0 // pred_check_branch
    %19 = sbr.rel (0) target = $region21
  $region20: #{ulosd_forward.19} parent=0 // pred_region
    _
  $region21: #{ulosd_forward.19} parent=0 // pred_fallthru
    _
  %v20 = vld [vmem:[%s3] sm:$0x1]
  %v21 = vld [vmem:[%s0] sm:$0xff]
  %v22 = vld [vmem:[%s0 + $0x8] sm:$0xff]
  %v23 = vld [vmem:[%s0 + $0x10] sm:$0xff]
  %v25 = vlaneseq
  %v26 = vshrl.u32 %v25, 7
  %v27 = vsub.s32 0, %v26
  %v28 = vrot.slane %v20, %v27
  %31 = vset.pattern.permute.xlu0 0
  %32 = vperm.xlu0 %31, %v21
  %v33 = vpop.permute.xlu0 %32
  %36 = vset.pattern.permute.xlu0 0
  %37 = vperm.xlu0 %36, %v22
  %v38 = vpop.permute.xlu0 %37
  %41 = vset.pattern.permute.xlu0 0
  %42 = vperm.xlu0 %41, %v23
  %v43 = vpop.permute.xlu0 %42
  %v45 = vsub.f32 %v28, %v33
  %v46 = vsub.f32 %v28, %v38
  %v47 = vsub.f32 %v28, %v43
  %v48 = vmul.f32 %v45, %v45
  %v49 = vmul.f32 %v46, %v46
  %v50 = vmul.f32 %v47, %v47
  %v51 = vld [vmem:[%s4] sm:$0x1]
  %v52 = vld [vmem:[%s1] sm:$0xff]
  %v53 = vld [vmem:[%s1 + $0x8] sm:$0xff]
  %v54 = vld [vmem:[%s1 + $0x10] sm:$0xff]
  %v56 = vlaneseq
  %v57 = vshrl.u32 %v56, 7
  %v58 = vsub.s32 0, %v57
  %v59 = vrot.slane %v51, %v58
  %62 = vset.pattern.permute.xlu0 0
  %63 = vperm.xlu0 %62, %v52
  %v64 = vpop.permute.xlu0 %63
  %67 = vset.pattern.permute.xlu0 0
  %68 = vperm.xlu0 %67, %v53
  %v69 = vpop.permute.xlu0 %68
  %72 = vset.pattern.permute.xlu0 0
  %73 = vperm.xlu0 %72, %v54
  %v74 = vpop.permute.xlu0 %73
  %v76 = vsub.f32 %v59, %v64
  %v77 = vsub.f32 %v59, %v69
  %v78 = vsub.f32 %v59, %v74
  %v79 = vmul.f32 %v76, %v76
  %v80 = vmul.f32 %v77, %v77
  %v81 = vmul.f32 %v78, %v78
  %v82 = vadd.f32 %v48, %v79
  %v83 = vadd.f32 %v49, %v80
  %v84 = vadd.f32 %v50, %v81
  %v85 = vsub.f32 0.0, %v82
  %v86 = vsub.f32 0.0, %v83
  %v87 = vsub.f32 0.0, %v84
  %v88 = vmul.f32 %v85, 3.5555556
  %v89 = vmul.f32 %v86, 3.5555556
  %v90 = vmul.f32 %v87, 3.5555556
  %v91 = vmul.f32 %v88, 1.442695
  %v92 = vpow.pop %v91
  %v93 = vmul.f32 %v89, 1.442695
  %v94 = vpow.pop %v93
  %v95 = vmul.f32 %v90, 1.442695
  %v96 = vpow.pop %v95
  %v97 = vld [vmem:[%s2] sm:$0xff]
  %v98 = vld [vmem:[%s2 + $0x8] sm:$0xff]
  %v99 = vld [vmem:[%s2 + $0x10] sm:$0xff]
  %101 = vset.pattern.permute.xlu0 0
  %102 = vperm.xlu0 %101, %v97
  %v103 = vpop.permute.xlu0 %102
  %106 = vset.pattern.permute.xlu0 0
  %107 = vperm.xlu0 %106, %v98
  %v108 = vpop.permute.xlu0 %107
  %111 = vset.pattern.permute.xlu0 0
  %112 = vperm.xlu0 %111, %v99
  %v113 = vpop.permute.xlu0 %112
  %v115 = vmul.f32 %v92, %v103
  %v116 = vmul.f32 %v94, %v108
  %v117 = vmul.f32 %v96, %v113
  %vm118 = vcmask 130048
  %119 = vst.msk [vmem:[%s5] sm:$0xff] %vm118, %v115
  %120 = vst.msk [vmem:[%s5 + $0x8] sm:$0xff] %vm118, %v116
  %121 = vst.msk [vmem:[%s5 + $0x10] sm:$0xff] %vm118, %v117
  // Predicated region
  $region22: #{ulosd_forward.19} parent=0 // pred_check
    _
  $region23: #{ulosd_forward.19} parent=0 // pred_check_branch
    %123 = sbr.rel (0) target = $region25
  $region24: #{ulosd_forward.19} parent=0 // pred_region
    _
  $region25: #{ulosd_forward.19} parent=0 // pred_fallthru
    _
  // Predicated region
  $region26: #{ulosd_forward.19} parent=0 // pred_check
    _
  $region27: #{ulosd_forward.19} parent=0 // pred_check_branch
    %125 = sbr.rel (0) target = $region29
  $region28: #{ulosd_forward.19} parent=0 // pred_region
    _
  $region29: #{ulosd_forward.19} parent=0 // pred_fallthru
    _

// kernel: ulosd_forward.20
$region0: #{ulosd_forward.20}
  #allocation0 [shape = 'u32[]', space=smem, size = 0x4, offset = 0x4, fixed_abs, tag = 'smem constant byte address 0x4 - core index']
  #allocation1 [shape = 'u32[144,128]{1,0:T(1,128)}', space=vmem, size = 0x12000, scoped, tag = 'internal scratch']
  %s0 = inlined_call_operand.vmem [shape: bf16[512,128], index: 0, kind: input, shape index: {}]
  %s1 = inlined_call_operand.vmem [shape: bf16[128,128], index: 1, kind: input, shape index: {}]
  %s2 = inlined_call_operand.vmem [shape: f32[1,128], index: 2, kind: input, shape index: {}]
  %s3 = inlined_call_operand.vmem [shape: f32[512,128], index: 3, kind: output, shape index: {}]
  %s4 = sld [smem:[#allocation0]]
  $region45: #{ulosd_forward.20} parent=0
    _
  %s6 = ssub.s32 1, %s4
  %s7 = scalar_select 0, %s6, %s4
  loop: start=0, step=1, limit=4
  $region2: #{ulosd_forward.20} parent=0 // loop_pre_header
    _
  $region3: #{ulosd_forward.20} parent=0 // loop_header
    %s9 = sphi 0, %s13
    %p10 = scmp.ge.s32.totalorder %s9, 4
    %s19 = sphi 0, %s21
    %s22 = sphi 0, %s19
    %s23 = sphi 0, %s22
    %s39 = sphi 0, %s23
    %s43 = sphi 0, %s43
    %s45 = sphi 0, %s43
    %s46 = sphi 0, %s45
    %s60 = sphi 0, %s46
    %s64 = sphi 0, %s64
    %s66 = sphi 0, %s64
    %s67 = sphi 0, %s66
    %s81 = sphi 0, %s67
    %s87 = sphi 0, %s89
    %s90 = sphi 0, %s87
    %s91 = sphi 0, %s90
    %s107 = sphi 0, %s91
  $region4: #{ulosd_forward.20} parent=0 // loop_header_branch
    %12 = sbr.rel (%p10) target = $region8
  $region5: #{ulosd_forward.20} parent=0 // loop_body
    %s14 = ssub.s32 %s9, 1
    %s15 = ssub.s32 %s9, 2
    %s16 = sadd.s32 %s9, 1
    %s17 = ssub.s32 %s9, %s16
    %p18 = scmp.eq.s32.totalorder %s17, 0
    %s20 = sadd.s32 %s19, 1
    %s21 = scalar_select %p18, %s19, %s20
    %p24 = pneg %p18
    %p25 = scmp.eq.s32.totalorder %s9, 1
    %p26 = por %p24, %p25
    %p27 = scmp.ne.s32.totalorder %s19, %s22
    %p28 = scmp.eq.s32.totalorder %s9, 0
    %p29 = por %p27, %p28
    %p30 = scmp.ne.s32.totalorder %s19, %s22
    %p31 = scmp.eq.s32.totalorder %s14, 1
    %p32 = por %p30, %p31
    %p33 = scmp.ne.s32.totalorder %s22, %s23
    %p34 = scmp.eq.s32.totalorder %s14, 0
    %p35 = por %p33, %p34
    %p36 = scmp.ne.s32.totalorder %s22, %s23
    %p37 = scmp.eq.s32.totalorder %s15, 1
    %p38 = por %p36, %p37
    %p40 = scmp.ne.s32.totalorder %s23, %s39
    %p41 = scmp.eq.s32.totalorder %s15, 0
    %p42 = por %p40, %p41
    %s44 = sadd.s32 %s43, 1
    %p47 = scmp.eq.s32.totalorder %s9, 1
    %p48 = scmp.ne.s32.totalorder %s43, %s45
    %p49 = scmp.eq.s32.totalorder %s9, 0
    %p50 = por %p48, %p49
    %p51 = scmp.ne.s32.totalorder %s43, %s45
    %p52 = scmp.eq.s32.totalorder %s14, 1
    %p53 = por %p51, %p52
    %p54 = scmp.ne.s32.totalorder %s45, %s46
    %p55 = scmp.eq.s32.totalorder %s14, 0
    %p56 = por %p54, %p55
    %p57 = scmp.ne.s32.totalorder %s45, %s46
    %p58 = scmp.eq.s32.totalorder %s15, 1
    %p59 = por %p57, %p58
    %p61 = scmp.ne.s32.totalorder %s46, %s60
    %p62 = scmp.eq.s32.totalorder %s15, 0
    %p63 = por %p61, %p62
    %s65 = sadd.s32 %s64, 1
    %p68 = scmp.eq.s32.totalorder %s9, 1
    %p69 = scmp.ne.s32.totalorder %s64, %s66
    %p70 = scmp.eq.s32.totalorder %s9, 0
    %p71 = por %p69, %p70
    %p72 = scmp.ne.s32.totalorder %s64, %s66
    %p73 = scmp.eq.s32.totalorder %s14, 1
    %p74 = por %p72, %p73
    %p75 = scmp.ne.s32.totalorder %s66, %s67
    %p76 = scmp.eq.s32.totalorder %s14, 0
    %p77 = por %p75, %p76
    %p78 = scmp.ne.s32.totalorder %s66, %s67
    %p79 = scmp.eq.s32.totalorder %s15, 1
    %p80 = por %p78, %p79
    %p82 = scmp.ne.s32.totalorder %s67, %s81
    %p83 = scmp.eq.s32.totalorder %s15, 0
    %p84 = por %p82, %p83
    %s85 = ssub.s32 %s9, %s16
    %p86 = scmp.eq.s32.totalorder %s85, 0
    %s88 = sadd.s32 %s87, 1
    %s89 = scalar_select %p86, %s87, %s88
    %p92 = pneg %p86
    %p93 = scmp.eq.s32.totalorder %s9, 1
    %p94 = por %p92, %p93
    %p95 = scmp.ne.s32.totalorder %s87, %s90
    %p96 = scmp.eq.s32.totalorder %s9, 0
    %p97 = por %p95, %p96
    %p98 = scmp.ne.s32.totalorder %s87, %s90
    %p99 = scmp.eq.s32.totalorder %s14, 1
    %p100 = por %p98, %p99
    %p101 = scmp.ne.s32.totalorder %s90, %s91
    %p102 = scmp.eq.s32.totalorder %s14, 0
    %p103 = por %p101, %p102
    %p104 = scmp.ne.s32.totalorder %s90, %s91
    %p105 = scmp.eq.s32.totalorder %s15, 1
    %p106 = por %p104, %p105
    %p108 = scmp.ne.s32.totalorder %s91, %s107
    %p109 = scmp.eq.s32.totalorder %s15, 0
    %p110 = por %p108, %p109
    %p111 = scmp.le.s32.totalorder 1, %s9
    %p112 = scmp.lt.s32.totalorder %s9, 3
    %p113 = pnand %p111, %p112
    %p114 = pneg %p113
    // Predicated region
    $region9: #{ulosd_forward.20} parent=5 // pred_check
      _
    $region10: #{ulosd_forward.20} parent=5 // pred_check_branch
      %116 = sbr.rel (%p113) target = $region12
    $region11: #{ulosd_forward.20} parent=5 // pred_region
      %s117 = ssub.s32 %s9, 1
      // Predicated region
      $region13: #{ulosd_forward.20} parent=11 // pred_check
        %p118 = pneg %p56
      $region14: #{ulosd_forward.20} parent=11 // pred_check_branch
        %120 = sbr.rel (%p118) target = $region16
      $region15: #{ulosd_forward.20} parent=11 // pred_region
        _
      $region16: #{ulosd_forward.20} parent=11 // pred_fallthru
        _
      // Predicated region
      $region17: #{ulosd_forward.20} parent=11 // pred_check
        %p121 = pneg %p77
      $region18: #{ulosd_forward.20} parent=11 // pred_check_branch
        %123 = sbr.rel (%p121) target = $region20
      $region19: #{ulosd_forward.20} parent=11 // pred_region
        _
      $region20: #{ulosd_forward.20} parent=11 // pred_fallthru
        _
    $region12: #{ulosd_forward.20} parent=5 // pred_fallthru
      _
    %p124 = scmp.lt.s32.totalorder %s9, 2
    // Predicated region
    $region21: #{ulosd_forward.20} parent=5 // pred_check
      %p125 = pneg %p124
    $region22: #{ulosd_forward.20} parent=5 // pred_check_branch
      %127 = sbr.rel (%p125) target = $region24
    $region23: #{ulosd_forward.20} parent=5 // pred_region
      // Predicated region
      $region25: #{ulosd_forward.20} parent=23 // pred_check
        %p128 = pneg %p29
      $region26: #{ulosd_forward.20} parent=23 // pred_check_branch
        %130 = sbr.rel (%p128) target = $region28
      $region27: #{ulosd_forward.20} parent=23 // pred_region
        %s131 = smul.u32 32, %s9
        %p132 = scmp.lt.s32.totalorder %s131, 63
        %s133 = scalar_select %p132, %s131, 63
        %s134 = smul.addr %s133, 4
        %s135 = scalar_lea.vmem %s0, %s134
        %s136 = smul.u32 32, %s9
      $region28: #{ulosd_forward.20} parent=23 // pred_fallthru
        _
    $region24: #{ulosd_forward.20} parent=5 // pred_fallthru
      _
    %p137 = scmp.le.s32.totalorder 1, %s9
    %p138 = scmp.lt.s32.totalorder %s9, 3
    %p139 = pnand %p137, %p138
    %p140 = pneg %p139
    // Predicated region
    $region29: #{ulosd_forward.20} parent=5 // pred_check
      _
    $region30: #{ulosd_forward.20} parent=5 // pred_check_branch
      %142 = sbr.rel (%p139) target = $region32
    $region31: #{ulosd_forward.20} parent=5 // pred_region
      %s143 = ssub.s32 %s9, 1
      %s144 = smul.u32 32, %s14
      %p145 = scmp.lt.s32.totalorder %s144, 63
      %s146 = scalar_select %p145, %s144, 63
      %s147 = smul.addr %s146, 4
      %s148 = scalar_lea.vmem %s0, %s147
      %p149 = pneg %p35
      %p150 = pneg %p32
      %p151 = pneg %p56
      %p152 = pneg %p53
      %p153 = pneg %p77
      %p154 = pneg %p74
      %p155 = pneg %p103
      %p156 = pneg %p100
      %s157 = smul.u32 32, %s14
      %p158 = scmp.lt.s32.totalorder %s157, 63
      %s159 = scalar_select %p158, %s157, 63
      %s160 = smul.addr %s159, 8
      %s161 = scalar_lea.vmem %s3, %s160
      %s162 = smul.u32 32, %s14
      %p163 = scmp.lt.s32.totalorder %s162, 63
      %s164 = scalar_select %p163, %s162, 63
      %s165 = smul.addr %s164, 4
      %s166 = scalar_lea.vmem %s0, %s165
      %s167 = smul.u32 32, %s14
      %s168 = smul.u32 32, %s14
      %p169 = scmp.lt.s32.totalorder %s168, 63
      %s170 = scalar_select %p169, %s168, 63
      %s171 = smul.addr %s170, 8
      %s172 = scalar_lea.vmem %s3, %s171
      %s173 = smul.u32 32, %s14
      %v175 = vld [vmem:[%s166] sm:$0xf]
      %v176 = vld [vmem:[%s166 + $0x4] sm:$0xf]
      %v177 = vld [vmem:[%s166 + $0x8] sm:$0xf]
      %v178 = vld [vmem:[%s166 + $0xc] sm:$0xf]
      %v179 = vld [vmem:[%s166 + $0x10] sm:$0xf]
      %v180 = vld [vmem:[%s166 + $0x14] sm:$0xf]
      %v181 = vld [vmem:[%s166 + $0x18] sm:$0xf]
      %v182 = vld [vmem:[%s166 + $0x1c] sm:$0xf]
      %v183 = vld [vmem:[%s166 + $0x20] sm:$0xf]
      %v184 = vld [vmem:[%s166 + $0x24] sm:$0xf]
      %v185 = vld [vmem:[%s166 + $0x28] sm:$0xf]
      %v186 = vld [vmem:[%s166 + $0x2c] sm:$0xf]
      %v187 = vld [vmem:[%s166 + $0x30] sm:$0xf]
      %v188 = vld [vmem:[%s166 + $0x34] sm:$0xf]
      %v189 = vld [vmem:[%s166 + $0x38] sm:$0xf]
      %v190 = vld [vmem:[%s166 + $0x3c] sm:$0xf]
      %v191 = vld [vmem:[%s166 + $0x40] sm:$0xf]
      %v192 = vld [vmem:[%s166 + $0x44] sm:$0xf]
      %v193 = vld [vmem:[%s166 + $0x48] sm:$0xf]
      %v194 = vld [vmem:[%s166 + $0x4c] sm:$0xf]
      %v195 = vld [vmem:[%s166 + $0x50] sm:$0xf]
      %v196 = vld [vmem:[%s166 + $0x54] sm:$0xf]
      %v197 = vld [vmem:[%s166 + $0x58] sm:$0xf]
      %v198 = vld [vmem:[%s166 + $0x5c] sm:$0xf]
      %v199 = vld [vmem:[%s166 + $0x60] sm:$0xf]
      %v200 = vld [vmem:[%s166 + $0x64] sm:$0xf]
      %v201 = vld [vmem:[%s166 + $0x68] sm:$0xf]
      %v202 = vld [vmem:[%s166 + $0x6c] sm:$0xf]
      %v203 = vld [vmem:[%s166 + $0x70] sm:$0xf]
      %v204 = vld [vmem:[%s166 + $0x74] sm:$0xf]
      %v205 = vld [vmem:[%s166 + $0x78] sm:$0xf]
      %v206 = vld [vmem:[%s166 + $0x7c] sm:$0xf]
      %v207 = vld [vmem:[%s1] sm:$0xf]
      %v208 = vld [vmem:[%s1 + $0x4] sm:$0xf]
      %v209 = vld [vmem:[%s1 + $0x8] sm:$0xf]
      %v210 = vld [vmem:[%s1 + $0xc] sm:$0xf]
      %v211 = vld [vmem:[%s1 + $0x10] sm:$0xf]
      %v212 = vld [vmem:[%s1 + $0x14] sm:$0xf]
      %v213 = vld [vmem:[%s1 + $0x18] sm:$0xf]
      %v214 = vld [vmem:[%s1 + $0x1c] sm:$0xf]
      %v215 = vld [vmem:[%s1 + $0x20] sm:$0xf]
      %v216 = vld [vmem:[%s1 + $0x24] sm:$0xf]
      %v217 = vld [vmem:[%s1 + $0x28] sm:$0xf]
      %v218 = vld [vmem:[%s1 + $0x2c] sm:$0xf]
      %v219 = vld [vmem:[%s1 + $0x30] sm:$0xf]
      %v220 = vld [vmem:[%s1 + $0x34] sm:$0xf]
      %v221 = vld [vmem:[%s1 + $0x38] sm:$0xf]
      %v222 = vld [vmem:[%s1 + $0x3c] sm:$0xf]
      %v223 = vld [vmem:[%s2] sm:$0x1]
      %v225 = vlaneseq
      %v226 = vshrl.u32 %v225, 7
      %v227 = vsub.s32 0, %v226
      %v228 = vrot.slane %v223, %v227
      %v262 = vunpack.c.l.b16 %v175
      %v263 = vunpack.c.l.b16 %v176
      %v264 = vunpack.c.l.b16 %v177
      %v265 = vunpack.c.l.b16 %v178
      %v266 = vunpack.c.l.b16 %v179
      %v267 = vunpack.c.l.b16 %v180
      %v268 = vunpack.c.l.b16 %v181
      %v269 = vunpack.c.l.b16 %v182
      %v270 = vunpack.c.l.b16 %v183
      %v271 = vunpack.c.l.b16 %v184
      %v272 = vunpack.c.l.b16 %v185
      %v273 = vunpack.c.l.b16 %v186
      %v274 = vunpack.c.l.b16 %v187
      %v275 = vunpack.c.l.b16 %v188
      %v276 = vunpack.c.l.b16 %v189
      %v277 = vunpack.c.l.b16 %v190
      %v278 = vunpack.c.l.b16 %v191
      %v279 = vunpack.c.l.b16 %v192
      %v280 = vunpack.c.l.b16 %v193
      %v281 = vunpack.c.l.b16 %v194
      %v282 = vunpack.c.l.b16 %v195
      %v283 = vunpack.c.l.b16 %v196
      %v284 = vunpack.c.l.b16 %v197
      %v285 = vunpack.c.l.b16 %v198
      %v286 = vunpack.c.l.b16 %v199
      %v287 = vunpack.c.l.b16 %v200
      %v288 = vunpack.c.l.b16 %v201
      %v289 = vunpack.c.l.b16 %v202
      %v290 = vunpack.c.l.b16 %v203
      %v291 = vunpack.c.l.b16 %v204
      %v292 = vunpack.c.l.b16 %v205
      %v293 = vunpack.c.l.b16 %v206
      %v294 = vpack.c.b16 %v263, %v262
      %v295 = vpack.c.b16 %v265, %v264
      %v296 = vpack.c.b16 %v267, %v266
      %v297 = vpack.c.b16 %v269, %v268
      %v298 = vpack.c.b16 %v271, %v270
      %v299 = vpack.c.b16 %v273, %v272
      %v300 = vpack.c.b16 %v275, %v274
      %v301 = vpack.c.b16 %v277, %v276
      %v302 = vpack.c.b16 %v279, %v278
      %v303 = vpack.c.b16 %v281, %v280
      %v304 = vpack.c.b16 %v283, %v282
      %v305 = vpack.c.b16 %v285, %v284
      %v306 = vpack.c.b16 %v287, %v286
      %v307 = vpack.c.b16 %v289, %v288
      %v308 = vpack.c.b16 %v291, %v290
      %v309 = vpack.c.b16 %v293, %v292
      %v342 = vunpack.c.l.b16 %v207
      %v343 = vunpack.c.l.b16 %v208
      %v344 = vunpack.c.l.b16 %v209
      %v345 = vunpack.c.l.b16 %v210
      %v346 = vunpack.c.l.b16 %v211
      %v347 = vunpack.c.l.b16 %v212
      %v348 = vunpack.c.l.b16 %v213
      %v349 = vunpack.c.l.b16 %v214
      %v350 = vunpack.c.l.b16 %v215
      %v351 = vunpack.c.l.b16 %v216
      %v352 = vunpack.c.l.b16 %v217
      %v353 = vunpack.c.l.b16 %v218
      %v354 = vunpack.c.l.b16 %v219
      %v355 = vunpack.c.l.b16 %v220
      %v356 = vunpack.c.l.b16 %v221
      %v357 = vunpack.c.l.b16 %v222
      %v358 = vpack.c.b16 %v343, %v342
      %v359 = vpack.c.b16 %v345, %v344
      %v360 = vpack.c.b16 %v347, %v346
      %v361 = vpack.c.b16 %v349, %v348
      %v362 = vpack.c.b16 %v351, %v350
      %v363 = vpack.c.b16 %v353, %v352
      %v364 = vpack.c.b16 %v355, %v354
      %v365 = vpack.c.b16 %v357, %v356
      %374 = vmatprep.subr.bf16.mxu0 0
      %375 = vmatpush1.bf16.msra.mxu0 %v358
      %376 = vmatprep.subr.bf16.mxu0 0
      %377 = vmatpush1.bf16.msra.mxu0 %v359
      %378 = vmatprep.subr.bf16.mxu0 0
      %379 = vmatpush1.bf16.msra.mxu0 %v360
      %380 = vmatprep.subr.bf16.mxu0 0
      %381 = vmatpush1.bf16.msra.mxu0 %v361
      %382 = vmatprep.subr.bf16.mxu0 0
      %383 = vmatpush1.bf16.msra.mxu0 %v362
      %384 = vmatprep.subr.bf16.mxu0 0
      %385 = vmatpush1.bf16.msra.mxu0 %v363
      %386 = vmatprep.subr.bf16.mxu0 0
      %387 = vmatpush1.bf16.msra.mxu0 %v364
      %388 = vmatprep.subr.bf16.mxu0 0
      %389 = vmatpush1.bf16.msra.mxu0 %v365
      %390 = vmatprep.subr.bf16.mxu0 0
      %391 = vmatpush1.bf16.msra.mxu0 0
      %392 = vmatprep.subr.bf16.mxu0 0
      %393 = vmatpush1.bf16.msra.mxu0 0
      %394 = vmatprep.subr.bf16.mxu0 0
      %395 = vmatpush1.bf16.msra.mxu0 0
      %396 = vmatprep.subr.bf16.mxu0 0
      %397 = vmatpush1.bf16.msra.mxu0 0
      %398 = vmatprep.subr.bf16.mxu0 0
      %399 = vmatpush1.bf16.msra.mxu0 0
      %400 = vmatprep.subr.bf16.mxu0 0
      %401 = vmatpush1.bf16.msra.mxu0 0
      %402 = vmatprep.subr.bf16.mxu0 0
      %403 = vmatpush1.bf16.msra.mxu0 0
      %404 = vmatprep.subr.bf16.mxu0 0
      %405 = vmatpush1.bf16.msra.mxu0 0
      %406 = vmatprep.mubr.bf16.mxu0 0
      %407 = vmatmul.mubr.bf16.gmra.mrb[0].mxu0 %v294
      %v408 = vpop.f32.mrb[0].mxu0
      %v409 = vadd.f32 %v228, %v408
      %v410 = vpop.f32.mrb[0].mxu0
      %v411 = vpop.f32.mrb[0].mxu0
      %v412 = vadd.f32 %v228, %v411
      %v413 = vpop.f32.mrb[0].mxu0
      %414 = vmatprep.mubr.bf16.mxu0 0
      %415 = vmatmul.mubr.bf16.gmra.mrb[0].mxu0 %v295
      %v416 = vpop.f32.mrb[0].mxu0
      %v417 = vadd.f32 %v228, %v416
      %v418 = vpop.f32.mrb[0].mxu0
      %v419 = vpop.f32.mrb[0].mxu0
      %v420 = vadd.f32 %v228, %v419
      %v421 = vpop.f32.mrb[0].mxu0
      %422 = vmatprep.mubr.bf16.mxu0 0
      %423 = vmatmul.mubr.bf16.gmra.mrb[0].mxu0 %v296
      %v424 = vpop.f32.mrb[0].mxu0
      %v425 = vadd.f32 %v228, %v424
      %v426 = vpop.f32.mrb[0].mxu0
      %v427 = vpop.f32.mrb[0].mxu0
      %v428 = vadd.f32 %v228, %v427
      %v429 = vpop.f32.mrb[0].mxu0
      %430 = vmatprep.mubr.bf16.mxu0 0
      %431 = vmatmul.mubr.bf16.gmra.mrb[0].mxu0 %v297
      %v432 = vpop.f32.mrb[0].mxu0
      %v433 = vadd.f32 %v228, %v432
      %v434 = vpop.f32.mrb[0].mxu0
      %v435 = vpop.f32.mrb[0].mxu0
      %v436 = vadd.f32 %v228, %v435
      %v437 = vpop.f32.mrb[0].mxu0
      %438 = vmatprep.mubr.bf16.mxu0 0
      %439 = vmatmul.mubr.bf16.gmra.mrb[0].mxu0 %v298
      %v440 = vpop.f32.mrb[0].mxu0
      %v441 = vadd.f32 %v228, %v440
      %v442 = vpop.f32.mrb[0].mxu0
      %v443 = vpop.f32.mrb[0].mxu0
      %v444 = vadd.f32 %v228, %v443
      %v445 = vpop.f32.mrb[0].mxu0
      %446 = vmatprep.mubr.bf16.mxu0 0
      %447 = vmatmul.mubr.bf16.gmra.mrb[0].mxu0 %v299
      %v448 = vpop.f32.mrb[0].mxu0
      %v449 = vadd.f32 %v228, %v448
      %v450 = vpop.f32.mrb[0].mxu0
      %v451 = vpop.f32.mrb[0].mxu0
      %v452 = vadd.f32 %v228, %v451
      %v453 = vpop.f32.mrb[0].mxu0
      %454 = vmatprep.mubr.bf16.mxu0 0
      %455 = vmatmul.mubr.bf16.gmra.mrb[0].mxu0 %v300
      %v456 = vpop.f32.mrb[0].mxu0
      %v457 = vadd.f32 %v228, %v456
      %v458 = vpop.f32.mrb[0].mxu0
      %v459 = vpop.f32.mrb[0].mxu0
      %v460 = vadd.f32 %v228, %v459
      %v461 = vpop.f32.mrb[0].mxu0
      %462 = vmatprep.mubr.bf16.mxu0 0
      %463 = vmatmul.mubr.bf16.gmra.mrb[0].mxu0 %v301
      %v464 = vpop.f32.mrb[0].mxu0
      %v465 = vadd.f32 %v228, %v464
      %v466 = vpop.f32.mrb[0].mxu0
      %v467 = vpop.f32.mrb[0].mxu0
      %v468 = vadd.f32 %v228, %v467
      %v469 = vpop.f32.mrb[0].mxu0
      %470 = vmatprep.mubr.bf16.mxu0 0
      %471 = vmatmul.mubr.bf16.gmra.mrb[0].mxu0 %v302
      %v472 = vpop.f32.mrb[0].mxu0
      %v473 = vadd.f32 %v228, %v472
      %v474 = vpop.f32.mrb[0].mxu0
      %v475 = vpop.f32.mrb[0].mxu0
      %v476 = vadd.f32 %v228, %v475
      %v477 = vpop.f32.mrb[0].mxu0
      %478 = vmatprep.mubr.bf16.mxu0 0
      %479 = vmatmul.mubr.bf16.gmra.mrb[0].mxu0 %v303
      %v480 = vpop.f32.mrb[0].mxu0
      %v481 = vadd.f32 %v228, %v480
      %v482 = vpop.f32.mrb[0].mxu0
      %v483 = vpop.f32.mrb[0].mxu0
      %v484 = vadd.f32 %v228, %v483
      %v485 = vpop.f32.mrb[0].mxu0
      %486 = vmatprep.mubr.bf16.mxu0 0
      %487 = vmatmul.mubr.bf16.gmra.mrb[0].mxu0 %v304
      %v488 = vpop.f32.mrb[0].mxu0
      %v489 = vadd.f32 %v228, %v488
      %v490 = vpop.f32.mrb[0].mxu0
      %v491 = vpop.f32.mrb[0].mxu0
      %v492 = vadd.f32 %v228, %v491
      %v493 = vpop.f32.mrb[0].mxu0
      %494 = vmatprep.mubr.bf16.mxu0 0
      %495 = vmatmul.mubr.bf16.gmra.mrb[0].mxu0 %v305
      %v496 = vpop.f32.mrb[0].mxu0
      %v497 = vadd.f32 %v228, %v496
      %v498 = vpop.f32.mrb[0].mxu0
      %v499 = vpop.f32.mrb[0].mxu0
      %v500 = vadd.f32 %v228, %v499
      %v501 = vpop.f32.mrb[0].mxu0
      %502 = vmatprep.mubr.bf16.mxu0 0
      %503 = vmatmul.mubr.bf16.gmra.mrb[0].mxu0 %v306
      %v504 = vpop.f32.mrb[0].mxu0
      %v505 = vadd.f32 %v228, %v504
      %v506 = vpop.f32.mrb[0].mxu0
      %v507 = vpop.f32.mrb[0].mxu0
      %v508 = vadd.f32 %v228, %v507
      %v509 = vpop.f32.mrb[0].mxu0
      %510 = vmatprep.mubr.bf16.mxu0 0
      %511 = vmatmul.mubr.bf16.gmra.mrb[0].mxu0 %v307
      %v512 = vpop.f32.mrb[0].mxu0
      %v513 = vadd.f32 %v228, %v512
      %v514 = vpop.f32.mrb[0].mxu0
      %v515 = vpop.f32.mrb[0].mxu0
      %v516 = vadd.f32 %v228, %v515
      %v517 = vpop.f32.mrb[0].mxu0
      %518 = vmatprep.mubr.bf16.mxu0 0
      %519 = vmatmul.mubr.bf16.gmra.mrb[0].mxu0 %v308
      %v520 = vpop.f32.mrb[0].mxu0
      %v521 = vadd.f32 %v228, %v520
      %v522 = vpop.f32.mrb[0].mxu0
      %v523 = vpop.f32.mrb[0].mxu0
      %v524 = vadd.f32 %v228, %v523
      %v525 = vpop.f32.mrb[0].mxu0
      %526 = vmatprep.mubr.bf16.mxu0 0
      %527 = vmatmul.mubr.bf16.gmra.mrb[0].mxu0 %v309
      %v528 = vpop.f32.mrb[0].mxu0
      %v529 = vadd.f32 %v228, %v528
      %v530 = vpop.f32.mrb[0].mxu0
      %v531 = vpop.f32.mrb[0].mxu0
      %v532 = vadd.f32 %v228, %v531
      %v533 = vpop.f32.mrb[0].mxu0
      %534 = vdwg.mxu0
      %v535 = vmax.f32 %v409, 0.0
      %v536 = vmax.f32 %v412, 0.0
      %v537 = vmax.f32 %v417, 0.0
      %v538 = vmax.f32 %v420, 0.0
      %v539 = vmax.f32 %v425, 0.0
      %v540 = vmax.f32 %v428, 0.0
      %v541 = vmax.f32 %v433, 0.0
      %v542 = vmax.f32 %v436, 0.0
      %v543 = vmax.f32 %v441, 0.0
      %v544 = vmax.f32 %v444, 0.0
      %v545 = vmax.f32 %v449, 0.0
      %v546 = vmax.f32 %v452, 0.0
      %v547 = vmax.f32 %v457, 0.0
      %v548 = vmax.f32 %v460, 0.0
      %v549 = vmax.f32 %v465, 0.0
      %v550 = vmax.f32 %v468, 0.0
      %v551 = vmax.f32 %v473, 0.0
      %v552 = vmax.f32 %v476, 0.0
      %v553 = vmax.f32 %v481, 0.0
      %v554 = vmax.f32 %v484, 0.0
      %v555 = vmax.f32 %v489, 0.0
      %v556 = vmax.f32 %v492, 0.0
      %v557 = vmax.f32 %v497, 0.0
      %v558 = vmax.f32 %v500, 0.0
      %v559 = vmax.f32 %v505, 0.0
      %v560 = vmax.f32 %v508, 0.0
      %v561 = vmax.f32 %v513, 0.0
      %v562 = vmax.f32 %v516, 0.0
      %v563 = vmax.f32 %v521, 0.0
      %v564 = vmax.f32 %v524, 0.0
      %v565 = vmax.f32 %v529, 0.0
      %v566 = vmax.f32 %v532, 0.0
      %567 = vst [vmem:[%s172] sm:$0xff] %v535
      %568 = vst [vmem:[%s172 + $0x8] sm:$0xff] %v536
      %569 = vst [vmem:[%s172 + $0x10] sm:$0xff] %v537
      %570 = vst [vmem:[%s172 + $0x18] sm:$0xff] %v538
      %571 = vst [vmem:[%s172 + $0x20] sm:$0xff] %v539
      %572 = vst [vmem:[%s172 + $0x28] sm:$0xff] %v540
      %573 = vst [vmem:[%s172 + $0x30] sm:$0xff] %v541
      %574 = vst [vmem:[%s172 + $0x38] sm:$0xff] %v542
      %575 = vst [vmem:[%s172 + $0x40] sm:$0xff] %v543
      %576 = vst [vmem:[%s172 + $0x48] sm:$0xff] %v544
      %577 = vst [vmem:[%s172 + $0x50] sm:$0xff] %v545
      %578 = vst [vmem:[%s172 + $0x58] sm:$0xff] %v546
      %579 = vst [vmem:[%s172 + $0x60] sm:$0xff] %v547
      %580 = vst [vmem:[%s172 + $0x68] sm:$0xff] %v548
      %581 = vst [vmem:[%s172 + $0x70] sm:$0xff] %v549
      %582 = vst [vmem:[%s172 + $0x78] sm:$0xff] %v550
      %583 = vst [vmem:[%s172 + $0x80] sm:$0xff] %v551
      %584 = vst [vmem:[%s172 + $0x88] sm:$0xff] %v552
      %585 = vst [vmem:[%s172 + $0x90] sm:$0xff] %v553
      %586 = vst [vmem:[%s172 + $0x98] sm:$0xff] %v554
      %587 = vst [vmem:[%s172 + $0xa0] sm:$0xff] %v555
      %588 = vst [vmem:[%s172 + $0xa8] sm:$0xff] %v556
      %589 = vst [vmem:[%s172 + $0xb0] sm:$0xff] %v557
      %590 = vst [vmem:[%s172 + $0xb8] sm:$0xff] %v558
      %591 = vst [vmem:[%s172 + $0xc0] sm:$0xff] %v559
      %592 = vst [vmem:[%s172 + $0xc8] sm:$0xff] %v560
      %593 = vst [vmem:[%s172 + $0xd0] sm:$0xff] %v561
      %594 = vst [vmem:[%s172 + $0xd8] sm:$0xff] %v562
      %595 = vst [vmem:[%s172 + $0xe0] sm:$0xff] %v563
      %596 = vst [vmem:[%s172 + $0xe8] sm:$0xff] %v564
      %597 = vst [vmem:[%s172 + $0xf0] sm:$0xff] %v565
      %598 = vst [vmem:[%s172 + $0xf8] sm:$0xff] %v566
      %s599 = smul.u32 32, %s14
      %p600 = scmp.lt.s32.totalorder %s599, 63
      %s601 = scalar_select %p600, %s599, 63
      %s602 = smul.addr %s601, 8
      %s603 = scalar_lea.vmem %s3, %s602
      // Predicated region
      $region33: #{ulosd_forward.20} parent=31 // pred_check
        %p604 = pneg %p100
      $region34: #{ulosd_forward.20} parent=31 // pred_check_branch
        %606 = sbr.rel (%p604) target = $region36
      $region35: #{ulosd_forward.20} parent=31 // pred_region
        %s607 = smul.u32 32, %s14
      $region36: #{ulosd_forward.20} parent=31 // pred_fallthru
        _
    $region32: #{ulosd_forward.20} parent=5 // pred_fallthru
      _
    %p608 = scmp.le.s32.totalorder 2, %s9
    // Predicated region
    $region37: #{ulosd_forward.20} parent=5 // pred_check
      %p609 = pneg %p608
    $region38: #{ulosd_forward.20} parent=5 // pred_check_branch
      %611 = sbr.rel (%p609) target = $region40
    $region39: #{ulosd_forward.20} parent=5 // pred_region
      %s612 = ssub.s32 %s9, 2
      // Predicated region
      $region41: #{ulosd_forward.20} parent=39 // pred_check
        %p613 = pneg %p106
      $region42: #{ulosd_forward.20} parent=39 // pred_check_branch
        %615 = sbr.rel (%p613) target = $region44
      $region43: #{ulosd_forward.20} parent=39 // pred_region
        %s616 = smul.u32 32, %s15
        %p617 = scmp.lt.s32.totalorder %s616, 63
        %s618 = scalar_select %p617, %s616, 63
        %s619 = smul.addr %s618, 8
        %s620 = scalar_lea.vmem %s3, %s619
      $region44: #{ulosd_forward.20} parent=39 // pred_fallthru
        _
    $region40: #{ulosd_forward.20} parent=5 // pred_fallthru
      _
  $region6: #{ulosd_forward.20} parent=0 // loop_footer
    %s13 = sadd.s32 1, %s9
  $region7: #{ulosd_forward.20} parent=0 // loop_footer_branch
    %8 = sbr.rel target = $region3
  $region8: #{ulosd_forward.20} parent=0 // loop_exit
    _

// kernel: ulosd_forward.21
$region0: #{ulosd_forward.21}
  #allocation0 [shape = 'u32[]', space=smem, size = 0x4, offset = 0x4, fixed_abs, tag = 'smem constant byte address 0x4 - core index']
  #allocation1 [shape = 'u32[144,128]{1,0:T(1,128)}', space=vmem, size = 0x12000, scoped, tag = 'internal scratch']
  %s0 = inlined_call_operand.vmem [shape: bf16[128,256], index: 0, kind: input, shape index: {}]
  %s1 = inlined_call_operand.vmem [shape: bf16[256,128], index: 1, kind: input, shape index: {}]
  %s2 = inlined_call_operand.vmem [shape: f32[1,128], index: 2, kind: input, shape index: {}]
  %s3 = inlined_call_operand.vmem [shape: f32[128,128], index: 3, kind: output, shape index: {}]
  %s4 = sld [smem:[#allocation0]]
  $region22: #{ulosd_forward.21} parent=0
    _
  %s6 = ssub.s32 1, %s4
  %s7 = scalar_select 0, %s6, %s4
  // Predicated region
  $region2: #{ulosd_forward.21} parent=0 // pred_check
    _
  $region3: #{ulosd_forward.21} parent=0 // pred_check_branch
    %9 = sbr.rel (0) target = $region5
  $region4: #{ulosd_forward.21} parent=0 // pred_region
    _
  $region5: #{ulosd_forward.21} parent=0 // pred_fallthru
    _
  // Predicated region
  $region6: #{ulosd_forward.21} parent=0 // pred_check
    _
  $region7: #{ulosd_forward.21} parent=0 // pred_check_branch
    %11 = sbr.rel (0) target = $region9
  $region8: #{ulosd_forward.21} parent=0 // pred_region
    _
  $region9: #{ulosd_forward.21} parent=0 // pred_fallthru
    _
  // Predicated region
  $region10: #{ulosd_forward.21} parent=0 // pred_check
    _
  $region11: #{ulosd_forward.21} parent=0 // pred_check_branch
    %13 = sbr.rel (0) target = $region13
  $region12: #{ulosd_forward.21} parent=0 // pred_region
    _
  $region13: #{ulosd_forward.21} parent=0 // pred_fallthru
    _
  %v15 = vld [vmem:[%s0] sm:$0xff]
  %v16 = vld [vmem:[%s0 + $0x8] sm:$0xff]
  %v17 = vld [vmem:[%s0 + $0x10] sm:$0xff]
  %v18 = vld [vmem:[%s0 + $0x18] sm:$0xff]
  %v19 = vld [vmem:[%s0 + $0x20] sm:$0xff]
  %v20 = vld [vmem:[%s0 + $0x28] sm:$0xff]
  %v21 = vld [vmem:[%s0 + $0x30] sm:$0xff]
  %v22 = vld [vmem:[%s0 + $0x38] sm:$0xff]
  %v23 = vld [vmem:[%s0 + $0x40] sm:$0xff]
  %v24 = vld [vmem:[%s0 + $0x48] sm:$0xff]
  %v25 = vld [vmem:[%s0 + $0x50] sm:$0xff]
  %v26 = vld [vmem:[%s0 + $0x58] sm:$0xff]
  %v27 = vld [vmem:[%s0 + $0x60] sm:$0xff]
  %v28 = vld [vmem:[%s0 + $0x68] sm:$0xff]
  %v29 = vld [vmem:[%s0 + $0x70] sm:$0xff]
  %v30 = vld [vmem:[%s0 + $0x78] sm:$0xff]
  %v31 = vld [vmem:[%s1] sm:$0xf]
  %v32 = vld [vmem:[%s1 + $0x4] sm:$0xf]
  %v33 = vld [vmem:[%s1 + $0x8] sm:$0xf]
  %v34 = vld [vmem:[%s1 + $0xc] sm:$0xf]
  %v35 = vld [vmem:[%s1 + $0x10] sm:$0xf]
  %v36 = vld [vmem:[%s1 + $0x14] sm:$0xf]
  %v37 = vld [vmem:[%s1 + $0x18] sm:$0xf]
  %v38 = vld [vmem:[%s1 + $0x1c] sm:$0xf]
  %v39 = vld [vmem:[%s1 + $0x20] sm:$0xf]
  %v40 = vld [vmem:[%s1 + $0x24] sm:$0xf]
  %v41 = vld [vmem:[%s1 + $0x28] sm:$0xf]
  %v42 = vld [vmem:[%s1 + $0x2c] sm:$0xf]
  %v43 = vld [vmem:[%s1 + $0x30] sm:$0xf]
  %v44 = vld [vmem:[%s1 + $0x34] sm:$0xf]
  %v45 = vld [vmem:[%s1 + $0x38] sm:$0xf]
  %v46 = vld [vmem:[%s1 + $0x3c] sm:$0xf]
  %v47 = vld [vmem:[%s1 + $0x40] sm:$0xf]
  %v48 = vld [vmem:[%s1 + $0x44] sm:$0xf]
  %v49 = vld [vmem:[%s1 + $0x48] sm:$0xf]
  %v50 = vld [vmem:[%s1 + $0x4c] sm:$0xf]
  %v51 = vld [vmem:[%s1 + $0x50] sm:$0xf]
  %v52 = vld [vmem:[%s1 + $0x54] sm:$0xf]
  %v53 = vld [vmem:[%s1 + $0x58] sm:$0xf]
  %v54 = vld [vmem:[%s1 + $0x5c] sm:$0xf]
  %v55 = vld [vmem:[%s1 + $0x60] sm:$0xf]
  %v56 = vld [vmem:[%s1 + $0x64] sm:$0xf]
  %v57 = vld [vmem:[%s1 + $0x68] sm:$0xf]
  %v58 = vld [vmem:[%s1 + $0x6c] sm:$0xf]
  %v59 = vld [vmem:[%s1 + $0x70] sm:$0xf]
  %v60 = vld [vmem:[%s1 + $0x74] sm:$0xf]
  %v61 = vld [vmem:[%s1 + $0x78] sm:$0xf]
  %v62 = vld [vmem:[%s1 + $0x7c] sm:$0xf]
  %v63 = vld [vmem:[%s2] sm:$0x1]
  %v65 = vlaneseq
  %v66 = vshrl.u32 %v65, 7
  %v67 = vsub.s32 0, %v66
  %v68 = vrot.slane %v63, %v67
  %v86 = vunpack.c.l.b16 %v15
  %v87 = vunpack.c.h.b16 %v15
  %v88 = vunpack.c.l.b16 %v16
  %v89 = vunpack.c.h.b16 %v16
  %v90 = vunpack.c.l.b16 %v17
  %v91 = vunpack.c.h.b16 %v17
  %v92 = vunpack.c.l.b16 %v18
  %v93 = vunpack.c.h.b16 %v18
  %v94 = vunpack.c.l.b16 %v19
  %v95 = vunpack.c.h.b16 %v19
  %v96 = vunpack.c.l.b16 %v20
  %v97 = vunpack.c.h.b16 %v20
  %v98 = vunpack.c.l.b16 %v21
  %v99 = vunpack.c.h.b16 %v21
  %v100 = vunpack.c.l.b16 %v22
  %v101 = vunpack.c.h.b16 %v22
  %v102 = vunpack.c.l.b16 %v23
  %v103 = vunpack.c.h.b16 %v23
  %v104 = vunpack.c.l.b16 %v24
  %v105 = vunpack.c.h.b16 %v24
  %v106 = vunpack.c.l.b16 %v25
  %v107 = vunpack.c.h.b16 %v25
  %v108 = vunpack.c.l.b16 %v26
  %v109 = vunpack.c.h.b16 %v26
  %v110 = vunpack.c.l.b16 %v27
  %v111 = vunpack.c.h.b16 %v27
  %v112 = vunpack.c.l.b16 %v28
  %v113 = vunpack.c.h.b16 %v28
  %v114 = vunpack.c.l.b16 %v29
  %v115 = vunpack.c.h.b16 %v29
  %v116 = vunpack.c.l.b16 %v30
  %v117 = vunpack.c.h.b16 %v30
  %v118 = vpack.c.b16 %v88, %v86
  %v119 = vpack.c.b16 %v89, %v87
  %v120 = vpack.c.b16 %v92, %v90
  %v121 = vpack.c.b16 %v93, %v91
  %v122 = vpack.c.b16 %v96, %v94
  %v123 = vpack.c.b16 %v97, %v95
  %v124 = vpack.c.b16 %v100, %v98
  %v125 = vpack.c.b16 %v101, %v99
  %v126 = vpack.c.b16 %v104, %v102
  %v127 = vpack.c.b16 %v105, %v103
  %v128 = vpack.c.b16 %v108, %v106
  %v129 = vpack.c.b16 %v109, %v107
  %v130 = vpack.c.b16 %v112, %v110
  %v131 = vpack.c.b16 %v113, %v111
  %v132 = vpack.c.b16 %v116, %v114
  %v133 = vpack.c.b16 %v117, %v115
  %v182 = vunpack.c.l.b16 %v31
  %v183 = vunpack.c.l.b16 %v32
  %v184 = vunpack.c.l.b16 %v33
  %v185 = vunpack.c.l.b16 %v34
  %v186 = vunpack.c.l.b16 %v35
  %v187 = vunpack.c.l.b16 %v36
  %v188 = vunpack.c.l.b16 %v37
  %v189 = vunpack.c.l.b16 %v38
  %v190 = vunpack.c.l.b16 %v39
  %v191 = vunpack.c.l.b16 %v40
  %v192 = vunpack.c.l.b16 %v41
  %v193 = vunpack.c.l.b16 %v42
  %v194 = vunpack.c.l.b16 %v43
  %v195 = vunpack.c.l.b16 %v44
  %v196 = vunpack.c.l.b16 %v45
  %v197 = vunpack.c.l.b16 %v46
  %v198 = vunpack.c.l.b16 %v47
  %v199 = vunpack.c.l.b16 %v48
  %v200 = vunpack.c.l.b16 %v49
  %v201 = vunpack.c.l.b16 %v50
  %v202 = vunpack.c.l.b16 %v51
  %v203 = vunpack.c.l.b16 %v52
  %v204 = vunpack.c.l.b16 %v53
  %v205 = vunpack.c.l.b16 %v54
  %v206 = vunpack.c.l.b16 %v55
  %v207 = vunpack.c.l.b16 %v56
  %v208 = vunpack.c.l.b16 %v57
  %v209 = vunpack.c.l.b16 %v58
  %v210 = vunpack.c.l.b16 %v59
  %v211 = vunpack.c.l.b16 %v60
  %v212 = vunpack.c.l.b16 %v61
  %v213 = vunpack.c.l.b16 %v62
  %v214 = vpack.c.b16 %v183, %v182
  %v215 = vpack.c.b16 %v185, %v184
  %v216 = vpack.c.b16 %v187, %v186
  %v217 = vpack.c.b16 %v189, %v188
  %v218 = vpack.c.b16 %v191, %v190
  %v219 = vpack.c.b16 %v193, %v192
  %v220 = vpack.c.b16 %v195, %v194
  %v221 = vpack.c.b16 %v197, %v196
  %v222 = vpack.c.b16 %v199, %v198
  %v223 = vpack.c.b16 %v201, %v200
  %v224 = vpack.c.b16 %v203, %v202
  %v225 = vpack.c.b16 %v205, %v204
  %v226 = vpack.c.b16 %v207, %v206
  %v227 = vpack.c.b16 %v209, %v208
  %v228 = vpack.c.b16 %v211, %v210
  %v229 = vpack.c.b16 %v213, %v212
  %246 = vmatprep.subr.bf16.mxu0 0
  %247 = vmatpush1.bf16.msra.mxu0 %v214
  %248 = vmatprep.subr.bf16.mxu0 0
  %249 = vmatpush1.bf16.msra.mxu0 %v215
  %250 = vmatprep.subr.bf16.mxu0 0
  %251 = vmatpush1.bf16.msra.mxu0 %v216
  %252 = vmatprep.subr.bf16.mxu0 0
  %253 = vmatpush1.bf16.msra.mxu0 %v217
  %254 = vmatprep.subr.bf16.mxu0 0
  %255 = vmatpush1.bf16.msra.mxu0 %v218
  %256 = vmatprep.subr.bf16.mxu0 0
  %257 = vmatpush1.bf16.msra.mxu0 %v219
  %258 = vmatprep.subr.bf16.mxu0 0
  %259 = vmatpush1.bf16.msra.mxu0 %v220
  %260 = vmatprep.subr.bf16.mxu0 0
  %261 = vmatpush1.bf16.msra.mxu0 %v221
  %262 = vmatprep.subr.bf16.mxu0 0
  %263 = vmatpush1.bf16.msra.mxu0 %v222
  %264 = vmatprep.subr.bf16.mxu0 0
  %265 = vmatpush1.bf16.msra.mxu0 %v223
  %266 = vmatprep.subr.bf16.mxu0 0
  %267 = vmatpush1.bf16.msra.mxu0 %v224
  %268 = vmatprep.subr.bf16.mxu0 0
  %269 = vmatpush1.bf16.msra.mxu0 %v225
  %270 = vmatprep.subr.bf16.mxu0 0
  %271 = vmatpush1.bf16.msra.mxu0 %v226
  %272 = vmatprep.subr.bf16.mxu0 0
  %273 = vmatpush1.bf16.msra.mxu0 %v227
  %274 = vmatprep.subr.bf16.mxu0 0
  %275 = vmatpush1.bf16.msra.mxu0 %v228
  %276 = vmatprep.subr.bf16.mxu0 0
  %277 = vmatpush1.bf16.msra.mxu0 %v229
  %278 = vmatprep.mubr.bf16.mxu0 %v119
  %279 = vmatmul.mubr.bf16.gmra.mrb[0].mxu0 %v118
  %v280 = vpop.f32.mrb[0].mxu0
  %v281 = vadd.f32 %v68, %v280
  %v282 = vpop.f32.mrb[0].mxu0
  %v283 = vpop.f32.mrb[0].mxu0
  %v284 = vadd.f32 %v68, %v283
  %v285 = vpop.f32.mrb[0].mxu0
  %286 = vmatprep.mubr.bf16.mxu0 %v121
  %287 = vmatmul.mubr.bf16.gmra.mrb[0].mxu0 %v120
  %v288 = vpop.f32.mrb[0].mxu0
  %v289 = vadd.f32 %v68, %v288
  %v290 = vpop.f32.mrb[0].mxu0
  %v291 = vpop.f32.mrb[0].mxu0
  %v292 = vadd.f32 %v68, %v291
  %v293 = vpop.f32.mrb[0].mxu0
  %294 = vmatprep.mubr.bf16.mxu0 %v123
  %295 = vmatmul.mubr.bf16.gmra.mrb[0].mxu0 %v122
  %v296 = vpop.f32.mrb[0].mxu0
  %v297 = vadd.f32 %v68, %v296
  %v298 = vpop.f32.mrb[0].mxu0
  %v299 = vpop.f32.mrb[0].mxu0
  %v300 = vadd.f32 %v68, %v299
  %v301 = vpop.f32.mrb[0].mxu0
  %302 = vmatprep.mubr.bf16.mxu0 %v125
  %303 = vmatmul.mubr.bf16.gmra.mrb[0].mxu0 %v124
  %v304 = vpop.f32.mrb[0].mxu0
  %v305 = vadd.f32 %v68, %v304
  %v306 = vpop.f32.mrb[0].mxu0
  %v307 = vpop.f32.mrb[0].mxu0
  %v308 = vadd.f32 %v68, %v307
  %v309 = vpop.f32.mrb[0].mxu0
  %310 = vmatprep.mubr.bf16.mxu0 %v127
  %311 = vmatmul.mubr.bf16.gmra.mrb[0].mxu0 %v126
  %v312 = vpop.f32.mrb[0].mxu0
  %v313 = vadd.f32 %v68, %v312
  %v314 = vpop.f32.mrb[0].mxu0
  %v315 = vpop.f32.mrb[0].mxu0
  %v316 = vadd.f32 %v68, %v315
  %v317 = vpop.f32.mrb[0].mxu0
  %318 = vmatprep.mubr.bf16.mxu0 %v129
  %319 = vmatmul.mubr.bf16.gmra.mrb[0].mxu0 %v128
  %v320 = vpop.f32.mrb[0].mxu0
  %v321 = vadd.f32 %v68, %v320
  %v322 = vpop.f32.mrb[0].mxu0
  %v323 = vpop.f32.mrb[0].mxu0
  %v324 = vadd.f32 %v68, %v323
  %v325 = vpop.f32.mrb[0].mxu0
  %326 = vmatprep.mubr.bf16.mxu0 %v131
  %327 = vmatmul.mubr.bf16.gmra.mrb[0].mxu0 %v130
  %v328 = vpop.f32.mrb[0].mxu0
  %v329 = vadd.f32 %v68, %v328
  %v330 = vpop.f32.mrb[0].mxu0
  %v331 = vpop.f32.mrb[0].mxu0
  %v332 = vadd.f32 %v68, %v331
  %v333 = vpop.f32.mrb[0].mxu0
  %334 = vmatprep.mubr.bf16.mxu0 %v133
  %335 = vmatmul.mubr.bf16.gmra.mrb[0].mxu0 %v132
  %v336 = vpop.f32.mrb[0].mxu0
  %v337 = vadd.f32 %v68, %v336
  %v338 = vpop.f32.mrb[0].mxu0
  %v339 = vpop.f32.mrb[0].mxu0
  %v340 = vadd.f32 %v68, %v339
  %v341 = vpop.f32.mrb[0].mxu0
  %342 = vdwg.mxu0
  %v343 = vmax.f32 %v281, 0.0
  %v344 = vmax.f32 %v284, 0.0
  %v345 = vmax.f32 %v289, 0.0
  %v346 = vmax.f32 %v292, 0.0
  %v347 = vmax.f32 %v297, 0.0
  %v348 = vmax.f32 %v300, 0.0
  %v349 = vmax.f32 %v305, 0.0
  %v350 = vmax.f32 %v308, 0.0
  %v351 = vmax.f32 %v313, 0.0
  %v352 = vmax.f32 %v316, 0.0
  %v353 = vmax.f32 %v321, 0.0
  %v354 = vmax.f32 %v324, 0.0
  %v355 = vmax.f32 %v329, 0.0
  %v356 = vmax.f32 %v332, 0.0
  %v357 = vmax.f32 %v337, 0.0
  %v358 = vmax.f32 %v340, 0.0
  %359 = vst [vmem:[%s3] sm:$0xff] %v343
  %360 = vst [vmem:[%s3 + $0x8] sm:$0xff] %v344
  %361 = vst [vmem:[%s3 + $0x10] sm:$0xff] %v345
  %362 = vst [vmem:[%s3 + $0x18] sm:$0xff] %v346
  %363 = vst [vmem:[%s3 + $0x20] sm:$0xff] %v347
  %364 = vst [vmem:[%s3 + $0x28] sm:$0xff] %v348
  %365 = vst [vmem:[%s3 + $0x30] sm:$0xff] %v349
  %366 = vst [vmem:[%s3 + $0x38] sm:$0xff] %v350
  %367 = vst [vmem:[%s3 + $0x40] sm:$0xff] %v351
  %368 = vst [vmem:[%s3 + $0x48] sm:$0xff] %v352
  %369 = vst [vmem:[%s3 + $0x50] sm:$0xff] %v353
  %370 = vst [vmem:[%s3 + $0x58] sm:$0xff] %v354
  %371 = vst [vmem:[%s3 + $0x60] sm:$0xff] %v355
  %372 = vst [vmem:[%s3 + $0x68] sm:$0xff] %v356
  %373 = vst [vmem:[%s3 + $0x70] sm:$0xff] %v357
  %374 = vst [vmem:[%s3 + $0x78] sm:$0xff] %v358
  // Predicated region
  $region14: #{ulosd_forward.21} parent=0 // pred_check
    _
  $region15: #{ulosd_forward.21} parent=0 // pred_check_branch
    %376 = sbr.rel (0) target = $region17
  $region16: #{ulosd_forward.21} parent=0 // pred_region
    _
  $region17: #{ulosd_forward.21} parent=0 // pred_fallthru
    _
  // Predicated region
  $region18: #{ulosd_forward.21} parent=0 // pred_check
    _
  $region19: #{ulosd_forward.21} parent=0 // pred_check_branch
    %378 = sbr.rel (0) target = $region21
  $region20: #{ulosd_forward.21} parent=0 // pred_region
    _
  $region21: #{ulosd_forward.21} parent=0 // pred_fallthru
    _

// kernel: ulosd_forward.23
$region0: #{ulosd_forward.23}
  #allocation0 [shape = 'u32[]', space=smem, size = 0x4, offset = 0x4, fixed_abs, tag = 'smem constant byte address 0x4 - core index']
  #allocation1 [shape = 'u32[144,128]{1,0:T(1,128)}', space=vmem, size = 0x12000, scoped, tag = 'internal scratch']
  %s0 = inlined_call_operand.vmem [shape: bf16[32,128], index: 0, kind: input, shape index: {}]
  %s1 = inlined_call_operand.vmem [shape: bf16[128,128], index: 1, kind: input, shape index: {}]
  %s2 = inlined_call_operand.vmem [shape: f32[1,128], index: 2, kind: input, shape index: {}]
  %s3 = inlined_call_operand.vmem [shape: f32[32,128], index: 3, kind: output, shape index: {}]
  %s4 = sld [smem:[#allocation0]]
  $region22: #{ulosd_forward.23} parent=0
    _
  %s6 = ssub.s32 1, %s4
  %s7 = scalar_select 0, %s6, %s4
  // Predicated region
  $region2: #{ulosd_forward.23} parent=0 // pred_check
    _
  $region3: #{ulosd_forward.23} parent=0 // pred_check_branch
    %9 = sbr.rel (0) target = $region5
  $region4: #{ulosd_forward.23} parent=0 // pred_region
    _
  $region5: #{ulosd_forward.23} parent=0 // pred_fallthru
    _
  // Predicated region
  $region6: #{ulosd_forward.23} parent=0 // pred_check
    _
  $region7: #{ulosd_forward.23} parent=0 // pred_check_branch
    %11 = sbr.rel (0) target = $region9
  $region8: #{ulosd_forward.23} parent=0 // pred_region
    _
  $region9: #{ulosd_forward.23} parent=0 // pred_fallthru
    _
  // Predicated region
  $region10: #{ulosd_forward.23} parent=0 // pred_check
    _
  $region11: #{ulosd_forward.23} parent=0 // pred_check_branch
    %13 = sbr.rel (0) target = $region13
  $region12: #{ulosd_forward.23} parent=0 // pred_region
    _
  $region13: #{ulosd_forward.23} parent=0 // pred_fallthru
    _
  %v15 = vld [vmem:[%s0] sm:$0xf]
  %v16 = vld [vmem:[%s0 + $0x4] sm:$0xf]
  %v17 = vld [vmem:[%s0 + $0x8] sm:$0xf]
  %v18 = vld [vmem:[%s0 + $0xc] sm:$0xf]
  %v19 = vld [vmem:[%s1] sm:$0xf]
  %v20 = vld [vmem:[%s1 + $0x4] sm:$0xf]
  %v21 = vld [vmem:[%s1 + $0x8] sm:$0xf]
  %v22 = vld [vmem:[%s1 + $0xc] sm:$0xf]
  %v23 = vld [vmem:[%s1 + $0x10] sm:$0xf]
  %v24 = vld [vmem:[%s1 + $0x14] sm:$0xf]
  %v25 = vld [vmem:[%s1 + $0x18] sm:$0xf]
  %v26 = vld [vmem:[%s1 + $0x1c] sm:$0xf]
  %v27 = vld [vmem:[%s1 + $0x20] sm:$0xf]
  %v28 = vld [vmem:[%s1 + $0x24] sm:$0xf]
  %v29 = vld [vmem:[%s1 + $0x28] sm:$0xf]
  %v30 = vld [vmem:[%s1 + $0x2c] sm:$0xf]
  %v31 = vld [vmem:[%s1 + $0x30] sm:$0xf]
  %v32 = vld [vmem:[%s1 + $0x34] sm:$0xf]
  %v33 = vld [vmem:[%s1 + $0x38] sm:$0xf]
  %v34 = vld [vmem:[%s1 + $0x3c] sm:$0xf]
  %v35 = vld [vmem:[%s2] sm:$0x1]
  %v37 = vlaneseq
  %v38 = vshrl.u32 %v37, 7
  %v39 = vsub.s32 0, %v38
  %v40 = vrot.slane %v35, %v39
  %v46 = vunpack.c.l.b16 %v15
  %v47 = vunpack.c.l.b16 %v16
  %v48 = vunpack.c.l.b16 %v17
  %v49 = vunpack.c.l.b16 %v18
  %v50 = vpack.c.b16 %v47, %v46
  %v51 = vpack.c.b16 %v49, %v48
  %v70 = vunpack.c.l.b16 %v19
  %v71 = vunpack.c.l.b16 %v20
  %v72 = vunpack.c.l.b16 %v21
  %v73 = vunpack.c.l.b16 %v22
  %v74 = vunpack.c.l.b16 %v23
  %v75 = vunpack.c.l.b16 %v24
  %v76 = vunpack.c.l.b16 %v25
  %v77 = vunpack.c.l.b16 %v26
  %v78 = vunpack.c.l.b16 %v27
  %v79 = vunpack.c.l.b16 %v28
  %v80 = vunpack.c.l.b16 %v29
  %v81 = vunpack.c.l.b16 %v30
  %v82 = vunpack.c.l.b16 %v31
  %v83 = vunpack.c.l.b16 %v32
  %v84 = vunpack.c.l.b16 %v33
  %v85 = vunpack.c.l.b16 %v34
  %v86 = vpack.c.b16 %v71, %v70
  %v87 = vpack.c.b16 %v73, %v72
  %v88 = vpack.c.b16 %v75, %v74
  %v89 = vpack.c.b16 %v77, %v76
  %v90 = vpack.c.b16 %v79, %v78
  %v91 = vpack.c.b16 %v81, %v80
  %v92 = vpack.c.b16 %v83, %v82
  %v93 = vpack.c.b16 %v85, %v84
  %102 = vmatprep.subr.bf16.mxu0 0
  %103 = vmatpush1.bf16.msra.mxu0 %v86
  %104 = vmatprep.subr.bf16.mxu0 0
  %105 = vmatpush1.bf16.msra.mxu0 %v87
  %106 = vmatprep.subr.bf16.mxu0 0
  %107 = vmatpush1.bf16.msra.mxu0 %v88
  %108 = vmatprep.subr.bf16.mxu0 0
  %109 = vmatpush1.bf16.msra.mxu0 %v89
  %110 = vmatprep.subr.bf16.mxu0 0
  %111 = vmatpush1.bf16.msra.mxu0 %v90
  %112 = vmatprep.subr.bf16.mxu0 0
  %113 = vmatpush1.bf16.msra.mxu0 %v91
  %114 = vmatprep.subr.bf16.mxu0 0
  %115 = vmatpush1.bf16.msra.mxu0 %v92
  %116 = vmatprep.subr.bf16.mxu0 0
  %117 = vmatpush1.bf16.msra.mxu0 %v93
  %118 = vmatprep.subr.bf16.mxu0 0
  %119 = vmatpush1.bf16.msra.mxu0 0
  %120 = vmatprep.subr.bf16.mxu0 0
  %121 = vmatpush1.bf16.msra.mxu0 0
  %122 = vmatprep.subr.bf16.mxu0 0
  %123 = vmatpush1.bf16.msra.mxu0 0
  %124 = vmatprep.subr.bf16.mxu0 0
  %125 = vmatpush1.bf16.msra.mxu0 0
  %126 = vmatprep.subr.bf16.mxu0 0
  %127 = vmatpush1.bf16.msra.mxu0 0
  %128 = vmatprep.subr.bf16.mxu0 0
  %129 = vmatpush1.bf16.msra.mxu0 0
  %130 = vmatprep.subr.bf16.mxu0 0
  %131 = vmatpush1.bf16.msra.mxu0 0
  %132 = vmatprep.subr.bf16.mxu0 0
  %133 = vmatpush1.bf16.msra.mxu0 0
  %134 = vmatprep.mubr.bf16.mxu0 0
  %135 = vmatmul.mubr.bf16.gmra.mrb[0].mxu0 %v50
  %v136 = vpop.f32.mrb[0].mxu0
  %v137 = vadd.f32 %v40, %v136
  %v138 = vpop.f32.mrb[0].mxu0
  %v139 = vpop.f32.mrb[0].mxu0
  %v140 = vadd.f32 %v40, %v139
  %v141 = vpop.f32.mrb[0].mxu0
  %142 = vmatprep.mubr.bf16.mxu0 0
  %143 = vmatmul.mubr.bf16.gmra.mrb[0].mxu0 %v51
  %v144 = vpop.f32.mrb[0].mxu0
  %v145 = vadd.f32 %v40, %v144
  %v146 = vpop.f32.mrb[0].mxu0
  %v147 = vpop.f32.mrb[0].mxu0
  %v148 = vadd.f32 %v40, %v147
  %v149 = vpop.f32.mrb[0].mxu0
  %150 = vdwg.mxu0
  %151 = vst [vmem:[%s3] sm:$0xff] %v137
  %152 = vst [vmem:[%s3 + $0x8] sm:$0xff] %v140
  %153 = vst [vmem:[%s3 + $0x10] sm:$0xff] %v145
  %154 = vst [vmem:[%s3 + $0x18] sm:$0xff] %v148
  // Predicated region
  $region14: #{ulosd_forward.23} parent=0 // pred_check
    _
  $region15: #{ulosd_forward.23} parent=0 // pred_check_branch
    %156 = sbr.rel (0) target = $region17
  $region16: #{ulosd_forward.23} parent=0 // pred_region
    _
  $region17: #{ulosd_forward.23} parent=0 // pred_fallthru
    _
  // Predicated region
  $region18: #{ulosd_forward.23} parent=0 // pred_check
    _
  $region19: #{ulosd_forward.23} parent=0 // pred_check_branch
    %158 = sbr.rel (0) target = $region21
  $region20: #{ulosd_forward.23} parent=0 // pred_region
    _
  $region21: #{ulosd_forward.23} parent=0 // pred_fallthru
    _

// kernel: ulosd_forward.22
$region0: #{ulosd_forward.22}
  #allocation0 [shape = 'u32[]', space=smem, size = 0x4, offset = 0x4, fixed_abs, tag = 'smem constant byte address 0x4 - core index']
  #allocation1 [shape = 'u32[144,128]{1,0:T(1,128)}', space=vmem, size = 0x12000, scoped, tag = 'internal scratch']
  %s0 = inlined_call_operand.vmem [shape: bf16[32,384], index: 0, kind: input, shape index: {}]
  %s1 = inlined_call_operand.vmem [shape: bf16[384,128], index: 1, kind: input, shape index: {}]
  %s2 = inlined_call_operand.vmem [shape: f32[1,128], index: 2, kind: input, shape index: {}]
  %s3 = inlined_call_operand.vmem [shape: f32[32,128], index: 3, kind: output, shape index: {}]
  %s4 = sld [smem:[#allocation0]]
  $region22: #{ulosd_forward.22} parent=0
    _
  %s6 = ssub.s32 1, %s4
  %s7 = scalar_select 0, %s6, %s4
  // Predicated region
  $region2: #{ulosd_forward.22} parent=0 // pred_check
    _
  $region3: #{ulosd_forward.22} parent=0 // pred_check_branch
    %9 = sbr.rel (0) target = $region5
  $region4: #{ulosd_forward.22} parent=0 // pred_region
    _
  $region5: #{ulosd_forward.22} parent=0 // pred_fallthru
    _
  // Predicated region
  $region6: #{ulosd_forward.22} parent=0 // pred_check
    _
  $region7: #{ulosd_forward.22} parent=0 // pred_check_branch
    %11 = sbr.rel (0) target = $region9
  $region8: #{ulosd_forward.22} parent=0 // pred_region
    _
  $region9: #{ulosd_forward.22} parent=0 // pred_fallthru
    _
  // Predicated region
  $region10: #{ulosd_forward.22} parent=0 // pred_check
    _
  $region11: #{ulosd_forward.22} parent=0 // pred_check_branch
    %13 = sbr.rel (0) target = $region13
  $region12: #{ulosd_forward.22} parent=0 // pred_region
    _
  $region13: #{ulosd_forward.22} parent=0 // pred_fallthru
    _
  %v15 = vld [vmem:[%s0] sm:$0xff]
  %v16 = vld [vmem:[%s0 + $0x8] sm:$0xf]
  %v17 = vld [vmem:[%s0 + $0xc] sm:$0xff]
  %v18 = vld [vmem:[%s0 + $0x14] sm:$0xf]
  %v19 = vld [vmem:[%s0 + $0x18] sm:$0xff]
  %v20 = vld [vmem:[%s0 + $0x20] sm:$0xf]
  %v21 = vld [vmem:[%s0 + $0x24] sm:$0xff]
  %v22 = vld [vmem:[%s0 + $0x2c] sm:$0xf]
  %v23 = vld [vmem:[%s1] sm:$0xf]
  %v24 = vld [vmem:[%s1 + $0x4] sm:$0xf]
  %v25 = vld [vmem:[%s1 + $0x8] sm:$0xf]
  %v26 = vld [vmem:[%s1 + $0xc] sm:$0xf]
  %v27 = vld [vmem:[%s1 + $0x10] sm:$0xf]
  %v28 = vld [vmem:[%s1 + $0x14] sm:$0xf]
  %v29 = vld [vmem:[%s1 + $0x18] sm:$0xf]
  %v30 = vld [vmem:[%s1 + $0x1c] sm:$0xf]
  %v31 = vld [vmem:[%s1 + $0x20] sm:$0xf]
  %v32 = vld [vmem:[%s1 + $0x24] sm:$0xf]
  %v33 = vld [vmem:[%s1 + $0x28] sm:$0xf]
  %v34 = vld [vmem:[%s1 + $0x2c] sm:$0xf]
  %v35 = vld [vmem:[%s1 + $0x30] sm:$0xf]
  %v36 = vld [vmem:[%s1 + $0x34] sm:$0xf]
  %v37 = vld [vmem:[%s1 + $0x38] sm:$0xf]
  %v38 = vld [vmem:[%s1 + $0x3c] sm:$0xf]
  %v39 = vld [vmem:[%s1 + $0x40] sm:$0xf]
  %v40 = vld [vmem:[%s1 + $0x44] sm:$0xf]
  %v41 = vld [vmem:[%s1 + $0x48] sm:$0xf]
  %v42 = vld [vmem:[%s1 + $0x4c] sm:$0xf]
  %v43 = vld [vmem:[%s1 + $0x50] sm:$0xf]
  %v44 = vld [vmem:[%s1 + $0x54] sm:$0xf]
  %v45 = vld [vmem:[%s1 + $0x58] sm:$0xf]
  %v46 = vld [vmem:[%s1 + $0x5c] sm:$0xf]
  %v47 = vld [vmem:[%s1 + $0x60] sm:$0xf]
  %v48 = vld [vmem:[%s1 + $0x64] sm:$0xf]
  %v49 = vld [vmem:[%s1 + $0x68] sm:$0xf]
  %v50 = vld [vmem:[%s1 + $0x6c] sm:$0xf]
  %v51 = vld [vmem:[%s1 + $0x70] sm:$0xf]
  %v52 = vld [vmem:[%s1 + $0x74] sm:$0xf]
  %v53 = vld [vmem:[%s1 + $0x78] sm:$0xf]
  %v54 = vld [vmem:[%s1 + $0x7c] sm:$0xf]
  %v55 = vld [vmem:[%s1 + $0x80] sm:$0xf]
  %v56 = vld [vmem:[%s1 + $0x84] sm:$0xf]
  %v57 = vld [vmem:[%s1 + $0x88] sm:$0xf]
  %v58 = vld [vmem:[%s1 + $0x8c] sm:$0xf]
  %v59 = vld [vmem:[%s1 + $0x90] sm:$0xf]
  %v60 = vld [vmem:[%s1 + $0x94] sm:$0xf]
  %v61 = vld [vmem:[%s1 + $0x98] sm:$0xf]
  %v62 = vld [vmem:[%s1 + $0x9c] sm:$0xf]
  %v63 = vld [vmem:[%s1 + $0xa0] sm:$0xf]
  %v64 = vld [vmem:[%s1 + $0xa4] sm:$0xf]
  %v65 = vld [vmem:[%s1 + $0xa8] sm:$0xf]
  %v66 = vld [vmem:[%s1 + $0xac] sm:$0xf]
  %v67 = vld [vmem:[%s1 + $0xb0] sm:$0xf]
  %v68 = vld [vmem:[%s1 + $0xb4] sm:$0xf]
  %v69 = vld [vmem:[%s1 + $0xb8] sm:$0xf]
  %v70 = vld [vmem:[%s1 + $0xbc] sm:$0xf]
  %v71 = vld [vmem:[%s2] sm:$0x1]
  %v73 = vlaneseq
  %v74 = vshrl.u32 %v73, 7
  %v75 = vsub.s32 0, %v74
  %v76 = vrot.slane %v71, %v75
  %v86 = vunpack.c.l.b16 %v15
  %v87 = vunpack.c.h.b16 %v15
  %v88 = vunpack.c.l.b16 %v16
  %v89 = vunpack.c.l.b16 %v17
  %v90 = vunpack.c.h.b16 %v17
  %v91 = vunpack.c.l.b16 %v18
  %v92 = vunpack.c.l.b16 %v19
  %v93 = vunpack.c.h.b16 %v19
  %v94 = vunpack.c.l.b16 %v20
  %v95 = vunpack.c.l.b16 %v21
  %v96 = vunpack.c.h.b16 %v21
  %v97 = vunpack.c.l.b16 %v22
  %v98 = vpack.c.b16 %v89, %v86
  %v99 = vpack.c.b16 %v90, %v87
  %v100 = vpack.c.b16 %v91, %v88
  %v101 = vpack.c.b16 %v95, %v92
  %v102 = vpack.c.b16 %v96, %v93
  %v103 = vpack.c.b16 %v97, %v94
  %v158 = vunpack.c.l.b16 %v23
  %v159 = vunpack.c.l.b16 %v24
  %v160 = vunpack.c.l.b16 %v25
  %v161 = vunpack.c.l.b16 %v26
  %v162 = vunpack.c.l.b16 %v27
  %v163 = vunpack.c.l.b16 %v28
  %v164 = vunpack.c.l.b16 %v29
  %v165 = vunpack.c.l.b16 %v30
  %v166 = vunpack.c.l.b16 %v31
  %v167 = vunpack.c.l.b16 %v32
  %v168 = vunpack.c.l.b16 %v33
  %v169 = vunpack.c.l.b16 %v34
  %v170 = vunpack.c.l.b16 %v35
  %v171 = vunpack.c.l.b16 %v36
  %v172 = vunpack.c.l.b16 %v37
  %v173 = vunpack.c.l.b16 %v38
  %v174 = vunpack.c.l.b16 %v39
  %v175 = vunpack.c.l.b16 %v40
  %v176 = vunpack.c.l.b16 %v41
  %v177 = vunpack.c.l.b16 %v42
  %v178 = vunpack.c.l.b16 %v43
  %v179 = vunpack.c.l.b16 %v44
  %v180 = vunpack.c.l.b16 %v45
  %v181 = vunpack.c.l.b16 %v46
  %v182 = vunpack.c.l.b16 %v47
  %v183 = vunpack.c.l.b16 %v48
  %v184 = vunpack.c.l.b16 %v49
  %v185 = vunpack.c.l.b16 %v50
  %v186 = vunpack.c.l.b16 %v51
  %v187 = vunpack.c.l.b16 %v52
  %v188 = vunpack.c.l.b16 %v53
  %v189 = vunpack.c.l.b16 %v54
  %v190 = vunpack.c.l.b16 %v55
  %v191 = vunpack.c.l.b16 %v56
  %v192 = vunpack.c.l.b16 %v57
  %v193 = vunpack.c.l.b16 %v58
  %v194 = vunpack.c.l.b16 %v59
  %v195 = vunpack.c.l.b16 %v60
  %v196 = vunpack.c.l.b16 %v61
  %v197 = vunpack.c.l.b16 %v62
  %v198 = vunpack.c.l.b16 %v63
  %v199 = vunpack.c.l.b16 %v64
  %v200 = vunpack.c.l.b16 %v65
  %v201 = vunpack.c.l.b16 %v66
  %v202 = vunpack.c.l.b16 %v67
  %v203 = vunpack.c.l.b16 %v68
  %v204 = vunpack.c.l.b16 %v69
  %v205 = vunpack.c.l.b16 %v70
  %v206 = vpack.c.b16 %v159, %v158
  %v207 = vpack.c.b16 %v161, %v160
  %v208 = vpack.c.b16 %v163, %v162
  %v209 = vpack.c.b16 %v165, %v164
  %v210 = vpack.c.b16 %v167, %v166
  %v211 = vpack.c.b16 %v169, %v168
  %v212 = vpack.c.b16 %v171, %v170
  %v213 = vpack.c.b16 %v173, %v172
  %v214 = vpack.c.b16 %v175, %v174
  %v215 = vpack.c.b16 %v177, %v176
  %v216 = vpack.c.b16 %v179, %v178
  %v217 = vpack.c.b16 %v181, %v180
  %v218 = vpack.c.b16 %v183, %v182
  %v219 = vpack.c.b16 %v185, %v184
  %v220 = vpack.c.b16 %v187, %v186
  %v221 = vpack.c.b16 %v189, %v188
  %v222 = vpack.c.b16 %v191, %v190
  %v223 = vpack.c.b16 %v193, %v192
  %v224 = vpack.c.b16 %v195, %v194
  %v225 = vpack.c.b16 %v197, %v196
  %v226 = vpack.c.b16 %v199, %v198
  %v227 = vpack.c.b16 %v201, %v200
  %v228 = vpack.c.b16 %v203, %v202
  %v229 = vpack.c.b16 %v205, %v204
  %254 = vmatprep.subr.bf16.mxu0 0
  %255 = vmatpush1.bf16.msra.mxu0 %v206
  %256 = vmatprep.subr.bf16.mxu0 0
  %257 = vmatpush1.bf16.msra.mxu0 %v207
  %258 = vmatprep.subr.bf16.mxu0 0
  %259 = vmatpush1.bf16.msra.mxu0 %v208
  %260 = vmatprep.subr.bf16.mxu0 0
  %261 = vmatpush1.bf16.msra.mxu0 %v209
  %262 = vmatprep.subr.bf16.mxu0 0
  %263 = vmatpush1.bf16.msra.mxu0 %v210
  %264 = vmatprep.subr.bf16.mxu0 0
  %265 = vmatpush1.bf16.msra.mxu0 %v211
  %266 = vmatprep.subr.bf16.mxu0 0
  %267 = vmatpush1.bf16.msra.mxu0 %v212
  %268 = vmatprep.subr.bf16.mxu0 0
  %269 = vmatpush1.bf16.msra.mxu0 %v213
  %270 = vmatprep.subr.bf16.mxu0 0
  %271 = vmatpush1.bf16.msra.mxu0 %v214
  %272 = vmatprep.subr.bf16.mxu0 0
  %273 = vmatpush1.bf16.msra.mxu0 %v215
  %274 = vmatprep.subr.bf16.mxu0 0
  %275 = vmatpush1.bf16.msra.mxu0 %v216
  %276 = vmatprep.subr.bf16.mxu0 0
  %277 = vmatpush1.bf16.msra.mxu0 %v217
  %278 = vmatprep.subr.bf16.mxu0 0
  %279 = vmatpush1.bf16.msra.mxu0 %v218
  %280 = vmatprep.subr.bf16.mxu0 0
  %281 = vmatpush1.bf16.msra.mxu0 %v219
  %282 = vmatprep.subr.bf16.mxu0 0
  %283 = vmatpush1.bf16.msra.mxu0 %v220
  %284 = vmatprep.subr.bf16.mxu0 0
  %285 = vmatpush1.bf16.msra.mxu0 %v221
  %286 = vmatprep.mubr.bf16.mxu0 %v99
  %287 = vmatmul.mubr.bf16.gmra.mrb[0].mxu0 %v98
  %v288 = vpop.f32.mrb[0].mxu0
  %v289 = vadd.f32 %v76, %v288
  %v290 = vpop.f32.mrb[0].mxu0
  %v291 = vpop.f32.mrb[0].mxu0
  %v292 = vadd.f32 %v76, %v291
  %v293 = vpop.f32.mrb[0].mxu0
  %294 = vmatprep.mubr.bf16.mxu0 %v102
  %295 = vmatmul.mubr.bf16.gmra.mrb[0].mxu0 %v101
  %v296 = vpop.f32.mrb[0].mxu0
  %v297 = vadd.f32 %v76, %v296
  %v298 = vpop.f32.mrb[0].mxu0
  %v299 = vpop.f32.mrb[0].mxu0
  %v300 = vadd.f32 %v76, %v299
  %v301 = vpop.f32.mrb[0].mxu0
  %302 = vdwg.mxu0
  %303 = vmatprep.subr.bf16.mxu0 0
  %304 = vmatpush1.bf16.msra.mxu0 %v222
  %305 = vmatprep.subr.bf16.mxu0 0
  %306 = vmatpush1.bf16.msra.mxu0 %v223
  %307 = vmatprep.subr.bf16.mxu0 0
  %308 = vmatpush1.bf16.msra.mxu0 %v224
  %309 = vmatprep.subr.bf16.mxu0 0
  %310 = vmatpush1.bf16.msra.mxu0 %v225
  %311 = vmatprep.subr.bf16.mxu0 0
  %312 = vmatpush1.bf16.msra.mxu0 %v226
  %313 = vmatprep.subr.bf16.mxu0 0
  %314 = vmatpush1.bf16.msra.mxu0 %v227
  %315 = vmatprep.subr.bf16.mxu0 0
  %316 = vmatpush1.bf16.msra.mxu0 %v228
  %317 = vmatprep.subr.bf16.mxu0 0
  %318 = vmatpush1.bf16.msra.mxu0 %v229
  %319 = vmatprep.subr.bf16.mxu0 0
  %320 = vmatpush1.bf16.msra.mxu0 0
  %321 = vmatprep.subr.bf16.mxu0 0
  %322 = vmatpush1.bf16.msra.mxu0 0
  %323 = vmatprep.subr.bf16.mxu0 0
  %324 = vmatpush1.bf16.msra.mxu0 0
  %325 = vmatprep.subr.bf16.mxu0 0
  %326 = vmatpush1.bf16.msra.mxu0 0
  %327 = vmatprep.subr.bf16.mxu0 0
  %328 = vmatpush1.bf16.msra.mxu0 0
  %329 = vmatprep.subr.bf16.mxu0 0
  %330 = vmatpush1.bf16.msra.mxu0 0
  %331 = vmatprep.subr.bf16.mxu0 0
  %332 = vmatpush1.bf16.msra.mxu0 0
  %333 = vmatprep.subr.bf16.mxu0 0
  %334 = vmatpush1.bf16.msra.mxu0 0
  %335 = vmatprep.mubr.bf16.mxu0 0
  %336 = vmatmul.mubr.bf16.gmra.mrb[0].mxu0 %v100
  %v337 = vpop.f32.mrb[0].mxu0
  %v338 = vadd.f32 %v289, %v337
  %v339 = vpop.f32.mrb[0].mxu0
  %v340 = vpop.f32.mrb[0].mxu0
  %v341 = vadd.f32 %v292, %v340
  %v342 = vpop.f32.mrb[0].mxu0
  %343 = vmatprep.mubr.bf16.mxu0 0
  %344 = vmatmul.mubr.bf16.gmra.mrb[0].mxu0 %v103
  %v345 = vpop.f32.mrb[0].mxu0
  %v346 = vadd.f32 %v297, %v345
  %v347 = vpop.f32.mrb[0].mxu0
  %v348 = vpop.f32.mrb[0].mxu0
  %v349 = vadd.f32 %v300, %v348
  %v350 = vpop.f32.mrb[0].mxu0
  %351 = vdwg.mxu0
  %v352 = vmax.f32 %v338, 0.0
  %v353 = vmax.f32 %v341, 0.0
  %v354 = vmax.f32 %v346, 0.0
  %v355 = vmax.f32 %v349, 0.0
  %356 = vst [vmem:[%s3] sm:$0xff] %v352
  %357 = vst [vmem:[%s3 + $0x8] sm:$0xff] %v353
  %358 = vst [vmem:[%s3 + $0x10] sm:$0xff] %v354
  %359 = vst [vmem:[%s3 + $0x18] sm:$0xff] %v355
  // Predicated region
  $region14: #{ulosd_forward.22} parent=0 // pred_check
    _
  $region15: #{ulosd_forward.22} parent=0 // pred_check_branch
    %361 = sbr.rel (0) target = $region17
  $region16: #{ulosd_forward.22} parent=0 // pred_region
    _
  $region17: #{ulosd_forward.22} parent=0 // pred_fallthru
    _
  // Predicated region
  $region18: #{ulosd_forward.22} parent=0 // pred_check
    _
  $region19: #{ulosd_forward.22} parent=0 // pred_check_branch
    %363 = sbr.rel (0) target = $region21
  $region20: #{ulosd_forward.22} parent=0 // pred_region
    _
  $region21: #{ulosd_forward.22} parent=0 // pred_fallthru
    _

// kernel: ulosd_forward.24
$region0: #{ulosd_forward.24}
  #allocation0 [shape = 'u32[]', space=smem, size = 0x4, offset = 0x4, fixed_abs, tag = 'smem constant byte address 0x4 - core index']
  #allocation1 [shape = 'u32[144,128]{1,0:T(1,128)}', space=vmem, size = 0x12000, scoped, tag = 'internal scratch']
  %s0 = inlined_call_operand.vmem [shape: bf16[96,128], index: 0, kind: input, shape index: {}]
  %s1 = inlined_call_operand.vmem [shape: bf16[128,128], index: 1, kind: input, shape index: {}]
  %s2 = inlined_call_operand.vmem [shape: f32[1,128], index: 2, kind: input, shape index: {}]
  %s3 = inlined_call_operand.vmem [shape: f32[96,128], index: 3, kind: output, shape index: {}]
  %s4 = sld [smem:[#allocation0]]
  $region22: #{ulosd_forward.24} parent=0
    _
  %s6 = ssub.s32 1, %s4
  %s7 = scalar_select 0, %s6, %s4
  // Predicated region
  $region2: #{ulosd_forward.24} parent=0 // pred_check
    _
  $region3: #{ulosd_forward.24} parent=0 // pred_check_branch
    %9 = sbr.rel (0) target = $region5
  $region4: #{ulosd_forward.24} parent=0 // pred_region
    _
  $region5: #{ulosd_forward.24} parent=0 // pred_fallthru
    _
  // Predicated region
  $region6: #{ulosd_forward.24} parent=0 // pred_check
    _
  $region7: #{ulosd_forward.24} parent=0 // pred_check_branch
    %11 = sbr.rel (0) target = $region9
  $region8: #{ulosd_forward.24} parent=0 // pred_region
    _
  $region9: #{ulosd_forward.24} parent=0 // pred_fallthru
    _
  // Predicated region
  $region10: #{ulosd_forward.24} parent=0 // pred_check
    _
  $region11: #{ulosd_forward.24} parent=0 // pred_check_branch
    %13 = sbr.rel (0) target = $region13
  $region12: #{ulosd_forward.24} parent=0 // pred_region
    _
  $region13: #{ulosd_forward.24} parent=0 // pred_fallthru
    _
  %v15 = vld [vmem:[%s0] sm:$0xf]
  %v16 = vld [vmem:[%s0 + $0x4] sm:$0xf]
  %v17 = vld [vmem:[%s0 + $0x8] sm:$0xf]
  %v18 = vld [vmem:[%s0 + $0xc] sm:$0xf]
  %v19 = vld [vmem:[%s0 + $0x10] sm:$0xf]
  %v20 = vld [vmem:[%s0 + $0x14] sm:$0xf]
  %v21 = vld [vmem:[%s0 + $0x18] sm:$0xf]
  %v22 = vld [vmem:[%s0 + $0x1c] sm:$0xf]
  %v23 = vld [vmem:[%s0 + $0x20] sm:$0xf]
  %v24 = vld [vmem:[%s0 + $0x24] sm:$0xf]
  %v25 = vld [vmem:[%s0 + $0x28] sm:$0xf]
  %v26 = vld [vmem:[%s0 + $0x2c] sm:$0xf]
  %v27 = vld [vmem:[%s1] sm:$0xf]
  %v28 = vld [vmem:[%s1 + $0x4] sm:$0xf]
  %v29 = vld [vmem:[%s1 + $0x8] sm:$0xf]
  %v30 = vld [vmem:[%s1 + $0xc] sm:$0xf]
  %v31 = vld [vmem:[%s1 + $0x10] sm:$0xf]
  %v32 = vld [vmem:[%s1 + $0x14] sm:$0xf]
  %v33 = vld [vmem:[%s1 + $0x18] sm:$0xf]
  %v34 = vld [vmem:[%s1 + $0x1c] sm:$0xf]
  %v35 = vld [vmem:[%s1 + $0x20] sm:$0xf]
  %v36 = vld [vmem:[%s1 + $0x24] sm:$0xf]
  %v37 = vld [vmem:[%s1 + $0x28] sm:$0xf]
  %v38 = vld [vmem:[%s1 + $0x2c] sm:$0xf]
  %v39 = vld [vmem:[%s1 + $0x30] sm:$0xf]
  %v40 = vld [vmem:[%s1 + $0x34] sm:$0xf]
  %v41 = vld [vmem:[%s1 + $0x38] sm:$0xf]
  %v42 = vld [vmem:[%s1 + $0x3c] sm:$0xf]
  %v43 = vld [vmem:[%s2] sm:$0x1]
  %v45 = vlaneseq
  %v46 = vshrl.u32 %v45, 7
  %v47 = vsub.s32 0, %v46
  %v48 = vrot.slane %v43, %v47
  %v62 = vunpack.c.l.b16 %v15
  %v63 = vunpack.c.l.b16 %v16
  %v64 = vunpack.c.l.b16 %v17
  %v65 = vunpack.c.l.b16 %v18
  %v66 = vunpack.c.l.b16 %v19
  %v67 = vunpack.c.l.b16 %v20
  %v68 = vunpack.c.l.b16 %v21
  %v69 = vunpack.c.l.b16 %v22
  %v70 = vunpack.c.l.b16 %v23
  %v71 = vunpack.c.l.b16 %v24
  %v72 = vunpack.c.l.b16 %v25
  %v73 = vunpack.c.l.b16 %v26
  %v74 = vpack.c.b16 %v63, %v62
  %v75 = vpack.c.b16 %v65, %v64
  %v76 = vpack.c.b16 %v67, %v66
  %v77 = vpack.c.b16 %v69, %v68
  %v78 = vpack.c.b16 %v71, %v70
  %v79 = vpack.c.b16 %v73, %v72
  %v102 = vunpack.c.l.b16 %v27
  %v103 = vunpack.c.l.b16 %v28
  %v104 = vunpack.c.l.b16 %v29
  %v105 = vunpack.c.l.b16 %v30
  %v106 = vunpack.c.l.b16 %v31
  %v107 = vunpack.c.l.b16 %v32
  %v108 = vunpack.c.l.b16 %v33
  %v109 = vunpack.c.l.b16 %v34
  %v110 = vunpack.c.l.b16 %v35
  %v111 = vunpack.c.l.b16 %v36
  %v112 = vunpack.c.l.b16 %v37
  %v113 = vunpack.c.l.b16 %v38
  %v114 = vunpack.c.l.b16 %v39
  %v115 = vunpack.c.l.b16 %v40
  %v116 = vunpack.c.l.b16 %v41
  %v117 = vunpack.c.l.b16 %v42
  %v118 = vpack.c.b16 %v103, %v102
  %v119 = vpack.c.b16 %v105, %v104
  %v120 = vpack.c.b16 %v107, %v106
  %v121 = vpack.c.b16 %v109, %v108
  %v122 = vpack.c.b16 %v111, %v110
  %v123 = vpack.c.b16 %v113, %v112
  %v124 = vpack.c.b16 %v115, %v114
  %v125 = vpack.c.b16 %v117, %v116
  %134 = vmatprep.subr.bf16.mxu0 0
  %135 = vmatpush1.bf16.msra.mxu0 %v118
  %136 = vmatprep.subr.bf16.mxu0 0
  %137 = vmatpush1.bf16.msra.mxu0 %v119
  %138 = vmatprep.subr.bf16.mxu0 0
  %139 = vmatpush1.bf16.msra.mxu0 %v120
  %140 = vmatprep.subr.bf16.mxu0 0
  %141 = vmatpush1.bf16.msra.mxu0 %v121
  %142 = vmatprep.subr.bf16.mxu0 0
  %143 = vmatpush1.bf16.msra.mxu0 %v122
  %144 = vmatprep.subr.bf16.mxu0 0
  %145 = vmatpush1.bf16.msra.mxu0 %v123
  %146 = vmatprep.subr.bf16.mxu0 0
  %147 = vmatpush1.bf16.msra.mxu0 %v124
  %148 = vmatprep.subr.bf16.mxu0 0
  %149 = vmatpush1.bf16.msra.mxu0 %v125
  %150 = vmatprep.subr.bf16.mxu0 0
  %151 = vmatpush1.bf16.msra.mxu0 0
  %152 = vmatprep.subr.bf16.mxu0 0
  %153 = vmatpush1.bf16.msra.mxu0 0
  %154 = vmatprep.subr.bf16.mxu0 0
  %155 = vmatpush1.bf16.msra.mxu0 0
  %156 = vmatprep.subr.bf16.mxu0 0
  %157 = vmatpush1.bf16.msra.mxu0 0
  %158 = vmatprep.subr.bf16.mxu0 0
  %159 = vmatpush1.bf16.msra.mxu0 0
  %160 = vmatprep.subr.bf16.mxu0 0
  %161 = vmatpush1.bf16.msra.mxu0 0
  %162 = vmatprep.subr.bf16.mxu0 0
  %163 = vmatpush1.bf16.msra.mxu0 0
  %164 = vmatprep.subr.bf16.mxu0 0
  %165 = vmatpush1.bf16.msra.mxu0 0
  %166 = vmatprep.mubr.bf16.mxu0 0
  %167 = vmatmul.mubr.bf16.gmra.mrb[0].mxu0 %v74
  %v168 = vpop.f32.mrb[0].mxu0
  %v169 = vadd.f32 %v48, %v168
  %v170 = vpop.f32.mrb[0].mxu0
  %v171 = vpop.f32.mrb[0].mxu0
  %v172 = vadd.f32 %v48, %v171
  %v173 = vpop.f32.mrb[0].mxu0
  %174 = vmatprep.mubr.bf16.mxu0 0
  %175 = vmatmul.mubr.bf16.gmra.mrb[0].mxu0 %v75
  %v176 = vpop.f32.mrb[0].mxu0
  %v177 = vadd.f32 %v48, %v176
  %v178 = vpop.f32.mrb[0].mxu0
  %v179 = vpop.f32.mrb[0].mxu0
  %v180 = vadd.f32 %v48, %v179
  %v181 = vpop.f32.mrb[0].mxu0
  %182 = vmatprep.mubr.bf16.mxu0 0
  %183 = vmatmul.mubr.bf16.gmra.mrb[0].mxu0 %v76
  %v184 = vpop.f32.mrb[0].mxu0
  %v185 = vadd.f32 %v48, %v184
  %v186 = vpop.f32.mrb[0].mxu0
  %v187 = vpop.f32.mrb[0].mxu0
  %v188 = vadd.f32 %v48, %v187
  %v189 = vpop.f32.mrb[0].mxu0
  %190 = vmatprep.mubr.bf16.mxu0 0
  %191 = vmatmul.mubr.bf16.gmra.mrb[0].mxu0 %v77
  %v192 = vpop.f32.mrb[0].mxu0
  %v193 = vadd.f32 %v48, %v192
  %v194 = vpop.f32.mrb[0].mxu0
  %v195 = vpop.f32.mrb[0].mxu0
  %v196 = vadd.f32 %v48, %v195
  %v197 = vpop.f32.mrb[0].mxu0
  %198 = vmatprep.mubr.bf16.mxu0 0
  %199 = vmatmul.mubr.bf16.gmra.mrb[0].mxu0 %v78
  %v200 = vpop.f32.mrb[0].mxu0
  %v201 = vadd.f32 %v48, %v200
  %v202 = vpop.f32.mrb[0].mxu0
  %v203 = vpop.f32.mrb[0].mxu0
  %v204 = vadd.f32 %v48, %v203
  %v205 = vpop.f32.mrb[0].mxu0
  %206 = vmatprep.mubr.bf16.mxu0 0
  %207 = vmatmul.mubr.bf16.gmra.mrb[0].mxu0 %v79
  %v208 = vpop.f32.mrb[0].mxu0
  %v209 = vadd.f32 %v48, %v208
  %v210 = vpop.f32.mrb[0].mxu0
  %v211 = vpop.f32.mrb[0].mxu0
  %v212 = vadd.f32 %v48, %v211
  %v213 = vpop.f32.mrb[0].mxu0
  %214 = vdwg.mxu0
  %v215 = vmax.f32 %v169, 0.0
  %v216 = vmax.f32 %v172, 0.0
  %v217 = vmax.f32 %v177, 0.0
  %v218 = vmax.f32 %v180, 0.0
  %v219 = vmax.f32 %v185, 0.0
  %v220 = vmax.f32 %v188, 0.0
  %v221 = vmax.f32 %v193, 0.0
  %v222 = vmax.f32 %v196, 0.0
  %v223 = vmax.f32 %v201, 0.0
  %v224 = vmax.f32 %v204, 0.0
  %v225 = vmax.f32 %v209, 0.0
  %v226 = vmax.f32 %v212, 0.0
  %227 = vst [vmem:[%s3] sm:$0xff] %v215
  %228 = vst [vmem:[%s3 + $0x8] sm:$0xff] %v216
  %229 = vst [vmem:[%s3 + $0x10] sm:$0xff] %v217
  %230 = vst [vmem:[%s3 + $0x18] sm:$0xff] %v218
  %231 = vst [vmem:[%s3 + $0x20] sm:$0xff] %v219
  %232 = vst [vmem:[%s3 + $0x28] sm:$0xff] %v220
  %233 = vst [vmem:[%s3 + $0x30] sm:$0xff] %v221
  %234 = vst [vmem:[%s3 + $0x38] sm:$0xff] %v222
  %235 = vst [vmem:[%s3 + $0x40] sm:$0xff] %v223
  %236 = vst [vmem:[%s3 + $0x48] sm:$0xff] %v224
  %237 = vst [vmem:[%s3 + $0x50] sm:$0xff] %v225
  %238 = vst [vmem:[%s3 + $0x58] sm:$0xff] %v226
  // Predicated region
  $region14: #{ulosd_forward.24} parent=0 // pred_check
    _
  $region15: #{ulosd_forward.24} parent=0 // pred_check_branch
    %240 = sbr.rel (0) target = $region17
  $region16: #{ulosd_forward.24} parent=0 // pred_region
    _
  $region17: #{ulosd_forward.24} parent=0 // pred_fallthru
    _
  // Predicated region
  $region18: #{ulosd_forward.24} parent=0 // pred_check
    _
  $region19: #{ulosd_forward.24} parent=0 // pred_check_branch
    %242 = sbr.rel (0) target = $region21
  $region20: #{ulosd_forward.24} parent=0 // pred_region
    _
  $region21: #{ulosd_forward.24} parent=0 // pred_fallthru
    _

// kernel: ulosd_forward.25
$region0: #{ulosd_forward.25}
  #allocation0 [shape = 'u32[]', space=smem, size = 0x4, offset = 0x4, fixed_abs, tag = 'smem constant byte address 0x4 - core index']
  #allocation1 [shape = 'u32[144,128]{1,0:T(1,128)}', space=vmem, size = 0x12000, scoped, tag = 'internal scratch']
  %s0 = inlined_call_operand.vmem [shape: bf16[512,640], index: 0, kind: input, shape index: {}]
  %s1 = inlined_call_operand.vmem [shape: bf16[640,128], index: 1, kind: input, shape index: {}]
  %s2 = inlined_call_operand.vmem [shape: f32[1,128], index: 2, kind: input, shape index: {}]
  %s3 = inlined_call_operand.vmem [shape: f32[512,128], index: 3, kind: output, shape index: {}]
  %s4 = sld [smem:[#allocation0]]
  $region45: #{ulosd_forward.25} parent=0
    _
  %s6 = ssub.s32 1, %s4
  %s7 = scalar_select 0, %s6, %s4
  loop: start=0, step=1, limit=4
  $region2: #{ulosd_forward.25} parent=0 // loop_pre_header
    _
  $region3: #{ulosd_forward.25} parent=0 // loop_header
    %s9 = sphi 0, %s13
    %p10 = scmp.ge.s32.totalorder %s9, 4
    %s19 = sphi 0, %s21
    %s22 = sphi 0, %s19
    %s23 = sphi 0, %s22
    %s39 = sphi 0, %s23
    %s43 = sphi 0, %s43
    %s45 = sphi 0, %s43
    %s46 = sphi 0, %s45
    %s60 = sphi 0, %s46
    %s64 = sphi 0, %s64
    %s66 = sphi 0, %s64
    %s67 = sphi 0, %s66
    %s81 = sphi 0, %s67
    %s87 = sphi 0, %s89
    %s90 = sphi 0, %s87
    %s91 = sphi 0, %s90
    %s107 = sphi 0, %s91
  $region4: #{ulosd_forward.25} parent=0 // loop_header_branch
    %12 = sbr.rel (%p10) target = $region8
  $region5: #{ulosd_forward.25} parent=0 // loop_body
    %s14 = ssub.s32 %s9, 1
    %s15 = ssub.s32 %s9, 2
    %s16 = sadd.s32 %s9, 1
    %s17 = ssub.s32 %s9, %s16
    %p18 = scmp.eq.s32.totalorder %s17, 0
    %s20 = sadd.s32 %s19, 1
    %s21 = scalar_select %p18, %s19, %s20
    %p24 = pneg %p18
    %p25 = scmp.eq.s32.totalorder %s9, 1
    %p26 = por %p24, %p25
    %p27 = scmp.ne.s32.totalorder %s19, %s22
    %p28 = scmp.eq.s32.totalorder %s9, 0
    %p29 = por %p27, %p28
    %p30 = scmp.ne.s32.totalorder %s19, %s22
    %p31 = scmp.eq.s32.totalorder %s14, 1
    %p32 = por %p30, %p31
    %p33 = scmp.ne.s32.totalorder %s22, %s23
    %p34 = scmp.eq.s32.totalorder %s14, 0
    %p35 = por %p33, %p34
    %p36 = scmp.ne.s32.totalorder %s22, %s23
    %p37 = scmp.eq.s32.totalorder %s15, 1
    %p38 = por %p36, %p37
    %p40 = scmp.ne.s32.totalorder %s23, %s39
    %p41 = scmp.eq.s32.totalorder %s15, 0
    %p42 = por %p40, %p41
    %s44 = sadd.s32 %s43, 1
    %p47 = scmp.eq.s32.totalorder %s9, 1
    %p48 = scmp.ne.s32.totalorder %s43, %s45
    %p49 = scmp.eq.s32.totalorder %s9, 0
    %p50 = por %p48, %p49
    %p51 = scmp.ne.s32.totalorder %s43, %s45
    %p52 = scmp.eq.s32.totalorder %s14, 1
    %p53 = por %p51, %p52
    %p54 = scmp.ne.s32.totalorder %s45, %s46
    %p55 = scmp.eq.s32.totalorder %s14, 0
    %p56 = por %p54, %p55
    %p57 = scmp.ne.s32.totalorder %s45, %s46
    %p58 = scmp.eq.s32.totalorder %s15, 1
    %p59 = por %p57, %p58
    %p61 = scmp.ne.s32.totalorder %s46, %s60
    %p62 = scmp.eq.s32.totalorder %s15, 0
    %p63 = por %p61, %p62
    %s65 = sadd.s32 %s64, 1
    %p68 = scmp.eq.s32.totalorder %s9, 1
    %p69 = scmp.ne.s32.totalorder %s64, %s66
    %p70 = scmp.eq.s32.totalorder %s9, 0
    %p71 = por %p69, %p70
    %p72 = scmp.ne.s32.totalorder %s64, %s66
    %p73 = scmp.eq.s32.totalorder %s14, 1
    %p74 = por %p72, %p73
    %p75 = scmp.ne.s32.totalorder %s66, %s67
    %p76 = scmp.eq.s32.totalorder %s14, 0
    %p77 = por %p75, %p76
    %p78 = scmp.ne.s32.totalorder %s66, %s67
    %p79 = scmp.eq.s32.totalorder %s15, 1
    %p80 = por %p78, %p79
    %p82 = scmp.ne.s32.totalorder %s67, %s81
    %p83 = scmp.eq.s32.totalorder %s15, 0
    %p84 = por %p82, %p83
    %s85 = ssub.s32 %s9, %s16
    %p86 = scmp.eq.s32.totalorder %s85, 0
    %s88 = sadd.s32 %s87, 1
    %s89 = scalar_select %p86, %s87, %s88
    %p92 = pneg %p86
    %p93 = scmp.eq.s32.totalorder %s9, 1
    %p94 = por %p92, %p93
    %p95 = scmp.ne.s32.totalorder %s87, %s90
    %p96 = scmp.eq.s32.totalorder %s9, 0
    %p97 = por %p95, %p96
    %p98 = scmp.ne.s32.totalorder %s87, %s90
    %p99 = scmp.eq.s32.totalorder %s14, 1
    %p100 = por %p98, %p99
    %p101 = scmp.ne.s32.totalorder %s90, %s91
    %p102 = scmp.eq.s32.totalorder %s14, 0
    %p103 = por %p101, %p102
    %p104 = scmp.ne.s32.totalorder %s90, %s91
    %p105 = scmp.eq.s32.totalorder %s15, 1
    %p106 = por %p104, %p105
    %p108 = scmp.ne.s32.totalorder %s91, %s107
    %p109 = scmp.eq.s32.totalorder %s15, 0
    %p110 = por %p108, %p109
    %p111 = scmp.le.s32.totalorder 1, %s9
    %p112 = scmp.lt.s32.totalorder %s9, 3
    %p113 = pnand %p111, %p112
    %p114 = pneg %p113
    // Predicated region
    $region9: #{ulosd_forward.25} parent=5 // pred_check
      _
    $region10: #{ulosd_forward.25} parent=5 // pred_check_branch
      %116 = sbr.rel (%p113) target = $region12
    $region11: #{ulosd_forward.25} parent=5 // pred_region
      %s117 = ssub.s32 %s9, 1
      // Predicated region
      $region13: #{ulosd_forward.25} parent=11 // pred_check
        %p118 = pneg %p56
      $region14: #{ulosd_forward.25} parent=11 // pred_check_branch
        %120 = sbr.rel (%p118) target = $region16
      $region15: #{ulosd_forward.25} parent=11 // pred_region
        _
      $region16: #{ulosd_forward.25} parent=11 // pred_fallthru
        _
      // Predicated region
      $region17: #{ulosd_forward.25} parent=11 // pred_check
        %p121 = pneg %p77
      $region18: #{ulosd_forward.25} parent=11 // pred_check_branch
        %123 = sbr.rel (%p121) target = $region20
      $region19: #{ulosd_forward.25} parent=11 // pred_region
        _
      $region20: #{ulosd_forward.25} parent=11 // pred_fallthru
        _
    $region12: #{ulosd_forward.25} parent=5 // pred_fallthru
      _
    %p124 = scmp.lt.s32.totalorder %s9, 2
    // Predicated region
    $region21: #{ulosd_forward.25} parent=5 // pred_check
      %p125 = pneg %p124
    $region22: #{ulosd_forward.25} parent=5 // pred_check_branch
      %127 = sbr.rel (%p125) target = $region24
    $region23: #{ulosd_forward.25} parent=5 // pred_region
      // Predicated region
      $region25: #{ulosd_forward.25} parent=23 // pred_check
        %p128 = pneg %p29
      $region26: #{ulosd_forward.25} parent=23 // pred_check_branch
        %130 = sbr.rel (%p128) target = $region28
      $region27: #{ulosd_forward.25} parent=23 // pred_region
        %s131 = smul.u32 32, %s9
        %p132 = scmp.lt.s32.totalorder %s131, 63
        %s133 = scalar_select %p132, %s131, 63
        %s134 = smul.addr %s133, 5
        %s135 = smul.addr %s134, 4
        %s136 = scalar_lea.vmem %s0, %s135
        %s137 = smul.u32 32, %s9
      $region28: #{ulosd_forward.25} parent=23 // pred_fallthru
        _
    $region24: #{ulosd_forward.25} parent=5 // pred_fallthru
      _
    %p138 = scmp.le.s32.totalorder 1, %s9
    %p139 = scmp.lt.s32.totalorder %s9, 3
    %p140 = pnand %p138, %p139
    %p141 = pneg %p140
    // Predicated region
    $region29: #{ulosd_forward.25} parent=5 // pred_check
      _
    $region30: #{ulosd_forward.25} parent=5 // pred_check_branch
      %143 = sbr.rel (%p140) target = $region32
    $region31: #{ulosd_forward.25} parent=5 // pred_region
      %s144 = ssub.s32 %s9, 1
      %s145 = smul.u32 32, %s14
      %p146 = scmp.lt.s32.totalorder %s145, 63
      %s147 = scalar_select %p146, %s145, 63
      %s148 = smul.addr %s147, 5
      %s149 = smul.addr %s148, 4
      %s150 = scalar_lea.vmem %s0, %s149
      %p151 = pneg %p35
      %p152 = pneg %p32
      %p153 = pneg %p56
      %p154 = pneg %p53
      %p155 = pneg %p77
      %p156 = pneg %p74
      %p157 = pneg %p103
      %p158 = pneg %p100
      %s159 = smul.u32 32, %s14
      %p160 = scmp.lt.s32.totalorder %s159, 63
      %s161 = scalar_select %p160, %s159, 63
      %s162 = smul.addr %s161, 8
      %s163 = scalar_lea.vmem %s3, %s162
      %s164 = smul.u32 32, %s14
      %p165 = scmp.lt.s32.totalorder %s164, 63
      %s166 = scalar_select %p165, %s164, 63
      %s167 = smul.addr %s166, 5
      %s168 = smul.addr %s167, 4
      %s169 = scalar_lea.vmem %s0, %s168
      %s170 = smul.u32 32, %s14
      %s171 = smul.u32 32, %s14
      %p172 = scmp.lt.s32.totalorder %s171, 63
      %s173 = scalar_select %p172, %s171, 63
      %s174 = smul.addr %s173, 8
      %s175 = scalar_lea.vmem %s3, %s174
      %s176 = smul.u32 32, %s14
      %v178 = vld [vmem:[%s169] sm:$0xff]
      %v179 = vld [vmem:[%s169 + $0x8] sm:$0xff]
      %v180 = vld [vmem:[%s169 + $0x10] sm:$0xf]
      %v181 = vld [vmem:[%s169 + $0x14] sm:$0xff]
      %v182 = vld [vmem:[%s169 + $0x1c] sm:$0xff]
      %v183 = vld [vmem:[%s169 + $0x24] sm:$0xf]
      %v184 = vld [vmem:[%s169 + $0x28] sm:$0xff]
      %v185 = vld [vmem:[%s169 + $0x30] sm:$0xff]
      %v186 = vld [vmem:[%s169 + $0x38] sm:$0xf]
      %v187 = vld [vmem:[%s169 + $0x3c] sm:$0xff]
      %v188 = vld [vmem:[%s169 + $0x44] sm:$0xff]
      %v189 = vld [vmem:[%s169 + $0x4c] sm:$0xf]
      %v190 = vld [vmem:[%s169 + $0x50] sm:$0xff]
      %v191 = vld [vmem:[%s169 + $0x58] sm:$0xff]
      %v192 = vld [vmem:[%s169 + $0x60] sm:$0xf]
      %v193 = vld [vmem:[%s169 + $0x64] sm:$0xff]
      %v194 = vld [vmem:[%s169 + $0x6c] sm:$0xff]
      %v195 = vld [vmem:[%s169 + $0x74] sm:$0xf]
      %v196 = vld [vmem:[%s169 + $0x78] sm:$0xff]
      %v197 = vld [vmem:[%s169 + $0x80] sm:$0xff]
      %v198 = vld [vmem:[%s169 + $0x88] sm:$0xf]
      %v199 = vld [vmem:[%s169 + $0x8c] sm:$0xff]
      %v200 = vld [vmem:[%s169 + $0x94] sm:$0xff]
      %v201 = vld [vmem:[%s169 + $0x9c] sm:$0xf]
      %v202 = vld [vmem:[%s169 + $0xa0] sm:$0xff]
      %v203 = vld [vmem:[%s169 + $0xa8] sm:$0xff]
      %v204 = vld [vmem:[%s169 + $0xb0] sm:$0xf]
      %v205 = vld [vmem:[%s169 + $0xb4] sm:$0xff]
      %v206 = vld [vmem:[%s169 + $0xbc] sm:$0xff]
      %v207 = vld [vmem:[%s169 + $0xc4] sm:$0xf]
      %v208 = vld [vmem:[%s169 + $0xc8] sm:$0xff]
      %v209 = vld [vmem:[%s169 + $0xd0] sm:$0xff]
      %v210 = vld [vmem:[%s169 + $0xd8] sm:$0xf]
      %v211 = vld [vmem:[%s169 + $0xdc] sm:$0xff]
      %v212 = vld [vmem:[%s169 + $0xe4] sm:$0xff]
      %v213 = vld [vmem:[%s169 + $0xec] sm:$0xf]
      %v214 = vld [vmem:[%s169 + $0xf0] sm:$0xff]
      %v215 = vld [vmem:[%s169 + $0xf8] sm:$0xff]
      %v216 = vld [vmem:[%s169 + $0x100] sm:$0xf]
      %v217 = vld [vmem:[%s169 + $0x104] sm:$0xff]
      %v218 = vld [vmem:[%s169 + $0x10c] sm:$0xff]
      %v219 = vld [vmem:[%s169 + $0x114] sm:$0xf]
      %v220 = vld [vmem:[%s169 + $0x118] sm:$0xff]
      %v221 = vld [vmem:[%s169 + $0x120] sm:$0xff]
      %v222 = vld [vmem:[%s169 + $0x128] sm:$0xf]
      %v223 = vld [vmem:[%s169 + $0x12c] sm:$0xff]
      %v224 = vld [vmem:[%s169 + $0x134] sm:$0xff]
      %v225 = vld [vmem:[%s169 + $0x13c] sm:$0xf]
      %v226 = vld [vmem:[%s169 + $0x140] sm:$0xff]
      %v227 = vld [vmem:[%s169 + $0x148] sm:$0xff]
      %v228 = vld [vmem:[%s169 + $0x150] sm:$0xf]
      %v229 = vld [vmem:[%s169 + $0x154] sm:$0xff]
      %v230 = vld [vmem:[%s169 + $0x15c] sm:$0xff]
      %v231 = vld [vmem:[%s169 + $0x164] sm:$0xf]
      %v232 = vld [vmem:[%s169 + $0x168] sm:$0xff]
      %v233 = vld [vmem:[%s169 + $0x170] sm:$0xff]
      %v234 = vld [vmem:[%s169 + $0x178] sm:$0xf]
      %v235 = vld [vmem:[%s169 + $0x17c] sm:$0xff]
      %v236 = vld [vmem:[%s169 + $0x184] sm:$0xff]
      %v237 = vld [vmem:[%s169 + $0x18c] sm:$0xf]
      %v238 = vld [vmem:[%s169 + $0x190] sm:$0xff]
      %v239 = vld [vmem:[%s169 + $0x198] sm:$0xff]
      %v240 = vld [vmem:[%s169 + $0x1a0] sm:$0xf]
      %v241 = vld [vmem:[%s169 + $0x1a4] sm:$0xff]
      %v242 = vld [vmem:[%s169 + $0x1ac] sm:$0xff]
      %v243 = vld [vmem:[%s169 + $0x1b4] sm:$0xf]
      %v244 = vld [vmem:[%s169 + $0x1b8] sm:$0xff]
      %v245 = vld [vmem:[%s169 + $0x1c0] sm:$0xff]
      %v246 = vld [vmem:[%s169 + $0x1c8] sm:$0xf]
      %v247 = vld [vmem:[%s169 + $0x1cc] sm:$0xff]
      %v248 = vld [vmem:[%s169 + $0x1d4] sm:$0xff]
      %v249 = vld [vmem:[%s169 + $0x1dc] sm:$0xf]
      %v250 = vld [vmem:[%s169 + $0x1e0] sm:$0xff]
      %v251 = vld [vmem:[%s169 + $0x1e8] sm:$0xff]
      %v252 = vld [vmem:[%s169 + $0x1f0] sm:$0xf]
      %v253 = vld [vmem:[%s169 + $0x1f4] sm:$0xff]
      %v254 = vld [vmem:[%s169 + $0x1fc] sm:$0xff]
      %v255 = vld [vmem:[%s169 + $0x204] sm:$0xf]
      %v256 = vld [vmem:[%s169 + $0x208] sm:$0xff]
      %v257 = vld [vmem:[%s169 + $0x210] sm:$0xff]
      %v258 = vld [vmem:[%s169 + $0x218] sm:$0xf]
      %v259 = vld [vmem:[%s169 + $0x21c] sm:$0xff]
      %v260 = vld [vmem:[%s169 + $0x224] sm:$0xff]
      %v261 = vld [vmem:[%s169 + $0x22c] sm:$0xf]
      %v262 = vld [vmem:[%s169 + $0x230] sm:$0xff]
      %v263 = vld [vmem:[%s169 + $0x238] sm:$0xff]
      %v264 = vld [vmem:[%s169 + $0x240] sm:$0xf]
      %v265 = vld [vmem:[%s169 + $0x244] sm:$0xff]
      %v266 = vld [vmem:[%s169 + $0x24c] sm:$0xff]
      %v267 = vld [vmem:[%s169 + $0x254] sm:$0xf]
      %v268 = vld [vmem:[%s169 + $0x258] sm:$0xff]
      %v269 = vld [vmem:[%s169 + $0x260] sm:$0xff]
      %v270 = vld [vmem:[%s169 + $0x268] sm:$0xf]
      %v271 = vld [vmem:[%s169 + $0x26c] sm:$0xff]
      %v272 = vld [vmem:[%s169 + $0x274] sm:$0xff]
      %v273 = vld [vmem:[%s169 + $0x27c] sm:$0xf]
      %v274 = vld [vmem:[%s1] sm:$0xf]
      %v275 = vld [vmem:[%s1 + $0x4] sm:$0xf]
      %v276 = vld [vmem:[%s1 + $0x8] sm:$0xf]
      %v277 = vld [vmem:[%s1 + $0xc] sm:$0xf]
      %v278 = vld [vmem:[%s1 + $0x10] sm:$0xf]
      %v279 = vld [vmem:[%s1 + $0x14] sm:$0xf]
      %v280 = vld [vmem:[%s1 + $0x18] sm:$0xf]
      %v281 = vld [vmem:[%s1 + $0x1c] sm:$0xf]
      %v282 = vld [vmem:[%s1 + $0x20] sm:$0xf]
      %v283 = vld [vmem:[%s1 + $0x24] sm:$0xf]
      %v284 = vld [vmem:[%s1 + $0x28] sm:$0xf]
      %v285 = vld [vmem:[%s1 + $0x2c] sm:$0xf]
      %v286 = vld [vmem:[%s1 + $0x30] sm:$0xf]
      %v287 = vld [vmem:[%s1 + $0x34] sm:$0xf]
      %v288 = vld [vmem:[%s1 + $0x38] sm:$0xf]
      %v289 = vld [vmem:[%s1 + $0x3c] sm:$0xf]
      %v290 = vld [vmem:[%s1 + $0x40] sm:$0xf]
      %v291 = vld [vmem:[%s1 + $0x44] sm:$0xf]
      %v292 = vld [vmem:[%s1 + $0x48] sm:$0xf]
      %v293 = vld [vmem:[%s1 + $0x4c] sm:$0xf]
      %v294 = vld [vmem:[%s1 + $0x50] sm:$0xf]
      %v295 = vld [vmem:[%s1 + $0x54] sm:$0xf]
      %v296 = vld [vmem:[%s1 + $0x58] sm:$0xf]
      %v297 = vld [vmem:[%s1 + $0x5c] sm:$0xf]
      %v298 = vld [vmem:[%s1 + $0x60] sm:$0xf]
      %v299 = vld [vmem:[%s1 + $0x64] sm:$0xf]
      %v300 = vld [vmem:[%s1 + $0x68] sm:$0xf]
      %v301 = vld [vmem:[%s1 + $0x6c] sm:$0xf]
      %v302 = vld [vmem:[%s1 + $0x70] sm:$0xf]
      %v303 = vld [vmem:[%s1 + $0x74] sm:$0xf]
      %v304 = vld [vmem:[%s1 + $0x78] sm:$0xf]
      %v305 = vld [vmem:[%s1 + $0x7c] sm:$0xf]
      %v306 = vld [vmem:[%s1 + $0x80] sm:$0xf]
      %v307 = vld [vmem:[%s1 + $0x84] sm:$0xf]
      %v308 = vld [vmem:[%s1 + $0x88] sm:$0xf]
      %v309 = vld [vmem:[%s1 + $0x8c] sm:$0xf]
      %v310 = vld [vmem:[%s1 + $0x90] sm:$0xf]
      %v311 = vld [vmem:[%s1 + $0x94] sm:$0xf]
      %v312 = vld [vmem:[%s1 + $0x98] sm:$0xf]
      %v313 = vld [vmem:[%s1 + $0x9c] sm:$0xf]
      %v314 = vld [vmem:[%s1 + $0xa0] sm:$0xf]
      %v315 = vld [vmem:[%s1 + $0xa4] sm:$0xf]
      %v316 = vld [vmem:[%s1 + $0xa8] sm:$0xf]
      %v317 = vld [vmem:[%s1 + $0xac] sm:$0xf]
      %v318 = vld [vmem:[%s1 + $0xb0] sm:$0xf]
      %v319 = vld [vmem:[%s1 + $0xb4] sm:$0xf]
      %v320 = vld [vmem:[%s1 + $0xb8] sm:$0xf]
      %v321 = vld [vmem:[%s1 + $0xbc] sm:$0xf]
      %v322 = vld [vmem:[%s1 + $0xc0] sm:$0xf]
      %v323 = vld [vmem:[%s1 + $0xc4] sm:$0xf]
      %v324 = vld [vmem:[%s1 + $0xc8] sm:$0xf]
      %v325 = vld [vmem:[%s1 + $0xcc] sm:$0xf]
      %v326 = vld [vmem:[%s1 + $0xd0] sm:$0xf]
      %v327 = vld [vmem:[%s1 + $0xd4] sm:$0xf]
      %v328 = vld [vmem:[%s1 + $0xd8] sm:$0xf]
      %v329 = vld [vmem:[%s1 + $0xdc] sm:$0xf]
      %v330 = vld [vmem:[%s1 + $0xe0] sm:$0xf]
      %v331 = vld [vmem:[%s1 + $0xe4] sm:$0xf]
      %v332 = vld [vmem:[%s1 + $0xe8] sm:$0xf]
      %v333 = vld [vmem:[%s1 + $0xec] sm:$0xf]
      %v334 = vld [vmem:[%s1 + $0xf0] sm:$0xf]
      %v335 = vld [vmem:[%s1 + $0xf4] sm:$0xf]
      %v336 = vld [vmem:[%s1 + $0xf8] sm:$0xf]
      %v337 = vld [vmem:[%s1 + $0xfc] sm:$0xf]
      %v338 = vld [vmem:[%s1 + $0x100] sm:$0xf]
      %v339 = vld [vmem:[%s1 + $0x104] sm:$0xf]
      %v340 = vld [vmem:[%s1 + $0x108] sm:$0xf]
      %v341 = vld [vmem:[%s1 + $0x10c] sm:$0xf]
      %v342 = vld [vmem:[%s1 + $0x110] sm:$0xf]
      %v343 = vld [vmem:[%s1 + $0x114] sm:$0xf]
      %v344 = vld [vmem:[%s1 + $0x118] sm:$0xf]
      %v345 = vld [vmem:[%s1 + $0x11c] sm:$0xf]
      %v346 = vld [vmem:[%s1 + $0x120] sm:$0xf]
      %v347 = vld [vmem:[%s1 + $0x124] sm:$0xf]
      %v348 = vld [vmem:[%s1 + $0x128] sm:$0xf]
      %v349 = vld [vmem:[%s1 + $0x12c] sm:$0xf]
      %v350 = vld [vmem:[%s1 + $0x130] sm:$0xf]
      %v351 = vld [vmem:[%s1 + $0x134] sm:$0xf]
      %v352 = vld [vmem:[%s1 + $0x138] sm:$0xf]
      %v353 = vld [vmem:[%s1 + $0x13c] sm:$0xf]
      %v354 = vld [vmem:[%s2] sm:$0x1]
      %v356 = vlaneseq
      %v357 = vshrl.u32 %v356, 7
      %v358 = vsub.s32 0, %v357
      %v359 = vrot.slane %v354, %v358
      %v457 = vunpack.c.l.b16 %v178
      %v458 = vunpack.c.h.b16 %v178
      %v459 = vunpack.c.l.b16 %v179
      %v460 = vunpack.c.h.b16 %v179
      %v461 = vunpack.c.l.b16 %v180
      %v462 = vunpack.c.l.b16 %v181
      %v463 = vunpack.c.h.b16 %v181
      %v464 = vunpack.c.l.b16 %v182
      %v465 = vunpack.c.h.b16 %v182
      %v466 = vunpack.c.l.b16 %v183
      %v467 = vunpack.c.l.b16 %v184
      %v468 = vunpack.c.h.b16 %v184
      %v469 = vunpack.c.l.b16 %v185
      %v470 = vunpack.c.h.b16 %v185
      %v471 = vunpack.c.l.b16 %v186
      %v472 = vunpack.c.l.b16 %v187
      %v473 = vunpack.c.h.b16 %v187
      %v474 = vunpack.c.l.b16 %v188
      %v475 = vunpack.c.h.b16 %v188
      %v476 = vunpack.c.l.b16 %v189
      %v477 = vunpack.c.l.b16 %v190
      %v478 = vunpack.c.h.b16 %v190
      %v479 = vunpack.c.l.b16 %v191
      %v480 = vunpack.c.h.b16 %v191
      %v481 = vunpack.c.l.b16 %v192
      %v482 = vunpack.c.l.b16 %v193
      %v483 = vunpack.c.h.b16 %v193
      %v484 = vunpack.c.l.b16 %v194
      %v485 = vunpack.c.h.b16 %v194
      %v486 = vunpack.c.l.b16 %v195
      %v487 = vunpack.c.l.b16 %v196
      %v488 = vunpack.c.h.b16 %v196
      %v489 = vunpack.c.l.b16 %v197
      %v490 = vunpack.c.h.b16 %v197
      %v491 = vunpack.c.l.b16 %v198
      %v492 = vunpack.c.l.b16 %v199
      %v493 = vunpack.c.h.b16 %v199
      %v494 = vunpack.c.l.b16 %v200
      %v495 = vunpack.c.h.b16 %v200
      %v496 = vunpack.c.l.b16 %v201
      %v497 = vunpack.c.l.b16 %v202
      %v498 = vunpack.c.h.b16 %v202
      %v499 = vunpack.c.l.b16 %v203
      %v500 = vunpack.c.h.b16 %v203
      %v501 = vunpack.c.l.b16 %v204
      %v502 = vunpack.c.l.b16 %v205
      %v503 = vunpack.c.h.b16 %v205
      %v504 = vunpack.c.l.b16 %v206
      %v505 = vunpack.c.h.b16 %v206
      %v506 = vunpack.c.l.b16 %v207
      %v507 = vunpack.c.l.b16 %v208
      %v508 = vunpack.c.h.b16 %v208
      %v509 = vunpack.c.l.b16 %v209
      %v510 = vunpack.c.h.b16 %v209
      %v511 = vunpack.c.l.b16 %v210
      %v512 = vunpack.c.l.b16 %v211
      %v513 = vunpack.c.h.b16 %v211
      %v514 = vunpack.c.l.b16 %v212
      %v515 = vunpack.c.h.b16 %v212
      %v516 = vunpack.c.l.b16 %v213
      %v517 = vunpack.c.l.b16 %v214
      %v518 = vunpack.c.h.b16 %v214
      %v519 = vunpack.c.l.b16 %v215
      %v520 = vunpack.c.h.b16 %v215
      %v521 = vunpack.c.l.b16 %v216
      %v522 = vunpack.c.l.b16 %v217
      %v523 = vunpack.c.h.b16 %v217
      %v524 = vunpack.c.l.b16 %v218
      %v525 = vunpack.c.h.b16 %v218
      %v526 = vunpack.c.l.b16 %v219
      %v527 = vunpack.c.l.b16 %v220
      %v528 = vunpack.c.h.b16 %v220
      %v529 = vunpack.c.l.b16 %v221
      %v530 = vunpack.c.h.b16 %v221
      %v531 = vunpack.c.l.b16 %v222
      %v532 = vunpack.c.l.b16 %v223
      %v533 = vunpack.c.h.b16 %v223
      %v534 = vunpack.c.l.b16 %v224
      %v535 = vunpack.c.h.b16 %v224
      %v536 = vunpack.c.l.b16 %v225
      %v537 = vunpack.c.l.b16 %v226
      %v538 = vunpack.c.h.b16 %v226
      %v539 = vunpack.c.l.b16 %v227
      %v540 = vunpack.c.h.b16 %v227
      %v541 = vunpack.c.l.b16 %v228
      %v542 = vunpack.c.l.b16 %v229
      %v543 = vunpack.c.h.b16 %v229
      %v544 = vunpack.c.l.b16 %v230
      %v545 = vunpack.c.h.b16 %v230
      %v546 = vunpack.c.l.b16 %v231
      %v547 = vunpack.c.l.b16 %v232
      %v548 = vunpack.c.h.b16 %v232
      %v549 = vunpack.c.l.b16 %v233
      %v550 = vunpack.c.h.b16 %v233
      %v551 = vunpack.c.l.b16 %v234
      %v552 = vunpack.c.l.b16 %v235
      %v553 = vunpack.c.h.b16 %v235
      %v554 = vunpack.c.l.b16 %v236
      %v555 = vunpack.c.h.b16 %v236
      %v556 = vunpack.c.l.b16 %v237
      %v557 = vunpack.c.l.b16 %v238
      %v558 = vunpack.c.h.b16 %v238
      %v559 = vunpack.c.l.b16 %v239
      %v560 = vunpack.c.h.b16 %v239
      %v561 = vunpack.c.l.b16 %v240
      %v562 = vunpack.c.l.b16 %v241
      %v563 = vunpack.c.h.b16 %v241
      %v564 = vunpack.c.l.b16 %v242
      %v565 = vunpack.c.h.b16 %v242
      %v566 = vunpack.c.l.b16 %v243
      %v567 = vunpack.c.l.b16 %v244
      %v568 = vunpack.c.h.b16 %v244
      %v569 = vunpack.c.l.b16 %v245
      %v570 = vunpack.c.h.b16 %v245
      %v571 = vunpack.c.l.b16 %v246
      %v572 = vunpack.c.l.b16 %v247
      %v573 = vunpack.c.h.b16 %v247
      %v574 = vunpack.c.l.b16 %v248
      %v575 = vunpack.c.h.b16 %v248
      %v576 = vunpack.c.l.b16 %v249
      %v577 = vunpack.c.l.b16 %v250
      %v578 = vunpack.c.h.b16 %v250
      %v579 = vunpack.c.l.b16 %v251
      %v580 = vunpack.c.h.b16 %v251
      %v581 = vunpack.c.l.b16 %v252
      %v582 = vunpack.c.l.b16 %v253
      %v583 = vunpack.c.h.b16 %v253
      %v584 = vunpack.c.l.b16 %v254
      %v585 = vunpack.c.h.b16 %v254
      %v586 = vunpack.c.l.b16 %v255
      %v587 = vunpack.c.l.b16 %v256
      %v588 = vunpack.c.h.b16 %v256
      %v589 = vunpack.c.l.b16 %v257
      %v590 = vunpack.c.h.b16 %v257
      %v591 = vunpack.c.l.b16 %v258
      %v592 = vunpack.c.l.b16 %v259
      %v593 = vunpack.c.h.b16 %v259
      %v594 = vunpack.c.l.b16 %v260
      %v595 = vunpack.c.h.b16 %v260
      %v596 = vunpack.c.l.b16 %v261
      %v597 = vunpack.c.l.b16 %v262
      %v598 = vunpack.c.h.b16 %v262
      %v599 = vunpack.c.l.b16 %v263
      %v600 = vunpack.c.h.b16 %v263
      %v601 = vunpack.c.l.b16 %v264
      %v602 = vunpack.c.l.b16 %v265
      %v603 = vunpack.c.h.b16 %v265
      %v604 = vunpack.c.l.b16 %v266
      %v605 = vunpack.c.h.b16 %v266
      %v606 = vunpack.c.l.b16 %v267
      %v607 = vunpack.c.l.b16 %v268
      %v608 = vunpack.c.h.b16 %v268
      %v609 = vunpack.c.l.b16 %v269
      %v610 = vunpack.c.h.b16 %v269
      %v611 = vunpack.c.l.b16 %v270
      %v612 = vunpack.c.l.b16 %v271
      %v613 = vunpack.c.h.b16 %v271
      %v614 = vunpack.c.l.b16 %v272
      %v615 = vunpack.c.h.b16 %v272
      %v616 = vunpack.c.l.b16 %v273
      %v617 = vpack.c.b16 %v462, %v457
      %v618 = vpack.c.b16 %v463, %v458
      %v619 = vpack.c.b16 %v464, %v459
      %v620 = vpack.c.b16 %v465, %v460
      %v621 = vpack.c.b16 %v466, %v461
      %v622 = vpack.c.b16 %v472, %v467
      %v623 = vpack.c.b16 %v473, %v468
      %v624 = vpack.c.b16 %v474, %v469
      %v625 = vpack.c.b16 %v475, %v470
      %v626 = vpack.c.b16 %v476, %v471
      %v627 = vpack.c.b16 %v482, %v477
      %v628 = vpack.c.b16 %v483, %v478
      %v629 = vpack.c.b16 %v484, %v479
      %v630 = vpack.c.b16 %v485, %v480
      %v631 = vpack.c.b16 %v486, %v481
      %v632 = vpack.c.b16 %v492, %v487
      %v633 = vpack.c.b16 %v493, %v488
      %v634 = vpack.c.b16 %v494, %v489
      %v635 = vpack.c.b16 %v495, %v490
      %v636 = vpack.c.b16 %v496, %v491
      %v637 = vpack.c.b16 %v502, %v497
      %v638 = vpack.c.b16 %v503, %v498
      %v639 = vpack.c.b16 %v504, %v499
      %v640 = vpack.c.b16 %v505, %v500
      %v641 = vpack.c.b16 %v506, %v501
      %v642 = vpack.c.b16 %v512, %v507
      %v643 = vpack.c.b16 %v513, %v508
      %v644 = vpack.c.b16 %v514, %v509
      %v645 = vpack.c.b16 %v515, %v510
      %v646 = vpack.c.b16 %v516, %v511
      %v647 = vpack.c.b16 %v522, %v517
      %v648 = vpack.c.b16 %v523, %v518
      %v649 = vpack.c.b16 %v524, %v519
      %v650 = vpack.c.b16 %v525, %v520
      %v651 = vpack.c.b16 %v526, %v521
      %v652 = vpack.c.b16 %v532, %v527
      %v653 = vpack.c.b16 %v533, %v528
      %v654 = vpack.c.b16 %v534, %v529
      %v655 = vpack.c.b16 %v535, %v530
      %v656 = vpack.c.b16 %v536, %v531
      %v657 = vpack.c.b16 %v542, %v537
      %v658 = vpack.c.b16 %v543, %v538
      %v659 = vpack.c.b16 %v544, %v539
      %v660 = vpack.c.b16 %v545, %v540
      %v661 = vpack.c.b16 %v546, %v541
      %v662 = vpack.c.b16 %v552, %v547
      %v663 = vpack.c.b16 %v553, %v548
      %v664 = vpack.c.b16 %v554, %v549
      %v665 = vpack.c.b16 %v555, %v550
      %v666 = vpack.c.b16 %v556, %v551
      %v667 = vpack.c.b16 %v562, %v557
      %v668 = vpack.c.b16 %v563, %v558
      %v669 = vpack.c.b16 %v564, %v559
      %v670 = vpack.c.b16 %v565, %v560
      %v671 = vpack.c.b16 %v566, %v561
      %v672 = vpack.c.b16 %v572, %v567
      %v673 = vpack.c.b16 %v573, %v568
      %v674 = vpack.c.b16 %v574, %v569
      %v675 = vpack.c.b16 %v575, %v570
      %v676 = vpack.c.b16 %v576, %v571
      %v677 = vpack.c.b16 %v582, %v577
      %v678 = vpack.c.b16 %v583, %v578
      %v679 = vpack.c.b16 %v584, %v579
      %v680 = vpack.c.b16 %v585, %v580
      %v681 = vpack.c.b16 %v586, %v581
      %v682 = vpack.c.b16 %v592, %v587
      %v683 = vpack.c.b16 %v593, %v588
      %v684 = vpack.c.b16 %v594, %v589
      %v685 = vpack.c.b16 %v595, %v590
      %v686 = vpack.c.b16 %v596, %v591
      %v687 = vpack.c.b16 %v602, %v597
      %v688 = vpack.c.b16 %v603, %v598
      %v689 = vpack.c.b16 %v604, %v599
      %v690 = vpack.c.b16 %v605, %v600
      %v691 = vpack.c.b16 %v606, %v601
      %v692 = vpack.c.b16 %v612, %v607
      %v693 = vpack.c.b16 %v613, %v608
      %v694 = vpack.c.b16 %v614, %v609
      %v695 = vpack.c.b16 %v615, %v610
      %v696 = vpack.c.b16 %v616, %v611
      %v857 = vunpack.c.l.b16 %v274
      %v858 = vunpack.c.l.b16 %v275
      %v859 = vunpack.c.l.b16 %v276
      %v860 = vunpack.c.l.b16 %v277
      %v861 = vunpack.c.l.b16 %v278
      %v862 = vunpack.c.l.b16 %v279
      %v863 = vunpack.c.l.b16 %v280
      %v864 = vunpack.c.l.b16 %v281
      %v865 = vunpack.c.l.b16 %v282
      %v866 = vunpack.c.l.b16 %v283
      %v867 = vunpack.c.l.b16 %v284
      %v868 = vunpack.c.l.b16 %v285
      %v869 = vunpack.c.l.b16 %v286
      %v870 = vunpack.c.l.b16 %v287
      %v871 = vunpack.c.l.b16 %v288
      %v872 = vunpack.c.l.b16 %v289
      %v873 = vunpack.c.l.b16 %v290
      %v874 = vunpack.c.l.b16 %v291
      %v875 = vunpack.c.l.b16 %v292
      %v876 = vunpack.c.l.b16 %v293
      %v877 = vunpack.c.l.b16 %v294
      %v878 = vunpack.c.l.b16 %v295
      %v879 = vunpack.c.l.b16 %v296
      %v880 = vunpack.c.l.b16 %v297
      %v881 = vunpack.c.l.b16 %v298
      %v882 = vunpack.c.l.b16 %v299
      %v883 = vunpack.c.l.b16 %v300
      %v884 = vunpack.c.l.b16 %v301
      %v885 = vunpack.c.l.b16 %v302
      %v886 = vunpack.c.l.b16 %v303
      %v887 = vunpack.c.l.b16 %v304
      %v888 = vunpack.c.l.b16 %v305
      %v889 = vunpack.c.l.b16 %v306
      %v890 = vunpack.c.l.b16 %v307
      %v891 = vunpack.c.l.b16 %v308
      %v892 = vunpack.c.l.b16 %v309
      %v893 = vunpack.c.l.b16 %v310
      %v894 = vunpack.c.l.b16 %v311
      %v895 = vunpack.c.l.b16 %v312
      %v896 = vunpack.c.l.b16 %v313
      %v897 = vunpack.c.l.b16 %v314
      %v898 = vunpack.c.l.b16 %v315
      %v899 = vunpack.c.l.b16 %v316
      %v900 = vunpack.c.l.b16 %v317
      %v901 = vunpack.c.l.b16 %v318
      %v902 = vunpack.c.l.b16 %v319
      %v903 = vunpack.c.l.b16 %v320
      %v904 = vunpack.c.l.b16 %v321
      %v905 = vunpack.c.l.b16 %v322
      %v906 = vunpack.c.l.b16 %v323
      %v907 = vunpack.c.l.b16 %v324
      %v908 = vunpack.c.l.b16 %v325
      %v909 = vunpack.c.l.b16 %v326
      %v910 = vunpack.c.l.b16 %v327
      %v911 = vunpack.c.l.b16 %v328
      %v912 = vunpack.c.l.b16 %v329
      %v913 = vunpack.c.l.b16 %v330
      %v914 = vunpack.c.l.b16 %v331
      %v915 = vunpack.c.l.b16 %v332
      %v916 = vunpack.c.l.b16 %v333
      %v917 = vunpack.c.l.b16 %v334
      %v918 = vunpack.c.l.b16 %v335
      %v919 = vunpack.c.l.b16 %v336
      %v920 = vunpack.c.l.b16 %v337
      %v921 = vunpack.c.l.b16 %v338
      %v922 = vunpack.c.l.b16 %v339
      %v923 = vunpack.c.l.b16 %v340
      %v924 = vunpack.c.l.b16 %v341
      %v925 = vunpack.c.l.b16 %v342
      %v926 = vunpack.c.l.b16 %v343
      %v927 = vunpack.c.l.b16 %v344
      %v928 = vunpack.c.l.b16 %v345
      %v929 = vunpack.c.l.b16 %v346
      %v930 = vunpack.c.l.b16 %v347
      %v931 = vunpack.c.l.b16 %v348
      %v932 = vunpack.c.l.b16 %v349
      %v933 = vunpack.c.l.b16 %v350
      %v934 = vunpack.c.l.b16 %v351
      %v935 = vunpack.c.l.b16 %v352
      %v936 = vunpack.c.l.b16 %v353
      %v937 = vpack.c.b16 %v858, %v857
      %v938 = vpack.c.b16 %v860, %v859
      %v939 = vpack.c.b16 %v862, %v861
      %v940 = vpack.c.b16 %v864, %v863
      %v941 = vpack.c.b16 %v866, %v865
      %v942 = vpack.c.b16 %v868, %v867
      %v943 = vpack.c.b16 %v870, %v869
      %v944 = vpack.c.b16 %v872, %v871
      %v945 = vpack.c.b16 %v874, %v873
      %v946 = vpack.c.b16 %v876, %v875
      %v947 = vpack.c.b16 %v878, %v877
      %v948 = vpack.c.b16 %v880, %v879
      %v949 = vpack.c.b16 %v882, %v881
      %v950 = vpack.c.b16 %v884, %v883
      %v951 = vpack.c.b16 %v886, %v885
      %v952 = vpack.c.b16 %v888, %v887
      %v953 = vpack.c.b16 %v890, %v889
      %v954 = vpack.c.b16 %v892, %v891
      %v955 = vpack.c.b16 %v894, %v893
      %v956 = vpack.c.b16 %v896, %v895
      %v957 = vpack.c.b16 %v898, %v897
      %v958 = vpack.c.b16 %v900, %v899
      %v959 = vpack.c.b16 %v902, %v901
      %v960 = vpack.c.b16 %v904, %v903
      %v961 = vpack.c.b16 %v906, %v905
      %v962 = vpack.c.b16 %v908, %v907
      %v963 = vpack.c.b16 %v910, %v909
      %v964 = vpack.c.b16 %v912, %v911
      %v965 = vpack.c.b16 %v914, %v913
      %v966 = vpack.c.b16 %v916, %v915
      %v967 = vpack.c.b16 %v918, %v917
      %v968 = vpack.c.b16 %v920, %v919
      %v969 = vpack.c.b16 %v922, %v921
      %v970 = vpack.c.b16 %v924, %v923
      %v971 = vpack.c.b16 %v926, %v925
      %v972 = vpack.c.b16 %v928, %v927
      %v973 = vpack.c.b16 %v930, %v929
      %v974 = vpack.c.b16 %v932, %v931
      %v975 = vpack.c.b16 %v934, %v933
      %v976 = vpack.c.b16 %v936, %v935
      %1017 = vmatprep.subr.bf16.mxu0 0
      %1018 = vmatpush1.bf16.msra.mxu0 %v937
      %1019 = vmatprep.subr.bf16.mxu0 0
      %1020 = vmatpush1.bf16.msra.mxu0 %v938
      %1021 = vmatprep.subr.bf16.mxu0 0
      %1022 = vmatpush1.bf16.msra.mxu0 %v939
      %1023 = vmatprep.subr.bf16.mxu0 0
      %1024 = vmatpush1.bf16.msra.mxu0 %v940
      %1025 = vmatprep.subr.bf16.mxu0 0
      %1026 = vmatpush1.bf16.msra.mxu0 %v941
      %1027 = vmatprep.subr.bf16.mxu0 0
      %1028 = vmatpush1.bf16.msra.mxu0 %v942
      %1029 = vmatprep.subr.bf16.mxu0 0
      %1030 = vmatpush1.bf16.msra.mxu0 %v943
      %1031 = vmatprep.subr.bf16.mxu0 0
      %1032 = vmatpush1.bf16.msra.mxu0 %v944
      %1033 = vmatprep.subr.bf16.mxu0 0
      %1034 = vmatpush1.bf16.msra.mxu0 %v945
      %1035 = vmatprep.subr.bf16.mxu0 0
      %1036 = vmatpush1.bf16.msra.mxu0 %v946
      %1037 = vmatprep.subr.bf16.mxu0 0
      %1038 = vmatpush1.bf16.msra.mxu0 %v947
      %1039 = vmatprep.subr.bf16.mxu0 0
      %1040 = vmatpush1.bf16.msra.mxu0 %v948
      %1041 = vmatprep.subr.bf16.mxu0 0
      %1042 = vmatpush1.bf16.msra.mxu0 %v949
      %1043 = vmatprep.subr.bf16.mxu0 0
      %1044 = vmatpush1.bf16.msra.mxu0 %v950
      %1045 = vmatprep.subr.bf16.mxu0 0
      %1046 = vmatpush1.bf16.msra.mxu0 %v951
      %1047 = vmatprep.subr.bf16.mxu0 0
      %1048 = vmatpush1.bf16.msra.mxu0 %v952
      %1049 = vmatprep.mubr.bf16.mxu0 %v618
      %1050 = vmatmul.mubr.bf16.gmra.mrb[0].mxu0 %v617
      %v1051 = vpop.f32.mrb[0].mxu0
      %v1052 = vadd.f32 %v359, %v1051
      %v1053 = vpop.f32.mrb[0].mxu0
      %v1054 = vpop.f32.mrb[0].mxu0
      %v1055 = vadd.f32 %v359, %v1054
      %v1056 = vpop.f32.mrb[0].mxu0
      %1057 = vmatprep.mubr.bf16.mxu0 %v623
      %1058 = vmatmul.mubr.bf16.gmra.mrb[0].mxu0 %v622
      %v1059 = vpop.f32.mrb[0].mxu0
      %v1060 = vadd.f32 %v359, %v1059
      %v1061 = vpop.f32.mrb[0].mxu0
      %v1062 = vpop.f32.mrb[0].mxu0
      %v1063 = vadd.f32 %v359, %v1062
      %v1064 = vpop.f32.mrb[0].mxu0
      %1065 = vmatprep.mubr.bf16.mxu0 %v628
      %1066 = vmatmul.mubr.bf16.gmra.mrb[0].mxu0 %v627
      %v1067 = vpop.f32.mrb[0].mxu0
      %v1068 = vadd.f32 %v359, %v1067
      %v1069 = vpop.f32.mrb[0].mxu0
      %v1070 = vpop.f32.mrb[0].mxu0
      %v1071 = vadd.f32 %v359, %v1070
      %v1072 = vpop.f32.mrb[0].mxu0
      %1073 = vmatprep.mubr.bf16.mxu0 %v633
      %1074 = vmatmul.mubr.bf16.gmra.mrb[0].mxu0 %v632
      %v1075 = vpop.f32.mrb[0].mxu0
      %v1076 = vadd.f32 %v359, %v1075
      %v1077 = vpop.f32.mrb[0].mxu0
      %v1078 = vpop.f32.mrb[0].mxu0
      %v1079 = vadd.f32 %v359, %v1078
      %v1080 = vpop.f32.mrb[0].mxu0
      %1081 = vmatprep.mubr.bf16.mxu0 %v638
      %1082 = vmatmul.mubr.bf16.gmra.mrb[0].mxu0 %v637
      %v1083 = vpop.f32.mrb[0].mxu0
      %v1084 = vadd.f32 %v359, %v1083
      %v1085 = vpop.f32.mrb[0].mxu0
      %v1086 = vpop.f32.mrb[0].mxu0
      %v1087 = vadd.f32 %v359, %v1086
      %v1088 = vpop.f32.mrb[0].mxu0
      %1089 = vmatprep.mubr.bf16.mxu0 %v643
      %1090 = vmatmul.mubr.bf16.gmra.mrb[0].mxu0 %v642
      %v1091 = vpop.f32.mrb[0].mxu0
      %v1092 = vadd.f32 %v359, %v1091
      %v1093 = vpop.f32.mrb[0].mxu0
      %v1094 = vpop.f32.mrb[0].mxu0
      %v1095 = vadd.f32 %v359, %v1094
      %v1096 = vpop.f32.mrb[0].mxu0
      %1097 = vmatprep.mubr.bf16.mxu0 %v648
      %1098 = vmatmul.mubr.bf16.gmra.mrb[0].mxu0 %v647
      %v1099 = vpop.f32.mrb[0].mxu0
      %v1100 = vadd.f32 %v359, %v1099
      %v1101 = vpop.f32.mrb[0].mxu0
      %v1102 = vpop.f32.mrb[0].mxu0
      %v1103 = vadd.f32 %v359, %v1102
      %v1104 = vpop.f32.mrb[0].mxu0
      %1105 = vmatprep.mubr.bf16.mxu0 %v653
      %1106 = vmatmul.mubr.bf16.gmra.mrb[0].mxu0 %v652
      %v1107 = vpop.f32.mrb[0].mxu0
      %v1108 = vadd.f32 %v359, %v1107
      %v1109 = vpop.f32.mrb[0].mxu0
      %v1110 = vpop.f32.mrb[0].mxu0
      %v1111 = vadd.f32 %v359, %v1110
      %v1112 = vpop.f32.mrb[0].mxu0
      %1113 = vmatprep.mubr.bf16.mxu0 %v658
      %1114 = vmatmul.mubr.bf16.gmra.mrb[0].mxu0 %v657
      %v1115 = vpop.f32.mrb[0].mxu0
      %v1116 = vadd.f32 %v359, %v1115
      %v1117 = vpop.f32.mrb[0].mxu0
      %v1118 = vpop.f32.mrb[0].mxu0
      %v1119 = vadd.f32 %v359, %v1118
      %v1120 = vpop.f32.mrb[0].mxu0
      %1121 = vmatprep.mubr.bf16.mxu0 %v663
      %1122 = vmatmul.mubr.bf16.gmra.mrb[0].mxu0 %v662
      %v1123 = vpop.f32.mrb[0].mxu0
      %v1124 = vadd.f32 %v359, %v1123
      %v1125 = vpop.f32.mrb[0].mxu0
      %v1126 = vpop.f32.mrb[0].mxu0
      %v1127 = vadd.f32 %v359, %v1126
      %v1128 = vpop.f32.mrb[0].mxu0
      %1129 = vmatprep.mubr.bf16.mxu0 %v668
      %1130 = vmatmul.mubr.bf16.gmra.mrb[0].mxu0 %v667
      %v1131 = vpop.f32.mrb[0].mxu0
      %v1132 = vadd.f32 %v359, %v1131
      %v1133 = vpop.f32.mrb[0].mxu0
      %v1134 = vpop.f32.mrb[0].mxu0
      %v1135 = vadd.f32 %v359, %v1134
      %v1136 = vpop.f32.mrb[0].mxu0
      %1137 = vmatprep.mubr.bf16.mxu0 %v673
      %1138 = vmatmul.mubr.bf16.gmra.mrb[0].mxu0 %v672
      %v1139 = vpop.f32.mrb[0].mxu0
      %v1140 = vadd.f32 %v359, %v1139
      %v1141 = vpop.f32.mrb[0].mxu0
      %v1142 = vpop.f32.mrb[0].mxu0
      %v1143 = vadd.f32 %v359, %v1142
      %v1144 = vpop.f32.mrb[0].mxu0
      %1145 = vmatprep.mubr.bf16.mxu0 %v678
      %1146 = vmatmul.mubr.bf16.gmra.mrb[0].mxu0 %v677
      %v1147 = vpop.f32.mrb[0].mxu0
      %v1148 = vadd.f32 %v359, %v1147
      %v1149 = vpop.f32.mrb[0].mxu0
      %v1150 = vpop.f32.mrb[0].mxu0
      %v1151 = vadd.f32 %v359, %v1150
      %v1152 = vpop.f32.mrb[0].mxu0
      %1153 = vmatprep.mubr.bf16.mxu0 %v683
      %1154 = vmatmul.mubr.bf16.gmra.mrb[0].mxu0 %v682
      %v1155 = vpop.f32.mrb[0].mxu0
      %v1156 = vadd.f32 %v359, %v1155
      %v1157 = vpop.f32.mrb[0].mxu0
      %v1158 = vpop.f32.mrb[0].mxu0
      %v1159 = vadd.f32 %v359, %v1158
      %v1160 = vpop.f32.mrb[0].mxu0
      %1161 = vmatprep.mubr.bf16.mxu0 %v688
      %1162 = vmatmul.mubr.bf16.gmra.mrb[0].mxu0 %v687
      %v1163 = vpop.f32.mrb[0].mxu0
      %v1164 = vadd.f32 %v359, %v1163
      %v1165 = vpop.f32.mrb[0].mxu0
      %v1166 = vpop.f32.mrb[0].mxu0
      %v1167 = vadd.f32 %v359, %v1166
      %v1168 = vpop.f32.mrb[0].mxu0
      %1169 = vmatprep.mubr.bf16.mxu0 %v693
      %1170 = vmatmul.mubr.bf16.gmra.mrb[0].mxu0 %v692
      %v1171 = vpop.f32.mrb[0].mxu0
      %v1172 = vadd.f32 %v359, %v1171
      %v1173 = vpop.f32.mrb[0].mxu0
      %v1174 = vpop.f32.mrb[0].mxu0
      %v1175 = vadd.f32 %v359, %v1174
      %v1176 = vpop.f32.mrb[0].mxu0
      %1177 = vdwg.mxu0
      %1178 = vmatprep.subr.bf16.mxu0 0
      %1179 = vmatpush1.bf16.msra.mxu0 %v953
      %1180 = vmatprep.subr.bf16.mxu0 0
      %1181 = vmatpush1.bf16.msra.mxu0 %v954
      %1182 = vmatprep.subr.bf16.mxu0 0
      %1183 = vmatpush1.bf16.msra.mxu0 %v955
      %1184 = vmatprep.subr.bf16.mxu0 0
      %1185 = vmatpush1.bf16.msra.mxu0 %v956
      %1186 = vmatprep.subr.bf16.mxu0 0
      %1187 = vmatpush1.bf16.msra.mxu0 %v957
      %1188 = vmatprep.subr.bf16.mxu0 0
      %1189 = vmatpush1.bf16.msra.mxu0 %v958
      %1190 = vmatprep.subr.bf16.mxu0 0
      %1191 = vmatpush1.bf16.msra.mxu0 %v959
      %1192 = vmatprep.subr.bf16.mxu0 0
      %1193 = vmatpush1.bf16.msra.mxu0 %v960
      %1194 = vmatprep.subr.bf16.mxu0 0
      %1195 = vmatpush1.bf16.msra.mxu0 %v961
      %1196 = vmatprep.subr.bf16.mxu0 0
      %1197 = vmatpush1.bf16.msra.mxu0 %v962
      %1198 = vmatprep.subr.bf16.mxu0 0
      %1199 = vmatpush1.bf16.msra.mxu0 %v963
      %1200 = vmatprep.subr.bf16.mxu0 0
      %1201 = vmatpush1.bf16.msra.mxu0 %v964
      %1202 = vmatprep.subr.bf16.mxu0 0
      %1203 = vmatpush1.bf16.msra.mxu0 %v965
      %1204 = vmatprep.subr.bf16.mxu0 0
      %1205 = vmatpush1.bf16.msra.mxu0 %v966
      %1206 = vmatprep.subr.bf16.mxu0 0
      %1207 = vmatpush1.bf16.msra.mxu0 %v967
      %1208 = vmatprep.subr.bf16.mxu0 0
      %1209 = vmatpush1.bf16.msra.mxu0 %v968
      %1210 = vmatprep.mubr.bf16.mxu0 %v620
      %1211 = vmatmul.mubr.bf16.gmra.mrb[0].mxu0 %v619
      %v1212 = vpop.f32.mrb[0].mxu0
      %v1213 = vadd.f32 %v1052, %v1212
      %v1214 = vpop.f32.mrb[0].mxu0
      %v1215 = vpop.f32.mrb[0].mxu0
      %v1216 = vadd.f32 %v1055, %v1215
      %v1217 = vpop.f32.mrb[0].mxu0
      %1218 = vmatprep.mubr.bf16.mxu0 %v625
      %1219 = vmatmul.mubr.bf16.gmra.mrb[0].mxu0 %v624
      %v1220 = vpop.f32.mrb[0].mxu0
      %v1221 = vadd.f32 %v1060, %v1220
      %v1222 = vpop.f32.mrb[0].mxu0
      %v1223 = vpop.f32.mrb[0].mxu0
      %v1224 = vadd.f32 %v1063, %v1223
      %v1225 = vpop.f32.mrb[0].mxu0
      %1226 = vmatprep.mubr.bf16.mxu0 %v630
      %1227 = vmatmul.mubr.bf16.gmra.mrb[0].mxu0 %v629
      %v1228 = vpop.f32.mrb[0].mxu0
      %v1229 = vadd.f32 %v1068, %v1228
      %v1230 = vpop.f32.mrb[0].mxu0
      %v1231 = vpop.f32.mrb[0].mxu0
      %v1232 = vadd.f32 %v1071, %v1231
      %v1233 = vpop.f32.mrb[0].mxu0
      %1234 = vmatprep.mubr.bf16.mxu0 %v635
      %1235 = vmatmul.mubr.bf16.gmra.mrb[0].mxu0 %v634
      %v1236 = vpop.f32.mrb[0].mxu0
      %v1237 = vadd.f32 %v1076, %v1236
      %v1238 = vpop.f32.mrb[0].mxu0
      %v1239 = vpop.f32.mrb[0].mxu0
      %v1240 = vadd.f32 %v1079, %v1239
      %v1241 = vpop.f32.mrb[0].mxu0
      %1242 = vmatprep.mubr.bf16.mxu0 %v640
      %1243 = vmatmul.mubr.bf16.gmra.mrb[0].mxu0 %v639
      %v1244 = vpop.f32.mrb[0].mxu0
      %v1245 = vadd.f32 %v1084, %v1244
      %v1246 = vpop.f32.mrb[0].mxu0
      %v1247 = vpop.f32.mrb[0].mxu0
      %v1248 = vadd.f32 %v1087, %v1247
      %v1249 = vpop.f32.mrb[0].mxu0
      %1250 = vmatprep.mubr.bf16.mxu0 %v645
      %1251 = vmatmul.mubr.bf16.gmra.mrb[0].mxu0 %v644
      %v1252 = vpop.f32.mrb[0].mxu0
      %v1253 = vadd.f32 %v1092, %v1252
      %v1254 = vpop.f32.mrb[0].mxu0
      %v1255 = vpop.f32.mrb[0].mxu0
      %v1256 = vadd.f32 %v1095, %v1255
      %v1257 = vpop.f32.mrb[0].mxu0
      %1258 = vmatprep.mubr.bf16.mxu0 %v650
      %1259 = vmatmul.mubr.bf16.gmra.mrb[0].mxu0 %v649
      %v1260 = vpop.f32.mrb[0].mxu0
      %v1261 = vadd.f32 %v1100, %v1260
      %v1262 = vpop.f32.mrb[0].mxu0
      %v1263 = vpop.f32.mrb[0].mxu0
      %v1264 = vadd.f32 %v1103, %v1263
      %v1265 = vpop.f32.mrb[0].mxu0
      %1266 = vmatprep.mubr.bf16.mxu0 %v655
      %1267 = vmatmul.mubr.bf16.gmra.mrb[0].mxu0 %v654
      %v1268 = vpop.f32.mrb[0].mxu0
      %v1269 = vadd.f32 %v1108, %v1268
      %v1270 = vpop.f32.mrb[0].mxu0
      %v1271 = vpop.f32.mrb[0].mxu0
      %v1272 = vadd.f32 %v1111, %v1271
      %v1273 = vpop.f32.mrb[0].mxu0
      %1274 = vmatprep.mubr.bf16.mxu0 %v660
      %1275 = vmatmul.mubr.bf16.gmra.mrb[0].mxu0 %v659
      %v1276 = vpop.f32.mrb[0].mxu0
      %v1277 = vadd.f32 %v1116, %v1276
      %v1278 = vpop.f32.mrb[0].mxu0
      %v1279 = vpop.f32.mrb[0].mxu0
      %v1280 = vadd.f32 %v1119, %v1279
      %v1281 = vpop.f32.mrb[0].mxu0
      %1282 = vmatprep.mubr.bf16.mxu0 %v665
      %1283 = vmatmul.mubr.bf16.gmra.mrb[0].mxu0 %v664
      %v1284 = vpop.f32.mrb[0].mxu0
      %v1285 = vadd.f32 %v1124, %v1284
      %v1286 = vpop.f32.mrb[0].mxu0
      %v1287 = vpop.f32.mrb[0].mxu0
      %v1288 = vadd.f32 %v1127, %v1287
      %v1289 = vpop.f32.mrb[0].mxu0
      %1290 = vmatprep.mubr.bf16.mxu0 %v670
      %1291 = vmatmul.mubr.bf16.gmra.mrb[0].mxu0 %v669
      %v1292 = vpop.f32.mrb[0].mxu0
      %v1293 = vadd.f32 %v1132, %v1292
      %v1294 = vpop.f32.mrb[0].mxu0
      %v1295 = vpop.f32.mrb[0].mxu0
      %v1296 = vadd.f32 %v1135, %v1295
      %v1297 = vpop.f32.mrb[0].mxu0
      %1298 = vmatprep.mubr.bf16.mxu0 %v675
      %1299 = vmatmul.mubr.bf16.gmra.mrb[0].mxu0 %v674
      %v1300 = vpop.f32.mrb[0].mxu0
      %v1301 = vadd.f32 %v1140, %v1300
      %v1302 = vpop.f32.mrb[0].mxu0
      %v1303 = vpop.f32.mrb[0].mxu0
      %v1304 = vadd.f32 %v1143, %v1303
      %v1305 = vpop.f32.mrb[0].mxu0
      %1306 = vmatprep.mubr.bf16.mxu0 %v680
      %1307 = vmatmul.mubr.bf16.gmra.mrb[0].mxu0 %v679
      %v1308 = vpop.f32.mrb[0].mxu0
      %v1309 = vadd.f32 %v1148, %v1308
      %v1310 = vpop.f32.mrb[0].mxu0
      %v1311 = vpop.f32.mrb[0].mxu0
      %v1312 = vadd.f32 %v1151, %v1311
      %v1313 = vpop.f32.mrb[0].mxu0
      %1314 = vmatprep.mubr.bf16.mxu0 %v685
      %1315 = vmatmul.mubr.bf16.gmra.mrb[0].mxu0 %v684
      %v1316 = vpop.f32.mrb[0].mxu0
      %v1317 = vadd.f32 %v1156, %v1316
      %v1318 = vpop.f32.mrb[0].mxu0
      %v1319 = vpop.f32.mrb[0].mxu0
      %v1320 = vadd.f32 %v1159, %v1319
      %v1321 = vpop.f32.mrb[0].mxu0
      %1322 = vmatprep.mubr.bf16.mxu0 %v690
      %1323 = vmatmul.mubr.bf16.gmra.mrb[0].mxu0 %v689
      %v1324 = vpop.f32.mrb[0].mxu0
      %v1325 = vadd.f32 %v1164, %v1324
      %v1326 = vpop.f32.mrb[0].mxu0
      %v1327 = vpop.f32.mrb[0].mxu0
      %v1328 = vadd.f32 %v1167, %v1327
      %v1329 = vpop.f32.mrb[0].mxu0
      %1330 = vmatprep.mubr.bf16.mxu0 %v695
      %1331 = vmatmul.mubr.bf16.gmra.mrb[0].mxu0 %v694
      %v1332 = vpop.f32.mrb[0].mxu0
      %v1333 = vadd.f32 %v1172, %v1332
      %v1334 = vpop.f32.mrb[0].mxu0
      %v1335 = vpop.f32.mrb[0].mxu0
      %v1336 = vadd.f32 %v1175, %v1335
      %v1337 = vpop.f32.mrb[0].mxu0
      %1338 = vdwg.mxu0
      %1339 = vmatprep.subr.bf16.mxu0 0
      %1340 = vmatpush1.bf16.msra.mxu0 %v969
      %1341 = vmatprep.subr.bf16.mxu0 0
      %1342 = vmatpush1.bf16.msra.mxu0 %v970
      %1343 = vmatprep.subr.bf16.mxu0 0
      %1344 = vmatpush1.bf16.msra.mxu0 %v971
      %1345 = vmatprep.subr.bf16.mxu0 0
      %1346 = vmatpush1.bf16.msra.mxu0 %v972
      %1347 = vmatprep.subr.bf16.mxu0 0
      %1348 = vmatpush1.bf16.msra.mxu0 %v973
      %1349 = vmatprep.subr.bf16.mxu0 0
      %1350 = vmatpush1.bf16.msra.mxu0 %v974
      %1351 = vmatprep.subr.bf16.mxu0 0
      %1352 = vmatpush1.bf16.msra.mxu0 %v975
      %1353 = vmatprep.subr.bf16.mxu0 0
      %1354 = vmatpush1.bf16.msra.mxu0 %v976
      %1355 = vmatprep.subr.bf16.mxu0 0
      %1356 = vmatpush1.bf16.msra.mxu0 0
      %1357 = vmatprep.subr.bf16.mxu0 0
      %1358 = vmatpush1.bf16.msra.mxu0 0
      %1359 = vmatprep.subr.bf16.mxu0 0
      %1360 = vmatpush1.bf16.msra.mxu0 0
      %1361 = vmatprep.subr.bf16.mxu0 0
      %1362 = vmatpush1.bf16.msra.mxu0 0
      %1363 = vmatprep.subr.bf16.mxu0 0
      %1364 = vmatpush1.bf16.msra.mxu0 0
      %1365 = vmatprep.subr.bf16.mxu0 0
      %1366 = vmatpush1.bf16.msra.mxu0 0
      %1367 = vmatprep.subr.bf16.mxu0 0
      %1368 = vmatpush1.bf16.msra.mxu0 0
      %1369 = vmatprep.subr.bf16.mxu0 0
      %1370 = vmatpush1.bf16.msra.mxu0 0
      %1371 = vmatprep.mubr.bf16.mxu0 0
      %1372 = vmatmul.mubr.bf16.gmra.mrb[0].mxu0 %v621
      %v1373 = vpop.f32.mrb[0].mxu0
      %v1374 = vadd.f32 %v1213, %v1373
      %v1375 = vpop.f32.mrb[0].mxu0
      %v1376 = vpop.f32.mrb[0].mxu0
      %v1377 = vadd.f32 %v1216, %v1376
      %v1378 = vpop.f32.mrb[0].mxu0
      %1379 = vmatprep.mubr.bf16.mxu0 0
      %1380 = vmatmul.mubr.bf16.gmra.mrb[0].mxu0 %v626
      %v1381 = vpop.f32.mrb[0].mxu0
      %v1382 = vadd.f32 %v1221, %v1381
      %v1383 = vpop.f32.mrb[0].mxu0
      %v1384 = vpop.f32.mrb[0].mxu0
      %v1385 = vadd.f32 %v1224, %v1384
      %v1386 = vpop.f32.mrb[0].mxu0
      %1387 = vmatprep.mubr.bf16.mxu0 0
      %1388 = vmatmul.mubr.bf16.gmra.mrb[0].mxu0 %v631
      %v1389 = vpop.f32.mrb[0].mxu0
      %v1390 = vadd.f32 %v1229, %v1389
      %v1391 = vpop.f32.mrb[0].mxu0
      %v1392 = vpop.f32.mrb[0].mxu0
      %v1393 = vadd.f32 %v1232, %v1392
      %v1394 = vpop.f32.mrb[0].mxu0
      %1395 = vmatprep.mubr.bf16.mxu0 0
      %1396 = vmatmul.mubr.bf16.gmra.mrb[0].mxu0 %v636
      %v1397 = vpop.f32.mrb[0].mxu0
      %v1398 = vadd.f32 %v1237, %v1397
      %v1399 = vpop.f32.mrb[0].mxu0
      %v1400 = vpop.f32.mrb[0].mxu0
      %v1401 = vadd.f32 %v1240, %v1400
      %v1402 = vpop.f32.mrb[0].mxu0
      %1403 = vmatprep.mubr.bf16.mxu0 0
      %1404 = vmatmul.mubr.bf16.gmra.mrb[0].mxu0 %v641
      %v1405 = vpop.f32.mrb[0].mxu0
      %v1406 = vadd.f32 %v1245, %v1405
      %v1407 = vpop.f32.mrb[0].mxu0
      %v1408 = vpop.f32.mrb[0].mxu0
      %v1409 = vadd.f32 %v1248, %v1408
      %v1410 = vpop.f32.mrb[0].mxu0
      %1411 = vmatprep.mubr.bf16.mxu0 0
      %1412 = vmatmul.mubr.bf16.gmra.mrb[0].mxu0 %v646
      %v1413 = vpop.f32.mrb[0].mxu0
      %v1414 = vadd.f32 %v1253, %v1413
      %v1415 = vpop.f32.mrb[0].mxu0
      %v1416 = vpop.f32.mrb[0].mxu0
      %v1417 = vadd.f32 %v1256, %v1416
      %v1418 = vpop.f32.mrb[0].mxu0
      %1419 = vmatprep.mubr.bf16.mxu0 0
      %1420 = vmatmul.mubr.bf16.gmra.mrb[0].mxu0 %v651
      %v1421 = vpop.f32.mrb[0].mxu0
      %v1422 = vadd.f32 %v1261, %v1421
      %v1423 = vpop.f32.mrb[0].mxu0
      %v1424 = vpop.f32.mrb[0].mxu0
      %v1425 = vadd.f32 %v1264, %v1424
      %v1426 = vpop.f32.mrb[0].mxu0
      %1427 = vmatprep.mubr.bf16.mxu0 0
      %1428 = vmatmul.mubr.bf16.gmra.mrb[0].mxu0 %v656
      %v1429 = vpop.f32.mrb[0].mxu0
      %v1430 = vadd.f32 %v1269, %v1429
      %v1431 = vpop.f32.mrb[0].mxu0
      %v1432 = vpop.f32.mrb[0].mxu0
      %v1433 = vadd.f32 %v1272, %v1432
      %v1434 = vpop.f32.mrb[0].mxu0
      %1435 = vmatprep.mubr.bf16.mxu0 0
      %1436 = vmatmul.mubr.bf16.gmra.mrb[0].mxu0 %v661
      %v1437 = vpop.f32.mrb[0].mxu0
      %v1438 = vadd.f32 %v1277, %v1437
      %v1439 = vpop.f32.mrb[0].mxu0
      %v1440 = vpop.f32.mrb[0].mxu0
      %v1441 = vadd.f32 %v1280, %v1440
      %v1442 = vpop.f32.mrb[0].mxu0
      %1443 = vmatprep.mubr.bf16.mxu0 0
      %1444 = vmatmul.mubr.bf16.gmra.mrb[0].mxu0 %v666
      %v1445 = vpop.f32.mrb[0].mxu0
      %v1446 = vadd.f32 %v1285, %v1445
      %v1447 = vpop.f32.mrb[0].mxu0
      %v1448 = vpop.f32.mrb[0].mxu0
      %v1449 = vadd.f32 %v1288, %v1448
      %v1450 = vpop.f32.mrb[0].mxu0
      %1451 = vmatprep.mubr.bf16.mxu0 0
      %1452 = vmatmul.mubr.bf16.gmra.mrb[0].mxu0 %v671
      %v1453 = vpop.f32.mrb[0].mxu0
      %v1454 = vadd.f32 %v1293, %v1453
      %v1455 = vpop.f32.mrb[0].mxu0
      %v1456 = vpop.f32.mrb[0].mxu0
      %v1457 = vadd.f32 %v1296, %v1456
      %v1458 = vpop.f32.mrb[0].mxu0
      %1459 = vmatprep.mubr.bf16.mxu0 0
      %1460 = vmatmul.mubr.bf16.gmra.mrb[0].mxu0 %v676
      %v1461 = vpop.f32.mrb[0].mxu0
      %v1462 = vadd.f32 %v1301, %v1461
      %v1463 = vpop.f32.mrb[0].mxu0
      %v1464 = vpop.f32.mrb[0].mxu0
      %v1465 = vadd.f32 %v1304, %v1464
      %v1466 = vpop.f32.mrb[0].mxu0
      %1467 = vmatprep.mubr.bf16.mxu0 0
      %1468 = vmatmul.mubr.bf16.gmra.mrb[0].mxu0 %v681
      %v1469 = vpop.f32.mrb[0].mxu0
      %v1470 = vadd.f32 %v1309, %v1469
      %v1471 = vpop.f32.mrb[0].mxu0
      %v1472 = vpop.f32.mrb[0].mxu0
      %v1473 = vadd.f32 %v1312, %v1472
      %v1474 = vpop.f32.mrb[0].mxu0
      %1475 = vmatprep.mubr.bf16.mxu0 0
      %1476 = vmatmul.mubr.bf16.gmra.mrb[0].mxu0 %v686
      %v1477 = vpop.f32.mrb[0].mxu0
      %v1478 = vadd.f32 %v1317, %v1477
      %v1479 = vpop.f32.mrb[0].mxu0
      %v1480 = vpop.f32.mrb[0].mxu0
      %v1481 = vadd.f32 %v1320, %v1480
      %v1482 = vpop.f32.mrb[0].mxu0
      %1483 = vmatprep.mubr.bf16.mxu0 0
      %1484 = vmatmul.mubr.bf16.gmra.mrb[0].mxu0 %v691
      %v1485 = vpop.f32.mrb[0].mxu0
      %v1486 = vadd.f32 %v1325, %v1485
      %v1487 = vpop.f32.mrb[0].mxu0
      %v1488 = vpop.f32.mrb[0].mxu0
      %v1489 = vadd.f32 %v1328, %v1488
      %v1490 = vpop.f32.mrb[0].mxu0
      %1491 = vmatprep.mubr.bf16.mxu0 0
      %1492 = vmatmul.mubr.bf16.gmra.mrb[0].mxu0 %v696
      %v1493 = vpop.f32.mrb[0].mxu0
      %v1494 = vadd.f32 %v1333, %v1493
      %v1495 = vpop.f32.mrb[0].mxu0
      %v1496 = vpop.f32.mrb[0].mxu0
      %v1497 = vadd.f32 %v1336, %v1496
      %v1498 = vpop.f32.mrb[0].mxu0
      %1499 = vdwg.mxu0
      %v1500 = vmax.f32 %v1374, 0.0
      %v1501 = vmax.f32 %v1377, 0.0
      %v1502 = vmax.f32 %v1382, 0.0
      %v1503 = vmax.f32 %v1385, 0.0
      %v1504 = vmax.f32 %v1390, 0.0
      %v1505 = vmax.f32 %v1393, 0.0
      %v1506 = vmax.f32 %v1398, 0.0
      %v1507 = vmax.f32 %v1401, 0.0
      %v1508 = vmax.f32 %v1406, 0.0
      %v1509 = vmax.f32 %v1409, 0.0
      %v1510 = vmax.f32 %v1414, 0.0
      %v1511 = vmax.f32 %v1417, 0.0
      %v1512 = vmax.f32 %v1422, 0.0
      %v1513 = vmax.f32 %v1425, 0.0
      %v1514 = vmax.f32 %v1430, 0.0
      %v1515 = vmax.f32 %v1433, 0.0
      %v1516 = vmax.f32 %v1438, 0.0
      %v1517 = vmax.f32 %v1441, 0.0
      %v1518 = vmax.f32 %v1446, 0.0
      %v1519 = vmax.f32 %v1449, 0.0
      %v1520 = vmax.f32 %v1454, 0.0
      %v1521 = vmax.f32 %v1457, 0.0
      %v1522 = vmax.f32 %v1462, 0.0
      %v1523 = vmax.f32 %v1465, 0.0
      %v1524 = vmax.f32 %v1470, 0.0
      %v1525 = vmax.f32 %v1473, 0.0
      %v1526 = vmax.f32 %v1478, 0.0
      %v1527 = vmax.f32 %v1481, 0.0
      %v1528 = vmax.f32 %v1486, 0.0
      %v1529 = vmax.f32 %v1489, 0.0
      %v1530 = vmax.f32 %v1494, 0.0
      %v1531 = vmax.f32 %v1497, 0.0
      %1532 = vst [vmem:[%s175] sm:$0xff] %v1500
      %1533 = vst [vmem:[%s175 + $0x8] sm:$0xff] %v1501
      %1534 = vst [vmem:[%s175 + $0x10] sm:$0xff] %v1502
      %1535 = vst [vmem:[%s175 + $0x18] sm:$0xff] %v1503
      %1536 = vst [vmem:[%s175 + $0x20] sm:$0xff] %v1504
      %1537 = vst [vmem:[%s175 + $0x28] sm:$0xff] %v1505
      %1538 = vst [vmem:[%s175 + $0x30] sm:$0xff] %v1506
      %1539 = vst [vmem:[%s175 + $0x38] sm:$0xff] %v1507
      %1540 = vst [vmem:[%s175 + $0x40] sm:$0xff] %v1508
      %1541 = vst [vmem:[%s175 + $0x48] sm:$0xff] %v1509
      %1542 = vst [vmem:[%s175 + $0x50] sm:$0xff] %v1510
      %1543 = vst [vmem:[%s175 + $0x58] sm:$0xff] %v1511
      %1544 = vst [vmem:[%s175 + $0x60] sm:$0xff] %v1512
      %1545 = vst [vmem:[%s175 + $0x68] sm:$0xff] %v1513
      %1546 = vst [vmem:[%s175 + $0x70] sm:$0xff] %v1514
      %1547 = vst [vmem:[%s175 + $0x78] sm:$0xff] %v1515
      %1548 = vst [vmem:[%s175 + $0x80] sm:$0xff] %v1516
      %1549 = vst [vmem:[%s175 + $0x88] sm:$0xff] %v1517
      %1550 = vst [vmem:[%s175 + $0x90] sm:$0xff] %v1518
      %1551 = vst [vmem:[%s175 + $0x98] sm:$0xff] %v1519
      %1552 = vst [vmem:[%s175 + $0xa0] sm:$0xff] %v1520
      %1553 = vst [vmem:[%s175 + $0xa8] sm:$0xff] %v1521
      %1554 = vst [vmem:[%s175 + $0xb0] sm:$0xff] %v1522
      %1555 = vst [vmem:[%s175 + $0xb8] sm:$0xff] %v1523
      %1556 = vst [vmem:[%s175 + $0xc0] sm:$0xff] %v1524
      %1557 = vst [vmem:[%s175 + $0xc8] sm:$0xff] %v1525
      %1558 = vst [vmem:[%s175 + $0xd0] sm:$0xff] %v1526
      %1559 = vst [vmem:[%s175 + $0xd8] sm:$0xff] %v1527
      %1560 = vst [vmem:[%s175 + $0xe0] sm:$0xff] %v1528
      %1561 = vst [vmem:[%s175 + $0xe8] sm:$0xff] %v1529
      %1562 = vst [vmem:[%s175 + $0xf0] sm:$0xff] %v1530
      %1563 = vst [vmem:[%s175 + $0xf8] sm:$0xff] %v1531
      %s1564 = smul.u32 32, %s14
      %p1565 = scmp.lt.s32.totalorder %s1564, 63
      %s1566 = scalar_select %p1565, %s1564, 63
      %s1567 = smul.addr %s1566, 8
      %s1568 = scalar_lea.vmem %s3, %s1567
      // Predicated region
      $region33: #{ulosd_forward.25} parent=31 // pred_check
        %p1569 = pneg %p100
      $region34: #{ulosd_forward.25} parent=31 // pred_check_branch
        %1571 = sbr.rel (%p1569) target = $region36
      $region35: #{ulosd_forward.25} parent=31 // pred_region
        %s1572 = smul.u32 32, %s14
      $region36: #{ulosd_forward.25} parent=31 // pred_fallthru
        _
    $region32: #{ulosd_forward.25} parent=5 // pred_fallthru
      _
    %p1573 = scmp.le.s32.totalorder 2, %s9
    // Predicated region
    $region37: #{ulosd_forward.25} parent=5 // pred_check
      %p1574 = pneg %p1573
    $region38: #{ulosd_forward.25} parent=5 // pred_check_branch
      %1576 = sbr.rel (%p1574) target = $region40
    $region39: #{ulosd_forward.25} parent=5 // pred_region
      %s1577 = ssub.s32 %s9, 2
      // Predicated region
      $region41: #{ulosd_forward.25} parent=39 // pred_check
        %p1578 = pneg %p106
      $region42: #{ulosd_forward.25} parent=39 // pred_check_branch
        %1580 = sbr.rel (%p1578) target = $region44
      $region43: #{ulosd_forward.25} parent=39 // pred_region
        %s1581 = smul.u32 32, %s15
        %p1582 = scmp.lt.s32.totalorder %s1581, 63
        %s1583 = scalar_select %p1582, %s1581, 63
        %s1584 = smul.addr %s1583, 8
        %s1585 = scalar_lea.vmem %s3, %s1584
      $region44: #{ulosd_forward.25} parent=39 // pred_fallthru
        _
    $region40: #{ulosd_forward.25} parent=5 // pred_fallthru
      _
  $region6: #{ulosd_forward.25} parent=0 // loop_footer
    %s13 = sadd.s32 1, %s9
  $region7: #{ulosd_forward.25} parent=0 // loop_footer_branch
    %8 = sbr.rel target = $region3
  $region8: #{ulosd_forward.25} parent=0 // loop_exit
    _

// kernel: ulosd_forward.26
$region0: #{ulosd_forward.26}
  #allocation0 [shape = 'u32[]', space=smem, size = 0x4, offset = 0x4, fixed_abs, tag = 'smem constant byte address 0x4 - core index']
  #allocation1 [shape = 'u32[144,128]{1,0:T(1,128)}', space=vmem, size = 0x12000, scoped, tag = 'internal scratch']
  %s0 = inlined_call_operand.vmem [shape: bf16[1536,384], index: 0, kind: input, shape index: {}]
  %s1 = inlined_call_operand.vmem [shape: bf16[384,128], index: 1, kind: input, shape index: {}]
  %s2 = inlined_call_operand.vmem [shape: f32[1,128], index: 2, kind: input, shape index: {}]
  %s3 = inlined_call_operand.vmem [shape: f32[1536,128], index: 3, kind: output, shape index: {}]
  %s4 = sld [smem:[#allocation0]]
  $region45: #{ulosd_forward.26} parent=0
    _
  %s6 = ssub.s32 1, %s4
  %s7 = scalar_select 0, %s6, %s4
  loop: start=0, step=1, limit=8
  $region2: #{ulosd_forward.26} parent=0 // loop_pre_header
    _
  $region3: #{ulosd_forward.26} parent=0 // loop_header
    %s9 = sphi 0, %s13
    %p10 = scmp.ge.s32.totalorder %s9, 8
    %s19 = sphi 0, %s21
    %s22 = sphi 0, %s19
    %s23 = sphi 0, %s22
    %s39 = sphi 0, %s23
    %s43 = sphi 0, %s43
    %s45 = sphi 0, %s43
    %s46 = sphi 0, %s45
    %s60 = sphi 0, %s46
    %s64 = sphi 0, %s64
    %s66 = sphi 0, %s64
    %s67 = sphi 0, %s66
    %s81 = sphi 0, %s67
    %s87 = sphi 0, %s89
    %s90 = sphi 0, %s87
    %s91 = sphi 0, %s90
    %s107 = sphi 0, %s91
  $region4: #{ulosd_forward.26} parent=0 // loop_header_branch
    %12 = sbr.rel (%p10) target = $region8
  $region5: #{ulosd_forward.26} parent=0 // loop_body
    %s14 = ssub.s32 %s9, 1
    %s15 = ssub.s32 %s9, 2
    %s16 = sadd.s32 %s9, 1
    %s17 = ssub.s32 %s9, %s16
    %p18 = scmp.eq.s32.totalorder %s17, 0
    %s20 = sadd.s32 %s19, 1
    %s21 = scalar_select %p18, %s19, %s20
    %p24 = pneg %p18
    %p25 = scmp.eq.s32.totalorder %s9, 5
    %p26 = por %p24, %p25
    %p27 = scmp.ne.s32.totalorder %s19, %s22
    %p28 = scmp.eq.s32.totalorder %s9, 0
    %p29 = por %p27, %p28
    %p30 = scmp.ne.s32.totalorder %s19, %s22
    %p31 = scmp.eq.s32.totalorder %s14, 5
    %p32 = por %p30, %p31
    %p33 = scmp.ne.s32.totalorder %s22, %s23
    %p34 = scmp.eq.s32.totalorder %s14, 0
    %p35 = por %p33, %p34
    %p36 = scmp.ne.s32.totalorder %s22, %s23
    %p37 = scmp.eq.s32.totalorder %s15, 5
    %p38 = por %p36, %p37
    %p40 = scmp.ne.s32.totalorder %s23, %s39
    %p41 = scmp.eq.s32.totalorder %s15, 0
    %p42 = por %p40, %p41
    %s44 = sadd.s32 %s43, 1
    %p47 = scmp.eq.s32.totalorder %s9, 5
    %p48 = scmp.ne.s32.totalorder %s43, %s45
    %p49 = scmp.eq.s32.totalorder %s9, 0
    %p50 = por %p48, %p49
    %p51 = scmp.ne.s32.totalorder %s43, %s45
    %p52 = scmp.eq.s32.totalorder %s14, 5
    %p53 = por %p51, %p52
    %p54 = scmp.ne.s32.totalorder %s45, %s46
    %p55 = scmp.eq.s32.totalorder %s14, 0
    %p56 = por %p54, %p55
    %p57 = scmp.ne.s32.totalorder %s45, %s46
    %p58 = scmp.eq.s32.totalorder %s15, 5
    %p59 = por %p57, %p58
    %p61 = scmp.ne.s32.totalorder %s46, %s60
    %p62 = scmp.eq.s32.totalorder %s15, 0
    %p63 = por %p61, %p62
    %s65 = sadd.s32 %s64, 1
    %p68 = scmp.eq.s32.totalorder %s9, 5
    %p69 = scmp.ne.s32.totalorder %s64, %s66
    %p70 = scmp.eq.s32.totalorder %s9, 0
    %p71 = por %p69, %p70
    %p72 = scmp.ne.s32.totalorder %s64, %s66
    %p73 = scmp.eq.s32.totalorder %s14, 5
    %p74 = por %p72, %p73
    %p75 = scmp.ne.s32.totalorder %s66, %s67
    %p76 = scmp.eq.s32.totalorder %s14, 0
    %p77 = por %p75, %p76
    %p78 = scmp.ne.s32.totalorder %s66, %s67
    %p79 = scmp.eq.s32.totalorder %s15, 5
    %p80 = por %p78, %p79
    %p82 = scmp.ne.s32.totalorder %s67, %s81
    %p83 = scmp.eq.s32.totalorder %s15, 0
    %p84 = por %p82, %p83
    %s85 = ssub.s32 %s9, %s16
    %p86 = scmp.eq.s32.totalorder %s85, 0
    %s88 = sadd.s32 %s87, 1
    %s89 = scalar_select %p86, %s87, %s88
    %p92 = pneg %p86
    %p93 = scmp.eq.s32.totalorder %s9, 5
    %p94 = por %p92, %p93
    %p95 = scmp.ne.s32.totalorder %s87, %s90
    %p96 = scmp.eq.s32.totalorder %s9, 0
    %p97 = por %p95, %p96
    %p98 = scmp.ne.s32.totalorder %s87, %s90
    %p99 = scmp.eq.s32.totalorder %s14, 5
    %p100 = por %p98, %p99
    %p101 = scmp.ne.s32.totalorder %s90, %s91
    %p102 = scmp.eq.s32.totalorder %s14, 0
    %p103 = por %p101, %p102
    %p104 = scmp.ne.s32.totalorder %s90, %s91
    %p105 = scmp.eq.s32.totalorder %s15, 5
    %p106 = por %p104, %p105
    %p108 = scmp.ne.s32.totalorder %s91, %s107
    %p109 = scmp.eq.s32.totalorder %s15, 0
    %p110 = por %p108, %p109
    %p111 = scmp.le.s32.totalorder 1, %s9
    %p112 = scmp.lt.s32.totalorder %s9, 7
    %p113 = pnand %p111, %p112
    %p114 = pneg %p113
    // Predicated region
    $region9: #{ulosd_forward.26} parent=5 // pred_check
      _
    $region10: #{ulosd_forward.26} parent=5 // pred_check_branch
      %116 = sbr.rel (%p113) target = $region12
    $region11: #{ulosd_forward.26} parent=5 // pred_region
      %s117 = ssub.s32 %s9, 1
      // Predicated region
      $region13: #{ulosd_forward.26} parent=11 // pred_check
        %p118 = pneg %p56
      $region14: #{ulosd_forward.26} parent=11 // pred_check_branch
        %120 = sbr.rel (%p118) target = $region16
      $region15: #{ulosd_forward.26} parent=11 // pred_region
        _
      $region16: #{ulosd_forward.26} parent=11 // pred_fallthru
        _
      // Predicated region
      $region17: #{ulosd_forward.26} parent=11 // pred_check
        %p121 = pneg %p77
      $region18: #{ulosd_forward.26} parent=11 // pred_check_branch
        %123 = sbr.rel (%p121) target = $region20
      $region19: #{ulosd_forward.26} parent=11 // pred_region
        _
      $region20: #{ulosd_forward.26} parent=11 // pred_fallthru
        _
    $region12: #{ulosd_forward.26} parent=5 // pred_fallthru
      _
    %p124 = scmp.lt.s32.totalorder %s9, 6
    // Predicated region
    $region21: #{ulosd_forward.26} parent=5 // pred_check
      %p125 = pneg %p124
    $region22: #{ulosd_forward.26} parent=5 // pred_check_branch
      %127 = sbr.rel (%p125) target = $region24
    $region23: #{ulosd_forward.26} parent=5 // pred_region
      // Predicated region
      $region25: #{ulosd_forward.26} parent=23 // pred_check
        %p128 = pneg %p29
      $region26: #{ulosd_forward.26} parent=23 // pred_check_branch
        %130 = sbr.rel (%p128) target = $region28
      $region27: #{ulosd_forward.26} parent=23 // pred_region
        %s131 = smul.u32 32, %s9
        %p132 = scmp.lt.s32.totalorder %s131, 191
        %s133 = scalar_select %p132, %s131, 191
        %s134 = smul.addr %s133, 3
        %s135 = smul.addr %s134, 4
        %s136 = scalar_lea.vmem %s0, %s135
        %s137 = smul.u32 32, %s9
      $region28: #{ulosd_forward.26} parent=23 // pred_fallthru
        _
    $region24: #{ulosd_forward.26} parent=5 // pred_fallthru
      _
    %p138 = scmp.le.s32.totalorder 1, %s9
    %p139 = scmp.lt.s32.totalorder %s9, 7
    %p140 = pnand %p138, %p139
    %p141 = pneg %p140
    // Predicated region
    $region29: #{ulosd_forward.26} parent=5 // pred_check
      _
    $region30: #{ulosd_forward.26} parent=5 // pred_check_branch
      %143 = sbr.rel (%p140) target = $region32
    $region31: #{ulosd_forward.26} parent=5 // pred_region
      %s144 = ssub.s32 %s9, 1
      %s145 = smul.u32 32, %s14
      %p146 = scmp.lt.s32.totalorder %s145, 191
      %s147 = scalar_select %p146, %s145, 191
      %s148 = smul.addr %s147, 3
      %s149 = smul.addr %s148, 4
      %s150 = scalar_lea.vmem %s0, %s149
      %p151 = pneg %p35
      %p152 = pneg %p32
      %p153 = pneg %p56
      %p154 = pneg %p53
      %p155 = pneg %p77
      %p156 = pneg %p74
      %p157 = pneg %p103
      %p158 = pneg %p100
      %s159 = smul.u32 32, %s14
      %p160 = scmp.lt.s32.totalorder %s159, 191
      %s161 = scalar_select %p160, %s159, 191
      %s162 = smul.addr %s161, 8
      %s163 = scalar_lea.vmem %s3, %s162
      %s164 = smul.u32 32, %s14
      %p165 = scmp.lt.s32.totalorder %s164, 191
      %s166 = scalar_select %p165, %s164, 191
      %s167 = smul.addr %s166, 3
      %s168 = smul.addr %s167, 4
      %s169 = scalar_lea.vmem %s0, %s168
      %s170 = smul.u32 32, %s14
      %s171 = smul.u32 32, %s14
      %p172 = scmp.lt.s32.totalorder %s171, 191
      %s173 = scalar_select %p172, %s171, 191
      %s174 = smul.addr %s173, 8
      %s175 = scalar_lea.vmem %s3, %s174
      %s176 = smul.u32 32, %s14
      %v178 = vld [vmem:[%s169] sm:$0xff]
      %v179 = vld [vmem:[%s169 + $0x8] sm:$0xf]
      %v180 = vld [vmem:[%s169 + $0xc] sm:$0xff]
      %v181 = vld [vmem:[%s169 + $0x14] sm:$0xf]
      %v182 = vld [vmem:[%s169 + $0x18] sm:$0xff]
      %v183 = vld [vmem:[%s169 + $0x20] sm:$0xf]
      %v184 = vld [vmem:[%s169 + $0x24] sm:$0xff]
      %v185 = vld [vmem:[%s169 + $0x2c] sm:$0xf]
      %v186 = vld [vmem:[%s169 + $0x30] sm:$0xff]
      %v187 = vld [vmem:[%s169 + $0x38] sm:$0xf]
      %v188 = vld [vmem:[%s169 + $0x3c] sm:$0xff]
      %v189 = vld [vmem:[%s169 + $0x44] sm:$0xf]
      %v190 = vld [vmem:[%s169 + $0x48] sm:$0xff]
      %v191 = vld [vmem:[%s169 + $0x50] sm:$0xf]
      %v192 = vld [vmem:[%s169 + $0x54] sm:$0xff]
      %v193 = vld [vmem:[%s169 + $0x5c] sm:$0xf]
      %v194 = vld [vmem:[%s169 + $0x60] sm:$0xff]
      %v195 = vld [vmem:[%s169 + $0x68] sm:$0xf]
      %v196 = vld [vmem:[%s169 + $0x6c] sm:$0xff]
      %v197 = vld [vmem:[%s169 + $0x74] sm:$0xf]
      %v198 = vld [vmem:[%s169 + $0x78] sm:$0xff]
      %v199 = vld [vmem:[%s169 + $0x80] sm:$0xf]
      %v200 = vld [vmem:[%s169 + $0x84] sm:$0xff]
      %v201 = vld [vmem:[%s169 + $0x8c] sm:$0xf]
      %v202 = vld [vmem:[%s169 + $0x90] sm:$0xff]
      %v203 = vld [vmem:[%s169 + $0x98] sm:$0xf]
      %v204 = vld [vmem:[%s169 + $0x9c] sm:$0xff]
      %v205 = vld [vmem:[%s169 + $0xa4] sm:$0xf]
      %v206 = vld [vmem:[%s169 + $0xa8] sm:$0xff]
      %v207 = vld [vmem:[%s169 + $0xb0] sm:$0xf]
      %v208 = vld [vmem:[%s169 + $0xb4] sm:$0xff]
      %v209 = vld [vmem:[%s169 + $0xbc] sm:$0xf]
      %v210 = vld [vmem:[%s169 + $0xc0] sm:$0xff]
      %v211 = vld [vmem:[%s169 + $0xc8] sm:$0xf]
      %v212 = vld [vmem:[%s169 + $0xcc] sm:$0xff]
      %v213 = vld [vmem:[%s169 + $0xd4] sm:$0xf]
      %v214 = vld [vmem:[%s169 + $0xd8] sm:$0xff]
      %v215 = vld [vmem:[%s169 + $0xe0] sm:$0xf]
      %v216 = vld [vmem:[%s169 + $0xe4] sm:$0xff]
      %v217 = vld [vmem:[%s169 + $0xec] sm:$0xf]
      %v218 = vld [vmem:[%s169 + $0xf0] sm:$0xff]
      %v219 = vld [vmem:[%s169 + $0xf8] sm:$0xf]
      %v220 = vld [vmem:[%s169 + $0xfc] sm:$0xff]
      %v221 = vld [vmem:[%s169 + $0x104] sm:$0xf]
      %v222 = vld [vmem:[%s169 + $0x108] sm:$0xff]
      %v223 = vld [vmem:[%s169 + $0x110] sm:$0xf]
      %v224 = vld [vmem:[%s169 + $0x114] sm:$0xff]
      %v225 = vld [vmem:[%s169 + $0x11c] sm:$0xf]
      %v226 = vld [vmem:[%s169 + $0x120] sm:$0xff]
      %v227 = vld [vmem:[%s169 + $0x128] sm:$0xf]
      %v228 = vld [vmem:[%s169 + $0x12c] sm:$0xff]
      %v229 = vld [vmem:[%s169 + $0x134] sm:$0xf]
      %v230 = vld [vmem:[%s169 + $0x138] sm:$0xff]
      %v231 = vld [vmem:[%s169 + $0x140] sm:$0xf]
      %v232 = vld [vmem:[%s169 + $0x144] sm:$0xff]
      %v233 = vld [vmem:[%s169 + $0x14c] sm:$0xf]
      %v234 = vld [vmem:[%s169 + $0x150] sm:$0xff]
      %v235 = vld [vmem:[%s169 + $0x158] sm:$0xf]
      %v236 = vld [vmem:[%s169 + $0x15c] sm:$0xff]
      %v237 = vld [vmem:[%s169 + $0x164] sm:$0xf]
      %v238 = vld [vmem:[%s169 + $0x168] sm:$0xff]
      %v239 = vld [vmem:[%s169 + $0x170] sm:$0xf]
      %v240 = vld [vmem:[%s169 + $0x174] sm:$0xff]
      %v241 = vld [vmem:[%s169 + $0x17c] sm:$0xf]
      %v242 = vld [vmem:[%s1] sm:$0xf]
      %v243 = vld [vmem:[%s1 + $0x4] sm:$0xf]
      %v244 = vld [vmem:[%s1 + $0x8] sm:$0xf]
      %v245 = vld [vmem:[%s1 + $0xc] sm:$0xf]
      %v246 = vld [vmem:[%s1 + $0x10] sm:$0xf]
      %v247 = vld [vmem:[%s1 + $0x14] sm:$0xf]
      %v248 = vld [vmem:[%s1 + $0x18] sm:$0xf]
      %v249 = vld [vmem:[%s1 + $0x1c] sm:$0xf]
      %v250 = vld [vmem:[%s1 + $0x20] sm:$0xf]
      %v251 = vld [vmem:[%s1 + $0x24] sm:$0xf]
      %v252 = vld [vmem:[%s1 + $0x28] sm:$0xf]
      %v253 = vld [vmem:[%s1 + $0x2c] sm:$0xf]
      %v254 = vld [vmem:[%s1 + $0x30] sm:$0xf]
      %v255 = vld [vmem:[%s1 + $0x34] sm:$0xf]
      %v256 = vld [vmem:[%s1 + $0x38] sm:$0xf]
      %v257 = vld [vmem:[%s1 + $0x3c] sm:$0xf]
      %v258 = vld [vmem:[%s1 + $0x40] sm:$0xf]
      %v259 = vld [vmem:[%s1 + $0x44] sm:$0xf]
      %v260 = vld [vmem:[%s1 + $0x48] sm:$0xf]
      %v261 = vld [vmem:[%s1 + $0x4c] sm:$0xf]
      %v262 = vld [vmem:[%s1 + $0x50] sm:$0xf]
      %v263 = vld [vmem:[%s1 + $0x54] sm:$0xf]
      %v264 = vld [vmem:[%s1 + $0x58] sm:$0xf]
      %v265 = vld [vmem:[%s1 + $0x5c] sm:$0xf]
      %v266 = vld [vmem:[%s1 + $0x60] sm:$0xf]
      %v267 = vld [vmem:[%s1 + $0x64] sm:$0xf]
      %v268 = vld [vmem:[%s1 + $0x68] sm:$0xf]
      %v269 = vld [vmem:[%s1 + $0x6c] sm:$0xf]
      %v270 = vld [vmem:[%s1 + $0x70] sm:$0xf]
      %v271 = vld [vmem:[%s1 + $0x74] sm:$0xf]
      %v272 = vld [vmem:[%s1 + $0x78] sm:$0xf]
      %v273 = vld [vmem:[%s1 + $0x7c] sm:$0xf]
      %v274 = vld [vmem:[%s1 + $0x80] sm:$0xf]
      %v275 = vld [vmem:[%s1 + $0x84] sm:$0xf]
      %v276 = vld [vmem:[%s1 + $0x88] sm:$0xf]
      %v277 = vld [vmem:[%s1 + $0x8c] sm:$0xf]
      %v278 = vld [vmem:[%s1 + $0x90] sm:$0xf]
      %v279 = vld [vmem:[%s1 + $0x94] sm:$0xf]
      %v280 = vld [vmem:[%s1 + $0x98] sm:$0xf]
      %v281 = vld [vmem:[%s1 + $0x9c] sm:$0xf]
      %v282 = vld [vmem:[%s1 + $0xa0] sm:$0xf]
      %v283 = vld [vmem:[%s1 + $0xa4] sm:$0xf]
      %v284 = vld [vmem:[%s1 + $0xa8] sm:$0xf]
      %v285 = vld [vmem:[%s1 + $0xac] sm:$0xf]
      %v286 = vld [vmem:[%s1 + $0xb0] sm:$0xf]
      %v287 = vld [vmem:[%s1 + $0xb4] sm:$0xf]
      %v288 = vld [vmem:[%s1 + $0xb8] sm:$0xf]
      %v289 = vld [vmem:[%s1 + $0xbc] sm:$0xf]
      %v290 = vld [vmem:[%s2] sm:$0x1]
      %v292 = vlaneseq
      %v293 = vshrl.u32 %v292, 7
      %v294 = vsub.s32 0, %v293
      %v295 = vrot.slane %v290, %v294
      %v361 = vunpack.c.l.b16 %v178
      %v362 = vunpack.c.h.b16 %v178
      %v363 = vunpack.c.l.b16 %v179
      %v364 = vunpack.c.l.b16 %v180
      %v365 = vunpack.c.h.b16 %v180
      %v366 = vunpack.c.l.b16 %v181
      %v367 = vunpack.c.l.b16 %v182
      %v368 = vunpack.c.h.b16 %v182
      %v369 = vunpack.c.l.b16 %v183
      %v370 = vunpack.c.l.b16 %v184
      %v371 = vunpack.c.h.b16 %v184
      %v372 = vunpack.c.l.b16 %v185
      %v373 = vunpack.c.l.b16 %v186
      %v374 = vunpack.c.h.b16 %v186
      %v375 = vunpack.c.l.b16 %v187
      %v376 = vunpack.c.l.b16 %v188
      %v377 = vunpack.c.h.b16 %v188
      %v378 = vunpack.c.l.b16 %v189
      %v379 = vunpack.c.l.b16 %v190
      %v380 = vunpack.c.h.b16 %v190
      %v381 = vunpack.c.l.b16 %v191
      %v382 = vunpack.c.l.b16 %v192
      %v383 = vunpack.c.h.b16 %v192
      %v384 = vunpack.c.l.b16 %v193
      %v385 = vunpack.c.l.b16 %v194
      %v386 = vunpack.c.h.b16 %v194
      %v387 = vunpack.c.l.b16 %v195
      %v388 = vunpack.c.l.b16 %v196
      %v389 = vunpack.c.h.b16 %v196
      %v390 = vunpack.c.l.b16 %v197
      %v391 = vunpack.c.l.b16 %v198
      %v392 = vunpack.c.h.b16 %v198
      %v393 = vunpack.c.l.b16 %v199
      %v394 = vunpack.c.l.b16 %v200
      %v395 = vunpack.c.h.b16 %v200
      %v396 = vunpack.c.l.b16 %v201
      %v397 = vunpack.c.l.b16 %v202
      %v398 = vunpack.c.h.b16 %v202
      %v399 = vunpack.c.l.b16 %v203
      %v400 = vunpack.c.l.b16 %v204
      %v401 = vunpack.c.h.b16 %v204
      %v402 = vunpack.c.l.b16 %v205
      %v403 = vunpack.c.l.b16 %v206
      %v404 = vunpack.c.h.b16 %v206
      %v405 = vunpack.c.l.b16 %v207
      %v406 = vunpack.c.l.b16 %v208
      %v407 = vunpack.c.h.b16 %v208
      %v408 = vunpack.c.l.b16 %v209
      %v409 = vunpack.c.l.b16 %v210
      %v410 = vunpack.c.h.b16 %v210
      %v411 = vunpack.c.l.b16 %v211
      %v412 = vunpack.c.l.b16 %v212
      %v413 = vunpack.c.h.b16 %v212
      %v414 = vunpack.c.l.b16 %v213
      %v415 = vunpack.c.l.b16 %v214
      %v416 = vunpack.c.h.b16 %v214
      %v417 = vunpack.c.l.b16 %v215
      %v418 = vunpack.c.l.b16 %v216
      %v419 = vunpack.c.h.b16 %v216
      %v420 = vunpack.c.l.b16 %v217
      %v421 = vunpack.c.l.b16 %v218
      %v422 = vunpack.c.h.b16 %v218
      %v423 = vunpack.c.l.b16 %v219
      %v424 = vunpack.c.l.b16 %v220
      %v425 = vunpack.c.h.b16 %v220
      %v426 = vunpack.c.l.b16 %v221
      %v427 = vunpack.c.l.b16 %v222
      %v428 = vunpack.c.h.b16 %v222
      %v429 = vunpack.c.l.b16 %v223
      %v430 = vunpack.c.l.b16 %v224
      %v431 = vunpack.c.h.b16 %v224
      %v432 = vunpack.c.l.b16 %v225
      %v433 = vunpack.c.l.b16 %v226
      %v434 = vunpack.c.h.b16 %v226
      %v435 = vunpack.c.l.b16 %v227
      %v436 = vunpack.c.l.b16 %v228
      %v437 = vunpack.c.h.b16 %v228
      %v438 = vunpack.c.l.b16 %v229
      %v439 = vunpack.c.l.b16 %v230
      %v440 = vunpack.c.h.b16 %v230
      %v441 = vunpack.c.l.b16 %v231
      %v442 = vunpack.c.l.b16 %v232
      %v443 = vunpack.c.h.b16 %v232
      %v444 = vunpack.c.l.b16 %v233
      %v445 = vunpack.c.l.b16 %v234
      %v446 = vunpack.c.h.b16 %v234
      %v447 = vunpack.c.l.b16 %v235
      %v448 = vunpack.c.l.b16 %v236
      %v449 = vunpack.c.h.b16 %v236
      %v450 = vunpack.c.l.b16 %v237
      %v451 = vunpack.c.l.b16 %v238
      %v452 = vunpack.c.h.b16 %v238
      %v453 = vunpack.c.l.b16 %v239
      %v454 = vunpack.c.l.b16 %v240
      %v455 = vunpack.c.h.b16 %v240
      %v456 = vunpack.c.l.b16 %v241
      %v457 = vpack.c.b16 %v364, %v361
      %v458 = vpack.c.b16 %v365, %v362
      %v459 = vpack.c.b16 %v366, %v363
      %v460 = vpack.c.b16 %v370, %v367
      %v461 = vpack.c.b16 %v371, %v368
      %v462 = vpack.c.b16 %v372, %v369
      %v463 = vpack.c.b16 %v376, %v373
      %v464 = vpack.c.b16 %v377, %v374
      %v465 = vpack.c.b16 %v378, %v375
      %v466 = vpack.c.b16 %v382, %v379
      %v467 = vpack.c.b16 %v383, %v380
      %v468 = vpack.c.b16 %v384, %v381
      %v469 = vpack.c.b16 %v388, %v385
      %v470 = vpack.c.b16 %v389, %v386
      %v471 = vpack.c.b16 %v390, %v387
      %v472 = vpack.c.b16 %v394, %v391
      %v473 = vpack.c.b16 %v395, %v392
      %v474 = vpack.c.b16 %v396, %v393
      %v475 = vpack.c.b16 %v400, %v397
      %v476 = vpack.c.b16 %v401, %v398
      %v477 = vpack.c.b16 %v402, %v399
      %v478 = vpack.c.b16 %v406, %v403
      %v479 = vpack.c.b16 %v407, %v404
      %v480 = vpack.c.b16 %v408, %v405
      %v481 = vpack.c.b16 %v412, %v409
      %v482 = vpack.c.b16 %v413, %v410
      %v483 = vpack.c.b16 %v414, %v411
      %v484 = vpack.c.b16 %v418, %v415
      %v485 = vpack.c.b16 %v419, %v416
      %v486 = vpack.c.b16 %v420, %v417
      %v487 = vpack.c.b16 %v424, %v421
      %v488 = vpack.c.b16 %v425, %v422
      %v489 = vpack.c.b16 %v426, %v423
      %v490 = vpack.c.b16 %v430, %v427
      %v491 = vpack.c.b16 %v431, %v428
      %v492 = vpack.c.b16 %v432, %v429
      %v493 = vpack.c.b16 %v436, %v433
      %v494 = vpack.c.b16 %v437, %v434
      %v495 = vpack.c.b16 %v438, %v435
      %v496 = vpack.c.b16 %v442, %v439
      %v497 = vpack.c.b16 %v443, %v440
      %v498 = vpack.c.b16 %v444, %v441
      %v499 = vpack.c.b16 %v448, %v445
      %v500 = vpack.c.b16 %v449, %v446
      %v501 = vpack.c.b16 %v450, %v447
      %v502 = vpack.c.b16 %v454, %v451
      %v503 = vpack.c.b16 %v455, %v452
      %v504 = vpack.c.b16 %v456, %v453
      %v601 = vunpack.c.l.b16 %v242
      %v602 = vunpack.c.l.b16 %v243
      %v603 = vunpack.c.l.b16 %v244
      %v604 = vunpack.c.l.b16 %v245
      %v605 = vunpack.c.l.b16 %v246
      %v606 = vunpack.c.l.b16 %v247
      %v607 = vunpack.c.l.b16 %v248
      %v608 = vunpack.c.l.b16 %v249
      %v609 = vunpack.c.l.b16 %v250
      %v610 = vunpack.c.l.b16 %v251
      %v611 = vunpack.c.l.b16 %v252
      %v612 = vunpack.c.l.b16 %v253
      %v613 = vunpack.c.l.b16 %v254
      %v614 = vunpack.c.l.b16 %v255
      %v615 = vunpack.c.l.b16 %v256
      %v616 = vunpack.c.l.b16 %v257
      %v617 = vunpack.c.l.b16 %v258
      %v618 = vunpack.c.l.b16 %v259
      %v619 = vunpack.c.l.b16 %v260
      %v620 = vunpack.c.l.b16 %v261
      %v621 = vunpack.c.l.b16 %v262
      %v622 = vunpack.c.l.b16 %v263
      %v623 = vunpack.c.l.b16 %v264
      %v624 = vunpack.c.l.b16 %v265
      %v625 = vunpack.c.l.b16 %v266
      %v626 = vunpack.c.l.b16 %v267
      %v627 = vunpack.c.l.b16 %v268
      %v628 = vunpack.c.l.b16 %v269
      %v629 = vunpack.c.l.b16 %v270
      %v630 = vunpack.c.l.b16 %v271
      %v631 = vunpack.c.l.b16 %v272
      %v632 = vunpack.c.l.b16 %v273
      %v633 = vunpack.c.l.b16 %v274
      %v634 = vunpack.c.l.b16 %v275
      %v635 = vunpack.c.l.b16 %v276
      %v636 = vunpack.c.l.b16 %v277
      %v637 = vunpack.c.l.b16 %v278
      %v638 = vunpack.c.l.b16 %v279
      %v639 = vunpack.c.l.b16 %v280
      %v640 = vunpack.c.l.b16 %v281
      %v641 = vunpack.c.l.b16 %v282
      %v642 = vunpack.c.l.b16 %v283
      %v643 = vunpack.c.l.b16 %v284
      %v644 = vunpack.c.l.b16 %v285
      %v645 = vunpack.c.l.b16 %v286
      %v646 = vunpack.c.l.b16 %v287
      %v647 = vunpack.c.l.b16 %v288
      %v648 = vunpack.c.l.b16 %v289
      %v649 = vpack.c.b16 %v602, %v601
      %v650 = vpack.c.b16 %v604, %v603
      %v651 = vpack.c.b16 %v606, %v605
      %v652 = vpack.c.b16 %v608, %v607
      %v653 = vpack.c.b16 %v610, %v609
      %v654 = vpack.c.b16 %v612, %v611
      %v655 = vpack.c.b16 %v614, %v613
      %v656 = vpack.c.b16 %v616, %v615
      %v657 = vpack.c.b16 %v618, %v617
      %v658 = vpack.c.b16 %v620, %v619
      %v659 = vpack.c.b16 %v622, %v621
      %v660 = vpack.c.b16 %v624, %v623
      %v661 = vpack.c.b16 %v626, %v625
      %v662 = vpack.c.b16 %v628, %v627
      %v663 = vpack.c.b16 %v630, %v629
      %v664 = vpack.c.b16 %v632, %v631
      %v665 = vpack.c.b16 %v634, %v633
      %v666 = vpack.c.b16 %v636, %v635
      %v667 = vpack.c.b16 %v638, %v637
      %v668 = vpack.c.b16 %v640, %v639
      %v669 = vpack.c.b16 %v642, %v641
      %v670 = vpack.c.b16 %v644, %v643
      %v671 = vpack.c.b16 %v646, %v645
      %v672 = vpack.c.b16 %v648, %v647
      %697 = vmatprep.subr.bf16.mxu0 0
      %698 = vmatpush1.bf16.msra.mxu0 %v649
      %699 = vmatprep.subr.bf16.mxu0 0
      %700 = vmatpush1.bf16.msra.mxu0 %v650
      %701 = vmatprep.subr.bf16.mxu0 0
      %702 = vmatpush1.bf16.msra.mxu0 %v651
      %703 = vmatprep.subr.bf16.mxu0 0
      %704 = vmatpush1.bf16.msra.mxu0 %v652
      %705 = vmatprep.subr.bf16.mxu0 0
      %706 = vmatpush1.bf16.msra.mxu0 %v653
      %707 = vmatprep.subr.bf16.mxu0 0
      %708 = vmatpush1.bf16.msra.mxu0 %v654
      %709 = vmatprep.subr.bf16.mxu0 0
      %710 = vmatpush1.bf16.msra.mxu0 %v655
      %711 = vmatprep.subr.bf16.mxu0 0
      %712 = vmatpush1.bf16.msra.mxu0 %v656
      %713 = vmatprep.subr.bf16.mxu0 0
      %714 = vmatpush1.bf16.msra.mxu0 %v657
      %715 = vmatprep.subr.bf16.mxu0 0
      %716 = vmatpush1.bf16.msra.mxu0 %v658
      %717 = vmatprep.subr.bf16.mxu0 0
      %718 = vmatpush1.bf16.msra.mxu0 %v659
      %719 = vmatprep.subr.bf16.mxu0 0
      %720 = vmatpush1.bf16.msra.mxu0 %v660
      %721 = vmatprep.subr.bf16.mxu0 0
      %722 = vmatpush1.bf16.msra.mxu0 %v661
      %723 = vmatprep.subr.bf16.mxu0 0
      %724 = vmatpush1.bf16.msra.mxu0 %v662
      %725 = vmatprep.subr.bf16.mxu0 0
      %726 = vmatpush1.bf16.msra.mxu0 %v663
      %727 = vmatprep.subr.bf16.mxu0 0
      %728 = vmatpush1.bf16.msra.mxu0 %v664
      %729 = vmatprep.mubr.bf16.mxu0 %v458
      %730 = vmatmul.mubr.bf16.gmra.mrb[0].mxu0 %v457
      %v731 = vpop.f32.mrb[0].mxu0
      %v732 = vadd.f32 %v295, %v731
      %v733 = vpop.f32.mrb[0].mxu0
      %v734 = vpop.f32.mrb[0].mxu0
      %v735 = vadd.f32 %v295, %v734
      %v736 = vpop.f32.mrb[0].mxu0
      %737 = vmatprep.mubr.bf16.mxu0 %v461
      %738 = vmatmul.mubr.bf16.gmra.mrb[0].mxu0 %v460
      %v739 = vpop.f32.mrb[0].mxu0
      %v740 = vadd.f32 %v295, %v739
      %v741 = vpop.f32.mrb[0].mxu0
      %v742 = vpop.f32.mrb[0].mxu0
      %v743 = vadd.f32 %v295, %v742
      %v744 = vpop.f32.mrb[0].mxu0
      %745 = vmatprep.mubr.bf16.mxu0 %v464
      %746 = vmatmul.mubr.bf16.gmra.mrb[0].mxu0 %v463
      %v747 = vpop.f32.mrb[0].mxu0
      %v748 = vadd.f32 %v295, %v747
      %v749 = vpop.f32.mrb[0].mxu0
      %v750 = vpop.f32.mrb[0].mxu0
      %v751 = vadd.f32 %v295, %v750
      %v752 = vpop.f32.mrb[0].mxu0
      %753 = vmatprep.mubr.bf16.mxu0 %v467
      %754 = vmatmul.mubr.bf16.gmra.mrb[0].mxu0 %v466
      %v755 = vpop.f32.mrb[0].mxu0
      %v756 = vadd.f32 %v295, %v755
      %v757 = vpop.f32.mrb[0].mxu0
      %v758 = vpop.f32.mrb[0].mxu0
      %v759 = vadd.f32 %v295, %v758
      %v760 = vpop.f32.mrb[0].mxu0
      %761 = vmatprep.mubr.bf16.mxu0 %v470
      %762 = vmatmul.mubr.bf16.gmra.mrb[0].mxu0 %v469
      %v763 = vpop.f32.mrb[0].mxu0
      %v764 = vadd.f32 %v295, %v763
      %v765 = vpop.f32.mrb[0].mxu0
      %v766 = vpop.f32.mrb[0].mxu0
      %v767 = vadd.f32 %v295, %v766
      %v768 = vpop.f32.mrb[0].mxu0
      %769 = vmatprep.mubr.bf16.mxu0 %v473
      %770 = vmatmul.mubr.bf16.gmra.mrb[0].mxu0 %v472
      %v771 = vpop.f32.mrb[0].mxu0
      %v772 = vadd.f32 %v295, %v771
      %v773 = vpop.f32.mrb[0].mxu0
      %v774 = vpop.f32.mrb[0].mxu0
      %v775 = vadd.f32 %v295, %v774
      %v776 = vpop.f32.mrb[0].mxu0
      %777 = vmatprep.mubr.bf16.mxu0 %v476
      %778 = vmatmul.mubr.bf16.gmra.mrb[0].mxu0 %v475
      %v779 = vpop.f32.mrb[0].mxu0
      %v780 = vadd.f32 %v295, %v779
      %v781 = vpop.f32.mrb[0].mxu0
      %v782 = vpop.f32.mrb[0].mxu0
      %v783 = vadd.f32 %v295, %v782
      %v784 = vpop.f32.mrb[0].mxu0
      %785 = vmatprep.mubr.bf16.mxu0 %v479
      %786 = vmatmul.mubr.bf16.gmra.mrb[0].mxu0 %v478
      %v787 = vpop.f32.mrb[0].mxu0
      %v788 = vadd.f32 %v295, %v787
      %v789 = vpop.f32.mrb[0].mxu0
      %v790 = vpop.f32.mrb[0].mxu0
      %v791 = vadd.f32 %v295, %v790
      %v792 = vpop.f32.mrb[0].mxu0
      %793 = vmatprep.mubr.bf16.mxu0 %v482
      %794 = vmatmul.mubr.bf16.gmra.mrb[0].mxu0 %v481
      %v795 = vpop.f32.mrb[0].mxu0
      %v796 = vadd.f32 %v295, %v795
      %v797 = vpop.f32.mrb[0].mxu0
      %v798 = vpop.f32.mrb[0].mxu0
      %v799 = vadd.f32 %v295, %v798
      %v800 = vpop.f32.mrb[0].mxu0
      %801 = vmatprep.mubr.bf16.mxu0 %v485
      %802 = vmatmul.mubr.bf16.gmra.mrb[0].mxu0 %v484
      %v803 = vpop.f32.mrb[0].mxu0
      %v804 = vadd.f32 %v295, %v803
      %v805 = vpop.f32.mrb[0].mxu0
      %v806 = vpop.f32.mrb[0].mxu0
      %v807 = vadd.f32 %v295, %v806
      %v808 = vpop.f32.mrb[0].mxu0
      %809 = vmatprep.mubr.bf16.mxu0 %v488
      %810 = vmatmul.mubr.bf16.gmra.mrb[0].mxu0 %v487
      %v811 = vpop.f32.mrb[0].mxu0
      %v812 = vadd.f32 %v295, %v811
      %v813 = vpop.f32.mrb[0].mxu0
      %v814 = vpop.f32.mrb[0].mxu0
      %v815 = vadd.f32 %v295, %v814
      %v816 = vpop.f32.mrb[0].mxu0
      %817 = vmatprep.mubr.bf16.mxu0 %v491
      %818 = vmatmul.mubr.bf16.gmra.mrb[0].mxu0 %v490
      %v819 = vpop.f32.mrb[0].mxu0
      %v820 = vadd.f32 %v295, %v819
      %v821 = vpop.f32.mrb[0].mxu0
      %v822 = vpop.f32.mrb[0].mxu0
      %v823 = vadd.f32 %v295, %v822
      %v824 = vpop.f32.mrb[0].mxu0
      %825 = vmatprep.mubr.bf16.mxu0 %v494
      %826 = vmatmul.mubr.bf16.gmra.mrb[0].mxu0 %v493
      %v827 = vpop.f32.mrb[0].mxu0
      %v828 = vadd.f32 %v295, %v827
      %v829 = vpop.f32.mrb[0].mxu0
      %v830 = vpop.f32.mrb[0].mxu0
      %v831 = vadd.f32 %v295, %v830
      %v832 = vpop.f32.mrb[0].mxu0
      %833 = vmatprep.mubr.bf16.mxu0 %v497
      %834 = vmatmul.mubr.bf16.gmra.mrb[0].mxu0 %v496
      %v835 = vpop.f32.mrb[0].mxu0
      %v836 = vadd.f32 %v295, %v835
      %v837 = vpop.f32.mrb[0].mxu0
      %v838 = vpop.f32.mrb[0].mxu0
      %v839 = vadd.f32 %v295, %v838
      %v840 = vpop.f32.mrb[0].mxu0
      %841 = vmatprep.mubr.bf16.mxu0 %v500
      %842 = vmatmul.mubr.bf16.gmra.mrb[0].mxu0 %v499
      %v843 = vpop.f32.mrb[0].mxu0
      %v844 = vadd.f32 %v295, %v843
      %v845 = vpop.f32.mrb[0].mxu0
      %v846 = vpop.f32.mrb[0].mxu0
      %v847 = vadd.f32 %v295, %v846
      %v848 = vpop.f32.mrb[0].mxu0
      %849 = vmatprep.mubr.bf16.mxu0 %v503
      %850 = vmatmul.mubr.bf16.gmra.mrb[0].mxu0 %v502
      %v851 = vpop.f32.mrb[0].mxu0
      %v852 = vadd.f32 %v295, %v851
      %v853 = vpop.f32.mrb[0].mxu0
      %v854 = vpop.f32.mrb[0].mxu0
      %v855 = vadd.f32 %v295, %v854
      %v856 = vpop.f32.mrb[0].mxu0
      %857 = vdwg.mxu0
      %858 = vmatprep.subr.bf16.mxu0 0
      %859 = vmatpush1.bf16.msra.mxu0 %v665
      %860 = vmatprep.subr.bf16.mxu0 0
      %861 = vmatpush1.bf16.msra.mxu0 %v666
      %862 = vmatprep.subr.bf16.mxu0 0
      %863 = vmatpush1.bf16.msra.mxu0 %v667
      %864 = vmatprep.subr.bf16.mxu0 0
      %865 = vmatpush1.bf16.msra.mxu0 %v668
      %866 = vmatprep.subr.bf16.mxu0 0
      %867 = vmatpush1.bf16.msra.mxu0 %v669
      %868 = vmatprep.subr.bf16.mxu0 0
      %869 = vmatpush1.bf16.msra.mxu0 %v670
      %870 = vmatprep.subr.bf16.mxu0 0
      %871 = vmatpush1.bf16.msra.mxu0 %v671
      %872 = vmatprep.subr.bf16.mxu0 0
      %873 = vmatpush1.bf16.msra.mxu0 %v672
      %874 = vmatprep.subr.bf16.mxu0 0
      %875 = vmatpush1.bf16.msra.mxu0 0
      %876 = vmatprep.subr.bf16.mxu0 0
      %877 = vmatpush1.bf16.msra.mxu0 0
      %878 = vmatprep.subr.bf16.mxu0 0
      %879 = vmatpush1.bf16.msra.mxu0 0
      %880 = vmatprep.subr.bf16.mxu0 0
      %881 = vmatpush1.bf16.msra.mxu0 0
      %882 = vmatprep.subr.bf16.mxu0 0
      %883 = vmatpush1.bf16.msra.mxu0 0
      %884 = vmatprep.subr.bf16.mxu0 0
      %885 = vmatpush1.bf16.msra.mxu0 0
      %886 = vmatprep.subr.bf16.mxu0 0
      %887 = vmatpush1.bf16.msra.mxu0 0
      %888 = vmatprep.subr.bf16.mxu0 0
      %889 = vmatpush1.bf16.msra.mxu0 0
      %890 = vmatprep.mubr.bf16.mxu0 0
      %891 = vmatmul.mubr.bf16.gmra.mrb[0].mxu0 %v459
      %v892 = vpop.f32.mrb[0].mxu0
      %v893 = vadd.f32 %v732, %v892
      %v894 = vpop.f32.mrb[0].mxu0
      %v895 = vpop.f32.mrb[0].mxu0
      %v896 = vadd.f32 %v735, %v895
      %v897 = vpop.f32.mrb[0].mxu0
      %898 = vmatprep.mubr.bf16.mxu0 0
      %899 = vmatmul.mubr.bf16.gmra.mrb[0].mxu0 %v462
      %v900 = vpop.f32.mrb[0].mxu0
      %v901 = vadd.f32 %v740, %v900
      %v902 = vpop.f32.mrb[0].mxu0
      %v903 = vpop.f32.mrb[0].mxu0
      %v904 = vadd.f32 %v743, %v903
      %v905 = vpop.f32.mrb[0].mxu0
      %906 = vmatprep.mubr.bf16.mxu0 0
      %907 = vmatmul.mubr.bf16.gmra.mrb[0].mxu0 %v465
      %v908 = vpop.f32.mrb[0].mxu0
      %v909 = vadd.f32 %v748, %v908
      %v910 = vpop.f32.mrb[0].mxu0
      %v911 = vpop.f32.mrb[0].mxu0
      %v912 = vadd.f32 %v751, %v911
      %v913 = vpop.f32.mrb[0].mxu0
      %914 = vmatprep.mubr.bf16.mxu0 0
      %915 = vmatmul.mubr.bf16.gmra.mrb[0].mxu0 %v468
      %v916 = vpop.f32.mrb[0].mxu0
      %v917 = vadd.f32 %v756, %v916
      %v918 = vpop.f32.mrb[0].mxu0
      %v919 = vpop.f32.mrb[0].mxu0
      %v920 = vadd.f32 %v759, %v919
      %v921 = vpop.f32.mrb[0].mxu0
      %922 = vmatprep.mubr.bf16.mxu0 0
      %923 = vmatmul.mubr.bf16.gmra.mrb[0].mxu0 %v471
      %v924 = vpop.f32.mrb[0].mxu0
      %v925 = vadd.f32 %v764, %v924
      %v926 = vpop.f32.mrb[0].mxu0
      %v927 = vpop.f32.mrb[0].mxu0
      %v928 = vadd.f32 %v767, %v927
      %v929 = vpop.f32.mrb[0].mxu0
      %930 = vmatprep.mubr.bf16.mxu0 0
      %931 = vmatmul.mubr.bf16.gmra.mrb[0].mxu0 %v474
      %v932 = vpop.f32.mrb[0].mxu0
      %v933 = vadd.f32 %v772, %v932
      %v934 = vpop.f32.mrb[0].mxu0
      %v935 = vpop.f32.mrb[0].mxu0
      %v936 = vadd.f32 %v775, %v935
      %v937 = vpop.f32.mrb[0].mxu0
      %938 = vmatprep.mubr.bf16.mxu0 0
      %939 = vmatmul.mubr.bf16.gmra.mrb[0].mxu0 %v477
      %v940 = vpop.f32.mrb[0].mxu0
      %v941 = vadd.f32 %v780, %v940
      %v942 = vpop.f32.mrb[0].mxu0
      %v943 = vpop.f32.mrb[0].mxu0
      %v944 = vadd.f32 %v783, %v943
      %v945 = vpop.f32.mrb[0].mxu0
      %946 = vmatprep.mubr.bf16.mxu0 0
      %947 = vmatmul.mubr.bf16.gmra.mrb[0].mxu0 %v480
      %v948 = vpop.f32.mrb[0].mxu0
      %v949 = vadd.f32 %v788, %v948
      %v950 = vpop.f32.mrb[0].mxu0
      %v951 = vpop.f32.mrb[0].mxu0
      %v952 = vadd.f32 %v791, %v951
      %v953 = vpop.f32.mrb[0].mxu0
      %954 = vmatprep.mubr.bf16.mxu0 0
      %955 = vmatmul.mubr.bf16.gmra.mrb[0].mxu0 %v483
      %v956 = vpop.f32.mrb[0].mxu0
      %v957 = vadd.f32 %v796, %v956
      %v958 = vpop.f32.mrb[0].mxu0
      %v959 = vpop.f32.mrb[0].mxu0
      %v960 = vadd.f32 %v799, %v959
      %v961 = vpop.f32.mrb[0].mxu0
      %962 = vmatprep.mubr.bf16.mxu0 0
      %963 = vmatmul.mubr.bf16.gmra.mrb[0].mxu0 %v486
      %v964 = vpop.f32.mrb[0].mxu0
      %v965 = vadd.f32 %v804, %v964
      %v966 = vpop.f32.mrb[0].mxu0
      %v967 = vpop.f32.mrb[0].mxu0
      %v968 = vadd.f32 %v807, %v967
      %v969 = vpop.f32.mrb[0].mxu0
      %970 = vmatprep.mubr.bf16.mxu0 0
      %971 = vmatmul.mubr.bf16.gmra.mrb[0].mxu0 %v489
      %v972 = vpop.f32.mrb[0].mxu0
      %v973 = vadd.f32 %v812, %v972
      %v974 = vpop.f32.mrb[0].mxu0
      %v975 = vpop.f32.mrb[0].mxu0
      %v976 = vadd.f32 %v815, %v975
      %v977 = vpop.f32.mrb[0].mxu0
      %978 = vmatprep.mubr.bf16.mxu0 0
      %979 = vmatmul.mubr.bf16.gmra.mrb[0].mxu0 %v492
      %v980 = vpop.f32.mrb[0].mxu0
      %v981 = vadd.f32 %v820, %v980
      %v982 = vpop.f32.mrb[0].mxu0
      %v983 = vpop.f32.mrb[0].mxu0
      %v984 = vadd.f32 %v823, %v983
      %v985 = vpop.f32.mrb[0].mxu0
      %986 = vmatprep.mubr.bf16.mxu0 0
      %987 = vmatmul.mubr.bf16.gmra.mrb[0].mxu0 %v495
      %v988 = vpop.f32.mrb[0].mxu0
      %v989 = vadd.f32 %v828, %v988
      %v990 = vpop.f32.mrb[0].mxu0
      %v991 = vpop.f32.mrb[0].mxu0
      %v992 = vadd.f32 %v831, %v991
      %v993 = vpop.f32.mrb[0].mxu0
      %994 = vmatprep.mubr.bf16.mxu0 0
      %995 = vmatmul.mubr.bf16.gmra.mrb[0].mxu0 %v498
      %v996 = vpop.f32.mrb[0].mxu0
      %v997 = vadd.f32 %v836, %v996
      %v998 = vpop.f32.mrb[0].mxu0
      %v999 = vpop.f32.mrb[0].mxu0
      %v1000 = vadd.f32 %v839, %v999
      %v1001 = vpop.f32.mrb[0].mxu0
      %1002 = vmatprep.mubr.bf16.mxu0 0
      %1003 = vmatmul.mubr.bf16.gmra.mrb[0].mxu0 %v501
      %v1004 = vpop.f32.mrb[0].mxu0
      %v1005 = vadd.f32 %v844, %v1004
      %v1006 = vpop.f32.mrb[0].mxu0
      %v1007 = vpop.f32.mrb[0].mxu0
      %v1008 = vadd.f32 %v847, %v1007
      %v1009 = vpop.f32.mrb[0].mxu0
      %1010 = vmatprep.mubr.bf16.mxu0 0
      %1011 = vmatmul.mubr.bf16.gmra.mrb[0].mxu0 %v504
      %v1012 = vpop.f32.mrb[0].mxu0
      %v1013 = vadd.f32 %v852, %v1012
      %v1014 = vpop.f32.mrb[0].mxu0
      %v1015 = vpop.f32.mrb[0].mxu0
      %v1016 = vadd.f32 %v855, %v1015
      %v1017 = vpop.f32.mrb[0].mxu0
      %1018 = vdwg.mxu0
      %v1019 = vmax.f32 %v893, 0.0
      %v1020 = vmax.f32 %v896, 0.0
      %v1021 = vmax.f32 %v901, 0.0
      %v1022 = vmax.f32 %v904, 0.0
      %v1023 = vmax.f32 %v909, 0.0
      %v1024 = vmax.f32 %v912, 0.0
      %v1025 = vmax.f32 %v917, 0.0
      %v1026 = vmax.f32 %v920, 0.0
      %v1027 = vmax.f32 %v925, 0.0
      %v1028 = vmax.f32 %v928, 0.0
      %v1029 = vmax.f32 %v933, 0.0
      %v1030 = vmax.f32 %v936, 0.0
      %v1031 = vmax.f32 %v941, 0.0
      %v1032 = vmax.f32 %v944, 0.0
      %v1033 = vmax.f32 %v949, 0.0
      %v1034 = vmax.f32 %v952, 0.0
      %v1035 = vmax.f32 %v957, 0.0
      %v1036 = vmax.f32 %v960, 0.0
      %v1037 = vmax.f32 %v965, 0.0
      %v1038 = vmax.f32 %v968, 0.0
      %v1039 = vmax.f32 %v973, 0.0
      %v1040 = vmax.f32 %v976, 0.0
      %v1041 = vmax.f32 %v981, 0.0
      %v1042 = vmax.f32 %v984, 0.0
      %v1043 = vmax.f32 %v989, 0.0
      %v1044 = vmax.f32 %v992, 0.0
      %v1045 = vmax.f32 %v997, 0.0
      %v1046 = vmax.f32 %v1000, 0.0
      %v1047 = vmax.f32 %v1005, 0.0
      %v1048 = vmax.f32 %v1008, 0.0
      %v1049 = vmax.f32 %v1013, 0.0
      %v1050 = vmax.f32 %v1016, 0.0
      %1051 = vst [vmem:[%s175] sm:$0xff] %v1019
      %1052 = vst [vmem:[%s175 + $0x8] sm:$0xff] %v1020
      %1053 = vst [vmem:[%s175 + $0x10] sm:$0xff] %v1021
      %1054 = vst [vmem:[%s175 + $0x18] sm:$0xff] %v1022
      %1055 = vst [vmem:[%s175 + $0x20] sm:$0xff] %v1023
      %1056 = vst [vmem:[%s175 + $0x28] sm:$0xff] %v1024
      %1057 = vst [vmem:[%s175 + $0x30] sm:$0xff] %v1025
      %1058 = vst [vmem:[%s175 + $0x38] sm:$0xff] %v1026
      %1059 = vst [vmem:[%s175 + $0x40] sm:$0xff] %v1027
      %1060 = vst [vmem:[%s175 + $0x48] sm:$0xff] %v1028
      %1061 = vst [vmem:[%s175 + $0x50] sm:$0xff] %v1029
      %1062 = vst [vmem:[%s175 + $0x58] sm:$0xff] %v1030
      %1063 = vst [vmem:[%s175 + $0x60] sm:$0xff] %v1031
      %1064 = vst [vmem:[%s175 + $0x68] sm:$0xff] %v1032
      %1065 = vst [vmem:[%s175 + $0x70] sm:$0xff] %v1033
      %1066 = vst [vmem:[%s175 + $0x78] sm:$0xff] %v1034
      %1067 = vst [vmem:[%s175 + $0x80] sm:$0xff] %v1035
      %1068 = vst [vmem:[%s175 + $0x88] sm:$0xff] %v1036
      %1069 = vst [vmem:[%s175 + $0x90] sm:$0xff] %v1037
      %1070 = vst [vmem:[%s175 + $0x98] sm:$0xff] %v1038
      %1071 = vst [vmem:[%s175 + $0xa0] sm:$0xff] %v1039
      %1072 = vst [vmem:[%s175 + $0xa8] sm:$0xff] %v1040
      %1073 = vst [vmem:[%s175 + $0xb0] sm:$0xff] %v1041
      %1074 = vst [vmem:[%s175 + $0xb8] sm:$0xff] %v1042
      %1075 = vst [vmem:[%s175 + $0xc0] sm:$0xff] %v1043
      %1076 = vst [vmem:[%s175 + $0xc8] sm:$0xff] %v1044
      %1077 = vst [vmem:[%s175 + $0xd0] sm:$0xff] %v1045
      %1078 = vst [vmem:[%s175 + $0xd8] sm:$0xff] %v1046
      %1079 = vst [vmem:[%s175 + $0xe0] sm:$0xff] %v1047
      %1080 = vst [vmem:[%s175 + $0xe8] sm:$0xff] %v1048
      %1081 = vst [vmem:[%s175 + $0xf0] sm:$0xff] %v1049
      %1082 = vst [vmem:[%s175 + $0xf8] sm:$0xff] %v1050
      %s1083 = smul.u32 32, %s14
      %p1084 = scmp.lt.s32.totalorder %s1083, 191
      %s1085 = scalar_select %p1084, %s1083, 191
      %s1086 = smul.addr %s1085, 8
      %s1087 = scalar_lea.vmem %s3, %s1086
      // Predicated region
      $region33: #{ulosd_forward.26} parent=31 // pred_check
        %p1088 = pneg %p100
      $region34: #{ulosd_forward.26} parent=31 // pred_check_branch
        %1090 = sbr.rel (%p1088) target = $region36
      $region35: #{ulosd_forward.26} parent=31 // pred_region
        %s1091 = smul.u32 32, %s14
      $region36: #{ulosd_forward.26} parent=31 // pred_fallthru
        _
    $region32: #{ulosd_forward.26} parent=5 // pred_fallthru
      _
    %p1092 = scmp.le.s32.totalorder 2, %s9
    // Predicated region
    $region37: #{ulosd_forward.26} parent=5 // pred_check
      %p1093 = pneg %p1092
    $region38: #{ulosd_forward.26} parent=5 // pred_check_branch
      %1095 = sbr.rel (%p1093) target = $region40
    $region39: #{ulosd_forward.26} parent=5 // pred_region
      %s1096 = ssub.s32 %s9, 2
      // Predicated region
      $region41: #{ulosd_forward.26} parent=39 // pred_check
        %p1097 = pneg %p106
      $region42: #{ulosd_forward.26} parent=39 // pred_check_branch
        %1099 = sbr.rel (%p1097) target = $region44
      $region43: #{ulosd_forward.26} parent=39 // pred_region
        %s1100 = smul.u32 32, %s15
        %p1101 = scmp.lt.s32.totalorder %s1100, 191
        %s1102 = scalar_select %p1101, %s1100, 191
        %s1103 = smul.addr %s1102, 8
        %s1104 = scalar_lea.vmem %s3, %s1103
      $region44: #{ulosd_forward.26} parent=39 // pred_fallthru
        _
    $region40: #{ulosd_forward.26} parent=5 // pred_fallthru
      _
  $region6: #{ulosd_forward.26} parent=0 // loop_footer
    %s13 = sadd.s32 1, %s9
  $region7: #{ulosd_forward.26} parent=0 // loop_footer_branch
    %8 = sbr.rel target = $region3
  $region8: #{ulosd_forward.26} parent=0 // loop_exit
    _

// kernel: ulosd_forward.27
$region0: #{ulosd_forward.27}
  #allocation0 [shape = 'u32[]', space=smem, size = 0x4, offset = 0x4, fixed_abs, tag = 'smem constant byte address 0x4 - core index']
  #allocation1 [shape = 'u32[144,128]{1,0:T(1,128)}', space=vmem, size = 0x12000, scoped, tag = 'internal scratch']
  %s0 = inlined_call_operand.vmem [shape: bf16[1536,128], index: 0, kind: input, shape index: {}]
  %s1 = inlined_call_operand.vmem [shape: bf16[128,128], index: 1, kind: input, shape index: {}]
  %s2 = inlined_call_operand.vmem [shape: f32[1,128], index: 2, kind: input, shape index: {}]
  %s3 = inlined_call_operand.vmem [shape: f32[1536,128], index: 3, kind: output, shape index: {}]
  %s4 = sld [smem:[#allocation0]]
  $region45: #{ulosd_forward.27} parent=0
    _
  %s6 = ssub.s32 1, %s4
  %s7 = scalar_select 0, %s6, %s4
  loop: start=0, step=1, limit=8
  $region2: #{ulosd_forward.27} parent=0 // loop_pre_header
    _
  $region3: #{ulosd_forward.27} parent=0 // loop_header
    %s9 = sphi 0, %s13
    %p10 = scmp.ge.s32.totalorder %s9, 8
    %s19 = sphi 0, %s21
    %s22 = sphi 0, %s19
    %s23 = sphi 0, %s22
    %s39 = sphi 0, %s23
    %s43 = sphi 0, %s43
    %s45 = sphi 0, %s43
    %s46 = sphi 0, %s45
    %s60 = sphi 0, %s46
    %s64 = sphi 0, %s64
    %s66 = sphi 0, %s64
    %s67 = sphi 0, %s66
    %s81 = sphi 0, %s67
    %s87 = sphi 0, %s89
    %s90 = sphi 0, %s87
    %s91 = sphi 0, %s90
    %s107 = sphi 0, %s91
  $region4: #{ulosd_forward.27} parent=0 // loop_header_branch
    %12 = sbr.rel (%p10) target = $region8
  $region5: #{ulosd_forward.27} parent=0 // loop_body
    %s14 = ssub.s32 %s9, 1
    %s15 = ssub.s32 %s9, 2
    %s16 = sadd.s32 %s9, 1
    %s17 = ssub.s32 %s9, %s16
    %p18 = scmp.eq.s32.totalorder %s17, 0
    %s20 = sadd.s32 %s19, 1
    %s21 = scalar_select %p18, %s19, %s20
    %p24 = pneg %p18
    %p25 = scmp.eq.s32.totalorder %s9, 5
    %p26 = por %p24, %p25
    %p27 = scmp.ne.s32.totalorder %s19, %s22
    %p28 = scmp.eq.s32.totalorder %s9, 0
    %p29 = por %p27, %p28
    %p30 = scmp.ne.s32.totalorder %s19, %s22
    %p31 = scmp.eq.s32.totalorder %s14, 5
    %p32 = por %p30, %p31
    %p33 = scmp.ne.s32.totalorder %s22, %s23
    %p34 = scmp.eq.s32.totalorder %s14, 0
    %p35 = por %p33, %p34
    %p36 = scmp.ne.s32.totalorder %s22, %s23
    %p37 = scmp.eq.s32.totalorder %s15, 5
    %p38 = por %p36, %p37
    %p40 = scmp.ne.s32.totalorder %s23, %s39
    %p41 = scmp.eq.s32.totalorder %s15, 0
    %p42 = por %p40, %p41
    %s44 = sadd.s32 %s43, 1
    %p47 = scmp.eq.s32.totalorder %s9, 5
    %p48 = scmp.ne.s32.totalorder %s43, %s45
    %p49 = scmp.eq.s32.totalorder %s9, 0
    %p50 = por %p48, %p49
    %p51 = scmp.ne.s32.totalorder %s43, %s45
    %p52 = scmp.eq.s32.totalorder %s14, 5
    %p53 = por %p51, %p52
    %p54 = scmp.ne.s32.totalorder %s45, %s46
    %p55 = scmp.eq.s32.totalorder %s14, 0
    %p56 = por %p54, %p55
    %p57 = scmp.ne.s32.totalorder %s45, %s46
    %p58 = scmp.eq.s32.totalorder %s15, 5
    %p59 = por %p57, %p58
    %p61 = scmp.ne.s32.totalorder %s46, %s60
    %p62 = scmp.eq.s32.totalorder %s15, 0
    %p63 = por %p61, %p62
    %s65 = sadd.s32 %s64, 1
    %p68 = scmp.eq.s32.totalorder %s9, 5
    %p69 = scmp.ne.s32.totalorder %s64, %s66
    %p70 = scmp.eq.s32.totalorder %s9, 0
    %p71 = por %p69, %p70
    %p72 = scmp.ne.s32.totalorder %s64, %s66
    %p73 = scmp.eq.s32.totalorder %s14, 5
    %p74 = por %p72, %p73
    %p75 = scmp.ne.s32.totalorder %s66, %s67
    %p76 = scmp.eq.s32.totalorder %s14, 0
    %p77 = por %p75, %p76
    %p78 = scmp.ne.s32.totalorder %s66, %s67
    %p79 = scmp.eq.s32.totalorder %s15, 5
    %p80 = por %p78, %p79
    %p82 = scmp.ne.s32.totalorder %s67, %s81
    %p83 = scmp.eq.s32.totalorder %s15, 0
    %p84 = por %p82, %p83
    %s85 = ssub.s32 %s9, %s16
    %p86 = scmp.eq.s32.totalorder %s85, 0
    %s88 = sadd.s32 %s87, 1
    %s89 = scalar_select %p86, %s87, %s88
    %p92 = pneg %p86
    %p93 = scmp.eq.s32.totalorder %s9, 5
    %p94 = por %p92, %p93
    %p95 = scmp.ne.s32.totalorder %s87, %s90
    %p96 = scmp.eq.s32.totalorder %s9, 0
    %p97 = por %p95, %p96
    %p98 = scmp.ne.s32.totalorder %s87, %s90
    %p99 = scmp.eq.s32.totalorder %s14, 5
    %p100 = por %p98, %p99
    %p101 = scmp.ne.s32.totalorder %s90, %s91
    %p102 = scmp.eq.s32.totalorder %s14, 0
    %p103 = por %p101, %p102
    %p104 = scmp.ne.s32.totalorder %s90, %s91
    %p105 = scmp.eq.s32.totalorder %s15, 5
    %p106 = por %p104, %p105
    %p108 = scmp.ne.s32.totalorder %s91, %s107
    %p109 = scmp.eq.s32.totalorder %s15, 0
    %p110 = por %p108, %p109
    %p111 = scmp.le.s32.totalorder 1, %s9
    %p112 = scmp.lt.s32.totalorder %s9, 7
    %p113 = pnand %p111, %p112
    %p114 = pneg %p113
    // Predicated region
    $region9: #{ulosd_forward.27} parent=5 // pred_check
      _
    $region10: #{ulosd_forward.27} parent=5 // pred_check_branch
      %116 = sbr.rel (%p113) target = $region12
    $region11: #{ulosd_forward.27} parent=5 // pred_region
      %s117 = ssub.s32 %s9, 1
      // Predicated region
      $region13: #{ulosd_forward.27} parent=11 // pred_check
        %p118 = pneg %p56
      $region14: #{ulosd_forward.27} parent=11 // pred_check_branch
        %120 = sbr.rel (%p118) target = $region16
      $region15: #{ulosd_forward.27} parent=11 // pred_region
        _
      $region16: #{ulosd_forward.27} parent=11 // pred_fallthru
        _
      // Predicated region
      $region17: #{ulosd_forward.27} parent=11 // pred_check
        %p121 = pneg %p77
      $region18: #{ulosd_forward.27} parent=11 // pred_check_branch
        %123 = sbr.rel (%p121) target = $region20
      $region19: #{ulosd_forward.27} parent=11 // pred_region
        _
      $region20: #{ulosd_forward.27} parent=11 // pred_fallthru
        _
    $region12: #{ulosd_forward.27} parent=5 // pred_fallthru
      _
    %p124 = scmp.lt.s32.totalorder %s9, 6
    // Predicated region
    $region21: #{ulosd_forward.27} parent=5 // pred_check
      %p125 = pneg %p124
    $region22: #{ulosd_forward.27} parent=5 // pred_check_branch
      %127 = sbr.rel (%p125) target = $region24
    $region23: #{ulosd_forward.27} parent=5 // pred_region
      // Predicated region
      $region25: #{ulosd_forward.27} parent=23 // pred_check
        %p128 = pneg %p29
      $region26: #{ulosd_forward.27} parent=23 // pred_check_branch
        %130 = sbr.rel (%p128) target = $region28
      $region27: #{ulosd_forward.27} parent=23 // pred_region
        %s131 = smul.u32 32, %s9
        %p132 = scmp.lt.s32.totalorder %s131, 191
        %s133 = scalar_select %p132, %s131, 191
        %s134 = smul.addr %s133, 4
        %s135 = scalar_lea.vmem %s0, %s134
        %s136 = smul.u32 32, %s9
      $region28: #{ulosd_forward.27} parent=23 // pred_fallthru
        _
    $region24: #{ulosd_forward.27} parent=5 // pred_fallthru
      _
    %p137 = scmp.le.s32.totalorder 1, %s9
    %p138 = scmp.lt.s32.totalorder %s9, 7
    %p139 = pnand %p137, %p138
    %p140 = pneg %p139
    // Predicated region
    $region29: #{ulosd_forward.27} parent=5 // pred_check
      _
    $region30: #{ulosd_forward.27} parent=5 // pred_check_branch
      %142 = sbr.rel (%p139) target = $region32
    $region31: #{ulosd_forward.27} parent=5 // pred_region
      %s143 = ssub.s32 %s9, 1
      %s144 = smul.u32 32, %s14
      %p145 = scmp.lt.s32.totalorder %s144, 191
      %s146 = scalar_select %p145, %s144, 191
      %s147 = smul.addr %s146, 4
      %s148 = scalar_lea.vmem %s0, %s147
      %p149 = pneg %p35
      %p150 = pneg %p32
      %p151 = pneg %p56
      %p152 = pneg %p53
      %p153 = pneg %p77
      %p154 = pneg %p74
      %p155 = pneg %p103
      %p156 = pneg %p100
      %s157 = smul.u32 32, %s14
      %p158 = scmp.lt.s32.totalorder %s157, 191
      %s159 = scalar_select %p158, %s157, 191
      %s160 = smul.addr %s159, 8
      %s161 = scalar_lea.vmem %s3, %s160
      %s162 = smul.u32 32, %s14
      %p163 = scmp.lt.s32.totalorder %s162, 191
      %s164 = scalar_select %p163, %s162, 191
      %s165 = smul.addr %s164, 4
      %s166 = scalar_lea.vmem %s0, %s165
      %s167 = smul.u32 32, %s14
      %s168 = smul.u32 32, %s14
      %p169 = scmp.lt.s32.totalorder %s168, 191
      %s170 = scalar_select %p169, %s168, 191
      %s171 = smul.addr %s170, 8
      %s172 = scalar_lea.vmem %s3, %s171
      %s173 = smul.u32 32, %s14
      %v175 = vld [vmem:[%s166] sm:$0xf]
      %v176 = vld [vmem:[%s166 + $0x4] sm:$0xf]
      %v177 = vld [vmem:[%s166 + $0x8] sm:$0xf]
      %v178 = vld [vmem:[%s166 + $0xc] sm:$0xf]
      %v179 = vld [vmem:[%s166 + $0x10] sm:$0xf]
      %v180 = vld [vmem:[%s166 + $0x14] sm:$0xf]
      %v181 = vld [vmem:[%s166 + $0x18] sm:$0xf]
      %v182 = vld [vmem:[%s166 + $0x1c] sm:$0xf]
      %v183 = vld [vmem:[%s166 + $0x20] sm:$0xf]
      %v184 = vld [vmem:[%s166 + $0x24] sm:$0xf]
      %v185 = vld [vmem:[%s166 + $0x28] sm:$0xf]
      %v186 = vld [vmem:[%s166 + $0x2c] sm:$0xf]
      %v187 = vld [vmem:[%s166 + $0x30] sm:$0xf]
      %v188 = vld [vmem:[%s166 + $0x34] sm:$0xf]
      %v189 = vld [vmem:[%s166 + $0x38] sm:$0xf]
      %v190 = vld [vmem:[%s166 + $0x3c] sm:$0xf]
      %v191 = vld [vmem:[%s166 + $0x40] sm:$0xf]
      %v192 = vld [vmem:[%s166 + $0x44] sm:$0xf]
      %v193 = vld [vmem:[%s166 + $0x48] sm:$0xf]
      %v194 = vld [vmem:[%s166 + $0x4c] sm:$0xf]
      %v195 = vld [vmem:[%s166 + $0x50] sm:$0xf]
      %v196 = vld [vmem:[%s166 + $0x54] sm:$0xf]
      %v197 = vld [vmem:[%s166 + $0x58] sm:$0xf]
      %v198 = vld [vmem:[%s166 + $0x5c] sm:$0xf]
      %v199 = vld [vmem:[%s166 + $0x60] sm:$0xf]
      %v200 = vld [vmem:[%s166 + $0x64] sm:$0xf]
      %v201 = vld [vmem:[%s166 + $0x68] sm:$0xf]
      %v202 = vld [vmem:[%s166 + $0x6c] sm:$0xf]
      %v203 = vld [vmem:[%s166 + $0x70] sm:$0xf]
      %v204 = vld [vmem:[%s166 + $0x74] sm:$0xf]
      %v205 = vld [vmem:[%s166 + $0x78] sm:$0xf]
      %v206 = vld [vmem:[%s166 + $0x7c] sm:$0xf]
      %v207 = vld [vmem:[%s1] sm:$0xf]
      %v208 = vld [vmem:[%s1 + $0x4] sm:$0xf]
      %v209 = vld [vmem:[%s1 + $0x8] sm:$0xf]
      %v210 = vld [vmem:[%s1 + $0xc] sm:$0xf]
      %v211 = vld [vmem:[%s1 + $0x10] sm:$0xf]
      %v212 = vld [vmem:[%s1 + $0x14] sm:$0xf]
      %v213 = vld [vmem:[%s1 + $0x18] sm:$0xf]
      %v214 = vld [vmem:[%s1 + $0x1c] sm:$0xf]
      %v215 = vld [vmem:[%s1 + $0x20] sm:$0xf]
      %v216 = vld [vmem:[%s1 + $0x24] sm:$0xf]
      %v217 = vld [vmem:[%s1 + $0x28] sm:$0xf]
      %v218 = vld [vmem:[%s1 + $0x2c] sm:$0xf]
      %v219 = vld [vmem:[%s1 + $0x30] sm:$0xf]
      %v220 = vld [vmem:[%s1 + $0x34] sm:$0xf]
      %v221 = vld [vmem:[%s1 + $0x38] sm:$0xf]
      %v222 = vld [vmem:[%s1 + $0x3c] sm:$0xf]
      %v223 = vld [vmem:[%s2] sm:$0x1]
      %v225 = vlaneseq
      %v226 = vshrl.u32 %v225, 7
      %v227 = vsub.s32 0, %v226
      %v228 = vrot.slane %v223, %v227
      %v262 = vunpack.c.l.b16 %v175
      %v263 = vunpack.c.l.b16 %v176
      %v264 = vunpack.c.l.b16 %v177
      %v265 = vunpack.c.l.b16 %v178
      %v266 = vunpack.c.l.b16 %v179
      %v267 = vunpack.c.l.b16 %v180
      %v268 = vunpack.c.l.b16 %v181
      %v269 = vunpack.c.l.b16 %v182
      %v270 = vunpack.c.l.b16 %v183
      %v271 = vunpack.c.l.b16 %v184
      %v272 = vunpack.c.l.b16 %v185
      %v273 = vunpack.c.l.b16 %v186
      %v274 = vunpack.c.l.b16 %v187
      %v275 = vunpack.c.l.b16 %v188
      %v276 = vunpack.c.l.b16 %v189
      %v277 = vunpack.c.l.b16 %v190
      %v278 = vunpack.c.l.b16 %v191
      %v279 = vunpack.c.l.b16 %v192
      %v280 = vunpack.c.l.b16 %v193
      %v281 = vunpack.c.l.b16 %v194
      %v282 = vunpack.c.l.b16 %v195
      %v283 = vunpack.c.l.b16 %v196
      %v284 = vunpack.c.l.b16 %v197
      %v285 = vunpack.c.l.b16 %v198
      %v286 = vunpack.c.l.b16 %v199
      %v287 = vunpack.c.l.b16 %v200
      %v288 = vunpack.c.l.b16 %v201
      %v289 = vunpack.c.l.b16 %v202
      %v290 = vunpack.c.l.b16 %v203
      %v291 = vunpack.c.l.b16 %v204
      %v292 = vunpack.c.l.b16 %v205
      %v293 = vunpack.c.l.b16 %v206
      %v294 = vpack.c.b16 %v263, %v262
      %v295 = vpack.c.b16 %v265, %v264
      %v296 = vpack.c.b16 %v267, %v266
      %v297 = vpack.c.b16 %v269, %v268
      %v298 = vpack.c.b16 %v271, %v270
      %v299 = vpack.c.b16 %v273, %v272
      %v300 = vpack.c.b16 %v275, %v274
      %v301 = vpack.c.b16 %v277, %v276
      %v302 = vpack.c.b16 %v279, %v278
      %v303 = vpack.c.b16 %v281, %v280
      %v304 = vpack.c.b16 %v283, %v282
      %v305 = vpack.c.b16 %v285, %v284
      %v306 = vpack.c.b16 %v287, %v286
      %v307 = vpack.c.b16 %v289, %v288
      %v308 = vpack.c.b16 %v291, %v290
      %v309 = vpack.c.b16 %v293, %v292
      %v342 = vunpack.c.l.b16 %v207
      %v343 = vunpack.c.l.b16 %v208
      %v344 = vunpack.c.l.b16 %v209
      %v345 = vunpack.c.l.b16 %v210
      %v346 = vunpack.c.l.b16 %v211
      %v347 = vunpack.c.l.b16 %v212
      %v348 = vunpack.c.l.b16 %v213
      %v349 = vunpack.c.l.b16 %v214
      %v350 = vunpack.c.l.b16 %v215
      %v351 = vunpack.c.l.b16 %v216
      %v352 = vunpack.c.l.b16 %v217
      %v353 = vunpack.c.l.b16 %v218
      %v354 = vunpack.c.l.b16 %v219
      %v355 = vunpack.c.l.b16 %v220
      %v356 = vunpack.c.l.b16 %v221
      %v357 = vunpack.c.l.b16 %v222
      %v358 = vpack.c.b16 %v343, %v342
      %v359 = vpack.c.b16 %v345, %v344
      %v360 = vpack.c.b16 %v347, %v346
      %v361 = vpack.c.b16 %v349, %v348
      %v362 = vpack.c.b16 %v351, %v350
      %v363 = vpack.c.b16 %v353, %v352
      %v364 = vpack.c.b16 %v355, %v354
      %v365 = vpack.c.b16 %v357, %v356
      %374 = vmatprep.subr.bf16.mxu0 0
      %375 = vmatpush1.bf16.msra.mxu0 %v358
      %376 = vmatprep.subr.bf16.mxu0 0
      %377 = vmatpush1.bf16.msra.mxu0 %v359
      %378 = vmatprep.subr.bf16.mxu0 0
      %379 = vmatpush1.bf16.msra.mxu0 %v360
      %380 = vmatprep.subr.bf16.mxu0 0
      %381 = vmatpush1.bf16.msra.mxu0 %v361
      %382 = vmatprep.subr.bf16.mxu0 0
      %383 = vmatpush1.bf16.msra.mxu0 %v362
      %384 = vmatprep.subr.bf16.mxu0 0
      %385 = vmatpush1.bf16.msra.mxu0 %v363
      %386 = vmatprep.subr.bf16.mxu0 0
      %387 = vmatpush1.bf16.msra.mxu0 %v364
      %388 = vmatprep.subr.bf16.mxu0 0
      %389 = vmatpush1.bf16.msra.mxu0 %v365
      %390 = vmatprep.subr.bf16.mxu0 0
      %391 = vmatpush1.bf16.msra.mxu0 0
      %392 = vmatprep.subr.bf16.mxu0 0
      %393 = vmatpush1.bf16.msra.mxu0 0
      %394 = vmatprep.subr.bf16.mxu0 0
      %395 = vmatpush1.bf16.msra.mxu0 0
      %396 = vmatprep.subr.bf16.mxu0 0
      %397 = vmatpush1.bf16.msra.mxu0 0
      %398 = vmatprep.subr.bf16.mxu0 0
      %399 = vmatpush1.bf16.msra.mxu0 0
      %400 = vmatprep.subr.bf16.mxu0 0
      %401 = vmatpush1.bf16.msra.mxu0 0
      %402 = vmatprep.subr.bf16.mxu0 0
      %403 = vmatpush1.bf16.msra.mxu0 0
      %404 = vmatprep.subr.bf16.mxu0 0
      %405 = vmatpush1.bf16.msra.mxu0 0
      %406 = vmatprep.mubr.bf16.mxu0 0
      %407 = vmatmul.mubr.bf16.gmra.mrb[0].mxu0 %v294
      %v408 = vpop.f32.mrb[0].mxu0
      %v409 = vadd.f32 %v228, %v408
      %v410 = vpop.f32.mrb[0].mxu0
      %v411 = vpop.f32.mrb[0].mxu0
      %v412 = vadd.f32 %v228, %v411
      %v413 = vpop.f32.mrb[0].mxu0
      %414 = vmatprep.mubr.bf16.mxu0 0
      %415 = vmatmul.mubr.bf16.gmra.mrb[0].mxu0 %v295
      %v416 = vpop.f32.mrb[0].mxu0
      %v417 = vadd.f32 %v228, %v416
      %v418 = vpop.f32.mrb[0].mxu0
      %v419 = vpop.f32.mrb[0].mxu0
      %v420 = vadd.f32 %v228, %v419
      %v421 = vpop.f32.mrb[0].mxu0
      %422 = vmatprep.mubr.bf16.mxu0 0
      %423 = vmatmul.mubr.bf16.gmra.mrb[0].mxu0 %v296
      %v424 = vpop.f32.mrb[0].mxu0
      %v425 = vadd.f32 %v228, %v424
      %v426 = vpop.f32.mrb[0].mxu0
      %v427 = vpop.f32.mrb[0].mxu0
      %v428 = vadd.f32 %v228, %v427
      %v429 = vpop.f32.mrb[0].mxu0
      %430 = vmatprep.mubr.bf16.mxu0 0
      %431 = vmatmul.mubr.bf16.gmra.mrb[0].mxu0 %v297
      %v432 = vpop.f32.mrb[0].mxu0
      %v433 = vadd.f32 %v228, %v432
      %v434 = vpop.f32.mrb[0].mxu0
      %v435 = vpop.f32.mrb[0].mxu0
      %v436 = vadd.f32 %v228, %v435
      %v437 = vpop.f32.mrb[0].mxu0
      %438 = vmatprep.mubr.bf16.mxu0 0
      %439 = vmatmul.mubr.bf16.gmra.mrb[0].mxu0 %v298
      %v440 = vpop.f32.mrb[0].mxu0
      %v441 = vadd.f32 %v228, %v440
      %v442 = vpop.f32.mrb[0].mxu0
      %v443 = vpop.f32.mrb[0].mxu0
      %v444 = vadd.f32 %v228, %v443
      %v445 = vpop.f32.mrb[0].mxu0
      %446 = vmatprep.mubr.bf16.mxu0 0
      %447 = vmatmul.mubr.bf16.gmra.mrb[0].mxu0 %v299
      %v448 = vpop.f32.mrb[0].mxu0
      %v449 = vadd.f32 %v228, %v448
      %v450 = vpop.f32.mrb[0].mxu0
      %v451 = vpop.f32.mrb[0].mxu0
      %v452 = vadd.f32 %v228, %v451
      %v453 = vpop.f32.mrb[0].mxu0
      %454 = vmatprep.mubr.bf16.mxu0 0
      %455 = vmatmul.mubr.bf16.gmra.mrb[0].mxu0 %v300
      %v456 = vpop.f32.mrb[0].mxu0
      %v457 = vadd.f32 %v228, %v456
      %v458 = vpop.f32.mrb[0].mxu0
      %v459 = vpop.f32.mrb[0].mxu0
      %v460 = vadd.f32 %v228, %v459
      %v461 = vpop.f32.mrb[0].mxu0
      %462 = vmatprep.mubr.bf16.mxu0 0
      %463 = vmatmul.mubr.bf16.gmra.mrb[0].mxu0 %v301
      %v464 = vpop.f32.mrb[0].mxu0
      %v465 = vadd.f32 %v228, %v464
      %v466 = vpop.f32.mrb[0].mxu0
      %v467 = vpop.f32.mrb[0].mxu0
      %v468 = vadd.f32 %v228, %v467
      %v469 = vpop.f32.mrb[0].mxu0
      %470 = vmatprep.mubr.bf16.mxu0 0
      %471 = vmatmul.mubr.bf16.gmra.mrb[0].mxu0 %v302
      %v472 = vpop.f32.mrb[0].mxu0
      %v473 = vadd.f32 %v228, %v472
      %v474 = vpop.f32.mrb[0].mxu0
      %v475 = vpop.f32.mrb[0].mxu0
      %v476 = vadd.f32 %v228, %v475
      %v477 = vpop.f32.mrb[0].mxu0
      %478 = vmatprep.mubr.bf16.mxu0 0
      %479 = vmatmul.mubr.bf16.gmra.mrb[0].mxu0 %v303
      %v480 = vpop.f32.mrb[0].mxu0
      %v481 = vadd.f32 %v228, %v480
      %v482 = vpop.f32.mrb[0].mxu0
      %v483 = vpop.f32.mrb[0].mxu0
      %v484 = vadd.f32 %v228, %v483
      %v485 = vpop.f32.mrb[0].mxu0
      %486 = vmatprep.mubr.bf16.mxu0 0
      %487 = vmatmul.mubr.bf16.gmra.mrb[0].mxu0 %v304
      %v488 = vpop.f32.mrb[0].mxu0
      %v489 = vadd.f32 %v228, %v488
      %v490 = vpop.f32.mrb[0].mxu0
      %v491 = vpop.f32.mrb[0].mxu0
      %v492 = vadd.f32 %v228, %v491
      %v493 = vpop.f32.mrb[0].mxu0
      %494 = vmatprep.mubr.bf16.mxu0 0
      %495 = vmatmul.mubr.bf16.gmra.mrb[0].mxu0 %v305
      %v496 = vpop.f32.mrb[0].mxu0
      %v497 = vadd.f32 %v228, %v496
      %v498 = vpop.f32.mrb[0].mxu0
      %v499 = vpop.f32.mrb[0].mxu0
      %v500 = vadd.f32 %v228, %v499
      %v501 = vpop.f32.mrb[0].mxu0
      %502 = vmatprep.mubr.bf16.mxu0 0
      %503 = vmatmul.mubr.bf16.gmra.mrb[0].mxu0 %v306
      %v504 = vpop.f32.mrb[0].mxu0
      %v505 = vadd.f32 %v228, %v504
      %v506 = vpop.f32.mrb[0].mxu0
      %v507 = vpop.f32.mrb[0].mxu0
      %v508 = vadd.f32 %v228, %v507
      %v509 = vpop.f32.mrb[0].mxu0
      %510 = vmatprep.mubr.bf16.mxu0 0
      %511 = vmatmul.mubr.bf16.gmra.mrb[0].mxu0 %v307
      %v512 = vpop.f32.mrb[0].mxu0
      %v513 = vadd.f32 %v228, %v512
      %v514 = vpop.f32.mrb[0].mxu0
      %v515 = vpop.f32.mrb[0].mxu0
      %v516 = vadd.f32 %v228, %v515
      %v517 = vpop.f32.mrb[0].mxu0
      %518 = vmatprep.mubr.bf16.mxu0 0
      %519 = vmatmul.mubr.bf16.gmra.mrb[0].mxu0 %v308
      %v520 = vpop.f32.mrb[0].mxu0
      %v521 = vadd.f32 %v228, %v520
      %v522 = vpop.f32.mrb[0].mxu0
      %v523 = vpop.f32.mrb[0].mxu0
      %v524 = vadd.f32 %v228, %v523
      %v525 = vpop.f32.mrb[0].mxu0
      %526 = vmatprep.mubr.bf16.mxu0 0
      %527 = vmatmul.mubr.bf16.gmra.mrb[0].mxu0 %v309
      %v528 = vpop.f32.mrb[0].mxu0
      %v529 = vadd.f32 %v228, %v528
      %v530 = vpop.f32.mrb[0].mxu0
      %v531 = vpop.f32.mrb[0].mxu0
      %v532 = vadd.f32 %v228, %v531
      %v533 = vpop.f32.mrb[0].mxu0
      %534 = vdwg.mxu0
      %535 = vst [vmem:[%s172] sm:$0xff] %v409
      %536 = vst [vmem:[%s172 + $0x8] sm:$0xff] %v412
      %537 = vst [vmem:[%s172 + $0x10] sm:$0xff] %v417
      %538 = vst [vmem:[%s172 + $0x18] sm:$0xff] %v420
      %539 = vst [vmem:[%s172 + $0x20] sm:$0xff] %v425
      %540 = vst [vmem:[%s172 + $0x28] sm:$0xff] %v428
      %541 = vst [vmem:[%s172 + $0x30] sm:$0xff] %v433
      %542 = vst [vmem:[%s172 + $0x38] sm:$0xff] %v436
      %543 = vst [vmem:[%s172 + $0x40] sm:$0xff] %v441
      %544 = vst [vmem:[%s172 + $0x48] sm:$0xff] %v444
      %545 = vst [vmem:[%s172 + $0x50] sm:$0xff] %v449
      %546 = vst [vmem:[%s172 + $0x58] sm:$0xff] %v452
      %547 = vst [vmem:[%s172 + $0x60] sm:$0xff] %v457
      %548 = vst [vmem:[%s172 + $0x68] sm:$0xff] %v460
      %549 = vst [vmem:[%s172 + $0x70] sm:$0xff] %v465
      %550 = vst [vmem:[%s172 + $0x78] sm:$0xff] %v468
      %551 = vst [vmem:[%s172 + $0x80] sm:$0xff] %v473
      %552 = vst [vmem:[%s172 + $0x88] sm:$0xff] %v476
      %553 = vst [vmem:[%s172 + $0x90] sm:$0xff] %v481
      %554 = vst [vmem:[%s172 + $0x98] sm:$0xff] %v484
      %555 = vst [vmem:[%s172 + $0xa0] sm:$0xff] %v489
      %556 = vst [vmem:[%s172 + $0xa8] sm:$0xff] %v492
      %557 = vst [vmem:[%s172 + $0xb0] sm:$0xff] %v497
      %558 = vst [vmem:[%s172 + $0xb8] sm:$0xff] %v500
      %559 = vst [vmem:[%s172 + $0xc0] sm:$0xff] %v505
      %560 = vst [vmem:[%s172 + $0xc8] sm:$0xff] %v508
      %561 = vst [vmem:[%s172 + $0xd0] sm:$0xff] %v513
      %562 = vst [vmem:[%s172 + $0xd8] sm:$0xff] %v516
      %563 = vst [vmem:[%s172 + $0xe0] sm:$0xff] %v521
      %564 = vst [vmem:[%s172 + $0xe8] sm:$0xff] %v524
      %565 = vst [vmem:[%s172 + $0xf0] sm:$0xff] %v529
      %566 = vst [vmem:[%s172 + $0xf8] sm:$0xff] %v532
      %s567 = smul.u32 32, %s14
      %p568 = scmp.lt.s32.totalorder %s567, 191
      %s569 = scalar_select %p568, %s567, 191
      %s570 = smul.addr %s569, 8
      %s571 = scalar_lea.vmem %s3, %s570
      // Predicated region
      $region33: #{ulosd_forward.27} parent=31 // pred_check
        %p572 = pneg %p100
      $region34: #{ulosd_forward.27} parent=31 // pred_check_branch
        %574 = sbr.rel (%p572) target = $region36
      $region35: #{ulosd_forward.27} parent=31 // pred_region
        %s575 = smul.u32 32, %s14
      $region36: #{ulosd_forward.27} parent=31 // pred_fallthru
        _
    $region32: #{ulosd_forward.27} parent=5 // pred_fallthru
      _
    %p576 = scmp.le.s32.totalorder 2, %s9
    // Predicated region
    $region37: #{ulosd_forward.27} parent=5 // pred_check
      %p577 = pneg %p576
    $region38: #{ulosd_forward.27} parent=5 // pred_check_branch
      %579 = sbr.rel (%p577) target = $region40
    $region39: #{ulosd_forward.27} parent=5 // pred_region
      %s580 = ssub.s32 %s9, 2
      // Predicated region
      $region41: #{ulosd_forward.27} parent=39 // pred_check
        %p581 = pneg %p106
      $region42: #{ulosd_forward.27} parent=39 // pred_check_branch
        %583 = sbr.rel (%p581) target = $region44
      $region43: #{ulosd_forward.27} parent=39 // pred_region
        %s584 = smul.u32 32, %s15
        %p585 = scmp.lt.s32.totalorder %s584, 191
        %s586 = scalar_select %p585, %s584, 191
        %s587 = smul.addr %s586, 8
        %s588 = scalar_lea.vmem %s3, %s587
      $region44: #{ulosd_forward.27} parent=39 // pred_fallthru
        _
    $region40: #{ulosd_forward.27} parent=5 // pred_fallthru
      _
  $region6: #{ulosd_forward.27} parent=0 // loop_footer
    %s13 = sadd.s32 1, %s9
  $region7: #{ulosd_forward.27} parent=0 // loop_footer_branch
    %8 = sbr.rel target = $region3
  $region8: #{ulosd_forward.27} parent=0 // loop_exit
    _

</llo_original>
